<compile_context>
chip_gen: v5e
topology: v5e:2x2
jax: 0.10.0
libtpu: 0.0.40
codegen_flags: <defaults>
</compile_context>

<pallas_src>
import jax
import jax.numpy as jnp
import numpy as np
from jax.experimental import pallas as pl
from jax.experimental.pallas import tpu as pltpu

HIDDEN = 32                      # h
C_IN = 8                         # conv input channels
KSIZE = 3
R_IN = 21                        # input spatial size: 21 -> 10 -> 4
R2 = 4                           # conv2 output spatial size
N_POS2 = R2 * R2                 # 16 conv2 output positions
N_TAPS = KSIZE * KSIZE           # 9 conv taps
R1U = 9                          # conv1 output rows/cols actually consumed by conv2 (0..8)
N_POS_C1 = R1U * R1U             # 81 unique conv1 output positions needed
PATCH = C_IN * N_TAPS            # 72 = conv1 im2col patch length
FLAT_DIM = 5                     # fc1 in = 16*h + 5
LANE = 128

# Parity-major ordering of the 9 used conv1 output coordinates.  With this ordering the
# rows needed by conv2 tap ki (y1 = ki + 2*pi, pi = 0..3) are the CONTIGUOUS index range
# [_START[ki], _START[ki]+4), and likewise for kj on the x axis.
_ORD = np.array([0, 2, 4, 6, 8, 1, 3, 5, 7])
_START = (0, 5, 1)               # start index in _ORD for tap offset 0 / 1 / 2


# ---------------------------------------------------------------------------
# Kernel
# ---------------------------------------------------------------------------
def cnn2_kernel(patches_ref, flat_ref, w1_ref, b1_ref, w2_ref, b2_ref,
                wfp_ref, wff_ref, bf_ref, o_ref, a1_ref):
    tb = o_ref.shape[0]

    # conv1: ONE matmul over all 81 unique conv1 positions of this batch tile.
    a1 = jnp.dot(patches_ref[...], w1_ref[...], preferred_element_type=jnp.float32)
    a1_ref[...] = jnp.maximum(a1 + b1_ref[...], 0.0)        # (81*tb, 32); row=(yi,xi,s)

    # Hoist the 9 small conv2 tap weights out of the loops (loaded once).
    w2_taps = [w2_ref[k] for k in range(N_TAPS)]            # each (32, 32)

    # Fused conv2 + fc1 accumulation.
    # fc1 starts from the flat-feature term; conv2 output never round-trips a scratch.
    y = jnp.dot(flat_ref[...], wff_ref[...], preferred_element_type=jnp.float32)  # (tb,128)

    for pi in range(R2):                                    # conv2 output row
        acc = None                                          # (4*tb, 32) running accumulator
        for ki in range(KSIZE):
            for kj in range(KSIZE):
                # Contiguous slice: conv1 rows y1 = ki+2*pi, x1 = kj+2*pj (pj=0..3), all s.
                base = ((_START[ki] + pi) * R1U + _START[kj]) * tb
                blk = a1_ref[base:base + R2 * tb, :]        # (4*tb, 32), rows (pj, s)
                d = jnp.dot(blk, w2_taps[ki * KSIZE + kj],
                            preferred_element_type=jnp.float32)
                acc = d if acc is None else acc + d
        hpi = jnp.maximum(acc + b2_ref[...], 0.0)           # conv2+ReLU, rows (pj, s)

        for pj in range(R2):                                # fc1 per-position contribution
            p = pi * R2 + pj
            y = y + jnp.dot(hpi[pj * tb:(pj + 1) * tb, :], wfp_ref[p],
                            preferred_element_type=jnp.float32)

    o_ref[...] = jnp.maximum(y + bf_ref[...], 0.0)          # lane-dense (tb, 128) store


# ---------------------------------------------------------------------------
# Wrapper-side static index plumbing (no FLOPs)
# ---------------------------------------------------------------------------
def _patch_indices():
    y1 = _ORD[:, None]                                      # (9, 1) conv1 output row
    x1 = _ORD[None, :]                                      # (1, 9) conv1 output col
    d = np.arange(KSIZE)
    rows = 2 * y1[:, :, None, None] + d[None, None, :, None]
    cols = 2 * x1[:, :, None, None] + d[None, None, None, :]
    rows = np.broadcast_to(rows, (R1U, R1U, KSIZE, KSIZE))
    cols = np.broadcast_to(cols, (R1U, R1U, KSIZE, KSIZE))
    return rows, cols


_ROWS, _COLS = _patch_indices()


def _make_patches(conv, tb):
    # conv: (B, C, 21, 21) -> (B//tb * 81*tb, 72).  Per batch tile, row = (yi*9 + xi)*tb + s
    # (yi/xi index the parity-major order); patch element r = c*9 + di*3 + dj.
    B = conv.shape[0]
    g = conv[:, :, _ROWS, _COLS]                            # (B, C, 9, 9, 3, 3)
    g = jnp.transpose(g, (0, 2, 3, 1, 4, 5))                # (B, 9, 9, C, 3, 3)
    g = g.reshape(B // tb, tb, R1U, R1U, PATCH)
    g = jnp.transpose(g, (0, 2, 3, 1, 4))                   # (G, 9, 9, tb, 72)
    return g.reshape(-1, PATCH)


def _prep_params(params):
    h = HIDDEN
    # conv1: (h, C, 3, 3) -> (72, h); row = c*9 + di*3 + dj.
    w1c = params["conv1_w"].reshape(h, PATCH).T
    b1 = params["conv1_b"].reshape(1, h)
    # conv2: (h, h, 3, 3) -> (9, h, h); [k = ki*3+kj, c, o].
    w2 = jnp.transpose(params["conv2_w"], (2, 3, 1, 0)).reshape(N_TAPS, h, h)
    b2 = params["conv2_b"].reshape(1, h)
    # fc1: PyTorch flatten of (h,4,4) gives column index o*16 + p.  Per-position weights
    # wfp[p, o, j] = fc1_w[j, o*16 + p]; flat weights wff[f, j] = fc1_w[j, 16h + f].
    wf = params["fc1_w"]                                    # (h, 16h + 5)
    wfc = wf[:, :N_POS2 * h].reshape(h, h, N_POS2)          # [j, o, p]
    wfp = jnp.transpose(wfc, (2, 1, 0))                     # [p, o, j] (16, h, h)
    wfp = jnp.zeros((N_POS2, h, LANE), jnp.float32).at[:, :, :h].set(wfp)
    wff = jnp.zeros((LANE, LANE), jnp.float32).at[:FLAT_DIM, :h].set(wf[:, N_POS2 * h:].T)
    bf = jnp.zeros((1, LANE), jnp.float32).at[0, :h].set(params["fc1_b"])
    return w1c, b1, w2, b2, wfp, wff, bf


def _pick_tb(B, cap=64):
    # Largest multiple-of-8 divisor of B, <= cap, preferring an even grid (v7x has 2 TCs).
    divs = [t for t in range(8, min(cap, B) + 1, 8) if B % t == 0]
    if not divs:
        raise ValueError("batch size must be a multiple of 8")
    even = [t for t in divs if (B // t) % 2 == 0]
    return max(even) if even else max(divs)


def _vmem_limit_bytes(tb):
    f32 = 4
    patches_blk = N_POS_C1 * tb * PATCH * f32               # per-step patches block
    a1 = N_POS_C1 * tb * HIDDEN * f32                       # conv1 scratch
    weights = (PATCH * HIDDEN + HIDDEN + N_TAPS * HIDDEN * HIDDEN + HIDDEN
               + N_POS2 * HIDDEN * LANE + LANE * LANE + LANE) * f32
    io = 2 * 2 * tb * LANE * f32                            # flat + out, double-buffered
    temps = 3 * N_POS_C1 * tb * HIDDEN * f32                # matmul temporaries, margin
    est = 2 * patches_blk + a1 + weights + io + temps
    return int(min(max(2 * est, 16 * 2 ** 20), 40 * 2 ** 20))


def cnn2_forward(params, conv, flat, ents=None, *, tb=None):
    """Batched CNN2 forward: row b of the result equals CNN2(conv[b], flat[b], ents[b])."""
    del ents  # CNN2.forward accepts `ents` but never uses it.
    B = conv.shape[0]
    if tb is None:
        tb = _pick_tb(B)
    assert tb % 8 == 0, "batch tile must be a multiple of 8 (sublane alignment)"
    assert B % tb == 0, "batch must be divisible by the batch tile"
    rows_per_step = N_POS_C1 * tb

    patches = _make_patches(conv, tb)                       # (G*81*tb, 72), deduplicated
    flat_pad = jnp.zeros((B, LANE), jnp.float32).at[:, :FLAT_DIM].set(flat)
    w1c, b1, w2, b2, wfp, wff, bf = _prep_params(params)

    out = pl.pallas_call(
        cnn2_kernel,
        out_shape=jax.ShapeDtypeStruct((B, LANE), jnp.float32),
        grid=(B // tb,),
        in_specs=[
            pl.BlockSpec((rows_per_step, PATCH), lambda b: (b, 0)),     # per-tile patches
            pl.BlockSpec((tb, LANE), lambda b: (b, 0)),                 # per-tile flat
            pl.BlockSpec((PATCH, HIDDEN), lambda b: (0, 0)),            # weights: constant
            pl.BlockSpec((1, HIDDEN), lambda b: (0, 0)),                #   index_maps ->
            pl.BlockSpec((N_TAPS, HIDDEN, HIDDEN), lambda b: (0, 0, 0)),#   VMEM-resident
            pl.BlockSpec((1, HIDDEN), lambda b: (0, 0)),                #   across the grid
            pl.BlockSpec((N_POS2, HIDDEN, LANE), lambda b: (0, 0, 0)),
            pl.BlockSpec((LANE, LANE), lambda b: (0, 0)),
            pl.BlockSpec((1, LANE), lambda b: (0, 0)),
        ],
        out_specs=pl.BlockSpec((tb, LANE), lambda b: (b, 0)),
        scratch_shapes=[pltpu.VMEM((rows_per_step, HIDDEN), jnp.float32)],
        compiler_params=pltpu.CompilerParams(
            dimension_semantics=("parallel",),
            vmem_limit_bytes=_vmem_limit_bytes(tb)),
    )(patches, flat_pad, w1c, b1, w2, b2, wfp, wff, bf)
    return out[:, :HIDDEN]


# ---------------------------------------------------------------------------
# Pure-JAX reference mirroring the PyTorch forward, and synthetic params
# ---------------------------------------------------------------------------
def cnn2_ref(params, conv, flat):
    dn = ("NCHW", "OIHW", "NCHW")
    hp = jax.lax.Precision.HIGHEST

    def single(c, f):
        x = c[None]
        x = jax.lax.conv_general_dilated(x, params["conv1_w"], (2, 2), "VALID",
                                         dimension_numbers=dn, precision=hp)
        x = jax.nn.relu(x + params["conv1_b"][None, :, None, None])
        x = jax.lax.conv_general_dilated(x, params["conv2_w"], (2, 2), "VALID",
                                         dimension_numbers=dn, precision=hp)
        x = jax.nn.relu(x + params["conv2_b"][None, :, None, None])
        x = x.reshape(-1)                                   # (h, 4, 4) -> 16*h, PyTorch order
        x = jnp.concatenate([x, f])
        return jax.nn.relu(jnp.dot(x, params["fc1_w"].T, precision=hp) + params["fc1_b"])

    return jax.vmap(single)(conv, flat)


def init_params(key):
    # Synthetic weights with PyTorch-default-style init scales (no checkpoint loading).
    h = HIDDEN
    ks = jax.random.split(key, 6)
    lim_c1 = 1.0 / float(np.sqrt(C_IN * KSIZE * KSIZE))
    lim_c2 = 1.0 / float(np.sqrt(h * KSIZE * KSIZE))
    fc_in = N_POS2 * h + FLAT_DIM
    lim_fc = 1.0 / float(np.sqrt(fc_in))
    u = jax.random.uniform
    return dict(
        conv1_w=u(ks[0], (h, C_IN, KSIZE, KSIZE), jnp.float32, -lim_c1, lim_c1),
        conv1_b=u(ks[1], (h,), jnp.float32, -lim_c1, lim_c1),
        conv2_w=u(ks[2], (h, h, KSIZE, KSIZE), jnp.float32, -lim_c2, lim_c2),
        conv2_b=u(ks[3], (h,), jnp.float32, -lim_c2, lim_c2),
        fc1_w=u(ks[4], (h, fc_in), jnp.float32, -lim_fc, lim_fc),
        fc1_b=u(ks[5], (h,), jnp.float32, -lim_fc, lim_fc),
    )


if __name__ == "__main__":
    key = jax.random.PRNGKey(0)
    kp, kc, kf, ke = jax.random.split(key, 4)
    params = init_params(kp)

    B = 64
    conv = jax.random.normal(kc, (B, C_IN, R_IN, R_IN), jnp.float32)
    flat = jax.random.normal(kf, (B, FLAT_DIM), jnp.float32)
    ents = jax.random.normal(ke, (B, 8, 12), jnp.float32)   # unused by CNN2.forward

    fwd = jax.jit(cnn2_forward)                             # fuse wrapper-side im2col/pad
    out = fwd(params, conv, flat, ents)
    jax.block_until_ready(out)

    ref = cnn2_ref(params, conv, flat)
    assert out.shape == (B, HIDDEN)
    err = float(jnp.max(jnp.abs(out - ref)))
    assert jnp.allclose(out, ref, atol=5e-4, rtol=5e-4), err
    print("KERNEL_OK")
</pallas_src>

<mosaic_0001>
module attributes {stable_mosaic.version = 11 : i64} {
  func.func @cnn2_kernel(%arg0: i32, %arg1: memref<2592x72xf32, #tpu.memory_space<vmem>>, %arg2: memref<32x128xf32, #tpu.memory_space<vmem>>, %arg3: memref<72x32xf32, #tpu.memory_space<vmem>>, %arg4: memref<1x32xf32, #tpu.memory_space<vmem>>, %arg5: memref<9x32x32xf32, #tpu.memory_space<vmem>>, %arg6: memref<1x32xf32, #tpu.memory_space<vmem>>, %arg7: memref<16x32x128xf32, #tpu.memory_space<vmem>>, %arg8: memref<128x128xf32, #tpu.memory_space<vmem>>, %arg9: memref<1x128xf32, #tpu.memory_space<vmem>>, %arg10: memref<32x128xf32, #tpu.memory_space<vmem>>, %arg11: memref<2592x32xf32, #tpu.memory_space<vmem>>) attributes {dimension_semantics = [#tpu.dimension_semantics<parallel>], iteration_bounds = array<i64: 2>, scalar_prefetch = 0 : i64, scratch_operands = 1 : i64, tpu.core_type = #tpu.core_type<tc>, window_params = [{transform_indices = @transform_0, window_bounds = array<i64: 2592, 72>}, {transform_indices = @transform_1, window_bounds = array<i64: 32, 128>}, {pipeline_mode = #tpu.pipeline_mode<synchronous>, transform_indices = @transform_2, window_bounds = array<i64: 72, 32>}, {pipeline_mode = #tpu.pipeline_mode<synchronous>, transform_indices = @transform_3, window_bounds = array<i64: 1, 32>}, {pipeline_mode = #tpu.pipeline_mode<synchronous>, transform_indices = @transform_4, window_bounds = array<i64: 9, 32, 32>}, {pipeline_mode = #tpu.pipeline_mode<synchronous>, transform_indices = @transform_5, window_bounds = array<i64: 1, 32>}, {pipeline_mode = #tpu.pipeline_mode<synchronous>, transform_indices = @transform_6, window_bounds = array<i64: 16, 32, 128>}, {pipeline_mode = #tpu.pipeline_mode<synchronous>, transform_indices = @transform_7, window_bounds = array<i64: 128, 128>}, {pipeline_mode = #tpu.pipeline_mode<synchronous>, transform_indices = @transform_8, window_bounds = array<i64: 1, 128>}, {transform_indices = @transform_9, window_bounds = array<i64: 32, 128>}]} {
    %c0 = arith.constant 0 : index
    %c0_0 = arith.constant 0 : index
    %0 = vector.load %arg1[%c0, %c0_0] : memref<2592x72xf32, #tpu.memory_space<vmem>>, vector<2592x72xf32>
    %c0_1 = arith.constant 0 : index
    %c0_2 = arith.constant 0 : index
    %1 = vector.load %arg3[%c0_1, %c0_2] : memref<72x32xf32, #tpu.memory_space<vmem>>, vector<72x32xf32>
    %cst = arith.constant dense<0.000000e+00> : vector<2592x32xf32>
    %2 = tpu.matmul %0, %1, %cst {dimension_numbers = #tpu.dot_dimension_numbers<[1], [0], [0], [1], [0, 0, 1, 1], [], []>} : vector<2592x72xf32>, vector<72x32xf32>, vector<2592x32xf32> -> vector<2592x32xf32>
    %c0_3 = arith.constant 0 : index
    %c0_4 = arith.constant 0 : index
    %3 = vector.load %arg4[%c0_3, %c0_4] : memref<1x32xf32, #tpu.memory_space<vmem>>, vector<1x32xf32>
    %4 = vector.broadcast %3 : vector<1x32xf32> to vector<2592x32xf32>
    %5 = arith.addf %2, %4 : vector<2592x32xf32>
    %cst_5 = arith.constant 0.000000e+00 : f32
    %6 = vector.broadcast %cst_5 : f32 to vector<2592x32xf32>
    %7 = arith.maximumf %5, %6 : vector<2592x32xf32>
    %c0_6 = arith.constant 0 : index
    %c0_7 = arith.constant 0 : index
    %8 = vector.load %arg11[%c0_6, %c0_7] : memref<2592x32xf32, #tpu.memory_space<vmem>>, vector<2592x32xf32>
    tpu.vector_store %arg11[%c0_6, %c0_7], %7 {strides = array<i32>} : memref<2592x32xf32, #tpu.memory_space<vmem>>, vector<2592x32xf32>,
    %c0_8 = arith.constant 0 : index
    %c0_9 = arith.constant 0 : index
    %c0_10 = arith.constant 0 : index
    %9 = vector.load %arg5[%c0_8, %c0_9, %c0_10] : memref<9x32x32xf32, #tpu.memory_space<vmem>>, vector<1x32x32xf32>
    %10 = vector.shape_cast %9 : vector<1x32x32xf32> to vector<32x32xf32>
    %c1 = arith.constant 1 : index
    %c0_11 = arith.constant 0 : index
    %c0_12 = arith.constant 0 : index
    %11 = vector.load %arg5[%c1, %c0_11, %c0_12] : memref<9x32x32xf32, #tpu.memory_space<vmem>>, vector<1x32x32xf32>
    %12 = vector.shape_cast %11 : vector<1x32x32xf32> to vector<32x32xf32>
    %c2 = arith.constant 2 : index
    %c0_13 = arith.constant 0 : index
    %c0_14 = arith.constant 0 : index
    %13 = vector.load %arg5[%c2, %c0_13, %c0_14] : memref<9x32x32xf32, #tpu.memory_space<vmem>>, vector<1x32x32xf32>
    %14 = vector.shape_cast %13 : vector<1x32x32xf32> to vector<32x32xf32>
    %c3 = arith.constant 3 : index
    %c0_15 = arith.constant 0 : index
    %c0_16 = arith.constant 0 : index
    %15 = vector.load %arg5[%c3, %c0_15, %c0_16] : memref<9x32x32xf32, #tpu.memory_space<vmem>>, vector<1x32x32xf32>
    %16 = vector.shape_cast %15 : vector<1x32x32xf32> to vector<32x32xf32>
    %c4 = arith.constant 4 : index
    %c0_17 = arith.constant 0 : index
    %c0_18 = arith.constant 0 : index
    %17 = vector.load %arg5[%c4, %c0_17, %c0_18] : memref<9x32x32xf32, #tpu.memory_space<vmem>>, vector<1x32x32xf32>
    %18 = vector.shape_cast %17 : vector<1x32x32xf32> to vector<32x32xf32>
    %c5 = arith.constant 5 : index
    %c0_19 = arith.constant 0 : index
    %c0_20 = arith.constant 0 : index
    %19 = vector.load %arg5[%c5, %c0_19, %c0_20] : memref<9x32x32xf32, #tpu.memory_space<vmem>>, vector<1x32x32xf32>
    %20 = vector.shape_cast %19 : vector<1x32x32xf32> to vector<32x32xf32>
    %c6 = arith.constant 6 : index
    %c0_21 = arith.constant 0 : index
    %c0_22 = arith.constant 0 : index
    %21 = vector.load %arg5[%c6, %c0_21, %c0_22] : memref<9x32x32xf32, #tpu.memory_space<vmem>>, vector<1x32x32xf32>
    %22 = vector.shape_cast %21 : vector<1x32x32xf32> to vector<32x32xf32>
    %c7 = arith.constant 7 : index
    %c0_23 = arith.constant 0 : index
    %c0_24 = arith.constant 0 : index
    %23 = vector.load %arg5[%c7, %c0_23, %c0_24] : memref<9x32x32xf32, #tpu.memory_space<vmem>>, vector<1x32x32xf32>
    %24 = vector.shape_cast %23 : vector<1x32x32xf32> to vector<32x32xf32>
    %c8 = arith.constant 8 : index
    %c0_25 = arith.constant 0 : index
    %c0_26 = arith.constant 0 : index
    %25 = vector.load %arg5[%c8, %c0_25, %c0_26] : memref<9x32x32xf32, #tpu.memory_space<vmem>>, vector<1x32x32xf32>
    %26 = vector.shape_cast %25 : vector<1x32x32xf32> to vector<32x32xf32>
    %c0_27 = arith.constant 0 : index
    %c0_28 = arith.constant 0 : index
    %27 = vector.load %arg2[%c0_27, %c0_28] : memref<32x128xf32, #tpu.memory_space<vmem>>, vector<32x128xf32>
    %c0_29 = arith.constant 0 : index
    %c0_30 = arith.constant 0 : index
    %28 = vector.load %arg8[%c0_29, %c0_30] : memref<128x128xf32, #tpu.memory_space<vmem>>, vector<128x128xf32>
    %cst_31 = arith.constant dense<0.000000e+00> : vector<32x128xf32>
    %29 = tpu.matmul %27, %28, %cst_31 {dimension_numbers = #tpu.dot_dimension_numbers<[1], [0], [0], [1], [0, 0, 1, 1], [], []>} : vector<32x128xf32>, vector<128x128xf32>, vector<32x128xf32> -> vector<32x128xf32>
    %c0_32 = arith.constant 0 : index
    %c0_33 = arith.constant 0 : index
    %30 = vector.load %arg11[%c0_32, %c0_33] : memref<2592x32xf32, #tpu.memory_space<vmem>>, vector<128x32xf32>
    %cst_34 = arith.constant dense<0.000000e+00> : vector<128x32xf32>
    %31 = tpu.matmul %30, %10, %cst_34 {dimension_numbers = #tpu.dot_dimension_numbers<[1], [0], [0], [1], [0, 0, 1, 1], [], []>} : vector<128x32xf32>, vector<32x32xf32>, vector<128x32xf32> -> vector<128x32xf32>
    %c160 = arith.constant 160 : index
    %c0_35 = arith.constant 0 : index
    %32 = vector.load %arg11[%c160, %c0_35] : memref<2592x32xf32, #tpu.memory_space<vmem>>, vector<128x32xf32>
    %cst_36 = arith.constant dense<0.000000e+00> : vector<128x32xf32>
    %33 = tpu.matmul %32, %12, %cst_36 {dimension_numbers = #tpu.dot_dimension_numbers<[1], [0], [0], [1], [0, 0, 1, 1], [], []>} : vector<128x32xf32>, vector<32x32xf32>, vector<128x32xf32> -> vector<128x32xf32>
    %34 = arith.addf %31, %33 : vector<128x32xf32>
    %c32 = arith.constant 32 : index
    %c0_37 = arith.constant 0 : index
    %35 = vector.load %arg11[%c32, %c0_37] : memref<2592x32xf32, #tpu.memory_space<vmem>>, vector<128x32xf32>
    %cst_38 = arith.constant dense<0.000000e+00> : vector<128x32xf32>
    %36 = tpu.matmul %35, %14, %cst_38 {dimension_numbers = #tpu.dot_dimension_numbers<[1], [0], [0], [1], [0, 0, 1, 1], [], []>} : vector<128x32xf32>, vector<32x32xf32>, vector<128x32xf32> -> vector<128x32xf32>
    %37 = arith.addf %34, %36 : vector<128x32xf32>
    %c1440 = arith.constant 1440 : index
    %c0_39 = arith.constant 0 : index
    %38 = vector.load %arg11[%c1440, %c0_39] : memref<2592x32xf32, #tpu.memory_space<vmem>>, vector<128x32xf32>
    %cst_40 = arith.constant dense<0.000000e+00> : vector<128x32xf32>
    %39 = tpu.matmul %38, %16, %cst_40 {dimension_numbers = #tpu.dot_dimension_numbers<[1], [0], [0], [1], [0, 0, 1, 1], [], []>} : vector<128x32xf32>, vector<32x32xf32>, vector<128x32xf32> -> vector<128x32xf32>
    %40 = arith.addf %37, %39 : vector<128x32xf32>
    %c1600 = arith.constant 1600 : index
    %c0_41 = arith.constant 0 : index
    %41 = vector.load %arg11[%c1600, %c0_41] : memref<2592x32xf32, #tpu.memory_space<vmem>>, vector<128x32xf32>
    %cst_42 = arith.constant dense<0.000000e+00> : vector<128x32xf32>
    %42 = tpu.matmul %41, %18, %cst_42 {dimension_numbers = #tpu.dot_dimension_numbers<[1], [0], [0], [1], [0, 0, 1, 1], [], []>} : vector<128x32xf32>, vector<32x32xf32>, vector<128x32xf32> -> vector<128x32xf32>
    %43 = arith.addf %40, %42 : vector<128x32xf32>
    %c1472 = arith.constant 1472 : index
    %c0_43 = arith.constant 0 : index
    %44 = vector.load %arg11[%c1472, %c0_43] : memref<2592x32xf32, #tpu.memory_space<vmem>>, vector<128x32xf32>
    %cst_44 = arith.constant dense<0.000000e+00> : vector<128x32xf32>
    %45 = tpu.matmul %44, %20, %cst_44 {dimension_numbers = #tpu.dot_dimension_numbers<[1], [0], [0], [1], [0, 0, 1, 1], [], []>} : vector<128x32xf32>, vector<32x32xf32>, vector<128x32xf32> -> vector<128x32xf32>
    %46 = arith.addf %43, %45 : vector<128x32xf32>
    %c288 = arith.constant 288 : index
    %c0_45 = arith.constant 0 : index
    %47 = vector.load %arg11[%c288, %c0_45] : memref<2592x32xf32, #tpu.memory_space<vmem>>, vector<128x32xf32>
    %cst_46 = arith.constant dense<0.000000e+00> : vector<128x32xf32>
    %48 = tpu.matmul %47, %22, %cst_46 {dimension_numbers = #tpu.dot_dimension_numbers<[1], [0], [0], [1], [0, 0, 1, 1], [], []>} : vector<128x32xf32>, vector<32x32xf32>, vector<128x32xf32> -> vector<128x32xf32>
    %49 = arith.addf %46, %48 : vector<128x32xf32>
    %c448 = arith.constant 448 : index
    %c0_47 = arith.constant 0 : index
    %50 = vector.load %arg11[%c448, %c0_47] : memref<2592x32xf32, #tpu.memory_space<vmem>>, vector<128x32xf32>
    %cst_48 = arith.constant dense<0.000000e+00> : vector<128x32xf32>
    %51 = tpu.matmul %50, %24, %cst_48 {dimension_numbers = #tpu.dot_dimension_numbers<[1], [0], [0], [1], [0, 0, 1, 1], [], []>} : vector<128x32xf32>, vector<32x32xf32>, vector<128x32xf32> -> vector<128x32xf32>
    %52 = arith.addf %49, %51 : vector<128x32xf32>
    %c320 = arith.constant 320 : index
    %c0_49 = arith.constant 0 : index
    %53 = vector.load %arg11[%c320, %c0_49] : memref<2592x32xf32, #tpu.memory_space<vmem>>, vector<128x32xf32>
    %cst_50 = arith.constant dense<0.000000e+00> : vector<128x32xf32>
    %54 = tpu.matmul %53, %26, %cst_50 {dimension_numbers = #tpu.dot_dimension_numbers<[1], [0], [0], [1], [0, 0, 1, 1], [], []>} : vector<128x32xf32>, vector<32x32xf32>, vector<128x32xf32> -> vector<128x32xf32>
    %55 = arith.addf %52, %54 : vector<128x32xf32>
    %c0_51 = arith.constant 0 : index
    %c0_52 = arith.constant 0 : index
    %56 = vector.load %arg6[%c0_51, %c0_52] : memref<1x32xf32, #tpu.memory_space<vmem>>, vector<1x32xf32>
    %57 = vector.broadcast %56 : vector<1x32xf32> to vector<128x32xf32>
    %58 = arith.addf %55, %57 : vector<128x32xf32>
    %cst_53 = arith.constant 0.000000e+00 : f32
    %59 = vector.broadcast %cst_53 : f32 to vector<128x32xf32>
    %60 = arith.maximumf %58, %59 : vector<128x32xf32>
    %61 = vector.extract_strided_slice %60 {offsets = [0, 0], sizes = [32, 32], strides = [1, 1]} : vector<128x32xf32> to vector<32x32xf32>
    %c0_54 = arith.constant 0 : index
    %c0_55 = arith.constant 0 : index
    %c0_56 = arith.constant 0 : index
    %62 = vector.load %arg7[%c0_54, %c0_55, %c0_56] : memref<16x32x128xf32, #tpu.memory_space<vmem>>, vector<1x32x128xf32>
    %63 = vector.shape_cast %62 : vector<1x32x128xf32> to vector<32x128xf32>
    %cst_57 = arith.constant dense<0.000000e+00> : vector<32x128xf32>
    %64 = tpu.matmul %61, %63, %cst_57 {dimension_numbers = #tpu.dot_dimension_numbers<[1], [0], [0], [1], [0, 0, 1, 1], [], []>} : vector<32x32xf32>, vector<32x128xf32>, vector<32x128xf32> -> vector<32x128xf32>
    %65 = arith.addf %29, %64 : vector<32x128xf32>
    %66 = vector.extract_strided_slice %60 {offsets = [32, 0], sizes = [32, 32], strides = [1, 1]} : vector<128x32xf32> to vector<32x32xf32>
    %c1_58 = arith.constant 1 : index
    %c0_59 = arith.constant 0 : index
    %c0_60 = arith.constant 0 : index
    %67 = vector.load %arg7[%c1_58, %c0_59, %c0_60] : memref<16x32x128xf32, #tpu.memory_space<vmem>>, vector<1x32x128xf32>
    %68 = vector.shape_cast %67 : vector<1x32x128xf32> to vector<32x128xf32>
    %cst_61 = arith.constant dense<0.000000e+00> : vector<32x128xf32>
    %69 = tpu.matmul %66, %68, %cst_61 {dimension_numbers = #tpu.dot_dimension_numbers<[1], [0], [0], [1], [0, 0, 1, 1], [], []>} : vector<32x32xf32>, vector<32x128xf32>, vector<32x128xf32> -> vector<32x128xf32>
    %70 = arith.addf %65, %69 : vector<32x128xf32>
    %71 = vector.extract_strided_slice %60 {offsets = [64, 0], sizes = [32, 32], strides = [1, 1]} : vector<128x32xf32> to vector<32x32xf32>
    %c2_62 = arith.constant 2 : index
    %c0_63 = arith.constant 0 : index
    %c0_64 = arith.constant 0 : index
    %72 = vector.load %arg7[%c2_62, %c0_63, %c0_64] : memref<16x32x128xf32, #tpu.memory_space<vmem>>, vector<1x32x128xf32>
    %73 = vector.shape_cast %72 : vector<1x32x128xf32> to vector<32x128xf32>
    %cst_65 = arith.constant dense<0.000000e+00> : vector<32x128xf32>
    %74 = tpu.matmul %71, %73, %cst_65 {dimension_numbers = #tpu.dot_dimension_numbers<[1], [0], [0], [1], [0, 0, 1, 1], [], []>} : vector<32x32xf32>, vector<32x128xf32>, vector<32x128xf32> -> vector<32x128xf32>
    %75 = arith.addf %70, %74 : vector<32x128xf32>
    %76 = vector.extract_strided_slice %60 {offsets = [96, 0], sizes = [32, 32], strides = [1, 1]} : vector<128x32xf32> to vector<32x32xf32>
    %c3_66 = arith.constant 3 : index
    %c0_67 = arith.constant 0 : index
    %c0_68 = arith.constant 0 : index
    %77 = vector.load %arg7[%c3_66, %c0_67, %c0_68] : memref<16x32x128xf32, #tpu.memory_space<vmem>>, vector<1x32x128xf32>
    %78 = vector.shape_cast %77 : vector<1x32x128xf32> to vector<32x128xf32>
    %cst_69 = arith.constant dense<0.000000e+00> : vector<32x128xf32>
    %79 = tpu.matmul %76, %78, %cst_69 {dimension_numbers = #tpu.dot_dimension_numbers<[1], [0], [0], [1], [0, 0, 1, 1], [], []>} : vector<32x32xf32>, vector<32x128xf32>, vector<32x128xf32> -> vector<32x128xf32>
    %80 = arith.addf %75, %79 : vector<32x128xf32>
    %c288_70 = arith.constant 288 : index
    %c0_71 = arith.constant 0 : index
    %81 = vector.load %arg11[%c288_70, %c0_71] : memref<2592x32xf32, #tpu.memory_space<vmem>>, vector<128x32xf32>
    %cst_72 = arith.constant dense<0.000000e+00> : vector<128x32xf32>
    %82 = tpu.matmul %81, %10, %cst_72 {dimension_numbers = #tpu.dot_dimension_numbers<[1], [0], [0], [1], [0, 0, 1, 1], [], []>} : vector<128x32xf32>, vector<32x32xf32>, vector<128x32xf32> -> vector<128x32xf32>
    %c448_73 = arith.constant 448 : index
    %c0_74 = arith.constant 0 : index
    %83 = vector.load %arg11[%c448_73, %c0_74] : memref<2592x32xf32, #tpu.memory_space<vmem>>, vector<128x32xf32>
    %cst_75 = arith.constant dense<0.000000e+00> : vector<128x32xf32>
    %84 = tpu.matmul %83, %12, %cst_75 {dimension_numbers = #tpu.dot_dimension_numbers<[1], [0], [0], [1], [0, 0, 1, 1], [], []>} : vector<128x32xf32>, vector<32x32xf32>, vector<128x32xf32> -> vector<128x32xf32>
    %85 = arith.addf %82, %84 : vector<128x32xf32>
    %c320_76 = arith.constant 320 : index
    %c0_77 = arith.constant 0 : index
    %86 = vector.load %arg11[%c320_76, %c0_77] : memref<2592x32xf32, #tpu.memory_space<vmem>>, vector<128x32xf32>
    %cst_78 = arith.constant dense<0.000000e+00> : vector<128x32xf32>
    %87 = tpu.matmul %86, %14, %cst_78 {dimension_numbers = #tpu.dot_dimension_numbers<[1], [0], [0], [1], [0, 0, 1, 1], [], []>} : vector<128x32xf32>, vector<32x32xf32>, vector<128x32xf32> -> vector<128x32xf32>
    %88 = arith.addf %85, %87 : vector<128x32xf32>
    %c1728 = arith.constant 1728 : index
    %c0_79 = arith.constant 0 : index
    %89 = vector.load %arg11[%c1728, %c0_79] : memref<2592x32xf32, #tpu.memory_space<vmem>>, vector<128x32xf32>
    %cst_80 = arith.constant dense<0.000000e+00> : vector<128x32xf32>
    %90 = tpu.matmul %89, %16, %cst_80 {dimension_numbers = #tpu.dot_dimension_numbers<[1], [0], [0], [1], [0, 0, 1, 1], [], []>} : vector<128x32xf32>, vector<32x32xf32>, vector<128x32xf32> -> vector<128x32xf32>
    %91 = arith.addf %88, %90 : vector<128x32xf32>
    %c1888 = arith.constant 1888 : index
    %c0_81 = arith.constant 0 : index
    %92 = vector.load %arg11[%c1888, %c0_81] : memref<2592x32xf32, #tpu.memory_space<vmem>>, vector<128x32xf32>
    %cst_82 = arith.constant dense<0.000000e+00> : vector<128x32xf32>
    %93 = tpu.matmul %92, %18, %cst_82 {dimension_numbers = #tpu.dot_dimension_numbers<[1], [0], [0], [1], [0, 0, 1, 1], [], []>} : vector<128x32xf32>, vector<32x32xf32>, vector<128x32xf32> -> vector<128x32xf32>
    %94 = arith.addf %91, %93 : vector<128x32xf32>
    %c1760 = arith.constant 1760 : index
    %c0_83 = arith.constant 0 : index
    %95 = vector.load %arg11[%c1760, %c0_83] : memref<2592x32xf32, #tpu.memory_space<vmem>>, vector<128x32xf32>
    %cst_84 = arith.constant dense<0.000000e+00> : vector<128x32xf32>
    %96 = tpu.matmul %95, %20, %cst_84 {dimension_numbers = #tpu.dot_dimension_numbers<[1], [0], [0], [1], [0, 0, 1, 1], [], []>} : vector<128x32xf32>, vector<32x32xf32>, vector<128x32xf32> -> vector<128x32xf32>
    %97 = arith.addf %94, %96 : vector<128x32xf32>
    %c576 = arith.constant 576 : index
    %c0_85 = arith.constant 0 : index
    %98 = vector.load %arg11[%c576, %c0_85] : memref<2592x32xf32, #tpu.memory_space<vmem>>, vector<128x32xf32>
    %cst_86 = arith.constant dense<0.000000e+00> : vector<128x32xf32>
    %99 = tpu.matmul %98, %22, %cst_86 {dimension_numbers = #tpu.dot_dimension_numbers<[1], [0], [0], [1], [0, 0, 1, 1], [], []>} : vector<128x32xf32>, vector<32x32xf32>, vector<128x32xf32> -> vector<128x32xf32>
    %100 = arith.addf %97, %99 : vector<128x32xf32>
    %c736 = arith.constant 736 : index
    %c0_87 = arith.constant 0 : index
    %101 = vector.load %arg11[%c736, %c0_87] : memref<2592x32xf32, #tpu.memory_space<vmem>>, vector<128x32xf32>
    %cst_88 = arith.constant dense<0.000000e+00> : vector<128x32xf32>
    %102 = tpu.matmul %101, %24, %cst_88 {dimension_numbers = #tpu.dot_dimension_numbers<[1], [0], [0], [1], [0, 0, 1, 1], [], []>} : vector<128x32xf32>, vector<32x32xf32>, vector<128x32xf32> -> vector<128x32xf32>
    %103 = arith.addf %100, %102 : vector<128x32xf32>
    %c608 = arith.constant 608 : index
    %c0_89 = arith.constant 0 : index
    %104 = vector.load %arg11[%c608, %c0_89] : memref<2592x32xf32, #tpu.memory_space<vmem>>, vector<128x32xf32>
    %cst_90 = arith.constant dense<0.000000e+00> : vector<128x32xf32>
    %105 = tpu.matmul %104, %26, %cst_90 {dimension_numbers = #tpu.dot_dimension_numbers<[1], [0], [0], [1], [0, 0, 1, 1], [], []>} : vector<128x32xf32>, vector<32x32xf32>, vector<128x32xf32> -> vector<128x32xf32>
    %106 = arith.addf %103, %105 : vector<128x32xf32>
    %c0_91 = arith.constant 0 : index
    %c0_92 = arith.constant 0 : index
    %107 = vector.load %arg6[%c0_91, %c0_92] : memref<1x32xf32, #tpu.memory_space<vmem>>, vector<1x32xf32>
    %108 = vector.broadcast %107 : vector<1x32xf32> to vector<128x32xf32>
    %109 = arith.addf %106, %108 : vector<128x32xf32>
    %cst_93 = arith.constant 0.000000e+00 : f32
    %110 = vector.broadcast %cst_93 : f32 to vector<128x32xf32>
    %111 = arith.maximumf %109, %110 : vector<128x32xf32>
    %112 = vector.extract_strided_slice %111 {offsets = [0, 0], sizes = [32, 32], strides = [1, 1]} : vector<128x32xf32> to vector<32x32xf32>
    %c4_94 = arith.constant 4 : index
    %c0_95 = arith.constant 0 : index
    %c0_96 = arith.constant 0 : index
    %113 = vector.load %arg7[%c4_94, %c0_95, %c0_96] : memref<16x32x128xf32, #tpu.memory_space<vmem>>, vector<1x32x128xf32>
    %114 = vector.shape_cast %113 : vector<1x32x128xf32> to vector<32x128xf32>
    %cst_97 = arith.constant dense<0.000000e+00> : vector<32x128xf32>
    %115 = tpu.matmul %112, %114, %cst_97 {dimension_numbers = #tpu.dot_dimension_numbers<[1], [0], [0], [1], [0, 0, 1, 1], [], []>} : vector<32x32xf32>, vector<32x128xf32>, vector<32x128xf32> -> vector<32x128xf32>
    %116 = arith.addf %80, %115 : vector<32x128xf32>
    %117 = vector.extract_strided_slice %111 {offsets = [32, 0], sizes = [32, 32], strides = [1, 1]} : vector<128x32xf32> to vector<32x32xf32>
    %c5_98 = arith.constant 5 : index
    %c0_99 = arith.constant 0 : index
    %c0_100 = arith.constant 0 : index
    %118 = vector.load %arg7[%c5_98, %c0_99, %c0_100] : memref<16x32x128xf32, #tpu.memory_space<vmem>>, vector<1x32x128xf32>
    %119 = vector.shape_cast %118 : vector<1x32x128xf32> to vector<32x128xf32>
    %cst_101 = arith.constant dense<0.000000e+00> : vector<32x128xf32>
    %120 = tpu.matmul %117, %119, %cst_101 {dimension_numbers = #tpu.dot_dimension_numbers<[1], [0], [0], [1], [0, 0, 1, 1], [], []>} : vector<32x32xf32>, vector<32x128xf32>, vector<32x128xf32> -> vector<32x128xf32>
    %121 = arith.addf %116, %120 : vector<32x128xf32>
    %122 = vector.extract_strided_slice %111 {offsets = [64, 0], sizes = [32, 32], strides = [1, 1]} : vector<128x32xf32> to vector<32x32xf32>
    %c6_102 = arith.constant 6 : index
    %c0_103 = arith.constant 0 : index
    %c0_104 = arith.constant 0 : index
    %123 = vector.load %arg7[%c6_102, %c0_103, %c0_104] : memref<16x32x128xf32, #tpu.memory_space<vmem>>, vector<1x32x128xf32>
    %124 = vector.shape_cast %123 : vector<1x32x128xf32> to vector<32x128xf32>
    %cst_105 = arith.constant dense<0.000000e+00> : vector<32x128xf32>
    %125 = tpu.matmul %122, %124, %cst_105 {dimension_numbers = #tpu.dot_dimension_numbers<[1], [0], [0], [1], [0, 0, 1, 1], [], []>} : vector<32x32xf32>, vector<32x128xf32>, vector<32x128xf32> -> vector<32x128xf32>
    %126 = arith.addf %121, %125 : vector<32x128xf32>
    %127 = vector.extract_strided_slice %111 {offsets = [96, 0], sizes = [32, 32], strides = [1, 1]} : vector<128x32xf32> to vector<32x32xf32>
    %c7_106 = arith.constant 7 : index
    %c0_107 = arith.constant 0 : index
    %c0_108 = arith.constant 0 : index
    %128 = vector.load %arg7[%c7_106, %c0_107, %c0_108] : memref<16x32x128xf32, #tpu.memory_space<vmem>>, vector<1x32x128xf32>
    %129 = vector.shape_cast %128 : vector<1x32x128xf32> to vector<32x128xf32>
    %cst_109 = arith.constant dense<0.000000e+00> : vector<32x128xf32>
    %130 = tpu.matmul %127, %129, %cst_109 {dimension_numbers = #tpu.dot_dimension_numbers<[1], [0], [0], [1], [0, 0, 1, 1], [], []>} : vector<32x32xf32>, vector<32x128xf32>, vector<32x128xf32> -> vector<32x128xf32>
    %131 = arith.addf %126, %130 : vector<32x128xf32>
    %c576_110 = arith.constant 576 : index
    %c0_111 = arith.constant 0 : index
    %132 = vector.load %arg11[%c576_110, %c0_111] : memref<2592x32xf32, #tpu.memory_space<vmem>>, vector<128x32xf32>
    %cst_112 = arith.constant dense<0.000000e+00> : vector<128x32xf32>
    %133 = tpu.matmul %132, %10, %cst_112 {dimension_numbers = #tpu.dot_dimension_numbers<[1], [0], [0], [1], [0, 0, 1, 1], [], []>} : vector<128x32xf32>, vector<32x32xf32>, vector<128x32xf32> -> vector<128x32xf32>
    %c736_113 = arith.constant 736 : index
    %c0_114 = arith.constant 0 : index
    %134 = vector.load %arg11[%c736_113, %c0_114] : memref<2592x32xf32, #tpu.memory_space<vmem>>, vector<128x32xf32>
    %cst_115 = arith.constant dense<0.000000e+00> : vector<128x32xf32>
    %135 = tpu.matmul %134, %12, %cst_115 {dimension_numbers = #tpu.dot_dimension_numbers<[1], [0], [0], [1], [0, 0, 1, 1], [], []>} : vector<128x32xf32>, vector<32x32xf32>, vector<128x32xf32> -> vector<128x32xf32>
    %136 = arith.addf %133, %135 : vector<128x32xf32>
    %c608_116 = arith.constant 608 : index
    %c0_117 = arith.constant 0 : index
    %137 = vector.load %arg11[%c608_116, %c0_117] : memref<2592x32xf32, #tpu.memory_space<vmem>>, vector<128x32xf32>
    %cst_118 = arith.constant dense<0.000000e+00> : vector<128x32xf32>
    %138 = tpu.matmul %137, %14, %cst_118 {dimension_numbers = #tpu.dot_dimension_numbers<[1], [0], [0], [1], [0, 0, 1, 1], [], []>} : vector<128x32xf32>, vector<32x32xf32>, vector<128x32xf32> -> vector<128x32xf32>
    %139 = arith.addf %136, %138 : vector<128x32xf32>
    %c2016 = arith.constant 2016 : index
    %c0_119 = arith.constant 0 : index
    %140 = vector.load %arg11[%c2016, %c0_119] : memref<2592x32xf32, #tpu.memory_space<vmem>>, vector<128x32xf32>
    %cst_120 = arith.constant dense<0.000000e+00> : vector<128x32xf32>
    %141 = tpu.matmul %140, %16, %cst_120 {dimension_numbers = #tpu.dot_dimension_numbers<[1], [0], [0], [1], [0, 0, 1, 1], [], []>} : vector<128x32xf32>, vector<32x32xf32>, vector<128x32xf32> -> vector<128x32xf32>
    %142 = arith.addf %139, %141 : vector<128x32xf32>
    %c2176 = arith.constant 2176 : index
    %c0_121 = arith.constant 0 : index
    %143 = vector.load %arg11[%c2176, %c0_121] : memref<2592x32xf32, #tpu.memory_space<vmem>>, vector<128x32xf32>
    %cst_122 = arith.constant dense<0.000000e+00> : vector<128x32xf32>
    %144 = tpu.matmul %143, %18, %cst_122 {dimension_numbers = #tpu.dot_dimension_numbers<[1], [0], [0], [1], [0, 0, 1, 1], [], []>} : vector<128x32xf32>, vector<32x32xf32>, vector<128x32xf32> -> vector<128x32xf32>
    %145 = arith.addf %142, %144 : vector<128x32xf32>
    %c2048 = arith.constant 2048 : index
    %c0_123 = arith.constant 0 : index
    %146 = vector.load %arg11[%c2048, %c0_123] : memref<2592x32xf32, #tpu.memory_space<vmem>>, vector<128x32xf32>
    %cst_124 = arith.constant dense<0.000000e+00> : vector<128x32xf32>
    %147 = tpu.matmul %146, %20, %cst_124 {dimension_numbers = #tpu.dot_dimension_numbers<[1], [0], [0], [1], [0, 0, 1, 1], [], []>} : vector<128x32xf32>, vector<32x32xf32>, vector<128x32xf32> -> vector<128x32xf32>
    %148 = arith.addf %145, %147 : vector<128x32xf32>
    %c864 = arith.constant 864 : index
    %c0_125 = arith.constant 0 : index
    %149 = vector.load %arg11[%c864, %c0_125] : memref<2592x32xf32, #tpu.memory_space<vmem>>, vector<128x32xf32>
    %cst_126 = arith.constant dense<0.000000e+00> : vector<128x32xf32>
    %150 = tpu.matmul %149, %22, %cst_126 {dimension_numbers = #tpu.dot_dimension_numbers<[1], [0], [0], [1], [0, 0, 1, 1], [], []>} : vector<128x32xf32>, vector<32x32xf32>, vector<128x32xf32> -> vector<128x32xf32>
    %151 = arith.addf %148, %150 : vector<128x32xf32>
    %c1024 = arith.constant 1024 : index
    %c0_127 = arith.constant 0 : index
    %152 = vector.load %arg11[%c1024, %c0_127] : memref<2592x32xf32, #tpu.memory_space<vmem>>, vector<128x32xf32>
    %cst_128 = arith.constant dense<0.000000e+00> : vector<128x32xf32>
    %153 = tpu.matmul %152, %24, %cst_128 {dimension_numbers = #tpu.dot_dimension_numbers<[1], [0], [0], [1], [0, 0, 1, 1], [], []>} : vector<128x32xf32>, vector<32x32xf32>, vector<128x32xf32> -> vector<128x32xf32>
    %154 = arith.addf %151, %153 : vector<128x32xf32>
    %c896 = arith.constant 896 : index
    %c0_129 = arith.constant 0 : index
    %155 = vector.load %arg11[%c896, %c0_129] : memref<2592x32xf32, #tpu.memory_space<vmem>>, vector<128x32xf32>
    %cst_130 = arith.constant dense<0.000000e+00> : vector<128x32xf32>
    %156 = tpu.matmul %155, %26, %cst_130 {dimension_numbers = #tpu.dot_dimension_numbers<[1], [0], [0], [1], [0, 0, 1, 1], [], []>} : vector<128x32xf32>, vector<32x32xf32>, vector<128x32xf32> -> vector<128x32xf32>
    %157 = arith.addf %154, %156 : vector<128x32xf32>
    %c0_131 = arith.constant 0 : index
    %c0_132 = arith.constant 0 : index
    %158 = vector.load %arg6[%c0_131, %c0_132] : memref<1x32xf32, #tpu.memory_space<vmem>>, vector<1x32xf32>
    %159 = vector.broadcast %158 : vector<1x32xf32> to vector<128x32xf32>
    %160 = arith.addf %157, %159 : vector<128x32xf32>
    %cst_133 = arith.constant 0.000000e+00 : f32
    %161 = vector.broadcast %cst_133 : f32 to vector<128x32xf32>
    %162 = arith.maximumf %160, %161 : vector<128x32xf32>
    %163 = vector.extract_strided_slice %162 {offsets = [0, 0], sizes = [32, 32], strides = [1, 1]} : vector<128x32xf32> to vector<32x32xf32>
    %c8_134 = arith.constant 8 : index
    %c0_135 = arith.constant 0 : index
    %c0_136 = arith.constant 0 : index
    %164 = vector.load %arg7[%c8_134, %c0_135, %c0_136] : memref<16x32x128xf32, #tpu.memory_space<vmem>>, vector<1x32x128xf32>
    %165 = vector.shape_cast %164 : vector<1x32x128xf32> to vector<32x128xf32>
    %cst_137 = arith.constant dense<0.000000e+00> : vector<32x128xf32>
    %166 = tpu.matmul %163, %165, %cst_137 {dimension_numbers = #tpu.dot_dimension_numbers<[1], [0], [0], [1], [0, 0, 1, 1], [], []>} : vector<32x32xf32>, vector<32x128xf32>, vector<32x128xf32> -> vector<32x128xf32>
    %167 = arith.addf %131, %166 : vector<32x128xf32>
    %168 = vector.extract_strided_slice %162 {offsets = [32, 0], sizes = [32, 32], strides = [1, 1]} : vector<128x32xf32> to vector<32x32xf32>
    %c9 = arith.constant 9 : index
    %c0_138 = arith.constant 0 : index
    %c0_139 = arith.constant 0 : index
    %169 = vector.load %arg7[%c9, %c0_138, %c0_139] : memref<16x32x128xf32, #tpu.memory_space<vmem>>, vector<1x32x128xf32>
    %170 = vector.shape_cast %169 : vector<1x32x128xf32> to vector<32x128xf32>
    %cst_140 = arith.constant dense<0.000000e+00> : vector<32x128xf32>
    %171 = tpu.matmul %168, %170, %cst_140 {dimension_numbers = #tpu.dot_dimension_numbers<[1], [0], [0], [1], [0, 0, 1, 1], [], []>} : vector<32x32xf32>, vector<32x128xf32>, vector<32x128xf32> -> vector<32x128xf32>
    %172 = arith.addf %167, %171 : vector<32x128xf32>
    %173 = vector.extract_strided_slice %162 {offsets = [64, 0], sizes = [32, 32], strides = [1, 1]} : vector<128x32xf32> to vector<32x32xf32>
    %c10 = arith.constant 10 : index
    %c0_141 = arith.constant 0 : index
    %c0_142 = arith.constant 0 : index
    %174 = vector.load %arg7[%c10, %c0_141, %c0_142] : memref<16x32x128xf32, #tpu.memory_space<vmem>>, vector<1x32x128xf32>
    %175 = vector.shape_cast %174 : vector<1x32x128xf32> to vector<32x128xf32>
    %cst_143 = arith.constant dense<0.000000e+00> : vector<32x128xf32>
    %176 = tpu.matmul %173, %175, %cst_143 {dimension_numbers = #tpu.dot_dimension_numbers<[1], [0], [0], [1], [0, 0, 1, 1], [], []>} : vector<32x32xf32>, vector<32x128xf32>, vector<32x128xf32> -> vector<32x128xf32>
    %177 = arith.addf %172, %176 : vector<32x128xf32>
    %178 = vector.extract_strided_slice %162 {offsets = [96, 0], sizes = [32, 32], strides = [1, 1]} : vector<128x32xf32> to vector<32x32xf32>
    %c11 = arith.constant 11 : index
    %c0_144 = arith.constant 0 : index
    %c0_145 = arith.constant 0 : index
    %179 = vector.load %arg7[%c11, %c0_144, %c0_145] : memref<16x32x128xf32, #tpu.memory_space<vmem>>, vector<1x32x128xf32>
    %180 = vector.shape_cast %179 : vector<1x32x128xf32> to vector<32x128xf32>
    %cst_146 = arith.constant dense<0.000000e+00> : vector<32x128xf32>
    %181 = tpu.matmul %178, %180, %cst_146 {dimension_numbers = #tpu.dot_dimension_numbers<[1], [0], [0], [1], [0, 0, 1, 1], [], []>} : vector<32x32xf32>, vector<32x128xf32>, vector<32x128xf32> -> vector<32x128xf32>
    %182 = arith.addf %177, %181 : vector<32x128xf32>
    %c864_147 = arith.constant 864 : index
    %c0_148 = arith.constant 0 : index
    %183 = vector.load %arg11[%c864_147, %c0_148] : memref<2592x32xf32, #tpu.memory_space<vmem>>, vector<128x32xf32>
    %cst_149 = arith.constant dense<0.000000e+00> : vector<128x32xf32>
    %184 = tpu.matmul %183, %10, %cst_149 {dimension_numbers = #tpu.dot_dimension_numbers<[1], [0], [0], [1], [0, 0, 1, 1], [], []>} : vector<128x32xf32>, vector<32x32xf32>, vector<128x32xf32> -> vector<128x32xf32>
    %c1024_150 = arith.constant 1024 : index
    %c0_151 = arith.constant 0 : index
    %185 = vector.load %arg11[%c1024_150, %c0_151] : memref<2592x32xf32, #tpu.memory_space<vmem>>, vector<128x32xf32>
    %cst_152 = arith.constant dense<0.000000e+00> : vector<128x32xf32>
    %186 = tpu.matmul %185, %12, %cst_152 {dimension_numbers = #tpu.dot_dimension_numbers<[1], [0], [0], [1], [0, 0, 1, 1], [], []>} : vector<128x32xf32>, vector<32x32xf32>, vector<128x32xf32> -> vector<128x32xf32>
    %187 = arith.addf %184, %186 : vector<128x32xf32>
    %c896_153 = arith.constant 896 : index
    %c0_154 = arith.constant 0 : index
    %188 = vector.load %arg11[%c896_153, %c0_154] : memref<2592x32xf32, #tpu.memory_space<vmem>>, vector<128x32xf32>
    %cst_155 = arith.constant dense<0.000000e+00> : vector<128x32xf32>
    %189 = tpu.matmul %188, %14, %cst_155 {dimension_numbers = #tpu.dot_dimension_numbers<[1], [0], [0], [1], [0, 0, 1, 1], [], []>} : vector<128x32xf32>, vector<32x32xf32>, vector<128x32xf32> -> vector<128x32xf32>
    %190 = arith.addf %187, %189 : vector<128x32xf32>
    %c2304 = arith.constant 2304 : index
    %c0_156 = arith.constant 0 : index
    %191 = vector.load %arg11[%c2304, %c0_156] : memref<2592x32xf32, #tpu.memory_space<vmem>>, vector<128x32xf32>
    %cst_157 = arith.constant dense<0.000000e+00> : vector<128x32xf32>
    %192 = tpu.matmul %191, %16, %cst_157 {dimension_numbers = #tpu.dot_dimension_numbers<[1], [0], [0], [1], [0, 0, 1, 1], [], []>} : vector<128x32xf32>, vector<32x32xf32>, vector<128x32xf32> -> vector<128x32xf32>
    %193 = arith.addf %190, %192 : vector<128x32xf32>
    %c2464 = arith.constant 2464 : index
    %c0_158 = arith.constant 0 : index
    %194 = vector.load %arg11[%c2464, %c0_158] : memref<2592x32xf32, #tpu.memory_space<vmem>>, vector<128x32xf32>
    %cst_159 = arith.constant dense<0.000000e+00> : vector<128x32xf32>
    %195 = tpu.matmul %194, %18, %cst_159 {dimension_numbers = #tpu.dot_dimension_numbers<[1], [0], [0], [1], [0, 0, 1, 1], [], []>} : vector<128x32xf32>, vector<32x32xf32>, vector<128x32xf32> -> vector<128x32xf32>
    %196 = arith.addf %193, %195 : vector<128x32xf32>
    %c2336 = arith.constant 2336 : index
    %c0_160 = arith.constant 0 : index
    %197 = vector.load %arg11[%c2336, %c0_160] : memref<2592x32xf32, #tpu.memory_space<vmem>>, vector<128x32xf32>
    %cst_161 = arith.constant dense<0.000000e+00> : vector<128x32xf32>
    %198 = tpu.matmul %197, %20, %cst_161 {dimension_numbers = #tpu.dot_dimension_numbers<[1], [0], [0], [1], [0, 0, 1, 1], [], []>} : vector<128x32xf32>, vector<32x32xf32>, vector<128x32xf32> -> vector<128x32xf32>
    %199 = arith.addf %196, %198 : vector<128x32xf32>
    %c1152 = arith.constant 1152 : index
    %c0_162 = arith.constant 0 : index
    %200 = vector.load %arg11[%c1152, %c0_162] : memref<2592x32xf32, #tpu.memory_space<vmem>>, vector<128x32xf32>
    %cst_163 = arith.constant dense<0.000000e+00> : vector<128x32xf32>
    %201 = tpu.matmul %200, %22, %cst_163 {dimension_numbers = #tpu.dot_dimension_numbers<[1], [0], [0], [1], [0, 0, 1, 1], [], []>} : vector<128x32xf32>, vector<32x32xf32>, vector<128x32xf32> -> vector<128x32xf32>
    %202 = arith.addf %199, %201 : vector<128x32xf32>
    %c1312 = arith.constant 1312 : index
    %c0_164 = arith.constant 0 : index
    %203 = vector.load %arg11[%c1312, %c0_164] : memref<2592x32xf32, #tpu.memory_space<vmem>>, vector<128x32xf32>
    %cst_165 = arith.constant dense<0.000000e+00> : vector<128x32xf32>
    %204 = tpu.matmul %203, %24, %cst_165 {dimension_numbers = #tpu.dot_dimension_numbers<[1], [0], [0], [1], [0, 0, 1, 1], [], []>} : vector<128x32xf32>, vector<32x32xf32>, vector<128x32xf32> -> vector<128x32xf32>
    %205 = arith.addf %202, %204 : vector<128x32xf32>
    %c1184 = arith.constant 1184 : index
    %c0_166 = arith.constant 0 : index
    %206 = vector.load %arg11[%c1184, %c0_166] : memref<2592x32xf32, #tpu.memory_space<vmem>>, vector<128x32xf32>
    %cst_167 = arith.constant dense<0.000000e+00> : vector<128x32xf32>
    %207 = tpu.matmul %206, %26, %cst_167 {dimension_numbers = #tpu.dot_dimension_numbers<[1], [0], [0], [1], [0, 0, 1, 1], [], []>} : vector<128x32xf32>, vector<32x32xf32>, vector<128x32xf32> -> vector<128x32xf32>
    %208 = arith.addf %205, %207 : vector<128x32xf32>
    %c0_168 = arith.constant 0 : index
    %c0_169 = arith.constant 0 : index
    %209 = vector.load %arg6[%c0_168, %c0_169] : memref<1x32xf32, #tpu.memory_space<vmem>>, vector<1x32xf32>
    %210 = vector.broadcast %209 : vector<1x32xf32> to vector<128x32xf32>
    %211 = arith.addf %208, %210 : vector<128x32xf32>
    %cst_170 = arith.constant 0.000000e+00 : f32
    %212 = vector.broadcast %cst_170 : f32 to vector<128x32xf32>
    %213 = arith.maximumf %211, %212 : vector<128x32xf32>
    %214 = vector.extract_strided_slice %213 {offsets = [0, 0], sizes = [32, 32], strides = [1, 1]} : vector<128x32xf32> to vector<32x32xf32>
    %c12 = arith.constant 12 : index
    %c0_171 = arith.constant 0 : index
    %c0_172 = arith.constant 0 : index
    %215 = vector.load %arg7[%c12, %c0_171, %c0_172] : memref<16x32x128xf32, #tpu.memory_space<vmem>>, vector<1x32x128xf32>
    %216 = vector.shape_cast %215 : vector<1x32x128xf32> to vector<32x128xf32>
    %cst_173 = arith.constant dense<0.000000e+00> : vector<32x128xf32>
    %217 = tpu.matmul %214, %216, %cst_173 {dimension_numbers = #tpu.dot_dimension_numbers<[1], [0], [0], [1], [0, 0, 1, 1], [], []>} : vector<32x32xf32>, vector<32x128xf32>, vector<32x128xf32> -> vector<32x128xf32>
    %218 = arith.addf %182, %217 : vector<32x128xf32>
    %219 = vector.extract_strided_slice %213 {offsets = [32, 0], sizes = [32, 32], strides = [1, 1]} : vector<128x32xf32> to vector<32x32xf32>
    %c13 = arith.constant 13 : index
    %c0_174 = arith.constant 0 : index
    %c0_175 = arith.constant 0 : index
    %220 = vector.load %arg7[%c13, %c0_174, %c0_175] : memref<16x32x128xf32, #tpu.memory_space<vmem>>, vector<1x32x128xf32>
    %221 = vector.shape_cast %220 : vector<1x32x128xf32> to vector<32x128xf32>
    %cst_176 = arith.constant dense<0.000000e+00> : vector<32x128xf32>
    %222 = tpu.matmul %219, %221, %cst_176 {dimension_numbers = #tpu.dot_dimension_numbers<[1], [0], [0], [1], [0, 0, 1, 1], [], []>} : vector<32x32xf32>, vector<32x128xf32>, vector<32x128xf32> -> vector<32x128xf32>
    %223 = arith.addf %218, %222 : vector<32x128xf32>
    %224 = vector.extract_strided_slice %213 {offsets = [64, 0], sizes = [32, 32], strides = [1, 1]} : vector<128x32xf32> to vector<32x32xf32>
    %c14 = arith.constant 14 : index
    %c0_177 = arith.constant 0 : index
    %c0_178 = arith.constant 0 : index
    %225 = vector.load %arg7[%c14, %c0_177, %c0_178] : memref<16x32x128xf32, #tpu.memory_space<vmem>>, vector<1x32x128xf32>
    %226 = vector.shape_cast %225 : vector<1x32x128xf32> to vector<32x128xf32>
    %cst_179 = arith.constant dense<0.000000e+00> : vector<32x128xf32>
    %227 = tpu.matmul %224, %226, %cst_179 {dimension_numbers = #tpu.dot_dimension_numbers<[1], [0], [0], [1], [0, 0, 1, 1], [], []>} : vector<32x32xf32>, vector<32x128xf32>, vector<32x128xf32> -> vector<32x128xf32>
    %228 = arith.addf %223, %227 : vector<32x128xf32>
    %229 = vector.extract_strided_slice %213 {offsets = [96, 0], sizes = [32, 32], strides = [1, 1]} : vector<128x32xf32> to vector<32x32xf32>
    %c15 = arith.constant 15 : index
    %c0_180 = arith.constant 0 : index
    %c0_181 = arith.constant 0 : index
    %230 = vector.load %arg7[%c15, %c0_180, %c0_181] : memref<16x32x128xf32, #tpu.memory_space<vmem>>, vector<1x32x128xf32>
    %231 = vector.shape_cast %230 : vector<1x32x128xf32> to vector<32x128xf32>
    %cst_182 = arith.constant dense<0.000000e+00> : vector<32x128xf32>
    %232 = tpu.matmul %229, %231, %cst_182 {dimension_numbers = #tpu.dot_dimension_numbers<[1], [0], [0], [1], [0, 0, 1, 1], [], []>} : vector<32x32xf32>, vector<32x128xf32>, vector<32x128xf32> -> vector<32x128xf32>
    %233 = arith.addf %228, %232 : vector<32x128xf32>
    %c0_183 = arith.constant 0 : index
    %c0_184 = arith.constant 0 : index
    %234 = vector.load %arg9[%c0_183, %c0_184] : memref<1x128xf32, #tpu.memory_space<vmem>>, vector<1x128xf32>
    %235 = vector.broadcast %234 : vector<1x128xf32> to vector<32x128xf32>
    %236 = arith.addf %233, %235 : vector<32x128xf32>
    %cst_185 = arith.constant 0.000000e+00 : f32
    %237 = vector.broadcast %cst_185 : f32 to vector<32x128xf32>
    %238 = arith.maximumf %236, %237 : vector<32x128xf32>
    %c0_186 = arith.constant 0 : index
    %c0_187 = arith.constant 0 : index
    %239 = vector.load %arg10[%c0_186, %c0_187] : memref<32x128xf32, #tpu.memory_space<vmem>>, vector<32x128xf32>
    tpu.vector_store %arg10[%c0_186, %c0_187], %238 {strides = array<i32>} : memref<32x128xf32, #tpu.memory_space<vmem>>, vector<32x128xf32>,
    return
  }
  func.func @transform_0(%arg0: i32) -> (i32, i32) {
    %c0_i32 = arith.constant 0 : i32
    %c0_i32_0 = arith.constant 0 : i32
    return %arg0, %c0_i32 : i32, i32
  }
  func.func @transform_1(%arg0: i32) -> (i32, i32) {
    %c0_i32 = arith.constant 0 : i32
    %c0_i32_0 = arith.constant 0 : i32
    return %arg0, %c0_i32 : i32, i32
  }
  func.func @transform_2(%arg0: i32) -> (i32, i32) {
    %c0_i32 = arith.constant 0 : i32
    %c0_i32_0 = arith.constant 0 : i32
    %c0_i32_1 = arith.constant 0 : i32
    return %c0_i32, %c0_i32_0 : i32, i32
  }
  func.func @transform_3(%arg0: i32) -> (i32, i32) {
    %c0_i32 = arith.constant 0 : i32
    %c0_i32_0 = arith.constant 0 : i32
    %c0_i32_1 = arith.constant 0 : i32
    return %c0_i32, %c0_i32_0 : i32, i32
  }
  func.func @transform_4(%arg0: i32) -> (i32, i32, i32) {
    %c0_i32 = arith.constant 0 : i32
    %c0_i32_0 = arith.constant 0 : i32
    %c0_i32_1 = arith.constant 0 : i32
    %c0_i32_2 = arith.constant 0 : i32
    return %c0_i32, %c0_i32_0, %c0_i32_1 : i32, i32, i32
  }
  func.func @transform_5(%arg0: i32) -> (i32, i32) {
    %c0_i32 = arith.constant 0 : i32
    %c0_i32_0 = arith.constant 0 : i32
    %c0_i32_1 = arith.constant 0 : i32
    return %c0_i32, %c0_i32_0 : i32, i32
  }
  func.func @transform_6(%arg0: i32) -> (i32, i32, i32) {
    %c0_i32 = arith.constant 0 : i32
    %c0_i32_0 = arith.constant 0 : i32
    %c0_i32_1 = arith.constant 0 : i32
    %c0_i32_2 = arith.constant 0 : i32
    return %c0_i32, %c0_i32_0, %c0_i32_1 : i32, i32, i32
  }
  func.func @transform_7(%arg0: i32) -> (i32, i32) {
    %c0_i32 = arith.constant 0 : i32
    %c0_i32_0 = arith.constant 0 : i32
    %c0_i32_1 = arith.constant 0 : i32
    return %c0_i32, %c0_i32_0 : i32, i32
  }
  func.func @transform_8(%arg0: i32) -> (i32, i32) {
    %c0_i32 = arith.constant 0 : i32
    %c0_i32_0 = arith.constant 0 : i32
    %c0_i32_1 = arith.constant 0 : i32
    return %c0_i32, %c0_i32_0 : i32, i32
  }
  func.func @transform_9(%arg0: i32) -> (i32, i32) {
    %c0_i32 = arith.constant 0 : i32
    %c0_i32_0 = arith.constant 0 : i32
    return %arg0, %c0_i32 : i32, i32
  }
}

</mosaic_0001>

<llo_original>
// kernel: cnn2_forward.1
$region0: #{cnn2_forward.1}
  #allocation0 [shape = 'u32[]', space=smem, size = 0x4, offset = 0x4, fixed_abs, tag = 'smem constant byte address 0x4 - core index']
  #allocation1 [shape = 'u32[72,128]{1,0:T(1,128)}', space=vmem, size = 0x9000, scoped, tag = 'internal scratch']
  #allocation2 [shape = 'f32[2592,32]{1,0:T(8,128)}', space=vmem, size = 0x144000, scoped, tag = 'scratch operand']
  %s0 = inlined_call_operand.vmem [shape: f32[5184,72], index: 0, kind: input, shape index: {}]
  %s1 = inlined_call_operand.vmem [shape: f32[64,128], index: 1, kind: input, shape index: {}]
  %s2 = inlined_call_operand.vmem [shape: f32[72,32], index: 2, kind: input, shape index: {}]
  %s3 = inlined_call_operand.vmem [shape: f32[1,32], index: 3, kind: input, shape index: {}]
  %s4 = inlined_call_operand.vmem [shape: f32[9,32,32], index: 4, kind: input, shape index: {}]
  %s5 = inlined_call_operand.vmem [shape: f32[1,32], index: 5, kind: input, shape index: {}]
  %s6 = inlined_call_operand.vmem [shape: f32[16,32,128], index: 6, kind: input, shape index: {}]
  %s7 = inlined_call_operand.vmem [shape: f32[128,128], index: 7, kind: input, shape index: {}]
  %s8 = inlined_call_operand.vmem [shape: f32[1,128], index: 8, kind: input, shape index: {}]
  %s9 = inlined_call_operand.vmem [shape: f32[64,128], index: 9, kind: output, shape index: {}]
  %s10 = sld [smem:[#allocation0]]
  $region69: #{cnn2_forward.1} parent=0
    _
  %s12 = ssub.s32 1, %s10
  %s13 = scalar_select 0, %s12, %s10
  loop: start=0, step=1, limit=4
  $region2: #{cnn2_forward.1} parent=0 // loop_pre_header
    _
  $region3: #{cnn2_forward.1} parent=0 // loop_header
    %s15 = sphi 0, %s19
    %p16 = scmp.ge.s32.totalorder %s15, 4
    %s25 = sphi 0, %s27
    %s28 = sphi 0, %s25
    %s29 = sphi 0, %s28
    %s45 = sphi 0, %s29
    %s51 = sphi 0, %s53
    %s54 = sphi 0, %s51
    %s55 = sphi 0, %s54
    %s71 = sphi 0, %s55
    %s75 = sphi 0, %s75
    %s77 = sphi 0, %s75
    %s78 = sphi 0, %s77
    %s92 = sphi 0, %s78
    %s96 = sphi 0, %s96
    %s98 = sphi 0, %s96
    %s99 = sphi 0, %s98
    %s113 = sphi 0, %s99
    %s117 = sphi 0, %s117
    %s119 = sphi 0, %s117
    %s120 = sphi 0, %s119
    %s134 = sphi 0, %s120
    %s138 = sphi 0, %s138
    %s140 = sphi 0, %s138
    %s141 = sphi 0, %s140
    %s155 = sphi 0, %s141
    %s159 = sphi 0, %s159
    %s161 = sphi 0, %s159
    %s162 = sphi 0, %s161
    %s176 = sphi 0, %s162
    %s180 = sphi 0, %s180
    %s182 = sphi 0, %s180
    %s183 = sphi 0, %s182
    %s197 = sphi 0, %s183
    %s201 = sphi 0, %s201
    %s203 = sphi 0, %s201
    %s204 = sphi 0, %s203
    %s218 = sphi 0, %s204
    %s224 = sphi 0, %s226
    %s227 = sphi 0, %s224
    %s228 = sphi 0, %s227
    %s244 = sphi 0, %s228
  $region4: #{cnn2_forward.1} parent=0 // loop_header_branch
    %18 = sbr.rel (%p16) target = $region8
  $region5: #{cnn2_forward.1} parent=0 // loop_body
    %s20 = ssub.s32 %s15, 1
    %s21 = ssub.s32 %s15, 2
    %s22 = sadd.s32 %s15, 1
    %s23 = ssub.s32 %s15, %s22
    %p24 = scmp.eq.s32.totalorder %s23, 0
    %s26 = sadd.s32 %s25, 1
    %s27 = scalar_select %p24, %s25, %s26
    %p30 = pneg %p24
    %p31 = scmp.eq.s32.totalorder %s15, 1
    %p32 = por %p30, %p31
    %p33 = scmp.ne.s32.totalorder %s25, %s28
    %p34 = scmp.eq.s32.totalorder %s15, 0
    %p35 = por %p33, %p34
    %p36 = scmp.ne.s32.totalorder %s25, %s28
    %p37 = scmp.eq.s32.totalorder %s20, 1
    %p38 = por %p36, %p37
    %p39 = scmp.ne.s32.totalorder %s28, %s29
    %p40 = scmp.eq.s32.totalorder %s20, 0
    %p41 = por %p39, %p40
    %p42 = scmp.ne.s32.totalorder %s28, %s29
    %p43 = scmp.eq.s32.totalorder %s21, 1
    %p44 = por %p42, %p43
    %p46 = scmp.ne.s32.totalorder %s29, %s45
    %p47 = scmp.eq.s32.totalorder %s21, 0
    %p48 = por %p46, %p47
    %s49 = ssub.s32 %s15, %s22
    %p50 = scmp.eq.s32.totalorder %s49, 0
    %s52 = sadd.s32 %s51, 1
    %s53 = scalar_select %p50, %s51, %s52
    %p56 = pneg %p50
    %p57 = scmp.eq.s32.totalorder %s15, 1
    %p58 = por %p56, %p57
    %p59 = scmp.ne.s32.totalorder %s51, %s54
    %p60 = scmp.eq.s32.totalorder %s15, 0
    %p61 = por %p59, %p60
    %p62 = scmp.ne.s32.totalorder %s51, %s54
    %p63 = scmp.eq.s32.totalorder %s20, 1
    %p64 = por %p62, %p63
    %p65 = scmp.ne.s32.totalorder %s54, %s55
    %p66 = scmp.eq.s32.totalorder %s20, 0
    %p67 = por %p65, %p66
    %p68 = scmp.ne.s32.totalorder %s54, %s55
    %p69 = scmp.eq.s32.totalorder %s21, 1
    %p70 = por %p68, %p69
    %p72 = scmp.ne.s32.totalorder %s55, %s71
    %p73 = scmp.eq.s32.totalorder %s21, 0
    %p74 = por %p72, %p73
    %s76 = sadd.s32 %s75, 1
    %p79 = scmp.eq.s32.totalorder %s15, 1
    %p80 = scmp.ne.s32.totalorder %s75, %s77
    %p81 = scmp.eq.s32.totalorder %s15, 0
    %p82 = por %p80, %p81
    %p83 = scmp.ne.s32.totalorder %s75, %s77
    %p84 = scmp.eq.s32.totalorder %s20, 1
    %p85 = por %p83, %p84
    %p86 = scmp.ne.s32.totalorder %s77, %s78
    %p87 = scmp.eq.s32.totalorder %s20, 0
    %p88 = por %p86, %p87
    %p89 = scmp.ne.s32.totalorder %s77, %s78
    %p90 = scmp.eq.s32.totalorder %s21, 1
    %p91 = por %p89, %p90
    %p93 = scmp.ne.s32.totalorder %s78, %s92
    %p94 = scmp.eq.s32.totalorder %s21, 0
    %p95 = por %p93, %p94
    %s97 = sadd.s32 %s96, 1
    %p100 = scmp.eq.s32.totalorder %s15, 1
    %p101 = scmp.ne.s32.totalorder %s96, %s98
    %p102 = scmp.eq.s32.totalorder %s15, 0
    %p103 = por %p101, %p102
    %p104 = scmp.ne.s32.totalorder %s96, %s98
    %p105 = scmp.eq.s32.totalorder %s20, 1
    %p106 = por %p104, %p105
    %p107 = scmp.ne.s32.totalorder %s98, %s99
    %p108 = scmp.eq.s32.totalorder %s20, 0
    %p109 = por %p107, %p108
    %p110 = scmp.ne.s32.totalorder %s98, %s99
    %p111 = scmp.eq.s32.totalorder %s21, 1
    %p112 = por %p110, %p111
    %p114 = scmp.ne.s32.totalorder %s99, %s113
    %p115 = scmp.eq.s32.totalorder %s21, 0
    %p116 = por %p114, %p115
    %s118 = sadd.s32 %s117, 1
    %p121 = scmp.eq.s32.totalorder %s15, 1
    %p122 = scmp.ne.s32.totalorder %s117, %s119
    %p123 = scmp.eq.s32.totalorder %s15, 0
    %p124 = por %p122, %p123
    %p125 = scmp.ne.s32.totalorder %s117, %s119
    %p126 = scmp.eq.s32.totalorder %s20, 1
    %p127 = por %p125, %p126
    %p128 = scmp.ne.s32.totalorder %s119, %s120
    %p129 = scmp.eq.s32.totalorder %s20, 0
    %p130 = por %p128, %p129
    %p131 = scmp.ne.s32.totalorder %s119, %s120
    %p132 = scmp.eq.s32.totalorder %s21, 1
    %p133 = por %p131, %p132
    %p135 = scmp.ne.s32.totalorder %s120, %s134
    %p136 = scmp.eq.s32.totalorder %s21, 0
    %p137 = por %p135, %p136
    %s139 = sadd.s32 %s138, 1
    %p142 = scmp.eq.s32.totalorder %s15, 1
    %p143 = scmp.ne.s32.totalorder %s138, %s140
    %p144 = scmp.eq.s32.totalorder %s15, 0
    %p145 = por %p143, %p144
    %p146 = scmp.ne.s32.totalorder %s138, %s140
    %p147 = scmp.eq.s32.totalorder %s20, 1
    %p148 = por %p146, %p147
    %p149 = scmp.ne.s32.totalorder %s140, %s141
    %p150 = scmp.eq.s32.totalorder %s20, 0
    %p151 = por %p149, %p150
    %p152 = scmp.ne.s32.totalorder %s140, %s141
    %p153 = scmp.eq.s32.totalorder %s21, 1
    %p154 = por %p152, %p153
    %p156 = scmp.ne.s32.totalorder %s141, %s155
    %p157 = scmp.eq.s32.totalorder %s21, 0
    %p158 = por %p156, %p157
    %s160 = sadd.s32 %s159, 1
    %p163 = scmp.eq.s32.totalorder %s15, 1
    %p164 = scmp.ne.s32.totalorder %s159, %s161
    %p165 = scmp.eq.s32.totalorder %s15, 0
    %p166 = por %p164, %p165
    %p167 = scmp.ne.s32.totalorder %s159, %s161
    %p168 = scmp.eq.s32.totalorder %s20, 1
    %p169 = por %p167, %p168
    %p170 = scmp.ne.s32.totalorder %s161, %s162
    %p171 = scmp.eq.s32.totalorder %s20, 0
    %p172 = por %p170, %p171
    %p173 = scmp.ne.s32.totalorder %s161, %s162
    %p174 = scmp.eq.s32.totalorder %s21, 1
    %p175 = por %p173, %p174
    %p177 = scmp.ne.s32.totalorder %s162, %s176
    %p178 = scmp.eq.s32.totalorder %s21, 0
    %p179 = por %p177, %p178
    %s181 = sadd.s32 %s180, 1
    %p184 = scmp.eq.s32.totalorder %s15, 1
    %p185 = scmp.ne.s32.totalorder %s180, %s182
    %p186 = scmp.eq.s32.totalorder %s15, 0
    %p187 = por %p185, %p186
    %p188 = scmp.ne.s32.totalorder %s180, %s182
    %p189 = scmp.eq.s32.totalorder %s20, 1
    %p190 = por %p188, %p189
    %p191 = scmp.ne.s32.totalorder %s182, %s183
    %p192 = scmp.eq.s32.totalorder %s20, 0
    %p193 = por %p191, %p192
    %p194 = scmp.ne.s32.totalorder %s182, %s183
    %p195 = scmp.eq.s32.totalorder %s21, 1
    %p196 = por %p194, %p195
    %p198 = scmp.ne.s32.totalorder %s183, %s197
    %p199 = scmp.eq.s32.totalorder %s21, 0
    %p200 = por %p198, %p199
    %s202 = sadd.s32 %s201, 1
    %p205 = scmp.eq.s32.totalorder %s15, 1
    %p206 = scmp.ne.s32.totalorder %s201, %s203
    %p207 = scmp.eq.s32.totalorder %s15, 0
    %p208 = por %p206, %p207
    %p209 = scmp.ne.s32.totalorder %s201, %s203
    %p210 = scmp.eq.s32.totalorder %s20, 1
    %p211 = por %p209, %p210
    %p212 = scmp.ne.s32.totalorder %s203, %s204
    %p213 = scmp.eq.s32.totalorder %s20, 0
    %p214 = por %p212, %p213
    %p215 = scmp.ne.s32.totalorder %s203, %s204
    %p216 = scmp.eq.s32.totalorder %s21, 1
    %p217 = por %p215, %p216
    %p219 = scmp.ne.s32.totalorder %s204, %s218
    %p220 = scmp.eq.s32.totalorder %s21, 0
    %p221 = por %p219, %p220
    %s222 = ssub.s32 %s15, %s22
    %p223 = scmp.eq.s32.totalorder %s222, 0
    %s225 = sadd.s32 %s224, 1
    %s226 = scalar_select %p223, %s224, %s225
    %p229 = pneg %p223
    %p230 = scmp.eq.s32.totalorder %s15, 1
    %p231 = por %p229, %p230
    %p232 = scmp.ne.s32.totalorder %s224, %s227
    %p233 = scmp.eq.s32.totalorder %s15, 0
    %p234 = por %p232, %p233
    %p235 = scmp.ne.s32.totalorder %s224, %s227
    %p236 = scmp.eq.s32.totalorder %s20, 1
    %p237 = por %p235, %p236
    %p238 = scmp.ne.s32.totalorder %s227, %s228
    %p239 = scmp.eq.s32.totalorder %s20, 0
    %p240 = por %p238, %p239
    %p241 = scmp.ne.s32.totalorder %s227, %s228
    %p242 = scmp.eq.s32.totalorder %s21, 1
    %p243 = por %p241, %p242
    %p245 = scmp.ne.s32.totalorder %s228, %s244
    %p246 = scmp.eq.s32.totalorder %s21, 0
    %p247 = por %p245, %p246
    %p248 = scmp.le.s32.totalorder 1, %s15
    %p249 = scmp.lt.s32.totalorder %s15, 3
    %p250 = pnand %p248, %p249
    %p251 = pneg %p250
    // Predicated region
    $region9: #{cnn2_forward.1} parent=5 // pred_check
      _
    $region10: #{cnn2_forward.1} parent=5 // pred_check_branch
      %253 = sbr.rel (%p250) target = $region12
    $region11: #{cnn2_forward.1} parent=5 // pred_region
      %s254 = ssub.s32 %s15, 1
      // Predicated region
      $region13: #{cnn2_forward.1} parent=11 // pred_check
        %p255 = pneg %p88
      $region14: #{cnn2_forward.1} parent=11 // pred_check_branch
        %257 = sbr.rel (%p255) target = $region16
      $region15: #{cnn2_forward.1} parent=11 // pred_region
        _
      $region16: #{cnn2_forward.1} parent=11 // pred_fallthru
        _
      // Predicated region
      $region17: #{cnn2_forward.1} parent=11 // pred_check
        %p258 = pneg %p109
      $region18: #{cnn2_forward.1} parent=11 // pred_check_branch
        %260 = sbr.rel (%p258) target = $region20
      $region19: #{cnn2_forward.1} parent=11 // pred_region
        _
      $region20: #{cnn2_forward.1} parent=11 // pred_fallthru
        _
      // Predicated region
      $region21: #{cnn2_forward.1} parent=11 // pred_check
        %p261 = pneg %p130
      $region22: #{cnn2_forward.1} parent=11 // pred_check_branch
        %263 = sbr.rel (%p261) target = $region24
      $region23: #{cnn2_forward.1} parent=11 // pred_region
        _
      $region24: #{cnn2_forward.1} parent=11 // pred_fallthru
        _
      // Predicated region
      $region25: #{cnn2_forward.1} parent=11 // pred_check
        %p264 = pneg %p151
      $region26: #{cnn2_forward.1} parent=11 // pred_check_branch
        %266 = sbr.rel (%p264) target = $region28
      $region27: #{cnn2_forward.1} parent=11 // pred_region
        _
      $region28: #{cnn2_forward.1} parent=11 // pred_fallthru
        _
      // Predicated region
      $region29: #{cnn2_forward.1} parent=11 // pred_check
        %p267 = pneg %p172
      $region30: #{cnn2_forward.1} parent=11 // pred_check_branch
        %269 = sbr.rel (%p267) target = $region32
      $region31: #{cnn2_forward.1} parent=11 // pred_region
        _
      $region32: #{cnn2_forward.1} parent=11 // pred_fallthru
        _
      // Predicated region
      $region33: #{cnn2_forward.1} parent=11 // pred_check
        %p270 = pneg %p193
      $region34: #{cnn2_forward.1} parent=11 // pred_check_branch
        %272 = sbr.rel (%p270) target = $region36
      $region35: #{cnn2_forward.1} parent=11 // pred_region
        _
      $region36: #{cnn2_forward.1} parent=11 // pred_fallthru
        _
      // Predicated region
      $region37: #{cnn2_forward.1} parent=11 // pred_check
        %p273 = pneg %p214
      $region38: #{cnn2_forward.1} parent=11 // pred_check_branch
        %275 = sbr.rel (%p273) target = $region40
      $region39: #{cnn2_forward.1} parent=11 // pred_region
        _
      $region40: #{cnn2_forward.1} parent=11 // pred_fallthru
        _
    $region12: #{cnn2_forward.1} parent=5 // pred_fallthru
      _
    %p276 = scmp.lt.s32.totalorder %s15, 2
    // Predicated region
    $region41: #{cnn2_forward.1} parent=5 // pred_check
      %p277 = pneg %p276
    $region42: #{cnn2_forward.1} parent=5 // pred_check_branch
      %279 = sbr.rel (%p277) target = $region44
    $region43: #{cnn2_forward.1} parent=5 // pred_region
      // Predicated region
      $region45: #{cnn2_forward.1} parent=43 // pred_check
        %p280 = pneg %p35
      $region46: #{cnn2_forward.1} parent=43 // pred_check_branch
        %282 = sbr.rel (%p280) target = $region48
      $region47: #{cnn2_forward.1} parent=43 // pred_region
        %s283 = smul.u32 324, %s15
        %p284 = scmp.lt.s32.totalorder %s283, 647
        %s285 = scalar_select %p284, %s283, 647
        %s286 = smul.addr %s285, 8
        %s287 = scalar_lea.vmem %s0, %s286
        %s288 = smul.u32 324, %s15
      $region48: #{cnn2_forward.1} parent=43 // pred_fallthru
        _
      // Predicated region
      $region49: #{cnn2_forward.1} parent=43 // pred_check
        %p289 = pneg %p61
      $region50: #{cnn2_forward.1} parent=43 // pred_check_branch
        %291 = sbr.rel (%p289) target = $region52
      $region51: #{cnn2_forward.1} parent=43 // pred_region
        %s292 = smul.u32 4, %s15
        %p293 = scmp.lt.s32.totalorder %s292, 7
        %s294 = scalar_select %p293, %s292, 7
        %s295 = smul.addr %s294, 8
        %s296 = scalar_lea.vmem %s1, %s295
        %s297 = smul.u32 4, %s15
      $region52: #{cnn2_forward.1} parent=43 // pred_fallthru
        _
    $region44: #{cnn2_forward.1} parent=5 // pred_fallthru
      _
    %p298 = scmp.le.s32.totalorder 1, %s15
    %p299 = scmp.lt.s32.totalorder %s15, 3
    %p300 = pnand %p298, %p299
    %p301 = pneg %p300
    // Predicated region
    $region53: #{cnn2_forward.1} parent=5 // pred_check
      _
    $region54: #{cnn2_forward.1} parent=5 // pred_check_branch
      %303 = sbr.rel (%p300) target = $region56
    $region55: #{cnn2_forward.1} parent=5 // pred_region
      %s304 = ssub.s32 %s15, 1
      %s305 = smul.u32 324, %s20
      %p306 = scmp.lt.s32.totalorder %s305, 647
      %s307 = scalar_select %p306, %s305, 647
      %s308 = smul.addr %s307, 8
      %s309 = scalar_lea.vmem %s0, %s308
      %p310 = pneg %p41
      %p311 = pneg %p38
      %s312 = smul.u32 4, %s20
      %p313 = scmp.lt.s32.totalorder %s312, 7
      %s314 = scalar_select %p313, %s312, 7
      %s315 = smul.addr %s314, 8
      %s316 = scalar_lea.vmem %s1, %s315
      %p317 = pneg %p67
      %p318 = pneg %p64
      %p319 = pneg %p88
      %p320 = pneg %p85
      %p321 = pneg %p109
      %p322 = pneg %p106
      %p323 = pneg %p130
      %p324 = pneg %p127
      %p325 = pneg %p151
      %p326 = pneg %p148
      %p327 = pneg %p172
      %p328 = pneg %p169
      %p329 = pneg %p193
      %p330 = pneg %p190
      %p331 = pneg %p214
      %p332 = pneg %p211
      %p333 = pneg %p240
      %p334 = pneg %p237
      %s335 = smul.u32 4, %s20
      %p336 = scmp.lt.s32.totalorder %s335, 7
      %s337 = scalar_select %p336, %s335, 7
      %s338 = smul.addr %s337, 8
      %s339 = scalar_lea.vmem %s9, %s338
      %s340 = smul.u32 324, %s20
      %p341 = scmp.lt.s32.totalorder %s340, 647
      %s342 = scalar_select %p341, %s340, 647
      %s343 = smul.addr %s342, 8
      %s344 = scalar_lea.vmem %s0, %s343
      %s345 = smul.u32 324, %s20
      %s346 = smul.u32 4, %s20
      %p347 = scmp.lt.s32.totalorder %s346, 7
      %s348 = scalar_select %p347, %s346, 7
      %s349 = smul.addr %s348, 8
      %s350 = scalar_lea.vmem %s1, %s349
      %s351 = smul.u32 4, %s20
      %s352 = smul.u32 4, %s20
      %p353 = scmp.lt.s32.totalorder %s352, 7
      %s354 = scalar_select %p353, %s352, 7
      %s355 = smul.addr %s354, 8
      %s356 = scalar_lea.vmem %s9, %s355
      %s357 = smul.u32 4, %s20
      %v358 = vld [vmem:[%s344] sm:$0xff]
      %v359 = vld [vmem:[%s344 + $0x8] sm:$0xff]
      %v360 = vld [vmem:[%s344 + $0x10] sm:$0xff]
      %v361 = vld [vmem:[%s344 + $0x18] sm:$0xff]
      %v362 = vld [vmem:[%s344 + $0x20] sm:$0xff]
      %v363 = vld [vmem:[%s344 + $0x28] sm:$0xff]
      %v364 = vld [vmem:[%s344 + $0x30] sm:$0xff]
      %v365 = vld [vmem:[%s344 + $0x38] sm:$0xff]
      %v366 = vld [vmem:[%s344 + $0x40] sm:$0xff]
      %v367 = vld [vmem:[%s344 + $0x48] sm:$0xff]
      %v368 = vld [vmem:[%s344 + $0x50] sm:$0xff]
      %v369 = vld [vmem:[%s344 + $0x58] sm:$0xff]
      %v370 = vld [vmem:[%s344 + $0x60] sm:$0xff]
      %v371 = vld [vmem:[%s344 + $0x68] sm:$0xff]
      %v372 = vld [vmem:[%s344 + $0x70] sm:$0xff]
      %v373 = vld [vmem:[%s344 + $0x78] sm:$0xff]
      %v374 = vld [vmem:[%s344 + $0x80] sm:$0xff]
      %v375 = vld [vmem:[%s344 + $0x88] sm:$0xff]
      %v376 = vld [vmem:[%s344 + $0x90] sm:$0xff]
      %v377 = vld [vmem:[%s344 + $0x98] sm:$0xff]
      %v378 = vld [vmem:[%s344 + $0xa0] sm:$0xff]
      %v379 = vld [vmem:[%s344 + $0xa8] sm:$0xff]
      %v380 = vld [vmem:[%s344 + $0xb0] sm:$0xff]
      %v381 = vld [vmem:[%s344 + $0xb8] sm:$0xff]
      %v382 = vld [vmem:[%s344 + $0xc0] sm:$0xff]
      %v383 = vld [vmem:[%s344 + $0xc8] sm:$0xff]
      %v384 = vld [vmem:[%s344 + $0xd0] sm:$0xff]
      %v385 = vld [vmem:[%s344 + $0xd8] sm:$0xff]
      %v386 = vld [vmem:[%s344 + $0xe0] sm:$0xff]
      %v387 = vld [vmem:[%s344 + $0xe8] sm:$0xff]
      %v388 = vld [vmem:[%s344 + $0xf0] sm:$0xff]
      %v389 = vld [vmem:[%s344 + $0xf8] sm:$0xff]
      %v390 = vld [vmem:[%s344 + $0x100] sm:$0xff]
      %v391 = vld [vmem:[%s344 + $0x108] sm:$0xff]
      %v392 = vld [vmem:[%s344 + $0x110] sm:$0xff]
      %v393 = vld [vmem:[%s344 + $0x118] sm:$0xff]
      %v394 = vld [vmem:[%s344 + $0x120] sm:$0xff]
      %v395 = vld [vmem:[%s344 + $0x128] sm:$0xff]
      %v396 = vld [vmem:[%s344 + $0x130] sm:$0xff]
      %v397 = vld [vmem:[%s344 + $0x138] sm:$0xff]
      %v398 = vld [vmem:[%s344 + $0x140] sm:$0xff]
      %v399 = vld [vmem:[%s344 + $0x148] sm:$0xff]
      %v400 = vld [vmem:[%s344 + $0x150] sm:$0xff]
      %v401 = vld [vmem:[%s344 + $0x158] sm:$0xff]
      %v402 = vld [vmem:[%s344 + $0x160] sm:$0xff]
      %v403 = vld [vmem:[%s344 + $0x168] sm:$0xff]
      %v404 = vld [vmem:[%s344 + $0x170] sm:$0xff]
      %v405 = vld [vmem:[%s344 + $0x178] sm:$0xff]
      %v406 = vld [vmem:[%s344 + $0x180] sm:$0xff]
      %v407 = vld [vmem:[%s344 + $0x188] sm:$0xff]
      %v408 = vld [vmem:[%s344 + $0x190] sm:$0xff]
      %v409 = vld [vmem:[%s344 + $0x198] sm:$0xff]
      %v410 = vld [vmem:[%s344 + $0x1a0] sm:$0xff]
      %v411 = vld [vmem:[%s344 + $0x1a8] sm:$0xff]
      %v412 = vld [vmem:[%s344 + $0x1b0] sm:$0xff]
      %v413 = vld [vmem:[%s344 + $0x1b8] sm:$0xff]
      %v414 = vld [vmem:[%s344 + $0x1c0] sm:$0xff]
      %v415 = vld [vmem:[%s344 + $0x1c8] sm:$0xff]
      %v416 = vld [vmem:[%s344 + $0x1d0] sm:$0xff]
      %v417 = vld [vmem:[%s344 + $0x1d8] sm:$0xff]
      %v418 = vld [vmem:[%s344 + $0x1e0] sm:$0xff]
      %v419 = vld [vmem:[%s344 + $0x1e8] sm:$0xff]
      %v420 = vld [vmem:[%s344 + $0x1f0] sm:$0xff]
      %v421 = vld [vmem:[%s344 + $0x1f8] sm:$0xff]
      %v422 = vld [vmem:[%s344 + $0x200] sm:$0xff]
      %v423 = vld [vmem:[%s344 + $0x208] sm:$0xff]
      %v424 = vld [vmem:[%s344 + $0x210] sm:$0xff]
      %v425 = vld [vmem:[%s344 + $0x218] sm:$0xff]
      %v426 = vld [vmem:[%s344 + $0x220] sm:$0xff]
      %v427 = vld [vmem:[%s344 + $0x228] sm:$0xff]
      %v428 = vld [vmem:[%s344 + $0x230] sm:$0xff]
      %v429 = vld [vmem:[%s344 + $0x238] sm:$0xff]
      %v430 = vld [vmem:[%s344 + $0x240] sm:$0xff]
      %v431 = vld [vmem:[%s344 + $0x248] sm:$0xff]
      %v432 = vld [vmem:[%s344 + $0x250] sm:$0xff]
      %v433 = vld [vmem:[%s344 + $0x258] sm:$0xff]
      %v434 = vld [vmem:[%s344 + $0x260] sm:$0xff]
      %v435 = vld [vmem:[%s344 + $0x268] sm:$0xff]
      %v436 = vld [vmem:[%s344 + $0x270] sm:$0xff]
      %v437 = vld [vmem:[%s344 + $0x278] sm:$0xff]
      %v438 = vld [vmem:[%s344 + $0x280] sm:$0xff]
      %v439 = vld [vmem:[%s344 + $0x288] sm:$0xff]
      %v440 = vld [vmem:[%s344 + $0x290] sm:$0xff]
      %v441 = vld [vmem:[%s344 + $0x298] sm:$0xff]
      %v442 = vld [vmem:[%s344 + $0x2a0] sm:$0xff]
      %v443 = vld [vmem:[%s344 + $0x2a8] sm:$0xff]
      %v444 = vld [vmem:[%s344 + $0x2b0] sm:$0xff]
      %v445 = vld [vmem:[%s344 + $0x2b8] sm:$0xff]
      %v446 = vld [vmem:[%s344 + $0x2c0] sm:$0xff]
      %v447 = vld [vmem:[%s344 + $0x2c8] sm:$0xff]
      %v448 = vld [vmem:[%s344 + $0x2d0] sm:$0xff]
      %v449 = vld [vmem:[%s344 + $0x2d8] sm:$0xff]
      %v450 = vld [vmem:[%s344 + $0x2e0] sm:$0xff]
      %v451 = vld [vmem:[%s344 + $0x2e8] sm:$0xff]
      %v452 = vld [vmem:[%s344 + $0x2f0] sm:$0xff]
      %v453 = vld [vmem:[%s344 + $0x2f8] sm:$0xff]
      %v454 = vld [vmem:[%s344 + $0x300] sm:$0xff]
      %v455 = vld [vmem:[%s344 + $0x308] sm:$0xff]
      %v456 = vld [vmem:[%s344 + $0x310] sm:$0xff]
      %v457 = vld [vmem:[%s344 + $0x318] sm:$0xff]
      %v458 = vld [vmem:[%s344 + $0x320] sm:$0xff]
      %v459 = vld [vmem:[%s344 + $0x328] sm:$0xff]
      %v460 = vld [vmem:[%s344 + $0x330] sm:$0xff]
      %v461 = vld [vmem:[%s344 + $0x338] sm:$0xff]
      %v462 = vld [vmem:[%s344 + $0x340] sm:$0xff]
      %v463 = vld [vmem:[%s344 + $0x348] sm:$0xff]
      %v464 = vld [vmem:[%s344 + $0x350] sm:$0xff]
      %v465 = vld [vmem:[%s344 + $0x358] sm:$0xff]
      %v466 = vld [vmem:[%s344 + $0x360] sm:$0xff]
      %v467 = vld [vmem:[%s344 + $0x368] sm:$0xff]
      %v468 = vld [vmem:[%s344 + $0x370] sm:$0xff]
      %v469 = vld [vmem:[%s344 + $0x378] sm:$0xff]
      %v470 = vld [vmem:[%s344 + $0x380] sm:$0xff]
      %v471 = vld [vmem:[%s344 + $0x388] sm:$0xff]
      %v472 = vld [vmem:[%s344 + $0x390] sm:$0xff]
      %v473 = vld [vmem:[%s344 + $0x398] sm:$0xff]
      %v474 = vld [vmem:[%s344 + $0x3a0] sm:$0xff]
      %v475 = vld [vmem:[%s344 + $0x3a8] sm:$0xff]
      %v476 = vld [vmem:[%s344 + $0x3b0] sm:$0xff]
      %v477 = vld [vmem:[%s344 + $0x3b8] sm:$0xff]
      %v478 = vld [vmem:[%s344 + $0x3c0] sm:$0xff]
      %v479 = vld [vmem:[%s344 + $0x3c8] sm:$0xff]
      %v480 = vld [vmem:[%s344 + $0x3d0] sm:$0xff]
      %v481 = vld [vmem:[%s344 + $0x3d8] sm:$0xff]
      %v482 = vld [vmem:[%s344 + $0x3e0] sm:$0xff]
      %v483 = vld [vmem:[%s344 + $0x3e8] sm:$0xff]
      %v484 = vld [vmem:[%s344 + $0x3f0] sm:$0xff]
      %v485 = vld [vmem:[%s344 + $0x3f8] sm:$0xff]
      %v486 = vld [vmem:[%s344 + $0x400] sm:$0xff]
      %v487 = vld [vmem:[%s344 + $0x408] sm:$0xff]
      %v488 = vld [vmem:[%s344 + $0x410] sm:$0xff]
      %v489 = vld [vmem:[%s344 + $0x418] sm:$0xff]
      %v490 = vld [vmem:[%s344 + $0x420] sm:$0xff]
      %v491 = vld [vmem:[%s344 + $0x428] sm:$0xff]
      %v492 = vld [vmem:[%s344 + $0x430] sm:$0xff]
      %v493 = vld [vmem:[%s344 + $0x438] sm:$0xff]
      %v494 = vld [vmem:[%s344 + $0x440] sm:$0xff]
      %v495 = vld [vmem:[%s344 + $0x448] sm:$0xff]
      %v496 = vld [vmem:[%s344 + $0x450] sm:$0xff]
      %v497 = vld [vmem:[%s344 + $0x458] sm:$0xff]
      %v498 = vld [vmem:[%s344 + $0x460] sm:$0xff]
      %v499 = vld [vmem:[%s344 + $0x468] sm:$0xff]
      %v500 = vld [vmem:[%s344 + $0x470] sm:$0xff]
      %v501 = vld [vmem:[%s344 + $0x478] sm:$0xff]
      %v502 = vld [vmem:[%s344 + $0x480] sm:$0xff]
      %v503 = vld [vmem:[%s344 + $0x488] sm:$0xff]
      %v504 = vld [vmem:[%s344 + $0x490] sm:$0xff]
      %v505 = vld [vmem:[%s344 + $0x498] sm:$0xff]
      %v506 = vld [vmem:[%s344 + $0x4a0] sm:$0xff]
      %v507 = vld [vmem:[%s344 + $0x4a8] sm:$0xff]
      %v508 = vld [vmem:[%s344 + $0x4b0] sm:$0xff]
      %v509 = vld [vmem:[%s344 + $0x4b8] sm:$0xff]
      %v510 = vld [vmem:[%s344 + $0x4c0] sm:$0xff]
      %v511 = vld [vmem:[%s344 + $0x4c8] sm:$0xff]
      %v512 = vld [vmem:[%s344 + $0x4d0] sm:$0xff]
      %v513 = vld [vmem:[%s344 + $0x4d8] sm:$0xff]
      %v514 = vld [vmem:[%s344 + $0x4e0] sm:$0xff]
      %v515 = vld [vmem:[%s344 + $0x4e8] sm:$0xff]
      %v516 = vld [vmem:[%s344 + $0x4f0] sm:$0xff]
      %v517 = vld [vmem:[%s344 + $0x4f8] sm:$0xff]
      %v518 = vld [vmem:[%s344 + $0x500] sm:$0xff]
      %v519 = vld [vmem:[%s344 + $0x508] sm:$0xff]
      %v520 = vld [vmem:[%s344 + $0x510] sm:$0xff]
      %v521 = vld [vmem:[%s344 + $0x518] sm:$0xff]
      %v522 = vld [vmem:[%s344 + $0x520] sm:$0xff]
      %v523 = vld [vmem:[%s344 + $0x528] sm:$0xff]
      %v524 = vld [vmem:[%s344 + $0x530] sm:$0xff]
      %v525 = vld [vmem:[%s344 + $0x538] sm:$0xff]
      %v526 = vld [vmem:[%s344 + $0x540] sm:$0xff]
      %v527 = vld [vmem:[%s344 + $0x548] sm:$0xff]
      %v528 = vld [vmem:[%s344 + $0x550] sm:$0xff]
      %v529 = vld [vmem:[%s344 + $0x558] sm:$0xff]
      %v530 = vld [vmem:[%s344 + $0x560] sm:$0xff]
      %v531 = vld [vmem:[%s344 + $0x568] sm:$0xff]
      %v532 = vld [vmem:[%s344 + $0x570] sm:$0xff]
      %v533 = vld [vmem:[%s344 + $0x578] sm:$0xff]
      %v534 = vld [vmem:[%s344 + $0x580] sm:$0xff]
      %v535 = vld [vmem:[%s344 + $0x588] sm:$0xff]
      %v536 = vld [vmem:[%s344 + $0x590] sm:$0xff]
      %v537 = vld [vmem:[%s344 + $0x598] sm:$0xff]
      %v538 = vld [vmem:[%s344 + $0x5a0] sm:$0xff]
      %v539 = vld [vmem:[%s344 + $0x5a8] sm:$0xff]
      %v540 = vld [vmem:[%s344 + $0x5b0] sm:$0xff]
      %v541 = vld [vmem:[%s344 + $0x5b8] sm:$0xff]
      %v542 = vld [vmem:[%s344 + $0x5c0] sm:$0xff]
      %v543 = vld [vmem:[%s344 + $0x5c8] sm:$0xff]
      %v544 = vld [vmem:[%s344 + $0x5d0] sm:$0xff]
      %v545 = vld [vmem:[%s344 + $0x5d8] sm:$0xff]
      %v546 = vld [vmem:[%s344 + $0x5e0] sm:$0xff]
      %v547 = vld [vmem:[%s344 + $0x5e8] sm:$0xff]
      %v548 = vld [vmem:[%s344 + $0x5f0] sm:$0xff]
      %v549 = vld [vmem:[%s344 + $0x5f8] sm:$0xff]
      %v550 = vld [vmem:[%s344 + $0x600] sm:$0xff]
      %v551 = vld [vmem:[%s344 + $0x608] sm:$0xff]
      %v552 = vld [vmem:[%s344 + $0x610] sm:$0xff]
      %v553 = vld [vmem:[%s344 + $0x618] sm:$0xff]
      %v554 = vld [vmem:[%s344 + $0x620] sm:$0xff]
      %v555 = vld [vmem:[%s344 + $0x628] sm:$0xff]
      %v556 = vld [vmem:[%s344 + $0x630] sm:$0xff]
      %v557 = vld [vmem:[%s344 + $0x638] sm:$0xff]
      %v558 = vld [vmem:[%s344 + $0x640] sm:$0xff]
      %v559 = vld [vmem:[%s344 + $0x648] sm:$0xff]
      %v560 = vld [vmem:[%s344 + $0x650] sm:$0xff]
      %v561 = vld [vmem:[%s344 + $0x658] sm:$0xff]
      %v562 = vld [vmem:[%s344 + $0x660] sm:$0xff]
      %v563 = vld [vmem:[%s344 + $0x668] sm:$0xff]
      %v564 = vld [vmem:[%s344 + $0x670] sm:$0xff]
      %v565 = vld [vmem:[%s344 + $0x678] sm:$0xff]
      %v566 = vld [vmem:[%s344 + $0x680] sm:$0xff]
      %v567 = vld [vmem:[%s344 + $0x688] sm:$0xff]
      %v568 = vld [vmem:[%s344 + $0x690] sm:$0xff]
      %v569 = vld [vmem:[%s344 + $0x698] sm:$0xff]
      %v570 = vld [vmem:[%s344 + $0x6a0] sm:$0xff]
      %v571 = vld [vmem:[%s344 + $0x6a8] sm:$0xff]
      %v572 = vld [vmem:[%s344 + $0x6b0] sm:$0xff]
      %v573 = vld [vmem:[%s344 + $0x6b8] sm:$0xff]
      %v574 = vld [vmem:[%s344 + $0x6c0] sm:$0xff]
      %v575 = vld [vmem:[%s344 + $0x6c8] sm:$0xff]
      %v576 = vld [vmem:[%s344 + $0x6d0] sm:$0xff]
      %v577 = vld [vmem:[%s344 + $0x6d8] sm:$0xff]
      %v578 = vld [vmem:[%s344 + $0x6e0] sm:$0xff]
      %v579 = vld [vmem:[%s344 + $0x6e8] sm:$0xff]
      %v580 = vld [vmem:[%s344 + $0x6f0] sm:$0xff]
      %v581 = vld [vmem:[%s344 + $0x6f8] sm:$0xff]
      %v582 = vld [vmem:[%s344 + $0x700] sm:$0xff]
      %v583 = vld [vmem:[%s344 + $0x708] sm:$0xff]
      %v584 = vld [vmem:[%s344 + $0x710] sm:$0xff]
      %v585 = vld [vmem:[%s344 + $0x718] sm:$0xff]
      %v586 = vld [vmem:[%s344 + $0x720] sm:$0xff]
      %v587 = vld [vmem:[%s344 + $0x728] sm:$0xff]
      %v588 = vld [vmem:[%s344 + $0x730] sm:$0xff]
      %v589 = vld [vmem:[%s344 + $0x738] sm:$0xff]
      %v590 = vld [vmem:[%s344 + $0x740] sm:$0xff]
      %v591 = vld [vmem:[%s344 + $0x748] sm:$0xff]
      %v592 = vld [vmem:[%s344 + $0x750] sm:$0xff]
      %v593 = vld [vmem:[%s344 + $0x758] sm:$0xff]
      %v594 = vld [vmem:[%s344 + $0x760] sm:$0xff]
      %v595 = vld [vmem:[%s344 + $0x768] sm:$0xff]
      %v596 = vld [vmem:[%s344 + $0x770] sm:$0xff]
      %v597 = vld [vmem:[%s344 + $0x778] sm:$0xff]
      %v598 = vld [vmem:[%s344 + $0x780] sm:$0xff]
      %v599 = vld [vmem:[%s344 + $0x788] sm:$0xff]
      %v600 = vld [vmem:[%s344 + $0x790] sm:$0xff]
      %v601 = vld [vmem:[%s344 + $0x798] sm:$0xff]
      %v602 = vld [vmem:[%s344 + $0x7a0] sm:$0xff]
      %v603 = vld [vmem:[%s344 + $0x7a8] sm:$0xff]
      %v604 = vld [vmem:[%s344 + $0x7b0] sm:$0xff]
      %v605 = vld [vmem:[%s344 + $0x7b8] sm:$0xff]
      %v606 = vld [vmem:[%s344 + $0x7c0] sm:$0xff]
      %v607 = vld [vmem:[%s344 + $0x7c8] sm:$0xff]
      %v608 = vld [vmem:[%s344 + $0x7d0] sm:$0xff]
      %v609 = vld [vmem:[%s344 + $0x7d8] sm:$0xff]
      %v610 = vld [vmem:[%s344 + $0x7e0] sm:$0xff]
      %v611 = vld [vmem:[%s344 + $0x7e8] sm:$0xff]
      %v612 = vld [vmem:[%s344 + $0x7f0] sm:$0xff]
      %v613 = vld [vmem:[%s344 + $0x7f8] sm:$0xff]
      %v614 = vld [vmem:[%s344 + $0x800] sm:$0xff]
      %v615 = vld [vmem:[%s344 + $0x808] sm:$0xff]
      %v616 = vld [vmem:[%s344 + $0x810] sm:$0xff]
      %v617 = vld [vmem:[%s344 + $0x818] sm:$0xff]
      %v618 = vld [vmem:[%s344 + $0x820] sm:$0xff]
      %v619 = vld [vmem:[%s344 + $0x828] sm:$0xff]
      %v620 = vld [vmem:[%s344 + $0x830] sm:$0xff]
      %v621 = vld [vmem:[%s344 + $0x838] sm:$0xff]
      %v622 = vld [vmem:[%s344 + $0x840] sm:$0xff]
      %v623 = vld [vmem:[%s344 + $0x848] sm:$0xff]
      %v624 = vld [vmem:[%s344 + $0x850] sm:$0xff]
      %v625 = vld [vmem:[%s344 + $0x858] sm:$0xff]
      %v626 = vld [vmem:[%s344 + $0x860] sm:$0xff]
      %v627 = vld [vmem:[%s344 + $0x868] sm:$0xff]
      %v628 = vld [vmem:[%s344 + $0x870] sm:$0xff]
      %v629 = vld [vmem:[%s344 + $0x878] sm:$0xff]
      %v630 = vld [vmem:[%s344 + $0x880] sm:$0xff]
      %v631 = vld [vmem:[%s344 + $0x888] sm:$0xff]
      %v632 = vld [vmem:[%s344 + $0x890] sm:$0xff]
      %v633 = vld [vmem:[%s344 + $0x898] sm:$0xff]
      %v634 = vld [vmem:[%s344 + $0x8a0] sm:$0xff]
      %v635 = vld [vmem:[%s344 + $0x8a8] sm:$0xff]
      %v636 = vld [vmem:[%s344 + $0x8b0] sm:$0xff]
      %v637 = vld [vmem:[%s344 + $0x8b8] sm:$0xff]
      %v638 = vld [vmem:[%s344 + $0x8c0] sm:$0xff]
      %v639 = vld [vmem:[%s344 + $0x8c8] sm:$0xff]
      %v640 = vld [vmem:[%s344 + $0x8d0] sm:$0xff]
      %v641 = vld [vmem:[%s344 + $0x8d8] sm:$0xff]
      %v642 = vld [vmem:[%s344 + $0x8e0] sm:$0xff]
      %v643 = vld [vmem:[%s344 + $0x8e8] sm:$0xff]
      %v644 = vld [vmem:[%s344 + $0x8f0] sm:$0xff]
      %v645 = vld [vmem:[%s344 + $0x8f8] sm:$0xff]
      %v646 = vld [vmem:[%s344 + $0x900] sm:$0xff]
      %v647 = vld [vmem:[%s344 + $0x908] sm:$0xff]
      %v648 = vld [vmem:[%s344 + $0x910] sm:$0xff]
      %v649 = vld [vmem:[%s344 + $0x918] sm:$0xff]
      %v650 = vld [vmem:[%s344 + $0x920] sm:$0xff]
      %v651 = vld [vmem:[%s344 + $0x928] sm:$0xff]
      %v652 = vld [vmem:[%s344 + $0x930] sm:$0xff]
      %v653 = vld [vmem:[%s344 + $0x938] sm:$0xff]
      %v654 = vld [vmem:[%s344 + $0x940] sm:$0xff]
      %v655 = vld [vmem:[%s344 + $0x948] sm:$0xff]
      %v656 = vld [vmem:[%s344 + $0x950] sm:$0xff]
      %v657 = vld [vmem:[%s344 + $0x958] sm:$0xff]
      %v658 = vld [vmem:[%s344 + $0x960] sm:$0xff]
      %v659 = vld [vmem:[%s344 + $0x968] sm:$0xff]
      %v660 = vld [vmem:[%s344 + $0x970] sm:$0xff]
      %v661 = vld [vmem:[%s344 + $0x978] sm:$0xff]
      %v662 = vld [vmem:[%s344 + $0x980] sm:$0xff]
      %v663 = vld [vmem:[%s344 + $0x988] sm:$0xff]
      %v664 = vld [vmem:[%s344 + $0x990] sm:$0xff]
      %v665 = vld [vmem:[%s344 + $0x998] sm:$0xff]
      %v666 = vld [vmem:[%s344 + $0x9a0] sm:$0xff]
      %v667 = vld [vmem:[%s344 + $0x9a8] sm:$0xff]
      %v668 = vld [vmem:[%s344 + $0x9b0] sm:$0xff]
      %v669 = vld [vmem:[%s344 + $0x9b8] sm:$0xff]
      %v670 = vld [vmem:[%s344 + $0x9c0] sm:$0xff]
      %v671 = vld [vmem:[%s344 + $0x9c8] sm:$0xff]
      %v672 = vld [vmem:[%s344 + $0x9d0] sm:$0xff]
      %v673 = vld [vmem:[%s344 + $0x9d8] sm:$0xff]
      %v674 = vld [vmem:[%s344 + $0x9e0] sm:$0xff]
      %v675 = vld [vmem:[%s344 + $0x9e8] sm:$0xff]
      %v676 = vld [vmem:[%s344 + $0x9f0] sm:$0xff]
      %v677 = vld [vmem:[%s344 + $0x9f8] sm:$0xff]
      %v678 = vld [vmem:[%s344 + $0xa00] sm:$0xff]
      %v679 = vld [vmem:[%s344 + $0xa08] sm:$0xff]
      %v680 = vld [vmem:[%s344 + $0xa10] sm:$0xff]
      %v681 = vld [vmem:[%s344 + $0xa18] sm:$0xff]
      %v682 = vld [vmem:[%s2] sm:$0xff]
      %v683 = vld [vmem:[%s2 + $0x8] sm:$0xff]
      %v684 = vld [vmem:[%s2 + $0x10] sm:$0xff]
      %v685 = vld [vmem:[%s2 + $0x18] sm:$0xff]
      %v686 = vld [vmem:[%s2 + $0x20] sm:$0xff]
      %v687 = vld [vmem:[%s2 + $0x28] sm:$0xff]
      %v688 = vld [vmem:[%s2 + $0x30] sm:$0xff]
      %v689 = vld [vmem:[%s2 + $0x38] sm:$0xff]
      %v690 = vld [vmem:[%s2 + $0x40] sm:$0xff]
      %v691 = vld [vmem:[%s3] sm:$0x1]
      %v693 = vperm.slane %v691, 0
      %vm695 = vcmask 588800
      %v697 = vsel %vm695, %v358, 0
      %v700 = vsel %vm695, %v359, 0
      %v703 = vsel %vm695, %v360, 0
      %v706 = vsel %vm695, %v361, 0
      %v709 = vsel %vm695, %v362, 0
      %v712 = vsel %vm695, %v363, 0
      %v715 = vsel %vm695, %v364, 0
      %v718 = vsel %vm695, %v365, 0
      %v721 = vsel %vm695, %v366, 0
      %v724 = vsel %vm695, %v367, 0
      %v727 = vsel %vm695, %v368, 0
      %v730 = vsel %vm695, %v369, 0
      %v733 = vsel %vm695, %v370, 0
      %v736 = vsel %vm695, %v371, 0
      %v739 = vsel %vm695, %v372, 0
      %v742 = vsel %vm695, %v373, 0
      %v745 = vsel %vm695, %v374, 0
      %v748 = vsel %vm695, %v375, 0
      %v751 = vsel %vm695, %v376, 0
      %v754 = vsel %vm695, %v377, 0
      %v757 = vsel %vm695, %v378, 0
      %v760 = vsel %vm695, %v379, 0
      %v763 = vsel %vm695, %v380, 0
      %v766 = vsel %vm695, %v381, 0
      %v769 = vsel %vm695, %v382, 0
      %v772 = vsel %vm695, %v383, 0
      %v775 = vsel %vm695, %v384, 0
      %v778 = vsel %vm695, %v385, 0
      %v781 = vsel %vm695, %v386, 0
      %v784 = vsel %vm695, %v387, 0
      %v787 = vsel %vm695, %v388, 0
      %v790 = vsel %vm695, %v389, 0
      %v793 = vsel %vm695, %v390, 0
      %v796 = vsel %vm695, %v391, 0
      %v799 = vsel %vm695, %v392, 0
      %v802 = vsel %vm695, %v393, 0
      %v805 = vsel %vm695, %v394, 0
      %v808 = vsel %vm695, %v395, 0
      %v811 = vsel %vm695, %v396, 0
      %v814 = vsel %vm695, %v397, 0
      %v817 = vsel %vm695, %v398, 0
      %v820 = vsel %vm695, %v399, 0
      %v823 = vsel %vm695, %v400, 0
      %v826 = vsel %vm695, %v401, 0
      %v829 = vsel %vm695, %v402, 0
      %v832 = vsel %vm695, %v403, 0
      %v835 = vsel %vm695, %v404, 0
      %v838 = vsel %vm695, %v405, 0
      %v841 = vsel %vm695, %v406, 0
      %v844 = vsel %vm695, %v407, 0
      %v847 = vsel %vm695, %v408, 0
      %v850 = vsel %vm695, %v409, 0
      %v853 = vsel %vm695, %v410, 0
      %v856 = vsel %vm695, %v411, 0
      %v859 = vsel %vm695, %v412, 0
      %v862 = vsel %vm695, %v413, 0
      %v865 = vsel %vm695, %v414, 0
      %v868 = vsel %vm695, %v415, 0
      %v871 = vsel %vm695, %v416, 0
      %v874 = vsel %vm695, %v417, 0
      %v877 = vsel %vm695, %v418, 0
      %v880 = vsel %vm695, %v419, 0
      %v883 = vsel %vm695, %v420, 0
      %v886 = vsel %vm695, %v421, 0
      %v889 = vsel %vm695, %v422, 0
      %v892 = vsel %vm695, %v423, 0
      %v895 = vsel %vm695, %v424, 0
      %v898 = vsel %vm695, %v425, 0
      %v901 = vsel %vm695, %v426, 0
      %v904 = vsel %vm695, %v427, 0
      %v907 = vsel %vm695, %v428, 0
      %v910 = vsel %vm695, %v429, 0
      %v913 = vsel %vm695, %v430, 0
      %v916 = vsel %vm695, %v431, 0
      %v919 = vsel %vm695, %v432, 0
      %v922 = vsel %vm695, %v433, 0
      %v925 = vsel %vm695, %v434, 0
      %v928 = vsel %vm695, %v435, 0
      %v931 = vsel %vm695, %v436, 0
      %v934 = vsel %vm695, %v437, 0
      %v937 = vsel %vm695, %v438, 0
      %v940 = vsel %vm695, %v439, 0
      %v943 = vsel %vm695, %v440, 0
      %v946 = vsel %vm695, %v441, 0
      %v949 = vsel %vm695, %v442, 0
      %v952 = vsel %vm695, %v443, 0
      %v955 = vsel %vm695, %v444, 0
      %v958 = vsel %vm695, %v445, 0
      %v961 = vsel %vm695, %v446, 0
      %v964 = vsel %vm695, %v447, 0
      %v967 = vsel %vm695, %v448, 0
      %v970 = vsel %vm695, %v449, 0
      %v973 = vsel %vm695, %v450, 0
      %v976 = vsel %vm695, %v451, 0
      %v979 = vsel %vm695, %v452, 0
      %v982 = vsel %vm695, %v453, 0
      %v985 = vsel %vm695, %v454, 0
      %v988 = vsel %vm695, %v455, 0
      %v991 = vsel %vm695, %v456, 0
      %v994 = vsel %vm695, %v457, 0
      %v997 = vsel %vm695, %v458, 0
      %v1000 = vsel %vm695, %v459, 0
      %v1003 = vsel %vm695, %v460, 0
      %v1006 = vsel %vm695, %v461, 0
      %v1009 = vsel %vm695, %v462, 0
      %v1012 = vsel %vm695, %v463, 0
      %v1015 = vsel %vm695, %v464, 0
      %v1018 = vsel %vm695, %v465, 0
      %v1021 = vsel %vm695, %v466, 0
      %v1024 = vsel %vm695, %v467, 0
      %v1027 = vsel %vm695, %v468, 0
      %v1030 = vsel %vm695, %v469, 0
      %v1033 = vsel %vm695, %v470, 0
      %v1036 = vsel %vm695, %v471, 0
      %v1039 = vsel %vm695, %v472, 0
      %v1042 = vsel %vm695, %v473, 0
      %v1045 = vsel %vm695, %v474, 0
      %v1048 = vsel %vm695, %v475, 0
      %v1051 = vsel %vm695, %v476, 0
      %v1054 = vsel %vm695, %v477, 0
      %v1057 = vsel %vm695, %v478, 0
      %v1060 = vsel %vm695, %v479, 0
      %v1063 = vsel %vm695, %v480, 0
      %v1066 = vsel %vm695, %v481, 0
      %v1069 = vsel %vm695, %v482, 0
      %v1072 = vsel %vm695, %v483, 0
      %v1075 = vsel %vm695, %v484, 0
      %v1078 = vsel %vm695, %v485, 0
      %v1081 = vsel %vm695, %v486, 0
      %v1084 = vsel %vm695, %v487, 0
      %v1087 = vsel %vm695, %v488, 0
      %v1090 = vsel %vm695, %v489, 0
      %v1093 = vsel %vm695, %v490, 0
      %v1096 = vsel %vm695, %v491, 0
      %v1099 = vsel %vm695, %v492, 0
      %v1102 = vsel %vm695, %v493, 0
      %v1105 = vsel %vm695, %v494, 0
      %v1108 = vsel %vm695, %v495, 0
      %v1111 = vsel %vm695, %v496, 0
      %v1114 = vsel %vm695, %v497, 0
      %v1117 = vsel %vm695, %v498, 0
      %v1120 = vsel %vm695, %v499, 0
      %v1123 = vsel %vm695, %v500, 0
      %v1126 = vsel %vm695, %v501, 0
      %v1129 = vsel %vm695, %v502, 0
      %v1132 = vsel %vm695, %v503, 0
      %v1135 = vsel %vm695, %v504, 0
      %v1138 = vsel %vm695, %v505, 0
      %v1141 = vsel %vm695, %v506, 0
      %v1144 = vsel %vm695, %v507, 0
      %v1147 = vsel %vm695, %v508, 0
      %v1150 = vsel %vm695, %v509, 0
      %v1153 = vsel %vm695, %v510, 0
      %v1156 = vsel %vm695, %v511, 0
      %v1159 = vsel %vm695, %v512, 0
      %v1162 = vsel %vm695, %v513, 0
      %v1165 = vsel %vm695, %v514, 0
      %v1168 = vsel %vm695, %v515, 0
      %v1171 = vsel %vm695, %v516, 0
      %v1174 = vsel %vm695, %v517, 0
      %v1177 = vsel %vm695, %v518, 0
      %v1180 = vsel %vm695, %v519, 0
      %v1183 = vsel %vm695, %v520, 0
      %v1186 = vsel %vm695, %v521, 0
      %v1189 = vsel %vm695, %v522, 0
      %v1192 = vsel %vm695, %v523, 0
      %v1195 = vsel %vm695, %v524, 0
      %v1198 = vsel %vm695, %v525, 0
      %v1201 = vsel %vm695, %v526, 0
      %v1204 = vsel %vm695, %v527, 0
      %v1207 = vsel %vm695, %v528, 0
      %v1210 = vsel %vm695, %v529, 0
      %v1213 = vsel %vm695, %v530, 0
      %v1216 = vsel %vm695, %v531, 0
      %v1219 = vsel %vm695, %v532, 0
      %v1222 = vsel %vm695, %v533, 0
      %v1225 = vsel %vm695, %v534, 0
      %v1228 = vsel %vm695, %v535, 0
      %v1231 = vsel %vm695, %v536, 0
      %v1234 = vsel %vm695, %v537, 0
      %v1237 = vsel %vm695, %v538, 0
      %v1240 = vsel %vm695, %v539, 0
      %v1243 = vsel %vm695, %v540, 0
      %v1246 = vsel %vm695, %v541, 0
      %v1249 = vsel %vm695, %v542, 0
      %v1252 = vsel %vm695, %v543, 0
      %v1255 = vsel %vm695, %v544, 0
      %v1258 = vsel %vm695, %v545, 0
      %v1261 = vsel %vm695, %v546, 0
      %v1264 = vsel %vm695, %v547, 0
      %v1267 = vsel %vm695, %v548, 0
      %v1270 = vsel %vm695, %v549, 0
      %v1273 = vsel %vm695, %v550, 0
      %v1276 = vsel %vm695, %v551, 0
      %v1279 = vsel %vm695, %v552, 0
      %v1282 = vsel %vm695, %v553, 0
      %v1285 = vsel %vm695, %v554, 0
      %v1288 = vsel %vm695, %v555, 0
      %v1291 = vsel %vm695, %v556, 0
      %v1294 = vsel %vm695, %v557, 0
      %v1297 = vsel %vm695, %v558, 0
      %v1300 = vsel %vm695, %v559, 0
      %v1303 = vsel %vm695, %v560, 0
      %v1306 = vsel %vm695, %v561, 0
      %v1309 = vsel %vm695, %v562, 0
      %v1312 = vsel %vm695, %v563, 0
      %v1315 = vsel %vm695, %v564, 0
      %v1318 = vsel %vm695, %v565, 0
      %v1321 = vsel %vm695, %v566, 0
      %v1324 = vsel %vm695, %v567, 0
      %v1327 = vsel %vm695, %v568, 0
      %v1330 = vsel %vm695, %v569, 0
      %v1333 = vsel %vm695, %v570, 0
      %v1336 = vsel %vm695, %v571, 0
      %v1339 = vsel %vm695, %v572, 0
      %v1342 = vsel %vm695, %v573, 0
      %v1345 = vsel %vm695, %v574, 0
      %v1348 = vsel %vm695, %v575, 0
      %v1351 = vsel %vm695, %v576, 0
      %v1354 = vsel %vm695, %v577, 0
      %v1357 = vsel %vm695, %v578, 0
      %v1360 = vsel %vm695, %v579, 0
      %v1363 = vsel %vm695, %v580, 0
      %v1366 = vsel %vm695, %v581, 0
      %v1369 = vsel %vm695, %v582, 0
      %v1372 = vsel %vm695, %v583, 0
      %v1375 = vsel %vm695, %v584, 0
      %v1378 = vsel %vm695, %v585, 0
      %v1381 = vsel %vm695, %v586, 0
      %v1384 = vsel %vm695, %v587, 0
      %v1387 = vsel %vm695, %v588, 0
      %v1390 = vsel %vm695, %v589, 0
      %v1393 = vsel %vm695, %v590, 0
      %v1396 = vsel %vm695, %v591, 0
      %v1399 = vsel %vm695, %v592, 0
      %v1402 = vsel %vm695, %v593, 0
      %v1405 = vsel %vm695, %v594, 0
      %v1408 = vsel %vm695, %v595, 0
      %v1411 = vsel %vm695, %v596, 0
      %v1414 = vsel %vm695, %v597, 0
      %v1417 = vsel %vm695, %v598, 0
      %v1420 = vsel %vm695, %v599, 0
      %v1423 = vsel %vm695, %v600, 0
      %v1426 = vsel %vm695, %v601, 0
      %v1429 = vsel %vm695, %v602, 0
      %v1432 = vsel %vm695, %v603, 0
      %v1435 = vsel %vm695, %v604, 0
      %v1438 = vsel %vm695, %v605, 0
      %v1441 = vsel %vm695, %v606, 0
      %v1444 = vsel %vm695, %v607, 0
      %v1447 = vsel %vm695, %v608, 0
      %v1450 = vsel %vm695, %v609, 0
      %v1453 = vsel %vm695, %v610, 0
      %v1456 = vsel %vm695, %v611, 0
      %v1459 = vsel %vm695, %v612, 0
      %v1462 = vsel %vm695, %v613, 0
      %v1465 = vsel %vm695, %v614, 0
      %v1468 = vsel %vm695, %v615, 0
      %v1471 = vsel %vm695, %v616, 0
      %v1474 = vsel %vm695, %v617, 0
      %v1477 = vsel %vm695, %v618, 0
      %v1480 = vsel %vm695, %v619, 0
      %v1483 = vsel %vm695, %v620, 0
      %v1486 = vsel %vm695, %v621, 0
      %v1489 = vsel %vm695, %v622, 0
      %v1492 = vsel %vm695, %v623, 0
      %v1495 = vsel %vm695, %v624, 0
      %v1498 = vsel %vm695, %v625, 0
      %v1501 = vsel %vm695, %v626, 0
      %v1504 = vsel %vm695, %v627, 0
      %v1507 = vsel %vm695, %v628, 0
      %v1510 = vsel %vm695, %v629, 0
      %v1513 = vsel %vm695, %v630, 0
      %v1516 = vsel %vm695, %v631, 0
      %v1519 = vsel %vm695, %v632, 0
      %v1522 = vsel %vm695, %v633, 0
      %v1525 = vsel %vm695, %v634, 0
      %v1528 = vsel %vm695, %v635, 0
      %v1531 = vsel %vm695, %v636, 0
      %v1534 = vsel %vm695, %v637, 0
      %v1537 = vsel %vm695, %v638, 0
      %v1540 = vsel %vm695, %v639, 0
      %v1543 = vsel %vm695, %v640, 0
      %v1546 = vsel %vm695, %v641, 0
      %v1549 = vsel %vm695, %v642, 0
      %v1552 = vsel %vm695, %v643, 0
      %v1555 = vsel %vm695, %v644, 0
      %v1558 = vsel %vm695, %v645, 0
      %v1561 = vsel %vm695, %v646, 0
      %v1564 = vsel %vm695, %v647, 0
      %v1567 = vsel %vm695, %v648, 0
      %v1570 = vsel %vm695, %v649, 0
      %v1573 = vsel %vm695, %v650, 0
      %v1576 = vsel %vm695, %v651, 0
      %v1579 = vsel %vm695, %v652, 0
      %v1582 = vsel %vm695, %v653, 0
      %v1585 = vsel %vm695, %v654, 0
      %v1588 = vsel %vm695, %v655, 0
      %v1591 = vsel %vm695, %v656, 0
      %v1594 = vsel %vm695, %v657, 0
      %v1597 = vsel %vm695, %v658, 0
      %v1600 = vsel %vm695, %v659, 0
      %v1603 = vsel %vm695, %v660, 0
      %v1606 = vsel %vm695, %v661, 0
      %v1609 = vsel %vm695, %v662, 0
      %v1612 = vsel %vm695, %v663, 0
      %v1615 = vsel %vm695, %v664, 0
      %v1618 = vsel %vm695, %v665, 0
      %v1621 = vsel %vm695, %v666, 0
      %v1624 = vsel %vm695, %v667, 0
      %v1627 = vsel %vm695, %v668, 0
      %v1630 = vsel %vm695, %v669, 0
      %v1633 = vsel %vm695, %v670, 0
      %v1636 = vsel %vm695, %v671, 0
      %v1639 = vsel %vm695, %v672, 0
      %v1642 = vsel %vm695, %v673, 0
      %v1645 = vsel %vm695, %v674, 0
      %v1648 = vsel %vm695, %v675, 0
      %v1651 = vsel %vm695, %v676, 0
      %v1654 = vsel %vm695, %v677, 0
      %v1657 = vsel %vm695, %v678, 0
      %v1660 = vsel %vm695, %v679, 0
      %v1663 = vsel %vm695, %v680, 0
      %v1666 = vsel %vm695, %v681, 0
      %1668 = vmatpush.msra.mxu0 0.0
      %1669 = vmatpush.msra.mxu0 0.0
      %1670 = vmatpush.msra.mxu0 0.0
      %1671 = vmatpush.msra.mxu0 0.0
      %1672 = vmatpush.msra.mxu0 0.0
      %1673 = vmatpush.msra.mxu0 0.0
      %1674 = vmatpush.msra.mxu0 0.0
      %1675 = vmatpush.msra.mxu0 %v690
      %1676 = vmatpush.msra.mxu0 %v689
      %1677 = vmatpush.msra.mxu0 %v688
      %1678 = vmatpush.msra.mxu0 %v687
      %1679 = vmatpush.msra.mxu0 %v686
      %1680 = vmatpush.msra.mxu0 %v685
      %1681 = vmatpush.msra.mxu0 %v684
      %1682 = vmatpush.msra.mxu0 %v683
      %1683 = vmatpush.msra.mxu0 %v682
      %1684 = vmatmul.f32.gmra.mxu0 %v697
      %v1685 = vpop.f32.mrf.mxu0
      %v1686 = vadd.f32 %v693, %v1685
      %1687 = vmatmul.f32.gmra.mxu0 %v700
      %v1688 = vpop.f32.mrf.mxu0
      %v1689 = vadd.f32 %v693, %v1688
      %1690 = vmatmul.f32.gmra.mxu0 %v703
      %v1691 = vpop.f32.mrf.mxu0
      %v1692 = vadd.f32 %v693, %v1691
      %1693 = vmatmul.f32.gmra.mxu0 %v706
      %v1694 = vpop.f32.mrf.mxu0
      %v1695 = vadd.f32 %v693, %v1694
      %1696 = vmatmul.f32.gmra.mxu0 %v709
      %v1697 = vpop.f32.mrf.mxu0
      %v1698 = vadd.f32 %v693, %v1697
      %1699 = vmatmul.f32.gmra.mxu0 %v712
      %v1700 = vpop.f32.mrf.mxu0
      %v1701 = vadd.f32 %v693, %v1700
      %1702 = vmatmul.f32.gmra.mxu0 %v715
      %v1703 = vpop.f32.mrf.mxu0
      %v1704 = vadd.f32 %v693, %v1703
      %1705 = vmatmul.f32.gmra.mxu0 %v718
      %v1706 = vpop.f32.mrf.mxu0
      %v1707 = vadd.f32 %v693, %v1706
      %1708 = vmatmul.f32.gmra.mxu0 %v721
      %v1709 = vpop.f32.mrf.mxu0
      %v1710 = vadd.f32 %v693, %v1709
      %1711 = vmatmul.f32.gmra.mxu0 %v724
      %v1712 = vpop.f32.mrf.mxu0
      %v1713 = vadd.f32 %v693, %v1712
      %1714 = vmatmul.f32.gmra.mxu0 %v727
      %v1715 = vpop.f32.mrf.mxu0
      %v1716 = vadd.f32 %v693, %v1715
      %1717 = vmatmul.f32.gmra.mxu0 %v730
      %v1718 = vpop.f32.mrf.mxu0
      %v1719 = vadd.f32 %v693, %v1718
      %1720 = vmatmul.f32.gmra.mxu0 %v733
      %v1721 = vpop.f32.mrf.mxu0
      %v1722 = vadd.f32 %v693, %v1721
      %1723 = vmatmul.f32.gmra.mxu0 %v736
      %v1724 = vpop.f32.mrf.mxu0
      %v1725 = vadd.f32 %v693, %v1724
      %1726 = vmatmul.f32.gmra.mxu0 %v739
      %v1727 = vpop.f32.mrf.mxu0
      %v1728 = vadd.f32 %v693, %v1727
      %1729 = vmatmul.f32.gmra.mxu0 %v742
      %v1730 = vpop.f32.mrf.mxu0
      %v1731 = vadd.f32 %v693, %v1730
      %1732 = vmatmul.f32.gmra.mxu0 %v745
      %v1733 = vpop.f32.mrf.mxu0
      %v1734 = vadd.f32 %v693, %v1733
      %1735 = vmatmul.f32.gmra.mxu0 %v748
      %v1736 = vpop.f32.mrf.mxu0
      %v1737 = vadd.f32 %v693, %v1736
      %1738 = vmatmul.f32.gmra.mxu0 %v751
      %v1739 = vpop.f32.mrf.mxu0
      %v1740 = vadd.f32 %v693, %v1739
      %1741 = vmatmul.f32.gmra.mxu0 %v754
      %v1742 = vpop.f32.mrf.mxu0
      %v1743 = vadd.f32 %v693, %v1742
      %1744 = vmatmul.f32.gmra.mxu0 %v757
      %v1745 = vpop.f32.mrf.mxu0
      %v1746 = vadd.f32 %v693, %v1745
      %1747 = vmatmul.f32.gmra.mxu0 %v760
      %v1748 = vpop.f32.mrf.mxu0
      %v1749 = vadd.f32 %v693, %v1748
      %1750 = vmatmul.f32.gmra.mxu0 %v763
      %v1751 = vpop.f32.mrf.mxu0
      %v1752 = vadd.f32 %v693, %v1751
      %1753 = vmatmul.f32.gmra.mxu0 %v766
      %v1754 = vpop.f32.mrf.mxu0
      %v1755 = vadd.f32 %v693, %v1754
      %1756 = vmatmul.f32.gmra.mxu0 %v769
      %v1757 = vpop.f32.mrf.mxu0
      %v1758 = vadd.f32 %v693, %v1757
      %1759 = vmatmul.f32.gmra.mxu0 %v772
      %v1760 = vpop.f32.mrf.mxu0
      %v1761 = vadd.f32 %v693, %v1760
      %1762 = vmatmul.f32.gmra.mxu0 %v775
      %v1763 = vpop.f32.mrf.mxu0
      %v1764 = vadd.f32 %v693, %v1763
      %1765 = vmatmul.f32.gmra.mxu0 %v778
      %v1766 = vpop.f32.mrf.mxu0
      %v1767 = vadd.f32 %v693, %v1766
      %1768 = vmatmul.f32.gmra.mxu0 %v781
      %v1769 = vpop.f32.mrf.mxu0
      %v1770 = vadd.f32 %v693, %v1769
      %1771 = vmatmul.f32.gmra.mxu0 %v784
      %v1772 = vpop.f32.mrf.mxu0
      %v1773 = vadd.f32 %v693, %v1772
      %1774 = vmatmul.f32.gmra.mxu0 %v787
      %v1775 = vpop.f32.mrf.mxu0
      %v1776 = vadd.f32 %v693, %v1775
      %1777 = vmatmul.f32.gmra.mxu0 %v790
      %v1778 = vpop.f32.mrf.mxu0
      %v1779 = vadd.f32 %v693, %v1778
      %1780 = vmatmul.f32.gmra.mxu0 %v793
      %v1781 = vpop.f32.mrf.mxu0
      %v1782 = vadd.f32 %v693, %v1781
      %1783 = vmatmul.f32.gmra.mxu0 %v796
      %v1784 = vpop.f32.mrf.mxu0
      %v1785 = vadd.f32 %v693, %v1784
      %1786 = vmatmul.f32.gmra.mxu0 %v799
      %v1787 = vpop.f32.mrf.mxu0
      %v1788 = vadd.f32 %v693, %v1787
      %1789 = vmatmul.f32.gmra.mxu0 %v802
      %v1790 = vpop.f32.mrf.mxu0
      %v1791 = vadd.f32 %v693, %v1790
      %1792 = vmatmul.f32.gmra.mxu0 %v805
      %v1793 = vpop.f32.mrf.mxu0
      %v1794 = vadd.f32 %v693, %v1793
      %1795 = vmatmul.f32.gmra.mxu0 %v808
      %v1796 = vpop.f32.mrf.mxu0
      %v1797 = vadd.f32 %v693, %v1796
      %1798 = vmatmul.f32.gmra.mxu0 %v811
      %v1799 = vpop.f32.mrf.mxu0
      %v1800 = vadd.f32 %v693, %v1799
      %1801 = vmatmul.f32.gmra.mxu0 %v814
      %v1802 = vpop.f32.mrf.mxu0
      %v1803 = vadd.f32 %v693, %v1802
      %1804 = vmatmul.f32.gmra.mxu0 %v817
      %v1805 = vpop.f32.mrf.mxu0
      %v1806 = vadd.f32 %v693, %v1805
      %1807 = vmatmul.f32.gmra.mxu0 %v820
      %v1808 = vpop.f32.mrf.mxu0
      %v1809 = vadd.f32 %v693, %v1808
      %1810 = vmatmul.f32.gmra.mxu0 %v823
      %v1811 = vpop.f32.mrf.mxu0
      %v1812 = vadd.f32 %v693, %v1811
      %1813 = vmatmul.f32.gmra.mxu0 %v826
      %v1814 = vpop.f32.mrf.mxu0
      %v1815 = vadd.f32 %v693, %v1814
      %1816 = vmatmul.f32.gmra.mxu0 %v829
      %v1817 = vpop.f32.mrf.mxu0
      %v1818 = vadd.f32 %v693, %v1817
      %1819 = vmatmul.f32.gmra.mxu0 %v832
      %v1820 = vpop.f32.mrf.mxu0
      %v1821 = vadd.f32 %v693, %v1820
      %1822 = vmatmul.f32.gmra.mxu0 %v835
      %v1823 = vpop.f32.mrf.mxu0
      %v1824 = vadd.f32 %v693, %v1823
      %1825 = vmatmul.f32.gmra.mxu0 %v838
      %v1826 = vpop.f32.mrf.mxu0
      %v1827 = vadd.f32 %v693, %v1826
      %1828 = vmatmul.f32.gmra.mxu0 %v841
      %v1829 = vpop.f32.mrf.mxu0
      %v1830 = vadd.f32 %v693, %v1829
      %1831 = vmatmul.f32.gmra.mxu0 %v844
      %v1832 = vpop.f32.mrf.mxu0
      %v1833 = vadd.f32 %v693, %v1832
      %1834 = vmatmul.f32.gmra.mxu0 %v847
      %v1835 = vpop.f32.mrf.mxu0
      %v1836 = vadd.f32 %v693, %v1835
      %1837 = vmatmul.f32.gmra.mxu0 %v850
      %v1838 = vpop.f32.mrf.mxu0
      %v1839 = vadd.f32 %v693, %v1838
      %1840 = vmatmul.f32.gmra.mxu0 %v853
      %v1841 = vpop.f32.mrf.mxu0
      %v1842 = vadd.f32 %v693, %v1841
      %1843 = vmatmul.f32.gmra.mxu0 %v856
      %v1844 = vpop.f32.mrf.mxu0
      %v1845 = vadd.f32 %v693, %v1844
      %1846 = vmatmul.f32.gmra.mxu0 %v859
      %v1847 = vpop.f32.mrf.mxu0
      %v1848 = vadd.f32 %v693, %v1847
      %1849 = vmatmul.f32.gmra.mxu0 %v862
      %v1850 = vpop.f32.mrf.mxu0
      %v1851 = vadd.f32 %v693, %v1850
      %1852 = vmatmul.f32.gmra.mxu0 %v865
      %v1853 = vpop.f32.mrf.mxu0
      %v1854 = vadd.f32 %v693, %v1853
      %1855 = vmatmul.f32.gmra.mxu0 %v868
      %v1856 = vpop.f32.mrf.mxu0
      %v1857 = vadd.f32 %v693, %v1856
      %1858 = vmatmul.f32.gmra.mxu0 %v871
      %v1859 = vpop.f32.mrf.mxu0
      %v1860 = vadd.f32 %v693, %v1859
      %1861 = vmatmul.f32.gmra.mxu0 %v874
      %v1862 = vpop.f32.mrf.mxu0
      %v1863 = vadd.f32 %v693, %v1862
      %1864 = vmatmul.f32.gmra.mxu0 %v877
      %v1865 = vpop.f32.mrf.mxu0
      %v1866 = vadd.f32 %v693, %v1865
      %1867 = vmatmul.f32.gmra.mxu0 %v880
      %v1868 = vpop.f32.mrf.mxu0
      %v1869 = vadd.f32 %v693, %v1868
      %1870 = vmatmul.f32.gmra.mxu0 %v883
      %v1871 = vpop.f32.mrf.mxu0
      %v1872 = vadd.f32 %v693, %v1871
      %1873 = vmatmul.f32.gmra.mxu0 %v886
      %v1874 = vpop.f32.mrf.mxu0
      %v1875 = vadd.f32 %v693, %v1874
      %1876 = vmatmul.f32.gmra.mxu0 %v889
      %v1877 = vpop.f32.mrf.mxu0
      %v1878 = vadd.f32 %v693, %v1877
      %1879 = vmatmul.f32.gmra.mxu0 %v892
      %v1880 = vpop.f32.mrf.mxu0
      %v1881 = vadd.f32 %v693, %v1880
      %1882 = vmatmul.f32.gmra.mxu0 %v895
      %v1883 = vpop.f32.mrf.mxu0
      %v1884 = vadd.f32 %v693, %v1883
      %1885 = vmatmul.f32.gmra.mxu0 %v898
      %v1886 = vpop.f32.mrf.mxu0
      %v1887 = vadd.f32 %v693, %v1886
      %1888 = vmatmul.f32.gmra.mxu0 %v901
      %v1889 = vpop.f32.mrf.mxu0
      %v1890 = vadd.f32 %v693, %v1889
      %1891 = vmatmul.f32.gmra.mxu0 %v904
      %v1892 = vpop.f32.mrf.mxu0
      %v1893 = vadd.f32 %v693, %v1892
      %1894 = vmatmul.f32.gmra.mxu0 %v907
      %v1895 = vpop.f32.mrf.mxu0
      %v1896 = vadd.f32 %v693, %v1895
      %1897 = vmatmul.f32.gmra.mxu0 %v910
      %v1898 = vpop.f32.mrf.mxu0
      %v1899 = vadd.f32 %v693, %v1898
      %1900 = vmatmul.f32.gmra.mxu0 %v913
      %v1901 = vpop.f32.mrf.mxu0
      %v1902 = vadd.f32 %v693, %v1901
      %1903 = vmatmul.f32.gmra.mxu0 %v916
      %v1904 = vpop.f32.mrf.mxu0
      %v1905 = vadd.f32 %v693, %v1904
      %1906 = vmatmul.f32.gmra.mxu0 %v919
      %v1907 = vpop.f32.mrf.mxu0
      %v1908 = vadd.f32 %v693, %v1907
      %1909 = vmatmul.f32.gmra.mxu0 %v922
      %v1910 = vpop.f32.mrf.mxu0
      %v1911 = vadd.f32 %v693, %v1910
      %1912 = vmatmul.f32.gmra.mxu0 %v925
      %v1913 = vpop.f32.mrf.mxu0
      %v1914 = vadd.f32 %v693, %v1913
      %1915 = vmatmul.f32.gmra.mxu0 %v928
      %v1916 = vpop.f32.mrf.mxu0
      %v1917 = vadd.f32 %v693, %v1916
      %1918 = vmatmul.f32.gmra.mxu0 %v931
      %v1919 = vpop.f32.mrf.mxu0
      %v1920 = vadd.f32 %v693, %v1919
      %1921 = vmatmul.f32.gmra.mxu0 %v934
      %v1922 = vpop.f32.mrf.mxu0
      %v1923 = vadd.f32 %v693, %v1922
      %1924 = vmatmul.f32.gmra.mxu0 %v937
      %v1925 = vpop.f32.mrf.mxu0
      %v1926 = vadd.f32 %v693, %v1925
      %1927 = vmatmul.f32.gmra.mxu0 %v940
      %v1928 = vpop.f32.mrf.mxu0
      %v1929 = vadd.f32 %v693, %v1928
      %1930 = vmatmul.f32.gmra.mxu0 %v943
      %v1931 = vpop.f32.mrf.mxu0
      %v1932 = vadd.f32 %v693, %v1931
      %1933 = vmatmul.f32.gmra.mxu0 %v946
      %v1934 = vpop.f32.mrf.mxu0
      %v1935 = vadd.f32 %v693, %v1934
      %1936 = vmatmul.f32.gmra.mxu0 %v949
      %v1937 = vpop.f32.mrf.mxu0
      %v1938 = vadd.f32 %v693, %v1937
      %1939 = vmatmul.f32.gmra.mxu0 %v952
      %v1940 = vpop.f32.mrf.mxu0
      %v1941 = vadd.f32 %v693, %v1940
      %1942 = vmatmul.f32.gmra.mxu0 %v955
      %v1943 = vpop.f32.mrf.mxu0
      %v1944 = vadd.f32 %v693, %v1943
      %1945 = vmatmul.f32.gmra.mxu0 %v958
      %v1946 = vpop.f32.mrf.mxu0
      %v1947 = vadd.f32 %v693, %v1946
      %1948 = vmatmul.f32.gmra.mxu0 %v961
      %v1949 = vpop.f32.mrf.mxu0
      %v1950 = vadd.f32 %v693, %v1949
      %1951 = vmatmul.f32.gmra.mxu0 %v964
      %v1952 = vpop.f32.mrf.mxu0
      %v1953 = vadd.f32 %v693, %v1952
      %1954 = vmatmul.f32.gmra.mxu0 %v967
      %v1955 = vpop.f32.mrf.mxu0
      %v1956 = vadd.f32 %v693, %v1955
      %1957 = vmatmul.f32.gmra.mxu0 %v970
      %v1958 = vpop.f32.mrf.mxu0
      %v1959 = vadd.f32 %v693, %v1958
      %1960 = vmatmul.f32.gmra.mxu0 %v973
      %v1961 = vpop.f32.mrf.mxu0
      %v1962 = vadd.f32 %v693, %v1961
      %1963 = vmatmul.f32.gmra.mxu0 %v976
      %v1964 = vpop.f32.mrf.mxu0
      %v1965 = vadd.f32 %v693, %v1964
      %1966 = vmatmul.f32.gmra.mxu0 %v979
      %v1967 = vpop.f32.mrf.mxu0
      %v1968 = vadd.f32 %v693, %v1967
      %1969 = vmatmul.f32.gmra.mxu0 %v982
      %v1970 = vpop.f32.mrf.mxu0
      %v1971 = vadd.f32 %v693, %v1970
      %1972 = vmatmul.f32.gmra.mxu0 %v985
      %v1973 = vpop.f32.mrf.mxu0
      %v1974 = vadd.f32 %v693, %v1973
      %1975 = vmatmul.f32.gmra.mxu0 %v988
      %v1976 = vpop.f32.mrf.mxu0
      %v1977 = vadd.f32 %v693, %v1976
      %1978 = vmatmul.f32.gmra.mxu0 %v991
      %v1979 = vpop.f32.mrf.mxu0
      %v1980 = vadd.f32 %v693, %v1979
      %1981 = vmatmul.f32.gmra.mxu0 %v994
      %v1982 = vpop.f32.mrf.mxu0
      %v1983 = vadd.f32 %v693, %v1982
      %1984 = vmatmul.f32.gmra.mxu0 %v997
      %v1985 = vpop.f32.mrf.mxu0
      %v1986 = vadd.f32 %v693, %v1985
      %1987 = vmatmul.f32.gmra.mxu0 %v1000
      %v1988 = vpop.f32.mrf.mxu0
      %v1989 = vadd.f32 %v693, %v1988
      %1990 = vmatmul.f32.gmra.mxu0 %v1003
      %v1991 = vpop.f32.mrf.mxu0
      %v1992 = vadd.f32 %v693, %v1991
      %1993 = vmatmul.f32.gmra.mxu0 %v1006
      %v1994 = vpop.f32.mrf.mxu0
      %v1995 = vadd.f32 %v693, %v1994
      %1996 = vmatmul.f32.gmra.mxu0 %v1009
      %v1997 = vpop.f32.mrf.mxu0
      %v1998 = vadd.f32 %v693, %v1997
      %1999 = vmatmul.f32.gmra.mxu0 %v1012
      %v2000 = vpop.f32.mrf.mxu0
      %v2001 = vadd.f32 %v693, %v2000
      %2002 = vmatmul.f32.gmra.mxu0 %v1015
      %v2003 = vpop.f32.mrf.mxu0
      %v2004 = vadd.f32 %v693, %v2003
      %2005 = vmatmul.f32.gmra.mxu0 %v1018
      %v2006 = vpop.f32.mrf.mxu0
      %v2007 = vadd.f32 %v693, %v2006
      %2008 = vmatmul.f32.gmra.mxu0 %v1021
      %v2009 = vpop.f32.mrf.mxu0
      %v2010 = vadd.f32 %v693, %v2009
      %2011 = vmatmul.f32.gmra.mxu0 %v1024
      %v2012 = vpop.f32.mrf.mxu0
      %v2013 = vadd.f32 %v693, %v2012
      %2014 = vmatmul.f32.gmra.mxu0 %v1027
      %v2015 = vpop.f32.mrf.mxu0
      %v2016 = vadd.f32 %v693, %v2015
      %2017 = vmatmul.f32.gmra.mxu0 %v1030
      %v2018 = vpop.f32.mrf.mxu0
      %v2019 = vadd.f32 %v693, %v2018
      %2020 = vmatmul.f32.gmra.mxu0 %v1033
      %v2021 = vpop.f32.mrf.mxu0
      %v2022 = vadd.f32 %v693, %v2021
      %2023 = vmatmul.f32.gmra.mxu0 %v1036
      %v2024 = vpop.f32.mrf.mxu0
      %v2025 = vadd.f32 %v693, %v2024
      %2026 = vmatmul.f32.gmra.mxu0 %v1039
      %v2027 = vpop.f32.mrf.mxu0
      %v2028 = vadd.f32 %v693, %v2027
      %2029 = vmatmul.f32.gmra.mxu0 %v1042
      %v2030 = vpop.f32.mrf.mxu0
      %v2031 = vadd.f32 %v693, %v2030
      %2032 = vmatmul.f32.gmra.mxu0 %v1045
      %v2033 = vpop.f32.mrf.mxu0
      %v2034 = vadd.f32 %v693, %v2033
      %2035 = vmatmul.f32.gmra.mxu0 %v1048
      %v2036 = vpop.f32.mrf.mxu0
      %v2037 = vadd.f32 %v693, %v2036
      %2038 = vmatmul.f32.gmra.mxu0 %v1051
      %v2039 = vpop.f32.mrf.mxu0
      %v2040 = vadd.f32 %v693, %v2039
      %2041 = vmatmul.f32.gmra.mxu0 %v1054
      %v2042 = vpop.f32.mrf.mxu0
      %v2043 = vadd.f32 %v693, %v2042
      %2044 = vmatmul.f32.gmra.mxu0 %v1057
      %v2045 = vpop.f32.mrf.mxu0
      %v2046 = vadd.f32 %v693, %v2045
      %2047 = vmatmul.f32.gmra.mxu0 %v1060
      %v2048 = vpop.f32.mrf.mxu0
      %v2049 = vadd.f32 %v693, %v2048
      %2050 = vmatmul.f32.gmra.mxu0 %v1063
      %v2051 = vpop.f32.mrf.mxu0
      %v2052 = vadd.f32 %v693, %v2051
      %2053 = vmatmul.f32.gmra.mxu0 %v1066
      %v2054 = vpop.f32.mrf.mxu0
      %v2055 = vadd.f32 %v693, %v2054
      %2056 = vmatmul.f32.gmra.mxu0 %v1069
      %v2057 = vpop.f32.mrf.mxu0
      %v2058 = vadd.f32 %v693, %v2057
      %2059 = vmatmul.f32.gmra.mxu0 %v1072
      %v2060 = vpop.f32.mrf.mxu0
      %v2061 = vadd.f32 %v693, %v2060
      %2062 = vmatmul.f32.gmra.mxu0 %v1075
      %v2063 = vpop.f32.mrf.mxu0
      %v2064 = vadd.f32 %v693, %v2063
      %2065 = vmatmul.f32.gmra.mxu0 %v1078
      %v2066 = vpop.f32.mrf.mxu0
      %v2067 = vadd.f32 %v693, %v2066
      %2068 = vmatmul.f32.gmra.mxu0 %v1081
      %v2069 = vpop.f32.mrf.mxu0
      %v2070 = vadd.f32 %v693, %v2069
      %2071 = vmatmul.f32.gmra.mxu0 %v1084
      %v2072 = vpop.f32.mrf.mxu0
      %v2073 = vadd.f32 %v693, %v2072
      %2074 = vmatmul.f32.gmra.mxu0 %v1087
      %v2075 = vpop.f32.mrf.mxu0
      %v2076 = vadd.f32 %v693, %v2075
      %2077 = vmatmul.f32.gmra.mxu0 %v1090
      %v2078 = vpop.f32.mrf.mxu0
      %v2079 = vadd.f32 %v693, %v2078
      %2080 = vmatmul.f32.gmra.mxu0 %v1093
      %v2081 = vpop.f32.mrf.mxu0
      %v2082 = vadd.f32 %v693, %v2081
      %2083 = vmatmul.f32.gmra.mxu0 %v1096
      %v2084 = vpop.f32.mrf.mxu0
      %v2085 = vadd.f32 %v693, %v2084
      %2086 = vmatmul.f32.gmra.mxu0 %v1099
      %v2087 = vpop.f32.mrf.mxu0
      %v2088 = vadd.f32 %v693, %v2087
      %2089 = vmatmul.f32.gmra.mxu0 %v1102
      %v2090 = vpop.f32.mrf.mxu0
      %v2091 = vadd.f32 %v693, %v2090
      %2092 = vmatmul.f32.gmra.mxu0 %v1105
      %v2093 = vpop.f32.mrf.mxu0
      %v2094 = vadd.f32 %v693, %v2093
      %2095 = vmatmul.f32.gmra.mxu0 %v1108
      %v2096 = vpop.f32.mrf.mxu0
      %v2097 = vadd.f32 %v693, %v2096
      %2098 = vmatmul.f32.gmra.mxu0 %v1111
      %v2099 = vpop.f32.mrf.mxu0
      %v2100 = vadd.f32 %v693, %v2099
      %2101 = vmatmul.f32.gmra.mxu0 %v1114
      %v2102 = vpop.f32.mrf.mxu0
      %v2103 = vadd.f32 %v693, %v2102
      %2104 = vmatmul.f32.gmra.mxu0 %v1117
      %v2105 = vpop.f32.mrf.mxu0
      %v2106 = vadd.f32 %v693, %v2105
      %2107 = vmatmul.f32.gmra.mxu0 %v1120
      %v2108 = vpop.f32.mrf.mxu0
      %v2109 = vadd.f32 %v693, %v2108
      %2110 = vmatmul.f32.gmra.mxu0 %v1123
      %v2111 = vpop.f32.mrf.mxu0
      %v2112 = vadd.f32 %v693, %v2111
      %2113 = vmatmul.f32.gmra.mxu0 %v1126
      %v2114 = vpop.f32.mrf.mxu0
      %v2115 = vadd.f32 %v693, %v2114
      %2116 = vmatmul.f32.gmra.mxu0 %v1129
      %v2117 = vpop.f32.mrf.mxu0
      %v2118 = vadd.f32 %v693, %v2117
      %2119 = vmatmul.f32.gmra.mxu0 %v1132
      %v2120 = vpop.f32.mrf.mxu0
      %v2121 = vadd.f32 %v693, %v2120
      %2122 = vmatmul.f32.gmra.mxu0 %v1135
      %v2123 = vpop.f32.mrf.mxu0
      %v2124 = vadd.f32 %v693, %v2123
      %2125 = vmatmul.f32.gmra.mxu0 %v1138
      %v2126 = vpop.f32.mrf.mxu0
      %v2127 = vadd.f32 %v693, %v2126
      %2128 = vmatmul.f32.gmra.mxu0 %v1141
      %v2129 = vpop.f32.mrf.mxu0
      %v2130 = vadd.f32 %v693, %v2129
      %2131 = vmatmul.f32.gmra.mxu0 %v1144
      %v2132 = vpop.f32.mrf.mxu0
      %v2133 = vadd.f32 %v693, %v2132
      %2134 = vmatmul.f32.gmra.mxu0 %v1147
      %v2135 = vpop.f32.mrf.mxu0
      %v2136 = vadd.f32 %v693, %v2135
      %2137 = vmatmul.f32.gmra.mxu0 %v1150
      %v2138 = vpop.f32.mrf.mxu0
      %v2139 = vadd.f32 %v693, %v2138
      %2140 = vmatmul.f32.gmra.mxu0 %v1153
      %v2141 = vpop.f32.mrf.mxu0
      %v2142 = vadd.f32 %v693, %v2141
      %2143 = vmatmul.f32.gmra.mxu0 %v1156
      %v2144 = vpop.f32.mrf.mxu0
      %v2145 = vadd.f32 %v693, %v2144
      %2146 = vmatmul.f32.gmra.mxu0 %v1159
      %v2147 = vpop.f32.mrf.mxu0
      %v2148 = vadd.f32 %v693, %v2147
      %2149 = vmatmul.f32.gmra.mxu0 %v1162
      %v2150 = vpop.f32.mrf.mxu0
      %v2151 = vadd.f32 %v693, %v2150
      %2152 = vmatmul.f32.gmra.mxu0 %v1165
      %v2153 = vpop.f32.mrf.mxu0
      %v2154 = vadd.f32 %v693, %v2153
      %2155 = vmatmul.f32.gmra.mxu0 %v1168
      %v2156 = vpop.f32.mrf.mxu0
      %v2157 = vadd.f32 %v693, %v2156
      %2158 = vmatmul.f32.gmra.mxu0 %v1171
      %v2159 = vpop.f32.mrf.mxu0
      %v2160 = vadd.f32 %v693, %v2159
      %2161 = vmatmul.f32.gmra.mxu0 %v1174
      %v2162 = vpop.f32.mrf.mxu0
      %v2163 = vadd.f32 %v693, %v2162
      %2164 = vmatmul.f32.gmra.mxu0 %v1177
      %v2165 = vpop.f32.mrf.mxu0
      %v2166 = vadd.f32 %v693, %v2165
      %2167 = vmatmul.f32.gmra.mxu0 %v1180
      %v2168 = vpop.f32.mrf.mxu0
      %v2169 = vadd.f32 %v693, %v2168
      %2170 = vmatmul.f32.gmra.mxu0 %v1183
      %v2171 = vpop.f32.mrf.mxu0
      %v2172 = vadd.f32 %v693, %v2171
      %2173 = vmatmul.f32.gmra.mxu0 %v1186
      %v2174 = vpop.f32.mrf.mxu0
      %v2175 = vadd.f32 %v693, %v2174
      %2176 = vmatmul.f32.gmra.mxu0 %v1189
      %v2177 = vpop.f32.mrf.mxu0
      %v2178 = vadd.f32 %v693, %v2177
      %2179 = vmatmul.f32.gmra.mxu0 %v1192
      %v2180 = vpop.f32.mrf.mxu0
      %v2181 = vadd.f32 %v693, %v2180
      %2182 = vmatmul.f32.gmra.mxu0 %v1195
      %v2183 = vpop.f32.mrf.mxu0
      %v2184 = vadd.f32 %v693, %v2183
      %2185 = vmatmul.f32.gmra.mxu0 %v1198
      %v2186 = vpop.f32.mrf.mxu0
      %v2187 = vadd.f32 %v693, %v2186
      %2188 = vmatmul.f32.gmra.mxu0 %v1201
      %v2189 = vpop.f32.mrf.mxu0
      %v2190 = vadd.f32 %v693, %v2189
      %2191 = vmatmul.f32.gmra.mxu0 %v1204
      %v2192 = vpop.f32.mrf.mxu0
      %v2193 = vadd.f32 %v693, %v2192
      %2194 = vmatmul.f32.gmra.mxu0 %v1207
      %v2195 = vpop.f32.mrf.mxu0
      %v2196 = vadd.f32 %v693, %v2195
      %2197 = vmatmul.f32.gmra.mxu0 %v1210
      %v2198 = vpop.f32.mrf.mxu0
      %v2199 = vadd.f32 %v693, %v2198
      %2200 = vmatmul.f32.gmra.mxu0 %v1213
      %v2201 = vpop.f32.mrf.mxu0
      %v2202 = vadd.f32 %v693, %v2201
      %2203 = vmatmul.f32.gmra.mxu0 %v1216
      %v2204 = vpop.f32.mrf.mxu0
      %v2205 = vadd.f32 %v693, %v2204
      %2206 = vmatmul.f32.gmra.mxu0 %v1219
      %v2207 = vpop.f32.mrf.mxu0
      %v2208 = vadd.f32 %v693, %v2207
      %2209 = vmatmul.f32.gmra.mxu0 %v1222
      %v2210 = vpop.f32.mrf.mxu0
      %v2211 = vadd.f32 %v693, %v2210
      %2212 = vmatmul.f32.gmra.mxu0 %v1225
      %v2213 = vpop.f32.mrf.mxu0
      %v2214 = vadd.f32 %v693, %v2213
      %2215 = vmatmul.f32.gmra.mxu0 %v1228
      %v2216 = vpop.f32.mrf.mxu0
      %v2217 = vadd.f32 %v693, %v2216
      %2218 = vmatmul.f32.gmra.mxu0 %v1231
      %v2219 = vpop.f32.mrf.mxu0
      %v2220 = vadd.f32 %v693, %v2219
      %2221 = vmatmul.f32.gmra.mxu0 %v1234
      %v2222 = vpop.f32.mrf.mxu0
      %v2223 = vadd.f32 %v693, %v2222
      %2224 = vmatmul.f32.gmra.mxu0 %v1237
      %v2225 = vpop.f32.mrf.mxu0
      %v2226 = vadd.f32 %v693, %v2225
      %2227 = vmatmul.f32.gmra.mxu0 %v1240
      %v2228 = vpop.f32.mrf.mxu0
      %v2229 = vadd.f32 %v693, %v2228
      %2230 = vmatmul.f32.gmra.mxu0 %v1243
      %v2231 = vpop.f32.mrf.mxu0
      %v2232 = vadd.f32 %v693, %v2231
      %2233 = vmatmul.f32.gmra.mxu0 %v1246
      %v2234 = vpop.f32.mrf.mxu0
      %v2235 = vadd.f32 %v693, %v2234
      %2236 = vmatmul.f32.gmra.mxu0 %v1249
      %v2237 = vpop.f32.mrf.mxu0
      %v2238 = vadd.f32 %v693, %v2237
      %2239 = vmatmul.f32.gmra.mxu0 %v1252
      %v2240 = vpop.f32.mrf.mxu0
      %v2241 = vadd.f32 %v693, %v2240
      %2242 = vmatmul.f32.gmra.mxu0 %v1255
      %v2243 = vpop.f32.mrf.mxu0
      %v2244 = vadd.f32 %v693, %v2243
      %2245 = vmatmul.f32.gmra.mxu0 %v1258
      %v2246 = vpop.f32.mrf.mxu0
      %v2247 = vadd.f32 %v693, %v2246
      %2248 = vmatmul.f32.gmra.mxu0 %v1261
      %v2249 = vpop.f32.mrf.mxu0
      %v2250 = vadd.f32 %v693, %v2249
      %2251 = vmatmul.f32.gmra.mxu0 %v1264
      %v2252 = vpop.f32.mrf.mxu0
      %v2253 = vadd.f32 %v693, %v2252
      %2254 = vmatmul.f32.gmra.mxu0 %v1267
      %v2255 = vpop.f32.mrf.mxu0
      %v2256 = vadd.f32 %v693, %v2255
      %2257 = vmatmul.f32.gmra.mxu0 %v1270
      %v2258 = vpop.f32.mrf.mxu0
      %v2259 = vadd.f32 %v693, %v2258
      %2260 = vmatmul.f32.gmra.mxu0 %v1273
      %v2261 = vpop.f32.mrf.mxu0
      %v2262 = vadd.f32 %v693, %v2261
      %2263 = vmatmul.f32.gmra.mxu0 %v1276
      %v2264 = vpop.f32.mrf.mxu0
      %v2265 = vadd.f32 %v693, %v2264
      %2266 = vmatmul.f32.gmra.mxu0 %v1279
      %v2267 = vpop.f32.mrf.mxu0
      %v2268 = vadd.f32 %v693, %v2267
      %2269 = vmatmul.f32.gmra.mxu0 %v1282
      %v2270 = vpop.f32.mrf.mxu0
      %v2271 = vadd.f32 %v693, %v2270
      %2272 = vmatmul.f32.gmra.mxu0 %v1285
      %v2273 = vpop.f32.mrf.mxu0
      %v2274 = vadd.f32 %v693, %v2273
      %2275 = vmatmul.f32.gmra.mxu0 %v1288
      %v2276 = vpop.f32.mrf.mxu0
      %v2277 = vadd.f32 %v693, %v2276
      %2278 = vmatmul.f32.gmra.mxu0 %v1291
      %v2279 = vpop.f32.mrf.mxu0
      %v2280 = vadd.f32 %v693, %v2279
      %2281 = vmatmul.f32.gmra.mxu0 %v1294
      %v2282 = vpop.f32.mrf.mxu0
      %v2283 = vadd.f32 %v693, %v2282
      %2284 = vmatmul.f32.gmra.mxu0 %v1297
      %v2285 = vpop.f32.mrf.mxu0
      %v2286 = vadd.f32 %v693, %v2285
      %2287 = vmatmul.f32.gmra.mxu0 %v1300
      %v2288 = vpop.f32.mrf.mxu0
      %v2289 = vadd.f32 %v693, %v2288
      %2290 = vmatmul.f32.gmra.mxu0 %v1303
      %v2291 = vpop.f32.mrf.mxu0
      %v2292 = vadd.f32 %v693, %v2291
      %2293 = vmatmul.f32.gmra.mxu0 %v1306
      %v2294 = vpop.f32.mrf.mxu0
      %v2295 = vadd.f32 %v693, %v2294
      %2296 = vmatmul.f32.gmra.mxu0 %v1309
      %v2297 = vpop.f32.mrf.mxu0
      %v2298 = vadd.f32 %v693, %v2297
      %2299 = vmatmul.f32.gmra.mxu0 %v1312
      %v2300 = vpop.f32.mrf.mxu0
      %v2301 = vadd.f32 %v693, %v2300
      %2302 = vmatmul.f32.gmra.mxu0 %v1315
      %v2303 = vpop.f32.mrf.mxu0
      %v2304 = vadd.f32 %v693, %v2303
      %2305 = vmatmul.f32.gmra.mxu0 %v1318
      %v2306 = vpop.f32.mrf.mxu0
      %v2307 = vadd.f32 %v693, %v2306
      %2308 = vmatmul.f32.gmra.mxu0 %v1321
      %v2309 = vpop.f32.mrf.mxu0
      %v2310 = vadd.f32 %v693, %v2309
      %2311 = vmatmul.f32.gmra.mxu0 %v1324
      %v2312 = vpop.f32.mrf.mxu0
      %v2313 = vadd.f32 %v693, %v2312
      %2314 = vmatmul.f32.gmra.mxu0 %v1327
      %v2315 = vpop.f32.mrf.mxu0
      %v2316 = vadd.f32 %v693, %v2315
      %2317 = vmatmul.f32.gmra.mxu0 %v1330
      %v2318 = vpop.f32.mrf.mxu0
      %v2319 = vadd.f32 %v693, %v2318
      %2320 = vmatmul.f32.gmra.mxu0 %v1333
      %v2321 = vpop.f32.mrf.mxu0
      %v2322 = vadd.f32 %v693, %v2321
      %2323 = vmatmul.f32.gmra.mxu0 %v1336
      %v2324 = vpop.f32.mrf.mxu0
      %v2325 = vadd.f32 %v693, %v2324
      %2326 = vmatmul.f32.gmra.mxu0 %v1339
      %v2327 = vpop.f32.mrf.mxu0
      %v2328 = vadd.f32 %v693, %v2327
      %2329 = vmatmul.f32.gmra.mxu0 %v1342
      %v2330 = vpop.f32.mrf.mxu0
      %v2331 = vadd.f32 %v693, %v2330
      %2332 = vmatmul.f32.gmra.mxu0 %v1345
      %v2333 = vpop.f32.mrf.mxu0
      %v2334 = vadd.f32 %v693, %v2333
      %2335 = vmatmul.f32.gmra.mxu0 %v1348
      %v2336 = vpop.f32.mrf.mxu0
      %v2337 = vadd.f32 %v693, %v2336
      %2338 = vmatmul.f32.gmra.mxu0 %v1351
      %v2339 = vpop.f32.mrf.mxu0
      %v2340 = vadd.f32 %v693, %v2339
      %2341 = vmatmul.f32.gmra.mxu0 %v1354
      %v2342 = vpop.f32.mrf.mxu0
      %v2343 = vadd.f32 %v693, %v2342
      %2344 = vmatmul.f32.gmra.mxu0 %v1357
      %v2345 = vpop.f32.mrf.mxu0
      %v2346 = vadd.f32 %v693, %v2345
      %2347 = vmatmul.f32.gmra.mxu0 %v1360
      %v2348 = vpop.f32.mrf.mxu0
      %v2349 = vadd.f32 %v693, %v2348
      %2350 = vmatmul.f32.gmra.mxu0 %v1363
      %v2351 = vpop.f32.mrf.mxu0
      %v2352 = vadd.f32 %v693, %v2351
      %2353 = vmatmul.f32.gmra.mxu0 %v1366
      %v2354 = vpop.f32.mrf.mxu0
      %v2355 = vadd.f32 %v693, %v2354
      %2356 = vmatmul.f32.gmra.mxu0 %v1369
      %v2357 = vpop.f32.mrf.mxu0
      %v2358 = vadd.f32 %v693, %v2357
      %2359 = vmatmul.f32.gmra.mxu0 %v1372
      %v2360 = vpop.f32.mrf.mxu0
      %v2361 = vadd.f32 %v693, %v2360
      %2362 = vmatmul.f32.gmra.mxu0 %v1375
      %v2363 = vpop.f32.mrf.mxu0
      %v2364 = vadd.f32 %v693, %v2363
      %2365 = vmatmul.f32.gmra.mxu0 %v1378
      %v2366 = vpop.f32.mrf.mxu0
      %v2367 = vadd.f32 %v693, %v2366
      %2368 = vmatmul.f32.gmra.mxu0 %v1381
      %v2369 = vpop.f32.mrf.mxu0
      %v2370 = vadd.f32 %v693, %v2369
      %2371 = vmatmul.f32.gmra.mxu0 %v1384
      %v2372 = vpop.f32.mrf.mxu0
      %v2373 = vadd.f32 %v693, %v2372
      %2374 = vmatmul.f32.gmra.mxu0 %v1387
      %v2375 = vpop.f32.mrf.mxu0
      %v2376 = vadd.f32 %v693, %v2375
      %2377 = vmatmul.f32.gmra.mxu0 %v1390
      %v2378 = vpop.f32.mrf.mxu0
      %v2379 = vadd.f32 %v693, %v2378
      %2380 = vmatmul.f32.gmra.mxu0 %v1393
      %v2381 = vpop.f32.mrf.mxu0
      %v2382 = vadd.f32 %v693, %v2381
      %2383 = vmatmul.f32.gmra.mxu0 %v1396
      %v2384 = vpop.f32.mrf.mxu0
      %v2385 = vadd.f32 %v693, %v2384
      %2386 = vmatmul.f32.gmra.mxu0 %v1399
      %v2387 = vpop.f32.mrf.mxu0
      %v2388 = vadd.f32 %v693, %v2387
      %2389 = vmatmul.f32.gmra.mxu0 %v1402
      %v2390 = vpop.f32.mrf.mxu0
      %v2391 = vadd.f32 %v693, %v2390
      %2392 = vmatmul.f32.gmra.mxu0 %v1405
      %v2393 = vpop.f32.mrf.mxu0
      %v2394 = vadd.f32 %v693, %v2393
      %2395 = vmatmul.f32.gmra.mxu0 %v1408
      %v2396 = vpop.f32.mrf.mxu0
      %v2397 = vadd.f32 %v693, %v2396
      %2398 = vmatmul.f32.gmra.mxu0 %v1411
      %v2399 = vpop.f32.mrf.mxu0
      %v2400 = vadd.f32 %v693, %v2399
      %2401 = vmatmul.f32.gmra.mxu0 %v1414
      %v2402 = vpop.f32.mrf.mxu0
      %v2403 = vadd.f32 %v693, %v2402
      %2404 = vmatmul.f32.gmra.mxu0 %v1417
      %v2405 = vpop.f32.mrf.mxu0
      %v2406 = vadd.f32 %v693, %v2405
      %2407 = vmatmul.f32.gmra.mxu0 %v1420
      %v2408 = vpop.f32.mrf.mxu0
      %v2409 = vadd.f32 %v693, %v2408
      %2410 = vmatmul.f32.gmra.mxu0 %v1423
      %v2411 = vpop.f32.mrf.mxu0
      %v2412 = vadd.f32 %v693, %v2411
      %2413 = vmatmul.f32.gmra.mxu0 %v1426
      %v2414 = vpop.f32.mrf.mxu0
      %v2415 = vadd.f32 %v693, %v2414
      %2416 = vmatmul.f32.gmra.mxu0 %v1429
      %v2417 = vpop.f32.mrf.mxu0
      %v2418 = vadd.f32 %v693, %v2417
      %2419 = vmatmul.f32.gmra.mxu0 %v1432
      %v2420 = vpop.f32.mrf.mxu0
      %v2421 = vadd.f32 %v693, %v2420
      %2422 = vmatmul.f32.gmra.mxu0 %v1435
      %v2423 = vpop.f32.mrf.mxu0
      %v2424 = vadd.f32 %v693, %v2423
      %2425 = vmatmul.f32.gmra.mxu0 %v1438
      %v2426 = vpop.f32.mrf.mxu0
      %v2427 = vadd.f32 %v693, %v2426
      %2428 = vmatmul.f32.gmra.mxu0 %v1441
      %v2429 = vpop.f32.mrf.mxu0
      %v2430 = vadd.f32 %v693, %v2429
      %2431 = vmatmul.f32.gmra.mxu0 %v1444
      %v2432 = vpop.f32.mrf.mxu0
      %v2433 = vadd.f32 %v693, %v2432
      %2434 = vmatmul.f32.gmra.mxu0 %v1447
      %v2435 = vpop.f32.mrf.mxu0
      %v2436 = vadd.f32 %v693, %v2435
      %2437 = vmatmul.f32.gmra.mxu0 %v1450
      %v2438 = vpop.f32.mrf.mxu0
      %v2439 = vadd.f32 %v693, %v2438
      %2440 = vmatmul.f32.gmra.mxu0 %v1453
      %v2441 = vpop.f32.mrf.mxu0
      %v2442 = vadd.f32 %v693, %v2441
      %2443 = vmatmul.f32.gmra.mxu0 %v1456
      %v2444 = vpop.f32.mrf.mxu0
      %v2445 = vadd.f32 %v693, %v2444
      %2446 = vmatmul.f32.gmra.mxu0 %v1459
      %v2447 = vpop.f32.mrf.mxu0
      %v2448 = vadd.f32 %v693, %v2447
      %2449 = vmatmul.f32.gmra.mxu0 %v1462
      %v2450 = vpop.f32.mrf.mxu0
      %v2451 = vadd.f32 %v693, %v2450
      %2452 = vmatmul.f32.gmra.mxu0 %v1465
      %v2453 = vpop.f32.mrf.mxu0
      %v2454 = vadd.f32 %v693, %v2453
      %2455 = vmatmul.f32.gmra.mxu0 %v1468
      %v2456 = vpop.f32.mrf.mxu0
      %v2457 = vadd.f32 %v693, %v2456
      %2458 = vmatmul.f32.gmra.mxu0 %v1471
      %v2459 = vpop.f32.mrf.mxu0
      %v2460 = vadd.f32 %v693, %v2459
      %2461 = vmatmul.f32.gmra.mxu0 %v1474
      %v2462 = vpop.f32.mrf.mxu0
      %v2463 = vadd.f32 %v693, %v2462
      %2464 = vmatmul.f32.gmra.mxu0 %v1477
      %v2465 = vpop.f32.mrf.mxu0
      %v2466 = vadd.f32 %v693, %v2465
      %2467 = vmatmul.f32.gmra.mxu0 %v1480
      %v2468 = vpop.f32.mrf.mxu0
      %v2469 = vadd.f32 %v693, %v2468
      %2470 = vmatmul.f32.gmra.mxu0 %v1483
      %v2471 = vpop.f32.mrf.mxu0
      %v2472 = vadd.f32 %v693, %v2471
      %2473 = vmatmul.f32.gmra.mxu0 %v1486
      %v2474 = vpop.f32.mrf.mxu0
      %v2475 = vadd.f32 %v693, %v2474
      %2476 = vmatmul.f32.gmra.mxu0 %v1489
      %v2477 = vpop.f32.mrf.mxu0
      %v2478 = vadd.f32 %v693, %v2477
      %2479 = vmatmul.f32.gmra.mxu0 %v1492
      %v2480 = vpop.f32.mrf.mxu0
      %v2481 = vadd.f32 %v693, %v2480
      %2482 = vmatmul.f32.gmra.mxu0 %v1495
      %v2483 = vpop.f32.mrf.mxu0
      %v2484 = vadd.f32 %v693, %v2483
      %2485 = vmatmul.f32.gmra.mxu0 %v1498
      %v2486 = vpop.f32.mrf.mxu0
      %v2487 = vadd.f32 %v693, %v2486
      %2488 = vmatmul.f32.gmra.mxu0 %v1501
      %v2489 = vpop.f32.mrf.mxu0
      %v2490 = vadd.f32 %v693, %v2489
      %2491 = vmatmul.f32.gmra.mxu0 %v1504
      %v2492 = vpop.f32.mrf.mxu0
      %v2493 = vadd.f32 %v693, %v2492
      %2494 = vmatmul.f32.gmra.mxu0 %v1507
      %v2495 = vpop.f32.mrf.mxu0
      %v2496 = vadd.f32 %v693, %v2495
      %2497 = vmatmul.f32.gmra.mxu0 %v1510
      %v2498 = vpop.f32.mrf.mxu0
      %v2499 = vadd.f32 %v693, %v2498
      %2500 = vmatmul.f32.gmra.mxu0 %v1513
      %v2501 = vpop.f32.mrf.mxu0
      %v2502 = vadd.f32 %v693, %v2501
      %2503 = vmatmul.f32.gmra.mxu0 %v1516
      %v2504 = vpop.f32.mrf.mxu0
      %v2505 = vadd.f32 %v693, %v2504
      %2506 = vmatmul.f32.gmra.mxu0 %v1519
      %v2507 = vpop.f32.mrf.mxu0
      %v2508 = vadd.f32 %v693, %v2507
      %2509 = vmatmul.f32.gmra.mxu0 %v1522
      %v2510 = vpop.f32.mrf.mxu0
      %v2511 = vadd.f32 %v693, %v2510
      %2512 = vmatmul.f32.gmra.mxu0 %v1525
      %v2513 = vpop.f32.mrf.mxu0
      %v2514 = vadd.f32 %v693, %v2513
      %2515 = vmatmul.f32.gmra.mxu0 %v1528
      %v2516 = vpop.f32.mrf.mxu0
      %v2517 = vadd.f32 %v693, %v2516
      %2518 = vmatmul.f32.gmra.mxu0 %v1531
      %v2519 = vpop.f32.mrf.mxu0
      %v2520 = vadd.f32 %v693, %v2519
      %2521 = vmatmul.f32.gmra.mxu0 %v1534
      %v2522 = vpop.f32.mrf.mxu0
      %v2523 = vadd.f32 %v693, %v2522
      %2524 = vmatmul.f32.gmra.mxu0 %v1537
      %v2525 = vpop.f32.mrf.mxu0
      %v2526 = vadd.f32 %v693, %v2525
      %2527 = vmatmul.f32.gmra.mxu0 %v1540
      %v2528 = vpop.f32.mrf.mxu0
      %v2529 = vadd.f32 %v693, %v2528
      %2530 = vmatmul.f32.gmra.mxu0 %v1543
      %v2531 = vpop.f32.mrf.mxu0
      %v2532 = vadd.f32 %v693, %v2531
      %2533 = vmatmul.f32.gmra.mxu0 %v1546
      %v2534 = vpop.f32.mrf.mxu0
      %v2535 = vadd.f32 %v693, %v2534
      %2536 = vmatmul.f32.gmra.mxu0 %v1549
      %v2537 = vpop.f32.mrf.mxu0
      %v2538 = vadd.f32 %v693, %v2537
      %2539 = vmatmul.f32.gmra.mxu0 %v1552
      %v2540 = vpop.f32.mrf.mxu0
      %v2541 = vadd.f32 %v693, %v2540
      %2542 = vmatmul.f32.gmra.mxu0 %v1555
      %v2543 = vpop.f32.mrf.mxu0
      %v2544 = vadd.f32 %v693, %v2543
      %2545 = vmatmul.f32.gmra.mxu0 %v1558
      %v2546 = vpop.f32.mrf.mxu0
      %v2547 = vadd.f32 %v693, %v2546
      %2548 = vmatmul.f32.gmra.mxu0 %v1561
      %v2549 = vpop.f32.mrf.mxu0
      %v2550 = vadd.f32 %v693, %v2549
      %2551 = vmatmul.f32.gmra.mxu0 %v1564
      %v2552 = vpop.f32.mrf.mxu0
      %v2553 = vadd.f32 %v693, %v2552
      %2554 = vmatmul.f32.gmra.mxu0 %v1567
      %v2555 = vpop.f32.mrf.mxu0
      %v2556 = vadd.f32 %v693, %v2555
      %2557 = vmatmul.f32.gmra.mxu0 %v1570
      %v2558 = vpop.f32.mrf.mxu0
      %v2559 = vadd.f32 %v693, %v2558
      %2560 = vmatmul.f32.gmra.mxu0 %v1573
      %v2561 = vpop.f32.mrf.mxu0
      %v2562 = vadd.f32 %v693, %v2561
      %2563 = vmatmul.f32.gmra.mxu0 %v1576
      %v2564 = vpop.f32.mrf.mxu0
      %v2565 = vadd.f32 %v693, %v2564
      %2566 = vmatmul.f32.gmra.mxu0 %v1579
      %v2567 = vpop.f32.mrf.mxu0
      %v2568 = vadd.f32 %v693, %v2567
      %2569 = vmatmul.f32.gmra.mxu0 %v1582
      %v2570 = vpop.f32.mrf.mxu0
      %v2571 = vadd.f32 %v693, %v2570
      %2572 = vmatmul.f32.gmra.mxu0 %v1585
      %v2573 = vpop.f32.mrf.mxu0
      %v2574 = vadd.f32 %v693, %v2573
      %2575 = vmatmul.f32.gmra.mxu0 %v1588
      %v2576 = vpop.f32.mrf.mxu0
      %v2577 = vadd.f32 %v693, %v2576
      %2578 = vmatmul.f32.gmra.mxu0 %v1591
      %v2579 = vpop.f32.mrf.mxu0
      %v2580 = vadd.f32 %v693, %v2579
      %2581 = vmatmul.f32.gmra.mxu0 %v1594
      %v2582 = vpop.f32.mrf.mxu0
      %v2583 = vadd.f32 %v693, %v2582
      %2584 = vmatmul.f32.gmra.mxu0 %v1597
      %v2585 = vpop.f32.mrf.mxu0
      %v2586 = vadd.f32 %v693, %v2585
      %2587 = vmatmul.f32.gmra.mxu0 %v1600
      %v2588 = vpop.f32.mrf.mxu0
      %v2589 = vadd.f32 %v693, %v2588
      %2590 = vmatmul.f32.gmra.mxu0 %v1603
      %v2591 = vpop.f32.mrf.mxu0
      %v2592 = vadd.f32 %v693, %v2591
      %2593 = vmatmul.f32.gmra.mxu0 %v1606
      %v2594 = vpop.f32.mrf.mxu0
      %v2595 = vadd.f32 %v693, %v2594
      %2596 = vmatmul.f32.gmra.mxu0 %v1609
      %v2597 = vpop.f32.mrf.mxu0
      %v2598 = vadd.f32 %v693, %v2597
      %2599 = vmatmul.f32.gmra.mxu0 %v1612
      %v2600 = vpop.f32.mrf.mxu0
      %v2601 = vadd.f32 %v693, %v2600
      %2602 = vmatmul.f32.gmra.mxu0 %v1615
      %v2603 = vpop.f32.mrf.mxu0
      %v2604 = vadd.f32 %v693, %v2603
      %2605 = vmatmul.f32.gmra.mxu0 %v1618
      %v2606 = vpop.f32.mrf.mxu0
      %v2607 = vadd.f32 %v693, %v2606
      %2608 = vmatmul.f32.gmra.mxu0 %v1621
      %v2609 = vpop.f32.mrf.mxu0
      %v2610 = vadd.f32 %v693, %v2609
      %2611 = vmatmul.f32.gmra.mxu0 %v1624
      %v2612 = vpop.f32.mrf.mxu0
      %v2613 = vadd.f32 %v693, %v2612
      %2614 = vmatmul.f32.gmra.mxu0 %v1627
      %v2615 = vpop.f32.mrf.mxu0
      %v2616 = vadd.f32 %v693, %v2615
      %2617 = vmatmul.f32.gmra.mxu0 %v1630
      %v2618 = vpop.f32.mrf.mxu0
      %v2619 = vadd.f32 %v693, %v2618
      %2620 = vmatmul.f32.gmra.mxu0 %v1633
      %v2621 = vpop.f32.mrf.mxu0
      %v2622 = vadd.f32 %v693, %v2621
      %2623 = vmatmul.f32.gmra.mxu0 %v1636
      %v2624 = vpop.f32.mrf.mxu0
      %v2625 = vadd.f32 %v693, %v2624
      %2626 = vmatmul.f32.gmra.mxu0 %v1639
      %v2627 = vpop.f32.mrf.mxu0
      %v2628 = vadd.f32 %v693, %v2627
      %2629 = vmatmul.f32.gmra.mxu0 %v1642
      %v2630 = vpop.f32.mrf.mxu0
      %v2631 = vadd.f32 %v693, %v2630
      %2632 = vmatmul.f32.gmra.mxu0 %v1645
      %v2633 = vpop.f32.mrf.mxu0
      %v2634 = vadd.f32 %v693, %v2633
      %2635 = vmatmul.f32.gmra.mxu0 %v1648
      %v2636 = vpop.f32.mrf.mxu0
      %v2637 = vadd.f32 %v693, %v2636
      %2638 = vmatmul.f32.gmra.mxu0 %v1651
      %v2639 = vpop.f32.mrf.mxu0
      %v2640 = vadd.f32 %v693, %v2639
      %2641 = vmatmul.f32.gmra.mxu0 %v1654
      %v2642 = vpop.f32.mrf.mxu0
      %v2643 = vadd.f32 %v693, %v2642
      %2644 = vmatmul.f32.gmra.mxu0 %v1657
      %v2645 = vpop.f32.mrf.mxu0
      %v2646 = vadd.f32 %v693, %v2645
      %2647 = vmatmul.f32.gmra.mxu0 %v1660
      %v2648 = vpop.f32.mrf.mxu0
      %v2649 = vadd.f32 %v693, %v2648
      %2650 = vmatmul.f32.gmra.mxu0 %v1663
      %v2651 = vpop.f32.mrf.mxu0
      %v2652 = vadd.f32 %v693, %v2651
      %2653 = vmatmul.f32.gmra.mxu0 %v1666
      %v2654 = vpop.f32.mrf.mxu0
      %v2655 = vadd.f32 %v693, %v2654
      %2656 = vdwg.mxu0
      %v2657 = vmax.f32 %v1686, 0.0
      %v2658 = vmax.f32 %v1689, 0.0
      %v2659 = vmax.f32 %v1692, 0.0
      %v2660 = vmax.f32 %v1695, 0.0
      %v2661 = vmax.f32 %v1698, 0.0
      %v2662 = vmax.f32 %v1701, 0.0
      %v2663 = vmax.f32 %v1704, 0.0
      %v2664 = vmax.f32 %v1707, 0.0
      %v2665 = vmax.f32 %v1710, 0.0
      %v2666 = vmax.f32 %v1713, 0.0
      %v2667 = vmax.f32 %v1716, 0.0
      %v2668 = vmax.f32 %v1719, 0.0
      %v2669 = vmax.f32 %v1722, 0.0
      %v2670 = vmax.f32 %v1725, 0.0
      %v2671 = vmax.f32 %v1728, 0.0
      %v2672 = vmax.f32 %v1731, 0.0
      %v2673 = vmax.f32 %v1734, 0.0
      %v2674 = vmax.f32 %v1737, 0.0
      %v2675 = vmax.f32 %v1740, 0.0
      %v2676 = vmax.f32 %v1743, 0.0
      %v2677 = vmax.f32 %v1746, 0.0
      %v2678 = vmax.f32 %v1749, 0.0
      %v2679 = vmax.f32 %v1752, 0.0
      %v2680 = vmax.f32 %v1755, 0.0
      %v2681 = vmax.f32 %v1758, 0.0
      %v2682 = vmax.f32 %v1761, 0.0
      %v2683 = vmax.f32 %v1764, 0.0
      %v2684 = vmax.f32 %v1767, 0.0
      %v2685 = vmax.f32 %v1770, 0.0
      %v2686 = vmax.f32 %v1773, 0.0
      %v2687 = vmax.f32 %v1776, 0.0
      %v2688 = vmax.f32 %v1779, 0.0
      %v2689 = vmax.f32 %v1782, 0.0
      %v2690 = vmax.f32 %v1785, 0.0
      %v2691 = vmax.f32 %v1788, 0.0
      %v2692 = vmax.f32 %v1791, 0.0
      %v2693 = vmax.f32 %v1794, 0.0
      %v2694 = vmax.f32 %v1797, 0.0
      %v2695 = vmax.f32 %v1800, 0.0
      %v2696 = vmax.f32 %v1803, 0.0
      %v2697 = vmax.f32 %v1806, 0.0
      %v2698 = vmax.f32 %v1809, 0.0
      %v2699 = vmax.f32 %v1812, 0.0
      %v2700 = vmax.f32 %v1815, 0.0
      %v2701 = vmax.f32 %v1818, 0.0
      %v2702 = vmax.f32 %v1821, 0.0
      %v2703 = vmax.f32 %v1824, 0.0
      %v2704 = vmax.f32 %v1827, 0.0
      %v2705 = vmax.f32 %v1830, 0.0
      %v2706 = vmax.f32 %v1833, 0.0
      %v2707 = vmax.f32 %v1836, 0.0
      %v2708 = vmax.f32 %v1839, 0.0
      %v2709 = vmax.f32 %v1842, 0.0
      %v2710 = vmax.f32 %v1845, 0.0
      %v2711 = vmax.f32 %v1848, 0.0
      %v2712 = vmax.f32 %v1851, 0.0
      %v2713 = vmax.f32 %v1854, 0.0
      %v2714 = vmax.f32 %v1857, 0.0
      %v2715 = vmax.f32 %v1860, 0.0
      %v2716 = vmax.f32 %v1863, 0.0
      %v2717 = vmax.f32 %v1866, 0.0
      %v2718 = vmax.f32 %v1869, 0.0
      %v2719 = vmax.f32 %v1872, 0.0
      %v2720 = vmax.f32 %v1875, 0.0
      %v2721 = vmax.f32 %v1878, 0.0
      %v2722 = vmax.f32 %v1881, 0.0
      %v2723 = vmax.f32 %v1884, 0.0
      %v2724 = vmax.f32 %v1887, 0.0
      %v2725 = vmax.f32 %v1890, 0.0
      %v2726 = vmax.f32 %v1893, 0.0
      %v2727 = vmax.f32 %v1896, 0.0
      %v2728 = vmax.f32 %v1899, 0.0
      %v2729 = vmax.f32 %v1902, 0.0
      %v2730 = vmax.f32 %v1905, 0.0
      %v2731 = vmax.f32 %v1908, 0.0
      %v2732 = vmax.f32 %v1911, 0.0
      %v2733 = vmax.f32 %v1914, 0.0
      %v2734 = vmax.f32 %v1917, 0.0
      %v2735 = vmax.f32 %v1920, 0.0
      %v2736 = vmax.f32 %v1923, 0.0
      %v2737 = vmax.f32 %v1926, 0.0
      %v2738 = vmax.f32 %v1929, 0.0
      %v2739 = vmax.f32 %v1932, 0.0
      %v2740 = vmax.f32 %v1935, 0.0
      %v2741 = vmax.f32 %v1938, 0.0
      %v2742 = vmax.f32 %v1941, 0.0
      %v2743 = vmax.f32 %v1944, 0.0
      %v2744 = vmax.f32 %v1947, 0.0
      %v2745 = vmax.f32 %v1950, 0.0
      %v2746 = vmax.f32 %v1953, 0.0
      %v2747 = vmax.f32 %v1956, 0.0
      %v2748 = vmax.f32 %v1959, 0.0
      %v2749 = vmax.f32 %v1962, 0.0
      %v2750 = vmax.f32 %v1965, 0.0
      %v2751 = vmax.f32 %v1968, 0.0
      %v2752 = vmax.f32 %v1971, 0.0
      %v2753 = vmax.f32 %v1974, 0.0
      %v2754 = vmax.f32 %v1977, 0.0
      %v2755 = vmax.f32 %v1980, 0.0
      %v2756 = vmax.f32 %v1983, 0.0
      %v2757 = vmax.f32 %v1986, 0.0
      %v2758 = vmax.f32 %v1989, 0.0
      %v2759 = vmax.f32 %v1992, 0.0
      %v2760 = vmax.f32 %v1995, 0.0
      %v2761 = vmax.f32 %v1998, 0.0
      %v2762 = vmax.f32 %v2001, 0.0
      %v2763 = vmax.f32 %v2004, 0.0
      %v2764 = vmax.f32 %v2007, 0.0
      %v2765 = vmax.f32 %v2010, 0.0
      %v2766 = vmax.f32 %v2013, 0.0
      %v2767 = vmax.f32 %v2016, 0.0
      %v2768 = vmax.f32 %v2019, 0.0
      %v2769 = vmax.f32 %v2022, 0.0
      %v2770 = vmax.f32 %v2025, 0.0
      %v2771 = vmax.f32 %v2028, 0.0
      %v2772 = vmax.f32 %v2031, 0.0
      %v2773 = vmax.f32 %v2034, 0.0
      %v2774 = vmax.f32 %v2037, 0.0
      %v2775 = vmax.f32 %v2040, 0.0
      %v2776 = vmax.f32 %v2043, 0.0
      %v2777 = vmax.f32 %v2046, 0.0
      %v2778 = vmax.f32 %v2049, 0.0
      %v2779 = vmax.f32 %v2052, 0.0
      %v2780 = vmax.f32 %v2055, 0.0
      %v2781 = vmax.f32 %v2058, 0.0
      %v2782 = vmax.f32 %v2061, 0.0
      %v2783 = vmax.f32 %v2064, 0.0
      %v2784 = vmax.f32 %v2067, 0.0
      %v2785 = vmax.f32 %v2070, 0.0
      %v2786 = vmax.f32 %v2073, 0.0
      %v2787 = vmax.f32 %v2076, 0.0
      %v2788 = vmax.f32 %v2079, 0.0
      %v2789 = vmax.f32 %v2082, 0.0
      %v2790 = vmax.f32 %v2085, 0.0
      %v2791 = vmax.f32 %v2088, 0.0
      %v2792 = vmax.f32 %v2091, 0.0
      %v2793 = vmax.f32 %v2094, 0.0
      %v2794 = vmax.f32 %v2097, 0.0
      %v2795 = vmax.f32 %v2100, 0.0
      %v2796 = vmax.f32 %v2103, 0.0
      %v2797 = vmax.f32 %v2106, 0.0
      %v2798 = vmax.f32 %v2109, 0.0
      %v2799 = vmax.f32 %v2112, 0.0
      %v2800 = vmax.f32 %v2115, 0.0
      %v2801 = vmax.f32 %v2118, 0.0
      %v2802 = vmax.f32 %v2121, 0.0
      %v2803 = vmax.f32 %v2124, 0.0
      %v2804 = vmax.f32 %v2127, 0.0
      %v2805 = vmax.f32 %v2130, 0.0
      %v2806 = vmax.f32 %v2133, 0.0
      %v2807 = vmax.f32 %v2136, 0.0
      %v2808 = vmax.f32 %v2139, 0.0
      %v2809 = vmax.f32 %v2142, 0.0
      %v2810 = vmax.f32 %v2145, 0.0
      %v2811 = vmax.f32 %v2148, 0.0
      %v2812 = vmax.f32 %v2151, 0.0
      %v2813 = vmax.f32 %v2154, 0.0
      %v2814 = vmax.f32 %v2157, 0.0
      %v2815 = vmax.f32 %v2160, 0.0
      %v2816 = vmax.f32 %v2163, 0.0
      %v2817 = vmax.f32 %v2166, 0.0
      %v2818 = vmax.f32 %v2169, 0.0
      %v2819 = vmax.f32 %v2172, 0.0
      %v2820 = vmax.f32 %v2175, 0.0
      %v2821 = vmax.f32 %v2178, 0.0
      %v2822 = vmax.f32 %v2181, 0.0
      %v2823 = vmax.f32 %v2184, 0.0
      %v2824 = vmax.f32 %v2187, 0.0
      %v2825 = vmax.f32 %v2190, 0.0
      %v2826 = vmax.f32 %v2193, 0.0
      %v2827 = vmax.f32 %v2196, 0.0
      %v2828 = vmax.f32 %v2199, 0.0
      %v2829 = vmax.f32 %v2202, 0.0
      %v2830 = vmax.f32 %v2205, 0.0
      %v2831 = vmax.f32 %v2208, 0.0
      %v2832 = vmax.f32 %v2211, 0.0
      %v2833 = vmax.f32 %v2214, 0.0
      %v2834 = vmax.f32 %v2217, 0.0
      %v2835 = vmax.f32 %v2220, 0.0
      %v2836 = vmax.f32 %v2223, 0.0
      %v2837 = vmax.f32 %v2226, 0.0
      %v2838 = vmax.f32 %v2229, 0.0
      %v2839 = vmax.f32 %v2232, 0.0
      %v2840 = vmax.f32 %v2235, 0.0
      %v2841 = vmax.f32 %v2238, 0.0
      %v2842 = vmax.f32 %v2241, 0.0
      %v2843 = vmax.f32 %v2244, 0.0
      %v2844 = vmax.f32 %v2247, 0.0
      %v2845 = vmax.f32 %v2250, 0.0
      %v2846 = vmax.f32 %v2253, 0.0
      %v2847 = vmax.f32 %v2256, 0.0
      %v2848 = vmax.f32 %v2259, 0.0
      %v2849 = vmax.f32 %v2262, 0.0
      %v2850 = vmax.f32 %v2265, 0.0
      %v2851 = vmax.f32 %v2268, 0.0
      %v2852 = vmax.f32 %v2271, 0.0
      %v2853 = vmax.f32 %v2274, 0.0
      %v2854 = vmax.f32 %v2277, 0.0
      %v2855 = vmax.f32 %v2280, 0.0
      %v2856 = vmax.f32 %v2283, 0.0
      %v2857 = vmax.f32 %v2286, 0.0
      %v2858 = vmax.f32 %v2289, 0.0
      %v2859 = vmax.f32 %v2292, 0.0
      %v2860 = vmax.f32 %v2295, 0.0
      %v2861 = vmax.f32 %v2298, 0.0
      %v2862 = vmax.f32 %v2301, 0.0
      %v2863 = vmax.f32 %v2304, 0.0
      %v2864 = vmax.f32 %v2307, 0.0
      %v2865 = vmax.f32 %v2310, 0.0
      %v2866 = vmax.f32 %v2313, 0.0
      %v2867 = vmax.f32 %v2316, 0.0
      %v2868 = vmax.f32 %v2319, 0.0
      %v2869 = vmax.f32 %v2322, 0.0
      %v2870 = vmax.f32 %v2325, 0.0
      %v2871 = vmax.f32 %v2328, 0.0
      %v2872 = vmax.f32 %v2331, 0.0
      %v2873 = vmax.f32 %v2334, 0.0
      %v2874 = vmax.f32 %v2337, 0.0
      %v2875 = vmax.f32 %v2340, 0.0
      %v2876 = vmax.f32 %v2343, 0.0
      %v2877 = vmax.f32 %v2346, 0.0
      %v2878 = vmax.f32 %v2349, 0.0
      %v2879 = vmax.f32 %v2352, 0.0
      %v2880 = vmax.f32 %v2355, 0.0
      %v2881 = vmax.f32 %v2358, 0.0
      %v2882 = vmax.f32 %v2361, 0.0
      %v2883 = vmax.f32 %v2364, 0.0
      %v2884 = vmax.f32 %v2367, 0.0
      %v2885 = vmax.f32 %v2370, 0.0
      %v2886 = vmax.f32 %v2373, 0.0
      %v2887 = vmax.f32 %v2376, 0.0
      %v2888 = vmax.f32 %v2379, 0.0
      %v2889 = vmax.f32 %v2382, 0.0
      %v2890 = vmax.f32 %v2385, 0.0
      %v2891 = vmax.f32 %v2388, 0.0
      %v2892 = vmax.f32 %v2391, 0.0
      %v2893 = vmax.f32 %v2394, 0.0
      %v2894 = vmax.f32 %v2397, 0.0
      %v2895 = vmax.f32 %v2400, 0.0
      %v2896 = vmax.f32 %v2403, 0.0
      %v2897 = vmax.f32 %v2406, 0.0
      %v2898 = vmax.f32 %v2409, 0.0
      %v2899 = vmax.f32 %v2412, 0.0
      %v2900 = vmax.f32 %v2415, 0.0
      %v2901 = vmax.f32 %v2418, 0.0
      %v2902 = vmax.f32 %v2421, 0.0
      %v2903 = vmax.f32 %v2424, 0.0
      %v2904 = vmax.f32 %v2427, 0.0
      %v2905 = vmax.f32 %v2430, 0.0
      %v2906 = vmax.f32 %v2433, 0.0
      %v2907 = vmax.f32 %v2436, 0.0
      %v2908 = vmax.f32 %v2439, 0.0
      %v2909 = vmax.f32 %v2442, 0.0
      %v2910 = vmax.f32 %v2445, 0.0
      %v2911 = vmax.f32 %v2448, 0.0
      %v2912 = vmax.f32 %v2451, 0.0
      %v2913 = vmax.f32 %v2454, 0.0
      %v2914 = vmax.f32 %v2457, 0.0
      %v2915 = vmax.f32 %v2460, 0.0
      %v2916 = vmax.f32 %v2463, 0.0
      %v2917 = vmax.f32 %v2466, 0.0
      %v2918 = vmax.f32 %v2469, 0.0
      %v2919 = vmax.f32 %v2472, 0.0
      %v2920 = vmax.f32 %v2475, 0.0
      %v2921 = vmax.f32 %v2478, 0.0
      %v2922 = vmax.f32 %v2481, 0.0
      %v2923 = vmax.f32 %v2484, 0.0
      %v2924 = vmax.f32 %v2487, 0.0
      %v2925 = vmax.f32 %v2490, 0.0
      %v2926 = vmax.f32 %v2493, 0.0
      %v2927 = vmax.f32 %v2496, 0.0
      %v2928 = vmax.f32 %v2499, 0.0
      %v2929 = vmax.f32 %v2502, 0.0
      %v2930 = vmax.f32 %v2505, 0.0
      %v2931 = vmax.f32 %v2508, 0.0
      %v2932 = vmax.f32 %v2511, 0.0
      %v2933 = vmax.f32 %v2514, 0.0
      %v2934 = vmax.f32 %v2517, 0.0
      %v2935 = vmax.f32 %v2520, 0.0
      %v2936 = vmax.f32 %v2523, 0.0
      %v2937 = vmax.f32 %v2526, 0.0
      %v2938 = vmax.f32 %v2529, 0.0
      %v2939 = vmax.f32 %v2532, 0.0
      %v2940 = vmax.f32 %v2535, 0.0
      %v2941 = vmax.f32 %v2538, 0.0
      %v2942 = vmax.f32 %v2541, 0.0
      %v2943 = vmax.f32 %v2544, 0.0
      %v2944 = vmax.f32 %v2547, 0.0
      %v2945 = vmax.f32 %v2550, 0.0
      %v2946 = vmax.f32 %v2553, 0.0
      %v2947 = vmax.f32 %v2556, 0.0
      %v2948 = vmax.f32 %v2559, 0.0
      %v2949 = vmax.f32 %v2562, 0.0
      %v2950 = vmax.f32 %v2565, 0.0
      %v2951 = vmax.f32 %v2568, 0.0
      %v2952 = vmax.f32 %v2571, 0.0
      %v2953 = vmax.f32 %v2574, 0.0
      %v2954 = vmax.f32 %v2577, 0.0
      %v2955 = vmax.f32 %v2580, 0.0
      %v2956 = vmax.f32 %v2583, 0.0
      %v2957 = vmax.f32 %v2586, 0.0
      %v2958 = vmax.f32 %v2589, 0.0
      %v2959 = vmax.f32 %v2592, 0.0
      %v2960 = vmax.f32 %v2595, 0.0
      %v2961 = vmax.f32 %v2598, 0.0
      %v2962 = vmax.f32 %v2601, 0.0
      %v2963 = vmax.f32 %v2604, 0.0
      %v2964 = vmax.f32 %v2607, 0.0
      %v2965 = vmax.f32 %v2610, 0.0
      %v2966 = vmax.f32 %v2613, 0.0
      %v2967 = vmax.f32 %v2616, 0.0
      %v2968 = vmax.f32 %v2619, 0.0
      %v2969 = vmax.f32 %v2622, 0.0
      %v2970 = vmax.f32 %v2625, 0.0
      %v2971 = vmax.f32 %v2628, 0.0
      %v2972 = vmax.f32 %v2631, 0.0
      %v2973 = vmax.f32 %v2634, 0.0
      %v2974 = vmax.f32 %v2637, 0.0
      %v2975 = vmax.f32 %v2640, 0.0
      %v2976 = vmax.f32 %v2643, 0.0
      %v2977 = vmax.f32 %v2646, 0.0
      %v2978 = vmax.f32 %v2649, 0.0
      %v2979 = vmax.f32 %v2652, 0.0
      %v2980 = vmax.f32 %v2655, 0.0
      %vm2981 = vcmask 261120
      %2982 = vst.msk [vmem:[#allocation2] sm:$0xff] %vm2981, %v2657
      %2983 = vst.msk [vmem:[#allocation2 + $0x8] sm:$0xff] %vm2981, %v2658
      %2984 = vst.msk [vmem:[#allocation2 + $0x10] sm:$0xff] %vm2981, %v2659
      %2985 = vst.msk [vmem:[#allocation2 + $0x18] sm:$0xff] %vm2981, %v2660
      %2986 = vst.msk [vmem:[#allocation2 + $0x20] sm:$0xff] %vm2981, %v2661
      %2987 = vst.msk [vmem:[#allocation2 + $0x28] sm:$0xff] %vm2981, %v2662
      %2988 = vst.msk [vmem:[#allocation2 + $0x30] sm:$0xff] %vm2981, %v2663
      %2989 = vst.msk [vmem:[#allocation2 + $0x38] sm:$0xff] %vm2981, %v2664
      %2990 = vst.msk [vmem:[#allocation2 + $0x40] sm:$0xff] %vm2981, %v2665
      %2991 = vst.msk [vmem:[#allocation2 + $0x48] sm:$0xff] %vm2981, %v2666
      %2992 = vst.msk [vmem:[#allocation2 + $0x50] sm:$0xff] %vm2981, %v2667
      %2993 = vst.msk [vmem:[#allocation2 + $0x58] sm:$0xff] %vm2981, %v2668
      %2994 = vst.msk [vmem:[#allocation2 + $0x60] sm:$0xff] %vm2981, %v2669
      %2995 = vst.msk [vmem:[#allocation2 + $0x68] sm:$0xff] %vm2981, %v2670
      %2996 = vst.msk [vmem:[#allocation2 + $0x70] sm:$0xff] %vm2981, %v2671
      %2997 = vst.msk [vmem:[#allocation2 + $0x78] sm:$0xff] %vm2981, %v2672
      %2998 = vst.msk [vmem:[#allocation2 + $0x80] sm:$0xff] %vm2981, %v2673
      %2999 = vst.msk [vmem:[#allocation2 + $0x88] sm:$0xff] %vm2981, %v2674
      %3000 = vst.msk [vmem:[#allocation2 + $0x90] sm:$0xff] %vm2981, %v2675
      %3001 = vst.msk [vmem:[#allocation2 + $0x98] sm:$0xff] %vm2981, %v2676
      %3002 = vst.msk [vmem:[#allocation2 + $0xa0] sm:$0xff] %vm2981, %v2677
      %3003 = vst.msk [vmem:[#allocation2 + $0xa8] sm:$0xff] %vm2981, %v2678
      %3004 = vst.msk [vmem:[#allocation2 + $0xb0] sm:$0xff] %vm2981, %v2679
      %3005 = vst.msk [vmem:[#allocation2 + $0xb8] sm:$0xff] %vm2981, %v2680
      %3006 = vst.msk [vmem:[#allocation2 + $0xc0] sm:$0xff] %vm2981, %v2681
      %3007 = vst.msk [vmem:[#allocation2 + $0xc8] sm:$0xff] %vm2981, %v2682
      %3008 = vst.msk [vmem:[#allocation2 + $0xd0] sm:$0xff] %vm2981, %v2683
      %3009 = vst.msk [vmem:[#allocation2 + $0xd8] sm:$0xff] %vm2981, %v2684
      %3010 = vst.msk [vmem:[#allocation2 + $0xe0] sm:$0xff] %vm2981, %v2685
      %3011 = vst.msk [vmem:[#allocation2 + $0xe8] sm:$0xff] %vm2981, %v2686
      %3012 = vst.msk [vmem:[#allocation2 + $0xf0] sm:$0xff] %vm2981, %v2687
      %3013 = vst.msk [vmem:[#allocation2 + $0xf8] sm:$0xff] %vm2981, %v2688
      %3014 = vst.msk [vmem:[#allocation2 + $0x100] sm:$0xff] %vm2981, %v2689
      %3015 = vst.msk [vmem:[#allocation2 + $0x108] sm:$0xff] %vm2981, %v2690
      %3016 = vst.msk [vmem:[#allocation2 + $0x110] sm:$0xff] %vm2981, %v2691
      %3017 = vst.msk [vmem:[#allocation2 + $0x118] sm:$0xff] %vm2981, %v2692
      %3018 = vst.msk [vmem:[#allocation2 + $0x120] sm:$0xff] %vm2981, %v2693
      %3019 = vst.msk [vmem:[#allocation2 + $0x128] sm:$0xff] %vm2981, %v2694
      %3020 = vst.msk [vmem:[#allocation2 + $0x130] sm:$0xff] %vm2981, %v2695
      %3021 = vst.msk [vmem:[#allocation2 + $0x138] sm:$0xff] %vm2981, %v2696
      %3022 = vst.msk [vmem:[#allocation2 + $0x140] sm:$0xff] %vm2981, %v2697
      %3023 = vst.msk [vmem:[#allocation2 + $0x148] sm:$0xff] %vm2981, %v2698
      %3024 = vst.msk [vmem:[#allocation2 + $0x150] sm:$0xff] %vm2981, %v2699
      %3025 = vst.msk [vmem:[#allocation2 + $0x158] sm:$0xff] %vm2981, %v2700
      %3026 = vst.msk [vmem:[#allocation2 + $0x160] sm:$0xff] %vm2981, %v2701
      %3027 = vst.msk [vmem:[#allocation2 + $0x168] sm:$0xff] %vm2981, %v2702
      %3028 = vst.msk [vmem:[#allocation2 + $0x170] sm:$0xff] %vm2981, %v2703
      %3029 = vst.msk [vmem:[#allocation2 + $0x178] sm:$0xff] %vm2981, %v2704
      %3030 = vst.msk [vmem:[#allocation2 + $0x180] sm:$0xff] %vm2981, %v2705
      %3031 = vst.msk [vmem:[#allocation2 + $0x188] sm:$0xff] %vm2981, %v2706
      %3032 = vst.msk [vmem:[#allocation2 + $0x190] sm:$0xff] %vm2981, %v2707
      %3033 = vst.msk [vmem:[#allocation2 + $0x198] sm:$0xff] %vm2981, %v2708
      %3034 = vst.msk [vmem:[#allocation2 + $0x1a0] sm:$0xff] %vm2981, %v2709
      %3035 = vst.msk [vmem:[#allocation2 + $0x1a8] sm:$0xff] %vm2981, %v2710
      %3036 = vst.msk [vmem:[#allocation2 + $0x1b0] sm:$0xff] %vm2981, %v2711
      %3037 = vst.msk [vmem:[#allocation2 + $0x1b8] sm:$0xff] %vm2981, %v2712
      %3038 = vst.msk [vmem:[#allocation2 + $0x1c0] sm:$0xff] %vm2981, %v2713
      %3039 = vst.msk [vmem:[#allocation2 + $0x1c8] sm:$0xff] %vm2981, %v2714
      %3040 = vst.msk [vmem:[#allocation2 + $0x1d0] sm:$0xff] %vm2981, %v2715
      %3041 = vst.msk [vmem:[#allocation2 + $0x1d8] sm:$0xff] %vm2981, %v2716
      %3042 = vst.msk [vmem:[#allocation2 + $0x1e0] sm:$0xff] %vm2981, %v2717
      %3043 = vst.msk [vmem:[#allocation2 + $0x1e8] sm:$0xff] %vm2981, %v2718
      %3044 = vst.msk [vmem:[#allocation2 + $0x1f0] sm:$0xff] %vm2981, %v2719
      %3045 = vst.msk [vmem:[#allocation2 + $0x1f8] sm:$0xff] %vm2981, %v2720
      %3046 = vst.msk [vmem:[#allocation2 + $0x200] sm:$0xff] %vm2981, %v2721
      %3047 = vst.msk [vmem:[#allocation2 + $0x208] sm:$0xff] %vm2981, %v2722
      %3048 = vst.msk [vmem:[#allocation2 + $0x210] sm:$0xff] %vm2981, %v2723
      %3049 = vst.msk [vmem:[#allocation2 + $0x218] sm:$0xff] %vm2981, %v2724
      %3050 = vst.msk [vmem:[#allocation2 + $0x220] sm:$0xff] %vm2981, %v2725
      %3051 = vst.msk [vmem:[#allocation2 + $0x228] sm:$0xff] %vm2981, %v2726
      %3052 = vst.msk [vmem:[#allocation2 + $0x230] sm:$0xff] %vm2981, %v2727
      %3053 = vst.msk [vmem:[#allocation2 + $0x238] sm:$0xff] %vm2981, %v2728
      %3054 = vst.msk [vmem:[#allocation2 + $0x240] sm:$0xff] %vm2981, %v2729
      %3055 = vst.msk [vmem:[#allocation2 + $0x248] sm:$0xff] %vm2981, %v2730
      %3056 = vst.msk [vmem:[#allocation2 + $0x250] sm:$0xff] %vm2981, %v2731
      %3057 = vst.msk [vmem:[#allocation2 + $0x258] sm:$0xff] %vm2981, %v2732
      %3058 = vst.msk [vmem:[#allocation2 + $0x260] sm:$0xff] %vm2981, %v2733
      %3059 = vst.msk [vmem:[#allocation2 + $0x268] sm:$0xff] %vm2981, %v2734
      %3060 = vst.msk [vmem:[#allocation2 + $0x270] sm:$0xff] %vm2981, %v2735
      %3061 = vst.msk [vmem:[#allocation2 + $0x278] sm:$0xff] %vm2981, %v2736
      %3062 = vst.msk [vmem:[#allocation2 + $0x280] sm:$0xff] %vm2981, %v2737
      %3063 = vst.msk [vmem:[#allocation2 + $0x288] sm:$0xff] %vm2981, %v2738
      %3064 = vst.msk [vmem:[#allocation2 + $0x290] sm:$0xff] %vm2981, %v2739
      %3065 = vst.msk [vmem:[#allocation2 + $0x298] sm:$0xff] %vm2981, %v2740
      %3066 = vst.msk [vmem:[#allocation2 + $0x2a0] sm:$0xff] %vm2981, %v2741
      %3067 = vst.msk [vmem:[#allocation2 + $0x2a8] sm:$0xff] %vm2981, %v2742
      %3068 = vst.msk [vmem:[#allocation2 + $0x2b0] sm:$0xff] %vm2981, %v2743
      %3069 = vst.msk [vmem:[#allocation2 + $0x2b8] sm:$0xff] %vm2981, %v2744
      %3070 = vst.msk [vmem:[#allocation2 + $0x2c0] sm:$0xff] %vm2981, %v2745
      %3071 = vst.msk [vmem:[#allocation2 + $0x2c8] sm:$0xff] %vm2981, %v2746
      %3072 = vst.msk [vmem:[#allocation2 + $0x2d0] sm:$0xff] %vm2981, %v2747
      %3073 = vst.msk [vmem:[#allocation2 + $0x2d8] sm:$0xff] %vm2981, %v2748
      %3074 = vst.msk [vmem:[#allocation2 + $0x2e0] sm:$0xff] %vm2981, %v2749
      %3075 = vst.msk [vmem:[#allocation2 + $0x2e8] sm:$0xff] %vm2981, %v2750
      %3076 = vst.msk [vmem:[#allocation2 + $0x2f0] sm:$0xff] %vm2981, %v2751
      %3077 = vst.msk [vmem:[#allocation2 + $0x2f8] sm:$0xff] %vm2981, %v2752
      %3078 = vst.msk [vmem:[#allocation2 + $0x300] sm:$0xff] %vm2981, %v2753
      %3079 = vst.msk [vmem:[#allocation2 + $0x308] sm:$0xff] %vm2981, %v2754
      %3080 = vst.msk [vmem:[#allocation2 + $0x310] sm:$0xff] %vm2981, %v2755
      %3081 = vst.msk [vmem:[#allocation2 + $0x318] sm:$0xff] %vm2981, %v2756
      %3082 = vst.msk [vmem:[#allocation2 + $0x320] sm:$0xff] %vm2981, %v2757
      %3083 = vst.msk [vmem:[#allocation2 + $0x328] sm:$0xff] %vm2981, %v2758
      %3084 = vst.msk [vmem:[#allocation2 + $0x330] sm:$0xff] %vm2981, %v2759
      %3085 = vst.msk [vmem:[#allocation2 + $0x338] sm:$0xff] %vm2981, %v2760
      %3086 = vst.msk [vmem:[#allocation2 + $0x340] sm:$0xff] %vm2981, %v2761
      %3087 = vst.msk [vmem:[#allocation2 + $0x348] sm:$0xff] %vm2981, %v2762
      %3088 = vst.msk [vmem:[#allocation2 + $0x350] sm:$0xff] %vm2981, %v2763
      %3089 = vst.msk [vmem:[#allocation2 + $0x358] sm:$0xff] %vm2981, %v2764
      %3090 = vst.msk [vmem:[#allocation2 + $0x360] sm:$0xff] %vm2981, %v2765
      %3091 = vst.msk [vmem:[#allocation2 + $0x368] sm:$0xff] %vm2981, %v2766
      %3092 = vst.msk [vmem:[#allocation2 + $0x370] sm:$0xff] %vm2981, %v2767
      %3093 = vst.msk [vmem:[#allocation2 + $0x378] sm:$0xff] %vm2981, %v2768
      %3094 = vst.msk [vmem:[#allocation2 + $0x380] sm:$0xff] %vm2981, %v2769
      %3095 = vst.msk [vmem:[#allocation2 + $0x388] sm:$0xff] %vm2981, %v2770
      %3096 = vst.msk [vmem:[#allocation2 + $0x390] sm:$0xff] %vm2981, %v2771
      %3097 = vst.msk [vmem:[#allocation2 + $0x398] sm:$0xff] %vm2981, %v2772
      %3098 = vst.msk [vmem:[#allocation2 + $0x3a0] sm:$0xff] %vm2981, %v2773
      %3099 = vst.msk [vmem:[#allocation2 + $0x3a8] sm:$0xff] %vm2981, %v2774
      %3100 = vst.msk [vmem:[#allocation2 + $0x3b0] sm:$0xff] %vm2981, %v2775
      %3101 = vst.msk [vmem:[#allocation2 + $0x3b8] sm:$0xff] %vm2981, %v2776
      %3102 = vst.msk [vmem:[#allocation2 + $0x3c0] sm:$0xff] %vm2981, %v2777
      %3103 = vst.msk [vmem:[#allocation2 + $0x3c8] sm:$0xff] %vm2981, %v2778
      %3104 = vst.msk [vmem:[#allocation2 + $0x3d0] sm:$0xff] %vm2981, %v2779
      %3105 = vst.msk [vmem:[#allocation2 + $0x3d8] sm:$0xff] %vm2981, %v2780
      %3106 = vst.msk [vmem:[#allocation2 + $0x3e0] sm:$0xff] %vm2981, %v2781
      %3107 = vst.msk [vmem:[#allocation2 + $0x3e8] sm:$0xff] %vm2981, %v2782
      %3108 = vst.msk [vmem:[#allocation2 + $0x3f0] sm:$0xff] %vm2981, %v2783
      %3109 = vst.msk [vmem:[#allocation2 + $0x3f8] sm:$0xff] %vm2981, %v2784
      %3110 = vst.msk [vmem:[#allocation2 + $0x400] sm:$0xff] %vm2981, %v2785
      %3111 = vst.msk [vmem:[#allocation2 + $0x408] sm:$0xff] %vm2981, %v2786
      %3112 = vst.msk [vmem:[#allocation2 + $0x410] sm:$0xff] %vm2981, %v2787
      %3113 = vst.msk [vmem:[#allocation2 + $0x418] sm:$0xff] %vm2981, %v2788
      %3114 = vst.msk [vmem:[#allocation2 + $0x420] sm:$0xff] %vm2981, %v2789
      %3115 = vst.msk [vmem:[#allocation2 + $0x428] sm:$0xff] %vm2981, %v2790
      %3116 = vst.msk [vmem:[#allocation2 + $0x430] sm:$0xff] %vm2981, %v2791
      %3117 = vst.msk [vmem:[#allocation2 + $0x438] sm:$0xff] %vm2981, %v2792
      %3118 = vst.msk [vmem:[#allocation2 + $0x440] sm:$0xff] %vm2981, %v2793
      %3119 = vst.msk [vmem:[#allocation2 + $0x448] sm:$0xff] %vm2981, %v2794
      %3120 = vst.msk [vmem:[#allocation2 + $0x450] sm:$0xff] %vm2981, %v2795
      %3121 = vst.msk [vmem:[#allocation2 + $0x458] sm:$0xff] %vm2981, %v2796
      %3122 = vst.msk [vmem:[#allocation2 + $0x460] sm:$0xff] %vm2981, %v2797
      %3123 = vst.msk [vmem:[#allocation2 + $0x468] sm:$0xff] %vm2981, %v2798
      %3124 = vst.msk [vmem:[#allocation2 + $0x470] sm:$0xff] %vm2981, %v2799
      %3125 = vst.msk [vmem:[#allocation2 + $0x478] sm:$0xff] %vm2981, %v2800
      %3126 = vst.msk [vmem:[#allocation2 + $0x480] sm:$0xff] %vm2981, %v2801
      %3127 = vst.msk [vmem:[#allocation2 + $0x488] sm:$0xff] %vm2981, %v2802
      %3128 = vst.msk [vmem:[#allocation2 + $0x490] sm:$0xff] %vm2981, %v2803
      %3129 = vst.msk [vmem:[#allocation2 + $0x498] sm:$0xff] %vm2981, %v2804
      %3130 = vst.msk [vmem:[#allocation2 + $0x4a0] sm:$0xff] %vm2981, %v2805
      %3131 = vst.msk [vmem:[#allocation2 + $0x4a8] sm:$0xff] %vm2981, %v2806
      %3132 = vst.msk [vmem:[#allocation2 + $0x4b0] sm:$0xff] %vm2981, %v2807
      %3133 = vst.msk [vmem:[#allocation2 + $0x4b8] sm:$0xff] %vm2981, %v2808
      %3134 = vst.msk [vmem:[#allocation2 + $0x4c0] sm:$0xff] %vm2981, %v2809
      %3135 = vst.msk [vmem:[#allocation2 + $0x4c8] sm:$0xff] %vm2981, %v2810
      %3136 = vst.msk [vmem:[#allocation2 + $0x4d0] sm:$0xff] %vm2981, %v2811
      %3137 = vst.msk [vmem:[#allocation2 + $0x4d8] sm:$0xff] %vm2981, %v2812
      %3138 = vst.msk [vmem:[#allocation2 + $0x4e0] sm:$0xff] %vm2981, %v2813
      %3139 = vst.msk [vmem:[#allocation2 + $0x4e8] sm:$0xff] %vm2981, %v2814
      %3140 = vst.msk [vmem:[#allocation2 + $0x4f0] sm:$0xff] %vm2981, %v2815
      %3141 = vst.msk [vmem:[#allocation2 + $0x4f8] sm:$0xff] %vm2981, %v2816
      %3142 = vst.msk [vmem:[#allocation2 + $0x500] sm:$0xff] %vm2981, %v2817
      %3143 = vst.msk [vmem:[#allocation2 + $0x508] sm:$0xff] %vm2981, %v2818
      %3144 = vst.msk [vmem:[#allocation2 + $0x510] sm:$0xff] %vm2981, %v2819
      %3145 = vst.msk [vmem:[#allocation2 + $0x518] sm:$0xff] %vm2981, %v2820
      %3146 = vst.msk [vmem:[#allocation2 + $0x520] sm:$0xff] %vm2981, %v2821
      %3147 = vst.msk [vmem:[#allocation2 + $0x528] sm:$0xff] %vm2981, %v2822
      %3148 = vst.msk [vmem:[#allocation2 + $0x530] sm:$0xff] %vm2981, %v2823
      %3149 = vst.msk [vmem:[#allocation2 + $0x538] sm:$0xff] %vm2981, %v2824
      %3150 = vst.msk [vmem:[#allocation2 + $0x540] sm:$0xff] %vm2981, %v2825
      %3151 = vst.msk [vmem:[#allocation2 + $0x548] sm:$0xff] %vm2981, %v2826
      %3152 = vst.msk [vmem:[#allocation2 + $0x550] sm:$0xff] %vm2981, %v2827
      %3153 = vst.msk [vmem:[#allocation2 + $0x558] sm:$0xff] %vm2981, %v2828
      %3154 = vst.msk [vmem:[#allocation2 + $0x560] sm:$0xff] %vm2981, %v2829
      %3155 = vst.msk [vmem:[#allocation2 + $0x568] sm:$0xff] %vm2981, %v2830
      %3156 = vst.msk [vmem:[#allocation2 + $0x570] sm:$0xff] %vm2981, %v2831
      %3157 = vst.msk [vmem:[#allocation2 + $0x578] sm:$0xff] %vm2981, %v2832
      %3158 = vst.msk [vmem:[#allocation2 + $0x580] sm:$0xff] %vm2981, %v2833
      %3159 = vst.msk [vmem:[#allocation2 + $0x588] sm:$0xff] %vm2981, %v2834
      %3160 = vst.msk [vmem:[#allocation2 + $0x590] sm:$0xff] %vm2981, %v2835
      %3161 = vst.msk [vmem:[#allocation2 + $0x598] sm:$0xff] %vm2981, %v2836
      %3162 = vst.msk [vmem:[#allocation2 + $0x5a0] sm:$0xff] %vm2981, %v2837
      %3163 = vst.msk [vmem:[#allocation2 + $0x5a8] sm:$0xff] %vm2981, %v2838
      %3164 = vst.msk [vmem:[#allocation2 + $0x5b0] sm:$0xff] %vm2981, %v2839
      %3165 = vst.msk [vmem:[#allocation2 + $0x5b8] sm:$0xff] %vm2981, %v2840
      %3166 = vst.msk [vmem:[#allocation2 + $0x5c0] sm:$0xff] %vm2981, %v2841
      %3167 = vst.msk [vmem:[#allocation2 + $0x5c8] sm:$0xff] %vm2981, %v2842
      %3168 = vst.msk [vmem:[#allocation2 + $0x5d0] sm:$0xff] %vm2981, %v2843
      %3169 = vst.msk [vmem:[#allocation2 + $0x5d8] sm:$0xff] %vm2981, %v2844
      %3170 = vst.msk [vmem:[#allocation2 + $0x5e0] sm:$0xff] %vm2981, %v2845
      %3171 = vst.msk [vmem:[#allocation2 + $0x5e8] sm:$0xff] %vm2981, %v2846
      %3172 = vst.msk [vmem:[#allocation2 + $0x5f0] sm:$0xff] %vm2981, %v2847
      %3173 = vst.msk [vmem:[#allocation2 + $0x5f8] sm:$0xff] %vm2981, %v2848
      %3174 = vst.msk [vmem:[#allocation2 + $0x600] sm:$0xff] %vm2981, %v2849
      %3175 = vst.msk [vmem:[#allocation2 + $0x608] sm:$0xff] %vm2981, %v2850
      %3176 = vst.msk [vmem:[#allocation2 + $0x610] sm:$0xff] %vm2981, %v2851
      %3177 = vst.msk [vmem:[#allocation2 + $0x618] sm:$0xff] %vm2981, %v2852
      %3178 = vst.msk [vmem:[#allocation2 + $0x620] sm:$0xff] %vm2981, %v2853
      %3179 = vst.msk [vmem:[#allocation2 + $0x628] sm:$0xff] %vm2981, %v2854
      %3180 = vst.msk [vmem:[#allocation2 + $0x630] sm:$0xff] %vm2981, %v2855
      %3181 = vst.msk [vmem:[#allocation2 + $0x638] sm:$0xff] %vm2981, %v2856
      %3182 = vst.msk [vmem:[#allocation2 + $0x640] sm:$0xff] %vm2981, %v2857
      %3183 = vst.msk [vmem:[#allocation2 + $0x648] sm:$0xff] %vm2981, %v2858
      %3184 = vst.msk [vmem:[#allocation2 + $0x650] sm:$0xff] %vm2981, %v2859
      %3185 = vst.msk [vmem:[#allocation2 + $0x658] sm:$0xff] %vm2981, %v2860
      %3186 = vst.msk [vmem:[#allocation2 + $0x660] sm:$0xff] %vm2981, %v2861
      %3187 = vst.msk [vmem:[#allocation2 + $0x668] sm:$0xff] %vm2981, %v2862
      %3188 = vst.msk [vmem:[#allocation2 + $0x670] sm:$0xff] %vm2981, %v2863
      %3189 = vst.msk [vmem:[#allocation2 + $0x678] sm:$0xff] %vm2981, %v2864
      %3190 = vst.msk [vmem:[#allocation2 + $0x680] sm:$0xff] %vm2981, %v2865
      %3191 = vst.msk [vmem:[#allocation2 + $0x688] sm:$0xff] %vm2981, %v2866
      %3192 = vst.msk [vmem:[#allocation2 + $0x690] sm:$0xff] %vm2981, %v2867
      %3193 = vst.msk [vmem:[#allocation2 + $0x698] sm:$0xff] %vm2981, %v2868
      %3194 = vst.msk [vmem:[#allocation2 + $0x6a0] sm:$0xff] %vm2981, %v2869
      %3195 = vst.msk [vmem:[#allocation2 + $0x6a8] sm:$0xff] %vm2981, %v2870
      %3196 = vst.msk [vmem:[#allocation2 + $0x6b0] sm:$0xff] %vm2981, %v2871
      %3197 = vst.msk [vmem:[#allocation2 + $0x6b8] sm:$0xff] %vm2981, %v2872
      %3198 = vst.msk [vmem:[#allocation2 + $0x6c0] sm:$0xff] %vm2981, %v2873
      %3199 = vst.msk [vmem:[#allocation2 + $0x6c8] sm:$0xff] %vm2981, %v2874
      %3200 = vst.msk [vmem:[#allocation2 + $0x6d0] sm:$0xff] %vm2981, %v2875
      %3201 = vst.msk [vmem:[#allocation2 + $0x6d8] sm:$0xff] %vm2981, %v2876
      %3202 = vst.msk [vmem:[#allocation2 + $0x6e0] sm:$0xff] %vm2981, %v2877
      %3203 = vst.msk [vmem:[#allocation2 + $0x6e8] sm:$0xff] %vm2981, %v2878
      %3204 = vst.msk [vmem:[#allocation2 + $0x6f0] sm:$0xff] %vm2981, %v2879
      %3205 = vst.msk [vmem:[#allocation2 + $0x6f8] sm:$0xff] %vm2981, %v2880
      %3206 = vst.msk [vmem:[#allocation2 + $0x700] sm:$0xff] %vm2981, %v2881
      %3207 = vst.msk [vmem:[#allocation2 + $0x708] sm:$0xff] %vm2981, %v2882
      %3208 = vst.msk [vmem:[#allocation2 + $0x710] sm:$0xff] %vm2981, %v2883
      %3209 = vst.msk [vmem:[#allocation2 + $0x718] sm:$0xff] %vm2981, %v2884
      %3210 = vst.msk [vmem:[#allocation2 + $0x720] sm:$0xff] %vm2981, %v2885
      %3211 = vst.msk [vmem:[#allocation2 + $0x728] sm:$0xff] %vm2981, %v2886
      %3212 = vst.msk [vmem:[#allocation2 + $0x730] sm:$0xff] %vm2981, %v2887
      %3213 = vst.msk [vmem:[#allocation2 + $0x738] sm:$0xff] %vm2981, %v2888
      %3214 = vst.msk [vmem:[#allocation2 + $0x740] sm:$0xff] %vm2981, %v2889
      %3215 = vst.msk [vmem:[#allocation2 + $0x748] sm:$0xff] %vm2981, %v2890
      %3216 = vst.msk [vmem:[#allocation2 + $0x750] sm:$0xff] %vm2981, %v2891
      %3217 = vst.msk [vmem:[#allocation2 + $0x758] sm:$0xff] %vm2981, %v2892
      %3218 = vst.msk [vmem:[#allocation2 + $0x760] sm:$0xff] %vm2981, %v2893
      %3219 = vst.msk [vmem:[#allocation2 + $0x768] sm:$0xff] %vm2981, %v2894
      %3220 = vst.msk [vmem:[#allocation2 + $0x770] sm:$0xff] %vm2981, %v2895
      %3221 = vst.msk [vmem:[#allocation2 + $0x778] sm:$0xff] %vm2981, %v2896
      %3222 = vst.msk [vmem:[#allocation2 + $0x780] sm:$0xff] %vm2981, %v2897
      %3223 = vst.msk [vmem:[#allocation2 + $0x788] sm:$0xff] %vm2981, %v2898
      %3224 = vst.msk [vmem:[#allocation2 + $0x790] sm:$0xff] %vm2981, %v2899
      %3225 = vst.msk [vmem:[#allocation2 + $0x798] sm:$0xff] %vm2981, %v2900
      %3226 = vst.msk [vmem:[#allocation2 + $0x7a0] sm:$0xff] %vm2981, %v2901
      %3227 = vst.msk [vmem:[#allocation2 + $0x7a8] sm:$0xff] %vm2981, %v2902
      %3228 = vst.msk [vmem:[#allocation2 + $0x7b0] sm:$0xff] %vm2981, %v2903
      %3229 = vst.msk [vmem:[#allocation2 + $0x7b8] sm:$0xff] %vm2981, %v2904
      %3230 = vst.msk [vmem:[#allocation2 + $0x7c0] sm:$0xff] %vm2981, %v2905
      %3231 = vst.msk [vmem:[#allocation2 + $0x7c8] sm:$0xff] %vm2981, %v2906
      %3232 = vst.msk [vmem:[#allocation2 + $0x7d0] sm:$0xff] %vm2981, %v2907
      %3233 = vst.msk [vmem:[#allocation2 + $0x7d8] sm:$0xff] %vm2981, %v2908
      %3234 = vst.msk [vmem:[#allocation2 + $0x7e0] sm:$0xff] %vm2981, %v2909
      %3235 = vst.msk [vmem:[#allocation2 + $0x7e8] sm:$0xff] %vm2981, %v2910
      %3236 = vst.msk [vmem:[#allocation2 + $0x7f0] sm:$0xff] %vm2981, %v2911
      %3237 = vst.msk [vmem:[#allocation2 + $0x7f8] sm:$0xff] %vm2981, %v2912
      %3238 = vst.msk [vmem:[#allocation2 + $0x800] sm:$0xff] %vm2981, %v2913
      %3239 = vst.msk [vmem:[#allocation2 + $0x808] sm:$0xff] %vm2981, %v2914
      %3240 = vst.msk [vmem:[#allocation2 + $0x810] sm:$0xff] %vm2981, %v2915
      %3241 = vst.msk [vmem:[#allocation2 + $0x818] sm:$0xff] %vm2981, %v2916
      %3242 = vst.msk [vmem:[#allocation2 + $0x820] sm:$0xff] %vm2981, %v2917
      %3243 = vst.msk [vmem:[#allocation2 + $0x828] sm:$0xff] %vm2981, %v2918
      %3244 = vst.msk [vmem:[#allocation2 + $0x830] sm:$0xff] %vm2981, %v2919
      %3245 = vst.msk [vmem:[#allocation2 + $0x838] sm:$0xff] %vm2981, %v2920
      %3246 = vst.msk [vmem:[#allocation2 + $0x840] sm:$0xff] %vm2981, %v2921
      %3247 = vst.msk [vmem:[#allocation2 + $0x848] sm:$0xff] %vm2981, %v2922
      %3248 = vst.msk [vmem:[#allocation2 + $0x850] sm:$0xff] %vm2981, %v2923
      %3249 = vst.msk [vmem:[#allocation2 + $0x858] sm:$0xff] %vm2981, %v2924
      %3250 = vst.msk [vmem:[#allocation2 + $0x860] sm:$0xff] %vm2981, %v2925
      %3251 = vst.msk [vmem:[#allocation2 + $0x868] sm:$0xff] %vm2981, %v2926
      %3252 = vst.msk [vmem:[#allocation2 + $0x870] sm:$0xff] %vm2981, %v2927
      %3253 = vst.msk [vmem:[#allocation2 + $0x878] sm:$0xff] %vm2981, %v2928
      %3254 = vst.msk [vmem:[#allocation2 + $0x880] sm:$0xff] %vm2981, %v2929
      %3255 = vst.msk [vmem:[#allocation2 + $0x888] sm:$0xff] %vm2981, %v2930
      %3256 = vst.msk [vmem:[#allocation2 + $0x890] sm:$0xff] %vm2981, %v2931
      %3257 = vst.msk [vmem:[#allocation2 + $0x898] sm:$0xff] %vm2981, %v2932
      %3258 = vst.msk [vmem:[#allocation2 + $0x8a0] sm:$0xff] %vm2981, %v2933
      %3259 = vst.msk [vmem:[#allocation2 + $0x8a8] sm:$0xff] %vm2981, %v2934
      %3260 = vst.msk [vmem:[#allocation2 + $0x8b0] sm:$0xff] %vm2981, %v2935
      %3261 = vst.msk [vmem:[#allocation2 + $0x8b8] sm:$0xff] %vm2981, %v2936
      %3262 = vst.msk [vmem:[#allocation2 + $0x8c0] sm:$0xff] %vm2981, %v2937
      %3263 = vst.msk [vmem:[#allocation2 + $0x8c8] sm:$0xff] %vm2981, %v2938
      %3264 = vst.msk [vmem:[#allocation2 + $0x8d0] sm:$0xff] %vm2981, %v2939
      %3265 = vst.msk [vmem:[#allocation2 + $0x8d8] sm:$0xff] %vm2981, %v2940
      %3266 = vst.msk [vmem:[#allocation2 + $0x8e0] sm:$0xff] %vm2981, %v2941
      %3267 = vst.msk [vmem:[#allocation2 + $0x8e8] sm:$0xff] %vm2981, %v2942
      %3268 = vst.msk [vmem:[#allocation2 + $0x8f0] sm:$0xff] %vm2981, %v2943
      %3269 = vst.msk [vmem:[#allocation2 + $0x8f8] sm:$0xff] %vm2981, %v2944
      %3270 = vst.msk [vmem:[#allocation2 + $0x900] sm:$0xff] %vm2981, %v2945
      %3271 = vst.msk [vmem:[#allocation2 + $0x908] sm:$0xff] %vm2981, %v2946
      %3272 = vst.msk [vmem:[#allocation2 + $0x910] sm:$0xff] %vm2981, %v2947
      %3273 = vst.msk [vmem:[#allocation2 + $0x918] sm:$0xff] %vm2981, %v2948
      %3274 = vst.msk [vmem:[#allocation2 + $0x920] sm:$0xff] %vm2981, %v2949
      %3275 = vst.msk [vmem:[#allocation2 + $0x928] sm:$0xff] %vm2981, %v2950
      %3276 = vst.msk [vmem:[#allocation2 + $0x930] sm:$0xff] %vm2981, %v2951
      %3277 = vst.msk [vmem:[#allocation2 + $0x938] sm:$0xff] %vm2981, %v2952
      %3278 = vst.msk [vmem:[#allocation2 + $0x940] sm:$0xff] %vm2981, %v2953
      %3279 = vst.msk [vmem:[#allocation2 + $0x948] sm:$0xff] %vm2981, %v2954
      %3280 = vst.msk [vmem:[#allocation2 + $0x950] sm:$0xff] %vm2981, %v2955
      %3281 = vst.msk [vmem:[#allocation2 + $0x958] sm:$0xff] %vm2981, %v2956
      %3282 = vst.msk [vmem:[#allocation2 + $0x960] sm:$0xff] %vm2981, %v2957
      %3283 = vst.msk [vmem:[#allocation2 + $0x968] sm:$0xff] %vm2981, %v2958
      %3284 = vst.msk [vmem:[#allocation2 + $0x970] sm:$0xff] %vm2981, %v2959
      %3285 = vst.msk [vmem:[#allocation2 + $0x978] sm:$0xff] %vm2981, %v2960
      %3286 = vst.msk [vmem:[#allocation2 + $0x980] sm:$0xff] %vm2981, %v2961
      %3287 = vst.msk [vmem:[#allocation2 + $0x988] sm:$0xff] %vm2981, %v2962
      %3288 = vst.msk [vmem:[#allocation2 + $0x990] sm:$0xff] %vm2981, %v2963
      %3289 = vst.msk [vmem:[#allocation2 + $0x998] sm:$0xff] %vm2981, %v2964
      %3290 = vst.msk [vmem:[#allocation2 + $0x9a0] sm:$0xff] %vm2981, %v2965
      %3291 = vst.msk [vmem:[#allocation2 + $0x9a8] sm:$0xff] %vm2981, %v2966
      %3292 = vst.msk [vmem:[#allocation2 + $0x9b0] sm:$0xff] %vm2981, %v2967
      %3293 = vst.msk [vmem:[#allocation2 + $0x9b8] sm:$0xff] %vm2981, %v2968
      %3294 = vst.msk [vmem:[#allocation2 + $0x9c0] sm:$0xff] %vm2981, %v2969
      %3295 = vst.msk [vmem:[#allocation2 + $0x9c8] sm:$0xff] %vm2981, %v2970
      %3296 = vst.msk [vmem:[#allocation2 + $0x9d0] sm:$0xff] %vm2981, %v2971
      %3297 = vst.msk [vmem:[#allocation2 + $0x9d8] sm:$0xff] %vm2981, %v2972
      %3298 = vst.msk [vmem:[#allocation2 + $0x9e0] sm:$0xff] %vm2981, %v2973
      %3299 = vst.msk [vmem:[#allocation2 + $0x9e8] sm:$0xff] %vm2981, %v2974
      %3300 = vst.msk [vmem:[#allocation2 + $0x9f0] sm:$0xff] %vm2981, %v2975
      %3301 = vst.msk [vmem:[#allocation2 + $0x9f8] sm:$0xff] %vm2981, %v2976
      %3302 = vst.msk [vmem:[#allocation2 + $0xa00] sm:$0xff] %vm2981, %v2977
      %3303 = vst.msk [vmem:[#allocation2 + $0xa08] sm:$0xff] %vm2981, %v2978
      %3304 = vst.msk [vmem:[#allocation2 + $0xa10] sm:$0xff] %vm2981, %v2979
      %3305 = vst.msk [vmem:[#allocation2 + $0xa18] sm:$0xff] %vm2981, %v2980
      %v3306 = vld [vmem:[%s4] sm:$0xff]
      %v3307 = vld [vmem:[%s4 + $0x8] sm:$0xff]
      %v3308 = vld [vmem:[%s4 + $0x10] sm:$0xff]
      %v3309 = vld [vmem:[%s4 + $0x18] sm:$0xff]
      %s3310 = scalar_lea.vmem %s4, 32
      %v3311 = vld [vmem:[%s3310] sm:$0xff]
      %v3312 = vld [vmem:[%s3310 + $0x8] sm:$0xff]
      %v3313 = vld [vmem:[%s3310 + $0x10] sm:$0xff]
      %v3314 = vld [vmem:[%s3310 + $0x18] sm:$0xff]
      %s3315 = scalar_lea.vmem %s4, 64
      %v3316 = vld [vmem:[%s3315] sm:$0xff]
      %v3317 = vld [vmem:[%s3315 + $0x8] sm:$0xff]
      %v3318 = vld [vmem:[%s3315 + $0x10] sm:$0xff]
      %v3319 = vld [vmem:[%s3315 + $0x18] sm:$0xff]
      %s3320 = scalar_lea.vmem %s4, 96
      %v3321 = vld [vmem:[%s3320] sm:$0xff]
      %v3322 = vld [vmem:[%s3320 + $0x8] sm:$0xff]
      %v3323 = vld [vmem:[%s3320 + $0x10] sm:$0xff]
      %v3324 = vld [vmem:[%s3320 + $0x18] sm:$0xff]
      %s3325 = scalar_lea.vmem %s4, 128
      %v3326 = vld [vmem:[%s3325] sm:$0xff]
      %v3327 = vld [vmem:[%s3325 + $0x8] sm:$0xff]
      %v3328 = vld [vmem:[%s3325 + $0x10] sm:$0xff]
      %v3329 = vld [vmem:[%s3325 + $0x18] sm:$0xff]
      %s3330 = scalar_lea.vmem %s4, 160
      %v3331 = vld [vmem:[%s3330] sm:$0xff]
      %v3332 = vld [vmem:[%s3330 + $0x8] sm:$0xff]
      %v3333 = vld [vmem:[%s3330 + $0x10] sm:$0xff]
      %v3334 = vld [vmem:[%s3330 + $0x18] sm:$0xff]
      %s3335 = scalar_lea.vmem %s4, 192
      %v3336 = vld [vmem:[%s3335] sm:$0xff]
      %v3337 = vld [vmem:[%s3335 + $0x8] sm:$0xff]
      %v3338 = vld [vmem:[%s3335 + $0x10] sm:$0xff]
      %v3339 = vld [vmem:[%s3335 + $0x18] sm:$0xff]
      %s3340 = scalar_lea.vmem %s4, 224
      %v3341 = vld [vmem:[%s3340] sm:$0xff]
      %v3342 = vld [vmem:[%s3340 + $0x8] sm:$0xff]
      %v3343 = vld [vmem:[%s3340 + $0x10] sm:$0xff]
      %v3344 = vld [vmem:[%s3340 + $0x18] sm:$0xff]
      %s3345 = scalar_lea.vmem %s4, 256
      %v3346 = vld [vmem:[%s3345] sm:$0xff]
      %v3347 = vld [vmem:[%s3345 + $0x8] sm:$0xff]
      %v3348 = vld [vmem:[%s3345 + $0x10] sm:$0xff]
      %v3349 = vld [vmem:[%s3345 + $0x18] sm:$0xff]
      %v3350 = vld [vmem:[%s350] sm:$0xff]
      %v3351 = vld [vmem:[%s350 + $0x8] sm:$0xff]
      %v3352 = vld [vmem:[%s350 + $0x10] sm:$0xff]
      %v3353 = vld [vmem:[%s350 + $0x18] sm:$0xff]
      %v3354 = vld [vmem:[%s7] sm:$0xff]
      %v3355 = vld [vmem:[%s7 + $0x8] sm:$0xff]
      %v3356 = vld [vmem:[%s7 + $0x10] sm:$0xff]
      %v3357 = vld [vmem:[%s7 + $0x18] sm:$0xff]
      %v3358 = vld [vmem:[%s7 + $0x20] sm:$0xff]
      %v3359 = vld [vmem:[%s7 + $0x28] sm:$0xff]
      %v3360 = vld [vmem:[%s7 + $0x30] sm:$0xff]
      %v3361 = vld [vmem:[%s7 + $0x38] sm:$0xff]
      %v3362 = vld [vmem:[%s7 + $0x40] sm:$0xff]
      %v3363 = vld [vmem:[%s7 + $0x48] sm:$0xff]
      %v3364 = vld [vmem:[%s7 + $0x50] sm:$0xff]
      %v3365 = vld [vmem:[%s7 + $0x58] sm:$0xff]
      %v3366 = vld [vmem:[%s7 + $0x60] sm:$0xff]
      %v3367 = vld [vmem:[%s7 + $0x68] sm:$0xff]
      %v3368 = vld [vmem:[%s7 + $0x70] sm:$0xff]
      %v3369 = vld [vmem:[%s7 + $0x78] sm:$0xff]
      %v3370 = vld [vmem:[#allocation2] sm:$0xff]
      %v3371 = vld [vmem:[#allocation2 + $0x8] sm:$0xff]
      %v3372 = vld [vmem:[#allocation2 + $0x10] sm:$0xff]
      %v3373 = vld [vmem:[#allocation2 + $0x18] sm:$0xff]
      %v3374 = vld [vmem:[#allocation2 + $0x20] sm:$0xff]
      %v3375 = vld [vmem:[#allocation2 + $0x28] sm:$0xff]
      %v3376 = vld [vmem:[#allocation2 + $0x30] sm:$0xff]
      %v3377 = vld [vmem:[#allocation2 + $0x38] sm:$0xff]
      %v3378 = vld [vmem:[#allocation2 + $0x40] sm:$0xff]
      %v3379 = vld [vmem:[#allocation2 + $0x48] sm:$0xff]
      %v3380 = vld [vmem:[#allocation2 + $0x50] sm:$0xff]
      %v3381 = vld [vmem:[#allocation2 + $0x58] sm:$0xff]
      %v3382 = vld [vmem:[#allocation2 + $0x60] sm:$0xff]
      %v3383 = vld [vmem:[#allocation2 + $0x68] sm:$0xff]
      %v3384 = vld [vmem:[#allocation2 + $0x70] sm:$0xff]
      %v3385 = vld [vmem:[#allocation2 + $0x78] sm:$0xff]
      %v3386 = vld [vmem:[#allocation2 + $0xa0] sm:$0xff]
      %v3387 = vld [vmem:[#allocation2 + $0xa8] sm:$0xff]
      %v3388 = vld [vmem:[#allocation2 + $0xb0] sm:$0xff]
      %v3389 = vld [vmem:[#allocation2 + $0xb8] sm:$0xff]
      %v3390 = vld [vmem:[#allocation2 + $0xc0] sm:$0xff]
      %v3391 = vld [vmem:[#allocation2 + $0xc8] sm:$0xff]
      %v3392 = vld [vmem:[#allocation2 + $0xd0] sm:$0xff]
      %v3393 = vld [vmem:[#allocation2 + $0xd8] sm:$0xff]
      %v3394 = vld [vmem:[#allocation2 + $0xe0] sm:$0xff]
      %v3395 = vld [vmem:[#allocation2 + $0xe8] sm:$0xff]
      %v3396 = vld [vmem:[#allocation2 + $0xf0] sm:$0xff]
      %v3397 = vld [vmem:[#allocation2 + $0xf8] sm:$0xff]
      %v3398 = vld [vmem:[#allocation2 + $0x100] sm:$0xff]
      %v3399 = vld [vmem:[#allocation2 + $0x108] sm:$0xff]
      %v3400 = vld [vmem:[#allocation2 + $0x110] sm:$0xff]
      %v3401 = vld [vmem:[#allocation2 + $0x118] sm:$0xff]
      %v3403 = vsel %vm2981, %v3386, 0
      %v3406 = vsel %vm2981, %v3387, 0
      %v3409 = vsel %vm2981, %v3388, 0
      %v3412 = vsel %vm2981, %v3389, 0
      %v3415 = vsel %vm2981, %v3390, 0
      %v3418 = vsel %vm2981, %v3391, 0
      %v3421 = vsel %vm2981, %v3392, 0
      %v3424 = vsel %vm2981, %v3393, 0
      %v3427 = vsel %vm2981, %v3394, 0
      %v3430 = vsel %vm2981, %v3395, 0
      %v3433 = vsel %vm2981, %v3396, 0
      %v3436 = vsel %vm2981, %v3397, 0
      %v3439 = vsel %vm2981, %v3398, 0
      %v3442 = vsel %vm2981, %v3399, 0
      %v3445 = vsel %vm2981, %v3400, 0
      %v3448 = vsel %vm2981, %v3401, 0
      %3450 = vmatpush.msra.mxu0 0.0
      %3451 = vmatpush.msra.mxu0 0.0
      %3452 = vmatpush.msra.mxu0 0.0
      %3453 = vmatpush.msra.mxu0 0.0
      %3454 = vmatpush.msra.mxu0 0.0
      %3455 = vmatpush.msra.mxu0 0.0
      %3456 = vmatpush.msra.mxu0 0.0
      %3457 = vmatpush.msra.mxu0 0.0
      %3458 = vmatpush.msra.mxu0 0.0
      %3459 = vmatpush.msra.mxu0 0.0
      %3460 = vmatpush.msra.mxu0 0.0
      %3461 = vmatpush.msra.mxu0 0.0
      %3462 = vmatpush.msra.mxu0 %v3314
      %3463 = vmatpush.msra.mxu0 %v3313
      %3464 = vmatpush.msra.mxu0 %v3312
      %3465 = vmatpush.msra.mxu0 %v3311
      %3466 = vmatmul.f32.gmra.mxu0 %v3403
      %v3467 = vpop.f32.mrf.mxu0
      %v3468 = vadd.f32 0.0, %v3467
      %3469 = vmatmul.f32.gmra.mxu0 %v3406
      %v3470 = vpop.f32.mrf.mxu0
      %v3471 = vadd.f32 0.0, %v3470
      %3472 = vmatmul.f32.gmra.mxu0 %v3409
      %v3473 = vpop.f32.mrf.mxu0
      %v3474 = vadd.f32 0.0, %v3473
      %3475 = vmatmul.f32.gmra.mxu0 %v3412
      %v3476 = vpop.f32.mrf.mxu0
      %v3477 = vadd.f32 0.0, %v3476
      %3478 = vmatmul.f32.gmra.mxu0 %v3415
      %v3479 = vpop.f32.mrf.mxu0
      %v3480 = vadd.f32 0.0, %v3479
      %3481 = vmatmul.f32.gmra.mxu0 %v3418
      %v3482 = vpop.f32.mrf.mxu0
      %v3483 = vadd.f32 0.0, %v3482
      %3484 = vmatmul.f32.gmra.mxu0 %v3421
      %v3485 = vpop.f32.mrf.mxu0
      %v3486 = vadd.f32 0.0, %v3485
      %3487 = vmatmul.f32.gmra.mxu0 %v3424
      %v3488 = vpop.f32.mrf.mxu0
      %v3489 = vadd.f32 0.0, %v3488
      %3490 = vmatmul.f32.gmra.mxu0 %v3427
      %v3491 = vpop.f32.mrf.mxu0
      %v3492 = vadd.f32 0.0, %v3491
      %3493 = vmatmul.f32.gmra.mxu0 %v3430
      %v3494 = vpop.f32.mrf.mxu0
      %v3495 = vadd.f32 0.0, %v3494
      %3496 = vmatmul.f32.gmra.mxu0 %v3433
      %v3497 = vpop.f32.mrf.mxu0
      %v3498 = vadd.f32 0.0, %v3497
      %3499 = vmatmul.f32.gmra.mxu0 %v3436
      %v3500 = vpop.f32.mrf.mxu0
      %v3501 = vadd.f32 0.0, %v3500
      %3502 = vmatmul.f32.gmra.mxu0 %v3439
      %v3503 = vpop.f32.mrf.mxu0
      %v3504 = vadd.f32 0.0, %v3503
      %3505 = vmatmul.f32.gmra.mxu0 %v3442
      %v3506 = vpop.f32.mrf.mxu0
      %v3507 = vadd.f32 0.0, %v3506
      %3508 = vmatmul.f32.gmra.mxu0 %v3445
      %v3509 = vpop.f32.mrf.mxu0
      %v3510 = vadd.f32 0.0, %v3509
      %3511 = vmatmul.f32.gmra.mxu0 %v3448
      %v3512 = vpop.f32.mrf.mxu0
      %v3513 = vadd.f32 0.0, %v3512
      %3514 = vdwg.mxu0
      %v3516 = vsel %vm2981, %v3370, 0
      %v3519 = vsel %vm2981, %v3371, 0
      %v3522 = vsel %vm2981, %v3372, 0
      %v3525 = vsel %vm2981, %v3373, 0
      %v3528 = vsel %vm2981, %v3374, 0
      %v3531 = vsel %vm2981, %v3375, 0
      %v3534 = vsel %vm2981, %v3376, 0
      %v3537 = vsel %vm2981, %v3377, 0
      %v3540 = vsel %vm2981, %v3378, 0
      %v3543 = vsel %vm2981, %v3379, 0
      %v3546 = vsel %vm2981, %v3380, 0
      %v3549 = vsel %vm2981, %v3381, 0
      %v3552 = vsel %vm2981, %v3382, 0
      %v3555 = vsel %vm2981, %v3383, 0
      %v3558 = vsel %vm2981, %v3384, 0
      %v3561 = vsel %vm2981, %v3385, 0
      %3563 = vmatpush.msra.mxu0 0.0
      %3564 = vmatpush.msra.mxu0 0.0
      %3565 = vmatpush.msra.mxu0 0.0
      %3566 = vmatpush.msra.mxu0 0.0
      %3567 = vmatpush.msra.mxu0 0.0
      %3568 = vmatpush.msra.mxu0 0.0
      %3569 = vmatpush.msra.mxu0 0.0
      %3570 = vmatpush.msra.mxu0 0.0
      %3571 = vmatpush.msra.mxu0 0.0
      %3572 = vmatpush.msra.mxu0 0.0
      %3573 = vmatpush.msra.mxu0 0.0
      %3574 = vmatpush.msra.mxu0 0.0
      %3575 = vmatpush.msra.mxu0 %v3309
      %3576 = vmatpush.msra.mxu0 %v3308
      %3577 = vmatpush.msra.mxu0 %v3307
      %3578 = vmatpush.msra.mxu0 %v3306
      %3579 = vmatmul.f32.gmra.mxu0 %v3516
      %v3580 = vpop.f32.mrf.mxu0
      %v3581 = vadd.f32 %v3468, %v3580
      %3582 = vmatmul.f32.gmra.mxu0 %v3519
      %v3583 = vpop.f32.mrf.mxu0
      %v3584 = vadd.f32 %v3471, %v3583
      %3585 = vmatmul.f32.gmra.mxu0 %v3522
      %v3586 = vpop.f32.mrf.mxu0
      %v3587 = vadd.f32 %v3474, %v3586
      %3588 = vmatmul.f32.gmra.mxu0 %v3525
      %v3589 = vpop.f32.mrf.mxu0
      %v3590 = vadd.f32 %v3477, %v3589
      %3591 = vmatmul.f32.gmra.mxu0 %v3528
      %v3592 = vpop.f32.mrf.mxu0
      %v3593 = vadd.f32 %v3480, %v3592
      %3594 = vmatmul.f32.gmra.mxu0 %v3531
      %v3595 = vpop.f32.mrf.mxu0
      %v3596 = vadd.f32 %v3483, %v3595
      %3597 = vmatmul.f32.gmra.mxu0 %v3534
      %v3598 = vpop.f32.mrf.mxu0
      %v3599 = vadd.f32 %v3486, %v3598
      %3600 = vmatmul.f32.gmra.mxu0 %v3537
      %v3601 = vpop.f32.mrf.mxu0
      %v3602 = vadd.f32 %v3489, %v3601
      %3603 = vmatmul.f32.gmra.mxu0 %v3540
      %v3604 = vpop.f32.mrf.mxu0
      %v3605 = vadd.f32 %v3492, %v3604
      %3606 = vmatmul.f32.gmra.mxu0 %v3543
      %v3607 = vpop.f32.mrf.mxu0
      %v3608 = vadd.f32 %v3495, %v3607
      %3609 = vmatmul.f32.gmra.mxu0 %v3546
      %v3610 = vpop.f32.mrf.mxu0
      %v3611 = vadd.f32 %v3498, %v3610
      %3612 = vmatmul.f32.gmra.mxu0 %v3549
      %v3613 = vpop.f32.mrf.mxu0
      %v3614 = vadd.f32 %v3501, %v3613
      %3615 = vmatmul.f32.gmra.mxu0 %v3552
      %v3616 = vpop.f32.mrf.mxu0
      %v3617 = vadd.f32 %v3504, %v3616
      %3618 = vmatmul.f32.gmra.mxu0 %v3555
      %v3619 = vpop.f32.mrf.mxu0
      %v3620 = vadd.f32 %v3507, %v3619
      %3621 = vmatmul.f32.gmra.mxu0 %v3558
      %v3622 = vpop.f32.mrf.mxu0
      %v3623 = vadd.f32 %v3510, %v3622
      %3624 = vmatmul.f32.gmra.mxu0 %v3561
      %v3625 = vpop.f32.mrf.mxu0
      %v3626 = vadd.f32 %v3513, %v3625
      %3627 = vdwg.mxu0
      %v3628 = vld [vmem:[#allocation2 + $0x20] sm:$0xff]
      %v3629 = vld [vmem:[#allocation2 + $0x28] sm:$0xff]
      %v3630 = vld [vmem:[#allocation2 + $0x30] sm:$0xff]
      %v3631 = vld [vmem:[#allocation2 + $0x38] sm:$0xff]
      %v3632 = vld [vmem:[#allocation2 + $0x40] sm:$0xff]
      %v3633 = vld [vmem:[#allocation2 + $0x48] sm:$0xff]
      %v3634 = vld [vmem:[#allocation2 + $0x50] sm:$0xff]
      %v3635 = vld [vmem:[#allocation2 + $0x58] sm:$0xff]
      %v3636 = vld [vmem:[#allocation2 + $0x60] sm:$0xff]
      %v3637 = vld [vmem:[#allocation2 + $0x68] sm:$0xff]
      %v3638 = vld [vmem:[#allocation2 + $0x70] sm:$0xff]
      %v3639 = vld [vmem:[#allocation2 + $0x78] sm:$0xff]
      %v3640 = vld [vmem:[#allocation2 + $0x80] sm:$0xff]
      %v3641 = vld [vmem:[#allocation2 + $0x88] sm:$0xff]
      %v3642 = vld [vmem:[#allocation2 + $0x90] sm:$0xff]
      %v3643 = vld [vmem:[#allocation2 + $0x98] sm:$0xff]
      %v3645 = vsel %vm2981, %v3628, 0
      %v3648 = vsel %vm2981, %v3629, 0
      %v3651 = vsel %vm2981, %v3630, 0
      %v3654 = vsel %vm2981, %v3631, 0
      %v3657 = vsel %vm2981, %v3632, 0
      %v3660 = vsel %vm2981, %v3633, 0
      %v3663 = vsel %vm2981, %v3634, 0
      %v3666 = vsel %vm2981, %v3635, 0
      %v3669 = vsel %vm2981, %v3636, 0
      %v3672 = vsel %vm2981, %v3637, 0
      %v3675 = vsel %vm2981, %v3638, 0
      %v3678 = vsel %vm2981, %v3639, 0
      %v3681 = vsel %vm2981, %v3640, 0
      %v3684 = vsel %vm2981, %v3641, 0
      %v3687 = vsel %vm2981, %v3642, 0
      %v3690 = vsel %vm2981, %v3643, 0
      %3692 = vmatpush.msra.mxu0 0.0
      %3693 = vmatpush.msra.mxu0 0.0
      %3694 = vmatpush.msra.mxu0 0.0
      %3695 = vmatpush.msra.mxu0 0.0
      %3696 = vmatpush.msra.mxu0 0.0
      %3697 = vmatpush.msra.mxu0 0.0
      %3698 = vmatpush.msra.mxu0 0.0
      %3699 = vmatpush.msra.mxu0 0.0
      %3700 = vmatpush.msra.mxu0 0.0
      %3701 = vmatpush.msra.mxu0 0.0
      %3702 = vmatpush.msra.mxu0 0.0
      %3703 = vmatpush.msra.mxu0 0.0
      %3704 = vmatpush.msra.mxu0 %v3319
      %3705 = vmatpush.msra.mxu0 %v3318
      %3706 = vmatpush.msra.mxu0 %v3317
      %3707 = vmatpush.msra.mxu0 %v3316
      %3708 = vmatmul.f32.gmra.mxu0 %v3645
      %v3709 = vpop.f32.mrf.mxu0
      %v3710 = vadd.f32 0.0, %v3709
      %3711 = vmatmul.f32.gmra.mxu0 %v3648
      %v3712 = vpop.f32.mrf.mxu0
      %v3713 = vadd.f32 0.0, %v3712
      %3714 = vmatmul.f32.gmra.mxu0 %v3651
      %v3715 = vpop.f32.mrf.mxu0
      %v3716 = vadd.f32 0.0, %v3715
      %3717 = vmatmul.f32.gmra.mxu0 %v3654
      %v3718 = vpop.f32.mrf.mxu0
      %v3719 = vadd.f32 0.0, %v3718
      %3720 = vmatmul.f32.gmra.mxu0 %v3657
      %v3721 = vpop.f32.mrf.mxu0
      %v3722 = vadd.f32 0.0, %v3721
      %3723 = vmatmul.f32.gmra.mxu0 %v3660
      %v3724 = vpop.f32.mrf.mxu0
      %v3725 = vadd.f32 0.0, %v3724
      %3726 = vmatmul.f32.gmra.mxu0 %v3663
      %v3727 = vpop.f32.mrf.mxu0
      %v3728 = vadd.f32 0.0, %v3727
      %3729 = vmatmul.f32.gmra.mxu0 %v3666
      %v3730 = vpop.f32.mrf.mxu0
      %v3731 = vadd.f32 0.0, %v3730
      %3732 = vmatmul.f32.gmra.mxu0 %v3669
      %v3733 = vpop.f32.mrf.mxu0
      %v3734 = vadd.f32 0.0, %v3733
      %3735 = vmatmul.f32.gmra.mxu0 %v3672
      %v3736 = vpop.f32.mrf.mxu0
      %v3737 = vadd.f32 0.0, %v3736
      %3738 = vmatmul.f32.gmra.mxu0 %v3675
      %v3739 = vpop.f32.mrf.mxu0
      %v3740 = vadd.f32 0.0, %v3739
      %3741 = vmatmul.f32.gmra.mxu0 %v3678
      %v3742 = vpop.f32.mrf.mxu0
      %v3743 = vadd.f32 0.0, %v3742
      %3744 = vmatmul.f32.gmra.mxu0 %v3681
      %v3745 = vpop.f32.mrf.mxu0
      %v3746 = vadd.f32 0.0, %v3745
      %3747 = vmatmul.f32.gmra.mxu0 %v3684
      %v3748 = vpop.f32.mrf.mxu0
      %v3749 = vadd.f32 0.0, %v3748
      %3750 = vmatmul.f32.gmra.mxu0 %v3687
      %v3751 = vpop.f32.mrf.mxu0
      %v3752 = vadd.f32 0.0, %v3751
      %3753 = vmatmul.f32.gmra.mxu0 %v3690
      %v3754 = vpop.f32.mrf.mxu0
      %v3755 = vadd.f32 0.0, %v3754
      %3756 = vdwg.mxu0
      %v3757 = vadd.f32 %v3581, %v3710
      %v3758 = vadd.f32 %v3584, %v3713
      %v3759 = vadd.f32 %v3587, %v3716
      %v3760 = vadd.f32 %v3590, %v3719
      %v3761 = vadd.f32 %v3593, %v3722
      %v3762 = vadd.f32 %v3596, %v3725
      %v3763 = vadd.f32 %v3599, %v3728
      %v3764 = vadd.f32 %v3602, %v3731
      %v3765 = vadd.f32 %v3605, %v3734
      %v3766 = vadd.f32 %v3608, %v3737
      %v3767 = vadd.f32 %v3611, %v3740
      %v3768 = vadd.f32 %v3614, %v3743
      %v3769 = vadd.f32 %v3617, %v3746
      %v3770 = vadd.f32 %v3620, %v3749
      %v3771 = vadd.f32 %v3623, %v3752
      %v3772 = vadd.f32 %v3626, %v3755
      %v3773 = vld [vmem:[#allocation2 + $0x5a0] sm:$0xff]
      %v3774 = vld [vmem:[#allocation2 + $0x5a8] sm:$0xff]
      %v3775 = vld [vmem:[#allocation2 + $0x5b0] sm:$0xff]
      %v3776 = vld [vmem:[#allocation2 + $0x5b8] sm:$0xff]
      %v3777 = vld [vmem:[#allocation2 + $0x5c0] sm:$0xff]
      %v3778 = vld [vmem:[#allocation2 + $0x5c8] sm:$0xff]
      %v3779 = vld [vmem:[#allocation2 + $0x5d0] sm:$0xff]
      %v3780 = vld [vmem:[#allocation2 + $0x5d8] sm:$0xff]
      %v3781 = vld [vmem:[#allocation2 + $0x5e0] sm:$0xff]
      %v3782 = vld [vmem:[#allocation2 + $0x5e8] sm:$0xff]
      %v3783 = vld [vmem:[#allocation2 + $0x5f0] sm:$0xff]
      %v3784 = vld [vmem:[#allocation2 + $0x5f8] sm:$0xff]
      %v3785 = vld [vmem:[#allocation2 + $0x600] sm:$0xff]
      %v3786 = vld [vmem:[#allocation2 + $0x608] sm:$0xff]
      %v3787 = vld [vmem:[#allocation2 + $0x610] sm:$0xff]
      %v3788 = vld [vmem:[#allocation2 + $0x618] sm:$0xff]
      %v3790 = vsel %vm2981, %v3773, 0
      %v3793 = vsel %vm2981, %v3774, 0
      %v3796 = vsel %vm2981, %v3775, 0
      %v3799 = vsel %vm2981, %v3776, 0
      %v3802 = vsel %vm2981, %v3777, 0
      %v3805 = vsel %vm2981, %v3778, 0
      %v3808 = vsel %vm2981, %v3779, 0
      %v3811 = vsel %vm2981, %v3780, 0
      %v3814 = vsel %vm2981, %v3781, 0
      %v3817 = vsel %vm2981, %v3782, 0
      %v3820 = vsel %vm2981, %v3783, 0
      %v3823 = vsel %vm2981, %v3784, 0
      %v3826 = vsel %vm2981, %v3785, 0
      %v3829 = vsel %vm2981, %v3786, 0
      %v3832 = vsel %vm2981, %v3787, 0
      %v3835 = vsel %vm2981, %v3788, 0
      %3837 = vmatpush.msra.mxu0 0.0
      %3838 = vmatpush.msra.mxu0 0.0
      %3839 = vmatpush.msra.mxu0 0.0
      %3840 = vmatpush.msra.mxu0 0.0
      %3841 = vmatpush.msra.mxu0 0.0
      %3842 = vmatpush.msra.mxu0 0.0
      %3843 = vmatpush.msra.mxu0 0.0
      %3844 = vmatpush.msra.mxu0 0.0
      %3845 = vmatpush.msra.mxu0 0.0
      %3846 = vmatpush.msra.mxu0 0.0
      %3847 = vmatpush.msra.mxu0 0.0
      %3848 = vmatpush.msra.mxu0 0.0
      %3849 = vmatpush.msra.mxu0 %v3324
      %3850 = vmatpush.msra.mxu0 %v3323
      %3851 = vmatpush.msra.mxu0 %v3322
      %3852 = vmatpush.msra.mxu0 %v3321
      %3853 = vmatmul.f32.gmra.mxu0 %v3790
      %v3854 = vpop.f32.mrf.mxu0
      %v3855 = vadd.f32 0.0, %v3854
      %3856 = vmatmul.f32.gmra.mxu0 %v3793
      %v3857 = vpop.f32.mrf.mxu0
      %v3858 = vadd.f32 0.0, %v3857
      %3859 = vmatmul.f32.gmra.mxu0 %v3796
      %v3860 = vpop.f32.mrf.mxu0
      %v3861 = vadd.f32 0.0, %v3860
      %3862 = vmatmul.f32.gmra.mxu0 %v3799
      %v3863 = vpop.f32.mrf.mxu0
      %v3864 = vadd.f32 0.0, %v3863
      %3865 = vmatmul.f32.gmra.mxu0 %v3802
      %v3866 = vpop.f32.mrf.mxu0
      %v3867 = vadd.f32 0.0, %v3866
      %3868 = vmatmul.f32.gmra.mxu0 %v3805
      %v3869 = vpop.f32.mrf.mxu0
      %v3870 = vadd.f32 0.0, %v3869
      %3871 = vmatmul.f32.gmra.mxu0 %v3808
      %v3872 = vpop.f32.mrf.mxu0
      %v3873 = vadd.f32 0.0, %v3872
      %3874 = vmatmul.f32.gmra.mxu0 %v3811
      %v3875 = vpop.f32.mrf.mxu0
      %v3876 = vadd.f32 0.0, %v3875
      %3877 = vmatmul.f32.gmra.mxu0 %v3814
      %v3878 = vpop.f32.mrf.mxu0
      %v3879 = vadd.f32 0.0, %v3878
      %3880 = vmatmul.f32.gmra.mxu0 %v3817
      %v3881 = vpop.f32.mrf.mxu0
      %v3882 = vadd.f32 0.0, %v3881
      %3883 = vmatmul.f32.gmra.mxu0 %v3820
      %v3884 = vpop.f32.mrf.mxu0
      %v3885 = vadd.f32 0.0, %v3884
      %3886 = vmatmul.f32.gmra.mxu0 %v3823
      %v3887 = vpop.f32.mrf.mxu0
      %v3888 = vadd.f32 0.0, %v3887
      %3889 = vmatmul.f32.gmra.mxu0 %v3826
      %v3890 = vpop.f32.mrf.mxu0
      %v3891 = vadd.f32 0.0, %v3890
      %3892 = vmatmul.f32.gmra.mxu0 %v3829
      %v3893 = vpop.f32.mrf.mxu0
      %v3894 = vadd.f32 0.0, %v3893
      %3895 = vmatmul.f32.gmra.mxu0 %v3832
      %v3896 = vpop.f32.mrf.mxu0
      %v3897 = vadd.f32 0.0, %v3896
      %3898 = vmatmul.f32.gmra.mxu0 %v3835
      %v3899 = vpop.f32.mrf.mxu0
      %v3900 = vadd.f32 0.0, %v3899
      %3901 = vdwg.mxu0
      %v3902 = vadd.f32 %v3757, %v3855
      %v3903 = vadd.f32 %v3758, %v3858
      %v3904 = vadd.f32 %v3759, %v3861
      %v3905 = vadd.f32 %v3760, %v3864
      %v3906 = vadd.f32 %v3761, %v3867
      %v3907 = vadd.f32 %v3762, %v3870
      %v3908 = vadd.f32 %v3763, %v3873
      %v3909 = vadd.f32 %v3764, %v3876
      %v3910 = vadd.f32 %v3765, %v3879
      %v3911 = vadd.f32 %v3766, %v3882
      %v3912 = vadd.f32 %v3767, %v3885
      %v3913 = vadd.f32 %v3768, %v3888
      %v3914 = vadd.f32 %v3769, %v3891
      %v3915 = vadd.f32 %v3770, %v3894
      %v3916 = vadd.f32 %v3771, %v3897
      %v3917 = vadd.f32 %v3772, %v3900
      %v3918 = vld [vmem:[#allocation2 + $0x640] sm:$0xff]
      %v3919 = vld [vmem:[#allocation2 + $0x648] sm:$0xff]
      %v3920 = vld [vmem:[#allocation2 + $0x650] sm:$0xff]
      %v3921 = vld [vmem:[#allocation2 + $0x658] sm:$0xff]
      %v3922 = vld [vmem:[#allocation2 + $0x660] sm:$0xff]
      %v3923 = vld [vmem:[#allocation2 + $0x668] sm:$0xff]
      %v3924 = vld [vmem:[#allocation2 + $0x670] sm:$0xff]
      %v3925 = vld [vmem:[#allocation2 + $0x678] sm:$0xff]
      %v3926 = vld [vmem:[#allocation2 + $0x680] sm:$0xff]
      %v3927 = vld [vmem:[#allocation2 + $0x688] sm:$0xff]
      %v3928 = vld [vmem:[#allocation2 + $0x690] sm:$0xff]
      %v3929 = vld [vmem:[#allocation2 + $0x698] sm:$0xff]
      %v3930 = vld [vmem:[#allocation2 + $0x6a0] sm:$0xff]
      %v3931 = vld [vmem:[#allocation2 + $0x6a8] sm:$0xff]
      %v3932 = vld [vmem:[#allocation2 + $0x6b0] sm:$0xff]
      %v3933 = vld [vmem:[#allocation2 + $0x6b8] sm:$0xff]
      %v3935 = vsel %vm2981, %v3918, 0
      %v3938 = vsel %vm2981, %v3919, 0
      %v3941 = vsel %vm2981, %v3920, 0
      %v3944 = vsel %vm2981, %v3921, 0
      %v3947 = vsel %vm2981, %v3922, 0
      %v3950 = vsel %vm2981, %v3923, 0
      %v3953 = vsel %vm2981, %v3924, 0
      %v3956 = vsel %vm2981, %v3925, 0
      %v3959 = vsel %vm2981, %v3926, 0
      %v3962 = vsel %vm2981, %v3927, 0
      %v3965 = vsel %vm2981, %v3928, 0
      %v3968 = vsel %vm2981, %v3929, 0
      %v3971 = vsel %vm2981, %v3930, 0
      %v3974 = vsel %vm2981, %v3931, 0
      %v3977 = vsel %vm2981, %v3932, 0
      %v3980 = vsel %vm2981, %v3933, 0
      %3982 = vmatpush.msra.mxu0 0.0
      %3983 = vmatpush.msra.mxu0 0.0
      %3984 = vmatpush.msra.mxu0 0.0
      %3985 = vmatpush.msra.mxu0 0.0
      %3986 = vmatpush.msra.mxu0 0.0
      %3987 = vmatpush.msra.mxu0 0.0
      %3988 = vmatpush.msra.mxu0 0.0
      %3989 = vmatpush.msra.mxu0 0.0
      %3990 = vmatpush.msra.mxu0 0.0
      %3991 = vmatpush.msra.mxu0 0.0
      %3992 = vmatpush.msra.mxu0 0.0
      %3993 = vmatpush.msra.mxu0 0.0
      %3994 = vmatpush.msra.mxu0 %v3329
      %3995 = vmatpush.msra.mxu0 %v3328
      %3996 = vmatpush.msra.mxu0 %v3327
      %3997 = vmatpush.msra.mxu0 %v3326
      %3998 = vmatmul.f32.gmra.mxu0 %v3935
      %v3999 = vpop.f32.mrf.mxu0
      %v4000 = vadd.f32 0.0, %v3999
      %4001 = vmatmul.f32.gmra.mxu0 %v3938
      %v4002 = vpop.f32.mrf.mxu0
      %v4003 = vadd.f32 0.0, %v4002
      %4004 = vmatmul.f32.gmra.mxu0 %v3941
      %v4005 = vpop.f32.mrf.mxu0
      %v4006 = vadd.f32 0.0, %v4005
      %4007 = vmatmul.f32.gmra.mxu0 %v3944
      %v4008 = vpop.f32.mrf.mxu0
      %v4009 = vadd.f32 0.0, %v4008
      %4010 = vmatmul.f32.gmra.mxu0 %v3947
      %v4011 = vpop.f32.mrf.mxu0
      %v4012 = vadd.f32 0.0, %v4011
      %4013 = vmatmul.f32.gmra.mxu0 %v3950
      %v4014 = vpop.f32.mrf.mxu0
      %v4015 = vadd.f32 0.0, %v4014
      %4016 = vmatmul.f32.gmra.mxu0 %v3953
      %v4017 = vpop.f32.mrf.mxu0
      %v4018 = vadd.f32 0.0, %v4017
      %4019 = vmatmul.f32.gmra.mxu0 %v3956
      %v4020 = vpop.f32.mrf.mxu0
      %v4021 = vadd.f32 0.0, %v4020
      %4022 = vmatmul.f32.gmra.mxu0 %v3959
      %v4023 = vpop.f32.mrf.mxu0
      %v4024 = vadd.f32 0.0, %v4023
      %4025 = vmatmul.f32.gmra.mxu0 %v3962
      %v4026 = vpop.f32.mrf.mxu0
      %v4027 = vadd.f32 0.0, %v4026
      %4028 = vmatmul.f32.gmra.mxu0 %v3965
      %v4029 = vpop.f32.mrf.mxu0
      %v4030 = vadd.f32 0.0, %v4029
      %4031 = vmatmul.f32.gmra.mxu0 %v3968
      %v4032 = vpop.f32.mrf.mxu0
      %v4033 = vadd.f32 0.0, %v4032
      %4034 = vmatmul.f32.gmra.mxu0 %v3971
      %v4035 = vpop.f32.mrf.mxu0
      %v4036 = vadd.f32 0.0, %v4035
      %4037 = vmatmul.f32.gmra.mxu0 %v3974
      %v4038 = vpop.f32.mrf.mxu0
      %v4039 = vadd.f32 0.0, %v4038
      %4040 = vmatmul.f32.gmra.mxu0 %v3977
      %v4041 = vpop.f32.mrf.mxu0
      %v4042 = vadd.f32 0.0, %v4041
      %4043 = vmatmul.f32.gmra.mxu0 %v3980
      %v4044 = vpop.f32.mrf.mxu0
      %v4045 = vadd.f32 0.0, %v4044
      %4046 = vdwg.mxu0
      %v4047 = vadd.f32 %v3902, %v4000
      %v4048 = vadd.f32 %v3903, %v4003
      %v4049 = vadd.f32 %v3904, %v4006
      %v4050 = vadd.f32 %v3905, %v4009
      %v4051 = vadd.f32 %v3906, %v4012
      %v4052 = vadd.f32 %v3907, %v4015
      %v4053 = vadd.f32 %v3908, %v4018
      %v4054 = vadd.f32 %v3909, %v4021
      %v4055 = vadd.f32 %v3910, %v4024
      %v4056 = vadd.f32 %v3911, %v4027
      %v4057 = vadd.f32 %v3912, %v4030
      %v4058 = vadd.f32 %v3913, %v4033
      %v4059 = vadd.f32 %v3914, %v4036
      %v4060 = vadd.f32 %v3915, %v4039
      %v4061 = vadd.f32 %v3916, %v4042
      %v4062 = vadd.f32 %v3917, %v4045
      %v4063 = vld [vmem:[#allocation2 + $0x5c0] sm:$0xff]
      %v4064 = vld [vmem:[#allocation2 + $0x5c8] sm:$0xff]
      %v4065 = vld [vmem:[#allocation2 + $0x5d0] sm:$0xff]
      %v4066 = vld [vmem:[#allocation2 + $0x5d8] sm:$0xff]
      %v4067 = vld [vmem:[#allocation2 + $0x5e0] sm:$0xff]
      %v4068 = vld [vmem:[#allocation2 + $0x5e8] sm:$0xff]
      %v4069 = vld [vmem:[#allocation2 + $0x5f0] sm:$0xff]
      %v4070 = vld [vmem:[#allocation2 + $0x5f8] sm:$0xff]
      %v4071 = vld [vmem:[#allocation2 + $0x600] sm:$0xff]
      %v4072 = vld [vmem:[#allocation2 + $0x608] sm:$0xff]
      %v4073 = vld [vmem:[#allocation2 + $0x610] sm:$0xff]
      %v4074 = vld [vmem:[#allocation2 + $0x618] sm:$0xff]
      %v4075 = vld [vmem:[#allocation2 + $0x620] sm:$0xff]
      %v4076 = vld [vmem:[#allocation2 + $0x628] sm:$0xff]
      %v4077 = vld [vmem:[#allocation2 + $0x630] sm:$0xff]
      %v4078 = vld [vmem:[#allocation2 + $0x638] sm:$0xff]
      %v4080 = vsel %vm2981, %v4063, 0
      %v4083 = vsel %vm2981, %v4064, 0
      %v4086 = vsel %vm2981, %v4065, 0
      %v4089 = vsel %vm2981, %v4066, 0
      %v4092 = vsel %vm2981, %v4067, 0
      %v4095 = vsel %vm2981, %v4068, 0
      %v4098 = vsel %vm2981, %v4069, 0
      %v4101 = vsel %vm2981, %v4070, 0
      %v4104 = vsel %vm2981, %v4071, 0
      %v4107 = vsel %vm2981, %v4072, 0
      %v4110 = vsel %vm2981, %v4073, 0
      %v4113 = vsel %vm2981, %v4074, 0
      %v4116 = vsel %vm2981, %v4075, 0
      %v4119 = vsel %vm2981, %v4076, 0
      %v4122 = vsel %vm2981, %v4077, 0
      %v4125 = vsel %vm2981, %v4078, 0
      %4127 = vmatpush.msra.mxu0 0.0
      %4128 = vmatpush.msra.mxu0 0.0
      %4129 = vmatpush.msra.mxu0 0.0
      %4130 = vmatpush.msra.mxu0 0.0
      %4131 = vmatpush.msra.mxu0 0.0
      %4132 = vmatpush.msra.mxu0 0.0
      %4133 = vmatpush.msra.mxu0 0.0
      %4134 = vmatpush.msra.mxu0 0.0
      %4135 = vmatpush.msra.mxu0 0.0
      %4136 = vmatpush.msra.mxu0 0.0
      %4137 = vmatpush.msra.mxu0 0.0
      %4138 = vmatpush.msra.mxu0 0.0
      %4139 = vmatpush.msra.mxu0 %v3334
      %4140 = vmatpush.msra.mxu0 %v3333
      %4141 = vmatpush.msra.mxu0 %v3332
      %4142 = vmatpush.msra.mxu0 %v3331
      %4143 = vmatmul.f32.gmra.mxu0 %v4080
      %v4144 = vpop.f32.mrf.mxu0
      %v4145 = vadd.f32 0.0, %v4144
      %4146 = vmatmul.f32.gmra.mxu0 %v4083
      %v4147 = vpop.f32.mrf.mxu0
      %v4148 = vadd.f32 0.0, %v4147
      %4149 = vmatmul.f32.gmra.mxu0 %v4086
      %v4150 = vpop.f32.mrf.mxu0
      %v4151 = vadd.f32 0.0, %v4150
      %4152 = vmatmul.f32.gmra.mxu0 %v4089
      %v4153 = vpop.f32.mrf.mxu0
      %v4154 = vadd.f32 0.0, %v4153
      %4155 = vmatmul.f32.gmra.mxu0 %v4092
      %v4156 = vpop.f32.mrf.mxu0
      %v4157 = vadd.f32 0.0, %v4156
      %4158 = vmatmul.f32.gmra.mxu0 %v4095
      %v4159 = vpop.f32.mrf.mxu0
      %v4160 = vadd.f32 0.0, %v4159
      %4161 = vmatmul.f32.gmra.mxu0 %v4098
      %v4162 = vpop.f32.mrf.mxu0
      %v4163 = vadd.f32 0.0, %v4162
      %4164 = vmatmul.f32.gmra.mxu0 %v4101
      %v4165 = vpop.f32.mrf.mxu0
      %v4166 = vadd.f32 0.0, %v4165
      %4167 = vmatmul.f32.gmra.mxu0 %v4104
      %v4168 = vpop.f32.mrf.mxu0
      %v4169 = vadd.f32 0.0, %v4168
      %4170 = vmatmul.f32.gmra.mxu0 %v4107
      %v4171 = vpop.f32.mrf.mxu0
      %v4172 = vadd.f32 0.0, %v4171
      %4173 = vmatmul.f32.gmra.mxu0 %v4110
      %v4174 = vpop.f32.mrf.mxu0
      %v4175 = vadd.f32 0.0, %v4174
      %4176 = vmatmul.f32.gmra.mxu0 %v4113
      %v4177 = vpop.f32.mrf.mxu0
      %v4178 = vadd.f32 0.0, %v4177
      %4179 = vmatmul.f32.gmra.mxu0 %v4116
      %v4180 = vpop.f32.mrf.mxu0
      %v4181 = vadd.f32 0.0, %v4180
      %4182 = vmatmul.f32.gmra.mxu0 %v4119
      %v4183 = vpop.f32.mrf.mxu0
      %v4184 = vadd.f32 0.0, %v4183
      %4185 = vmatmul.f32.gmra.mxu0 %v4122
      %v4186 = vpop.f32.mrf.mxu0
      %v4187 = vadd.f32 0.0, %v4186
      %4188 = vmatmul.f32.gmra.mxu0 %v4125
      %v4189 = vpop.f32.mrf.mxu0
      %v4190 = vadd.f32 0.0, %v4189
      %4191 = vdwg.mxu0
      %v4192 = vadd.f32 %v4047, %v4145
      %v4193 = vadd.f32 %v4048, %v4148
      %v4194 = vadd.f32 %v4049, %v4151
      %v4195 = vadd.f32 %v4050, %v4154
      %v4196 = vadd.f32 %v4051, %v4157
      %v4197 = vadd.f32 %v4052, %v4160
      %v4198 = vadd.f32 %v4053, %v4163
      %v4199 = vadd.f32 %v4054, %v4166
      %v4200 = vadd.f32 %v4055, %v4169
      %v4201 = vadd.f32 %v4056, %v4172
      %v4202 = vadd.f32 %v4057, %v4175
      %v4203 = vadd.f32 %v4058, %v4178
      %v4204 = vadd.f32 %v4059, %v4181
      %v4205 = vadd.f32 %v4060, %v4184
      %v4206 = vadd.f32 %v4061, %v4187
      %v4207 = vadd.f32 %v4062, %v4190
      %v4208 = vld [vmem:[#allocation2 + $0x120] sm:$0xff]
      %v4209 = vld [vmem:[#allocation2 + $0x128] sm:$0xff]
      %v4210 = vld [vmem:[#allocation2 + $0x130] sm:$0xff]
      %v4211 = vld [vmem:[#allocation2 + $0x138] sm:$0xff]
      %v4212 = vld [vmem:[#allocation2 + $0x140] sm:$0xff]
      %v4213 = vld [vmem:[#allocation2 + $0x148] sm:$0xff]
      %v4214 = vld [vmem:[#allocation2 + $0x150] sm:$0xff]
      %v4215 = vld [vmem:[#allocation2 + $0x158] sm:$0xff]
      %v4216 = vld [vmem:[#allocation2 + $0x160] sm:$0xff]
      %v4217 = vld [vmem:[#allocation2 + $0x168] sm:$0xff]
      %v4218 = vld [vmem:[#allocation2 + $0x170] sm:$0xff]
      %v4219 = vld [vmem:[#allocation2 + $0x178] sm:$0xff]
      %v4220 = vld [vmem:[#allocation2 + $0x180] sm:$0xff]
      %v4221 = vld [vmem:[#allocation2 + $0x188] sm:$0xff]
      %v4222 = vld [vmem:[#allocation2 + $0x190] sm:$0xff]
      %v4223 = vld [vmem:[#allocation2 + $0x198] sm:$0xff]
      %v4225 = vsel %vm2981, %v4208, 0
      %v4228 = vsel %vm2981, %v4209, 0
      %v4231 = vsel %vm2981, %v4210, 0
      %v4234 = vsel %vm2981, %v4211, 0
      %v4237 = vsel %vm2981, %v4212, 0
      %v4240 = vsel %vm2981, %v4213, 0
      %v4243 = vsel %vm2981, %v4214, 0
      %v4246 = vsel %vm2981, %v4215, 0
      %v4249 = vsel %vm2981, %v4216, 0
      %v4252 = vsel %vm2981, %v4217, 0
      %v4255 = vsel %vm2981, %v4218, 0
      %v4258 = vsel %vm2981, %v4219, 0
      %v4261 = vsel %vm2981, %v4220, 0
      %v4264 = vsel %vm2981, %v4221, 0
      %v4267 = vsel %vm2981, %v4222, 0
      %v4270 = vsel %vm2981, %v4223, 0
      %4272 = vmatpush.msra.mxu0 0.0
      %4273 = vmatpush.msra.mxu0 0.0
      %4274 = vmatpush.msra.mxu0 0.0
      %4275 = vmatpush.msra.mxu0 0.0
      %4276 = vmatpush.msra.mxu0 0.0
      %4277 = vmatpush.msra.mxu0 0.0
      %4278 = vmatpush.msra.mxu0 0.0
      %4279 = vmatpush.msra.mxu0 0.0
      %4280 = vmatpush.msra.mxu0 0.0
      %4281 = vmatpush.msra.mxu0 0.0
      %4282 = vmatpush.msra.mxu0 0.0
      %4283 = vmatpush.msra.mxu0 0.0
      %4284 = vmatpush.msra.mxu0 %v3339
      %4285 = vmatpush.msra.mxu0 %v3338
      %4286 = vmatpush.msra.mxu0 %v3337
      %4287 = vmatpush.msra.mxu0 %v3336
      %4288 = vmatmul.f32.gmra.mxu0 %v4225
      %v4289 = vpop.f32.mrf.mxu0
      %v4290 = vadd.f32 0.0, %v4289
      %4291 = vmatmul.f32.gmra.mxu0 %v4228
      %v4292 = vpop.f32.mrf.mxu0
      %v4293 = vadd.f32 0.0, %v4292
      %4294 = vmatmul.f32.gmra.mxu0 %v4231
      %v4295 = vpop.f32.mrf.mxu0
      %v4296 = vadd.f32 0.0, %v4295
      %4297 = vmatmul.f32.gmra.mxu0 %v4234
      %v4298 = vpop.f32.mrf.mxu0
      %v4299 = vadd.f32 0.0, %v4298
      %4300 = vmatmul.f32.gmra.mxu0 %v4237
      %v4301 = vpop.f32.mrf.mxu0
      %v4302 = vadd.f32 0.0, %v4301
      %4303 = vmatmul.f32.gmra.mxu0 %v4240
      %v4304 = vpop.f32.mrf.mxu0
      %v4305 = vadd.f32 0.0, %v4304
      %4306 = vmatmul.f32.gmra.mxu0 %v4243
      %v4307 = vpop.f32.mrf.mxu0
      %v4308 = vadd.f32 0.0, %v4307
      %4309 = vmatmul.f32.gmra.mxu0 %v4246
      %v4310 = vpop.f32.mrf.mxu0
      %v4311 = vadd.f32 0.0, %v4310
      %4312 = vmatmul.f32.gmra.mxu0 %v4249
      %v4313 = vpop.f32.mrf.mxu0
      %v4314 = vadd.f32 0.0, %v4313
      %4315 = vmatmul.f32.gmra.mxu0 %v4252
      %v4316 = vpop.f32.mrf.mxu0
      %v4317 = vadd.f32 0.0, %v4316
      %4318 = vmatmul.f32.gmra.mxu0 %v4255
      %v4319 = vpop.f32.mrf.mxu0
      %v4320 = vadd.f32 0.0, %v4319
      %4321 = vmatmul.f32.gmra.mxu0 %v4258
      %v4322 = vpop.f32.mrf.mxu0
      %v4323 = vadd.f32 0.0, %v4322
      %4324 = vmatmul.f32.gmra.mxu0 %v4261
      %v4325 = vpop.f32.mrf.mxu0
      %v4326 = vadd.f32 0.0, %v4325
      %4327 = vmatmul.f32.gmra.mxu0 %v4264
      %v4328 = vpop.f32.mrf.mxu0
      %v4329 = vadd.f32 0.0, %v4328
      %4330 = vmatmul.f32.gmra.mxu0 %v4267
      %v4331 = vpop.f32.mrf.mxu0
      %v4332 = vadd.f32 0.0, %v4331
      %4333 = vmatmul.f32.gmra.mxu0 %v4270
      %v4334 = vpop.f32.mrf.mxu0
      %v4335 = vadd.f32 0.0, %v4334
      %4336 = vdwg.mxu0
      %v4337 = vadd.f32 %v4192, %v4290
      %v4338 = vadd.f32 %v4193, %v4293
      %v4339 = vadd.f32 %v4194, %v4296
      %v4340 = vadd.f32 %v4195, %v4299
      %v4341 = vadd.f32 %v4196, %v4302
      %v4342 = vadd.f32 %v4197, %v4305
      %v4343 = vadd.f32 %v4198, %v4308
      %v4344 = vadd.f32 %v4199, %v4311
      %v4345 = vadd.f32 %v4200, %v4314
      %v4346 = vadd.f32 %v4201, %v4317
      %v4347 = vadd.f32 %v4202, %v4320
      %v4348 = vadd.f32 %v4203, %v4323
      %v4349 = vadd.f32 %v4204, %v4326
      %v4350 = vadd.f32 %v4205, %v4329
      %v4351 = vadd.f32 %v4206, %v4332
      %v4352 = vadd.f32 %v4207, %v4335
      %v4353 = vld [vmem:[#allocation2 + $0x1c0] sm:$0xff]
      %v4354 = vld [vmem:[#allocation2 + $0x1c8] sm:$0xff]
      %v4355 = vld [vmem:[#allocation2 + $0x1d0] sm:$0xff]
      %v4356 = vld [vmem:[#allocation2 + $0x1d8] sm:$0xff]
      %v4357 = vld [vmem:[#allocation2 + $0x1e0] sm:$0xff]
      %v4358 = vld [vmem:[#allocation2 + $0x1e8] sm:$0xff]
      %v4359 = vld [vmem:[#allocation2 + $0x1f0] sm:$0xff]
      %v4360 = vld [vmem:[#allocation2 + $0x1f8] sm:$0xff]
      %v4361 = vld [vmem:[#allocation2 + $0x200] sm:$0xff]
      %v4362 = vld [vmem:[#allocation2 + $0x208] sm:$0xff]
      %v4363 = vld [vmem:[#allocation2 + $0x210] sm:$0xff]
      %v4364 = vld [vmem:[#allocation2 + $0x218] sm:$0xff]
      %v4365 = vld [vmem:[#allocation2 + $0x220] sm:$0xff]
      %v4366 = vld [vmem:[#allocation2 + $0x228] sm:$0xff]
      %v4367 = vld [vmem:[#allocation2 + $0x230] sm:$0xff]
      %v4368 = vld [vmem:[#allocation2 + $0x238] sm:$0xff]
      %v4370 = vsel %vm2981, %v4353, 0
      %v4373 = vsel %vm2981, %v4354, 0
      %v4376 = vsel %vm2981, %v4355, 0
      %v4379 = vsel %vm2981, %v4356, 0
      %v4382 = vsel %vm2981, %v4357, 0
      %v4385 = vsel %vm2981, %v4358, 0
      %v4388 = vsel %vm2981, %v4359, 0
      %v4391 = vsel %vm2981, %v4360, 0
      %v4394 = vsel %vm2981, %v4361, 0
      %v4397 = vsel %vm2981, %v4362, 0
      %v4400 = vsel %vm2981, %v4363, 0
      %v4403 = vsel %vm2981, %v4364, 0
      %v4406 = vsel %vm2981, %v4365, 0
      %v4409 = vsel %vm2981, %v4366, 0
      %v4412 = vsel %vm2981, %v4367, 0
      %v4415 = vsel %vm2981, %v4368, 0
      %4417 = vmatpush.msra.mxu0 0.0
      %4418 = vmatpush.msra.mxu0 0.0
      %4419 = vmatpush.msra.mxu0 0.0
      %4420 = vmatpush.msra.mxu0 0.0
      %4421 = vmatpush.msra.mxu0 0.0
      %4422 = vmatpush.msra.mxu0 0.0
      %4423 = vmatpush.msra.mxu0 0.0
      %4424 = vmatpush.msra.mxu0 0.0
      %4425 = vmatpush.msra.mxu0 0.0
      %4426 = vmatpush.msra.mxu0 0.0
      %4427 = vmatpush.msra.mxu0 0.0
      %4428 = vmatpush.msra.mxu0 0.0
      %4429 = vmatpush.msra.mxu0 %v3344
      %4430 = vmatpush.msra.mxu0 %v3343
      %4431 = vmatpush.msra.mxu0 %v3342
      %4432 = vmatpush.msra.mxu0 %v3341
      %4433 = vmatmul.f32.gmra.mxu0 %v4370
      %v4434 = vpop.f32.mrf.mxu0
      %v4435 = vadd.f32 0.0, %v4434
      %4436 = vmatmul.f32.gmra.mxu0 %v4373
      %v4437 = vpop.f32.mrf.mxu0
      %v4438 = vadd.f32 0.0, %v4437
      %4439 = vmatmul.f32.gmra.mxu0 %v4376
      %v4440 = vpop.f32.mrf.mxu0
      %v4441 = vadd.f32 0.0, %v4440
      %4442 = vmatmul.f32.gmra.mxu0 %v4379
      %v4443 = vpop.f32.mrf.mxu0
      %v4444 = vadd.f32 0.0, %v4443
      %4445 = vmatmul.f32.gmra.mxu0 %v4382
      %v4446 = vpop.f32.mrf.mxu0
      %v4447 = vadd.f32 0.0, %v4446
      %4448 = vmatmul.f32.gmra.mxu0 %v4385
      %v4449 = vpop.f32.mrf.mxu0
      %v4450 = vadd.f32 0.0, %v4449
      %4451 = vmatmul.f32.gmra.mxu0 %v4388
      %v4452 = vpop.f32.mrf.mxu0
      %v4453 = vadd.f32 0.0, %v4452
      %4454 = vmatmul.f32.gmra.mxu0 %v4391
      %v4455 = vpop.f32.mrf.mxu0
      %v4456 = vadd.f32 0.0, %v4455
      %4457 = vmatmul.f32.gmra.mxu0 %v4394
      %v4458 = vpop.f32.mrf.mxu0
      %v4459 = vadd.f32 0.0, %v4458
      %4460 = vmatmul.f32.gmra.mxu0 %v4397
      %v4461 = vpop.f32.mrf.mxu0
      %v4462 = vadd.f32 0.0, %v4461
      %4463 = vmatmul.f32.gmra.mxu0 %v4400
      %v4464 = vpop.f32.mrf.mxu0
      %v4465 = vadd.f32 0.0, %v4464
      %4466 = vmatmul.f32.gmra.mxu0 %v4403
      %v4467 = vpop.f32.mrf.mxu0
      %v4468 = vadd.f32 0.0, %v4467
      %4469 = vmatmul.f32.gmra.mxu0 %v4406
      %v4470 = vpop.f32.mrf.mxu0
      %v4471 = vadd.f32 0.0, %v4470
      %4472 = vmatmul.f32.gmra.mxu0 %v4409
      %v4473 = vpop.f32.mrf.mxu0
      %v4474 = vadd.f32 0.0, %v4473
      %4475 = vmatmul.f32.gmra.mxu0 %v4412
      %v4476 = vpop.f32.mrf.mxu0
      %v4477 = vadd.f32 0.0, %v4476
      %4478 = vmatmul.f32.gmra.mxu0 %v4415
      %v4479 = vpop.f32.mrf.mxu0
      %v4480 = vadd.f32 0.0, %v4479
      %4481 = vdwg.mxu0
      %v4482 = vadd.f32 %v4337, %v4435
      %v4483 = vadd.f32 %v4338, %v4438
      %v4484 = vadd.f32 %v4339, %v4441
      %v4485 = vadd.f32 %v4340, %v4444
      %v4486 = vadd.f32 %v4341, %v4447
      %v4487 = vadd.f32 %v4342, %v4450
      %v4488 = vadd.f32 %v4343, %v4453
      %v4489 = vadd.f32 %v4344, %v4456
      %v4490 = vadd.f32 %v4345, %v4459
      %v4491 = vadd.f32 %v4346, %v4462
      %v4492 = vadd.f32 %v4347, %v4465
      %v4493 = vadd.f32 %v4348, %v4468
      %v4494 = vadd.f32 %v4349, %v4471
      %v4495 = vadd.f32 %v4350, %v4474
      %v4496 = vadd.f32 %v4351, %v4477
      %v4497 = vadd.f32 %v4352, %v4480
      %v4498 = vld [vmem:[#allocation2 + $0x140] sm:$0xff]
      %v4499 = vld [vmem:[#allocation2 + $0x148] sm:$0xff]
      %v4500 = vld [vmem:[#allocation2 + $0x150] sm:$0xff]
      %v4501 = vld [vmem:[#allocation2 + $0x158] sm:$0xff]
      %v4502 = vld [vmem:[#allocation2 + $0x160] sm:$0xff]
      %v4503 = vld [vmem:[#allocation2 + $0x168] sm:$0xff]
      %v4504 = vld [vmem:[#allocation2 + $0x170] sm:$0xff]
      %v4505 = vld [vmem:[#allocation2 + $0x178] sm:$0xff]
      %v4506 = vld [vmem:[#allocation2 + $0x180] sm:$0xff]
      %v4507 = vld [vmem:[#allocation2 + $0x188] sm:$0xff]
      %v4508 = vld [vmem:[#allocation2 + $0x190] sm:$0xff]
      %v4509 = vld [vmem:[#allocation2 + $0x198] sm:$0xff]
      %v4510 = vld [vmem:[#allocation2 + $0x1a0] sm:$0xff]
      %v4511 = vld [vmem:[#allocation2 + $0x1a8] sm:$0xff]
      %v4512 = vld [vmem:[#allocation2 + $0x1b0] sm:$0xff]
      %v4513 = vld [vmem:[#allocation2 + $0x1b8] sm:$0xff]
      %v4515 = vsel %vm2981, %v4498, 0
      %v4518 = vsel %vm2981, %v4499, 0
      %v4521 = vsel %vm2981, %v4500, 0
      %v4524 = vsel %vm2981, %v4501, 0
      %v4527 = vsel %vm2981, %v4502, 0
      %v4530 = vsel %vm2981, %v4503, 0
      %v4533 = vsel %vm2981, %v4504, 0
      %v4536 = vsel %vm2981, %v4505, 0
      %v4539 = vsel %vm2981, %v4506, 0
      %v4542 = vsel %vm2981, %v4507, 0
      %v4545 = vsel %vm2981, %v4508, 0
      %v4548 = vsel %vm2981, %v4509, 0
      %v4551 = vsel %vm2981, %v4510, 0
      %v4554 = vsel %vm2981, %v4511, 0
      %v4557 = vsel %vm2981, %v4512, 0
      %v4560 = vsel %vm2981, %v4513, 0
      %4562 = vmatpush.msra.mxu0 0.0
      %4563 = vmatpush.msra.mxu0 0.0
      %4564 = vmatpush.msra.mxu0 0.0
      %4565 = vmatpush.msra.mxu0 0.0
      %4566 = vmatpush.msra.mxu0 0.0
      %4567 = vmatpush.msra.mxu0 0.0
      %4568 = vmatpush.msra.mxu0 0.0
      %4569 = vmatpush.msra.mxu0 0.0
      %4570 = vmatpush.msra.mxu0 0.0
      %4571 = vmatpush.msra.mxu0 0.0
      %4572 = vmatpush.msra.mxu0 0.0
      %4573 = vmatpush.msra.mxu0 0.0
      %4574 = vmatpush.msra.mxu0 %v3349
      %4575 = vmatpush.msra.mxu0 %v3348
      %4576 = vmatpush.msra.mxu0 %v3347
      %4577 = vmatpush.msra.mxu0 %v3346
      %4578 = vmatmul.f32.gmra.mxu0 %v4515
      %v4579 = vpop.f32.mrf.mxu0
      %v4580 = vadd.f32 0.0, %v4579
      %4581 = vmatmul.f32.gmra.mxu0 %v4518
      %v4582 = vpop.f32.mrf.mxu0
      %v4583 = vadd.f32 0.0, %v4582
      %4584 = vmatmul.f32.gmra.mxu0 %v4521
      %v4585 = vpop.f32.mrf.mxu0
      %v4586 = vadd.f32 0.0, %v4585
      %4587 = vmatmul.f32.gmra.mxu0 %v4524
      %v4588 = vpop.f32.mrf.mxu0
      %v4589 = vadd.f32 0.0, %v4588
      %4590 = vmatmul.f32.gmra.mxu0 %v4527
      %v4591 = vpop.f32.mrf.mxu0
      %v4592 = vadd.f32 0.0, %v4591
      %4593 = vmatmul.f32.gmra.mxu0 %v4530
      %v4594 = vpop.f32.mrf.mxu0
      %v4595 = vadd.f32 0.0, %v4594
      %4596 = vmatmul.f32.gmra.mxu0 %v4533
      %v4597 = vpop.f32.mrf.mxu0
      %v4598 = vadd.f32 0.0, %v4597
      %4599 = vmatmul.f32.gmra.mxu0 %v4536
      %v4600 = vpop.f32.mrf.mxu0
      %v4601 = vadd.f32 0.0, %v4600
      %4602 = vmatmul.f32.gmra.mxu0 %v4539
      %v4603 = vpop.f32.mrf.mxu0
      %v4604 = vadd.f32 0.0, %v4603
      %4605 = vmatmul.f32.gmra.mxu0 %v4542
      %v4606 = vpop.f32.mrf.mxu0
      %v4607 = vadd.f32 0.0, %v4606
      %4608 = vmatmul.f32.gmra.mxu0 %v4545
      %v4609 = vpop.f32.mrf.mxu0
      %v4610 = vadd.f32 0.0, %v4609
      %4611 = vmatmul.f32.gmra.mxu0 %v4548
      %v4612 = vpop.f32.mrf.mxu0
      %v4613 = vadd.f32 0.0, %v4612
      %4614 = vmatmul.f32.gmra.mxu0 %v4551
      %v4615 = vpop.f32.mrf.mxu0
      %v4616 = vadd.f32 0.0, %v4615
      %4617 = vmatmul.f32.gmra.mxu0 %v4554
      %v4618 = vpop.f32.mrf.mxu0
      %v4619 = vadd.f32 0.0, %v4618
      %4620 = vmatmul.f32.gmra.mxu0 %v4557
      %v4621 = vpop.f32.mrf.mxu0
      %v4622 = vadd.f32 0.0, %v4621
      %4623 = vmatmul.f32.gmra.mxu0 %v4560
      %v4624 = vpop.f32.mrf.mxu0
      %v4625 = vadd.f32 0.0, %v4624
      %4626 = vdwg.mxu0
      %v4627 = vadd.f32 %v4482, %v4580
      %v4628 = vadd.f32 %v4483, %v4583
      %v4629 = vadd.f32 %v4484, %v4586
      %v4630 = vadd.f32 %v4485, %v4589
      %v4631 = vadd.f32 %v4486, %v4592
      %v4632 = vadd.f32 %v4487, %v4595
      %v4633 = vadd.f32 %v4488, %v4598
      %v4634 = vadd.f32 %v4489, %v4601
      %v4635 = vadd.f32 %v4490, %v4604
      %v4636 = vadd.f32 %v4491, %v4607
      %v4637 = vadd.f32 %v4492, %v4610
      %v4638 = vadd.f32 %v4493, %v4613
      %v4639 = vadd.f32 %v4494, %v4616
      %v4640 = vadd.f32 %v4495, %v4619
      %v4641 = vadd.f32 %v4496, %v4622
      %v4642 = vadd.f32 %v4497, %v4625
      %v4643 = vld [vmem:[%s5] sm:$0x1]
      %v4645 = vperm.slane %v4643, 0
      %v4647 = vadd.f32 %v4627, %v4645
      %v4648 = vadd.f32 %v4628, %v4645
      %v4649 = vadd.f32 %v4629, %v4645
      %v4650 = vadd.f32 %v4630, %v4645
      %v4651 = vadd.f32 %v4631, %v4645
      %v4652 = vadd.f32 %v4632, %v4645
      %v4653 = vadd.f32 %v4633, %v4645
      %v4654 = vadd.f32 %v4634, %v4645
      %v4655 = vadd.f32 %v4635, %v4645
      %v4656 = vadd.f32 %v4636, %v4645
      %v4657 = vadd.f32 %v4637, %v4645
      %v4658 = vadd.f32 %v4638, %v4645
      %v4659 = vadd.f32 %v4639, %v4645
      %v4660 = vadd.f32 %v4640, %v4645
      %v4661 = vadd.f32 %v4641, %v4645
      %v4662 = vadd.f32 %v4642, %v4645
      %v4663 = vmax.f32 %v4647, 0.0
      %v4664 = vmax.f32 %v4648, 0.0
      %v4665 = vmax.f32 %v4649, 0.0
      %v4666 = vmax.f32 %v4650, 0.0
      %v4667 = vmax.f32 %v4651, 0.0
      %v4668 = vmax.f32 %v4652, 0.0
      %v4669 = vmax.f32 %v4653, 0.0
      %v4670 = vmax.f32 %v4654, 0.0
      %v4671 = vmax.f32 %v4655, 0.0
      %v4672 = vmax.f32 %v4656, 0.0
      %v4673 = vmax.f32 %v4657, 0.0
      %v4674 = vmax.f32 %v4658, 0.0
      %v4675 = vmax.f32 %v4659, 0.0
      %v4676 = vmax.f32 %v4660, 0.0
      %v4677 = vmax.f32 %v4661, 0.0
      %v4678 = vmax.f32 %v4662, 0.0
      %v4679 = vld [vmem:[%s6] sm:$0xff]
      %v4680 = vld [vmem:[%s6 + $0x8] sm:$0xff]
      %v4681 = vld [vmem:[%s6 + $0x10] sm:$0xff]
      %v4682 = vld [vmem:[%s6 + $0x18] sm:$0xff]
      %v4684 = vsel %vm2981, %v4663, 0
      %v4687 = vsel %vm2981, %v4664, 0
      %v4690 = vsel %vm2981, %v4665, 0
      %v4693 = vsel %vm2981, %v4666, 0
      %4695 = vmatpush.msra.mxu0 0.0
      %4696 = vmatpush.msra.mxu0 0.0
      %4697 = vmatpush.msra.mxu0 0.0
      %4698 = vmatpush.msra.mxu0 0.0
      %4699 = vmatpush.msra.mxu0 0.0
      %4700 = vmatpush.msra.mxu0 0.0
      %4701 = vmatpush.msra.mxu0 0.0
      %4702 = vmatpush.msra.mxu0 0.0
      %4703 = vmatpush.msra.mxu0 0.0
      %4704 = vmatpush.msra.mxu0 0.0
      %4705 = vmatpush.msra.mxu0 0.0
      %4706 = vmatpush.msra.mxu0 0.0
      %4707 = vmatpush.msra.mxu0 %v4682
      %4708 = vmatpush.msra.mxu0 %v4681
      %4709 = vmatpush.msra.mxu0 %v4680
      %4710 = vmatpush.msra.mxu0 %v4679
      %4711 = vmatmul.f32.gmra.mxu0 %v4684
      %v4712 = vpop.f32.mrf.mxu0
      %v4713 = vadd.f32 0.0, %v4712
      %4714 = vmatmul.f32.gmra.mxu0 %v4687
      %v4715 = vpop.f32.mrf.mxu0
      %v4716 = vadd.f32 0.0, %v4715
      %4717 = vmatmul.f32.gmra.mxu0 %v4690
      %v4718 = vpop.f32.mrf.mxu0
      %v4719 = vadd.f32 0.0, %v4718
      %4720 = vmatmul.f32.gmra.mxu0 %v4693
      %v4721 = vpop.f32.mrf.mxu0
      %v4722 = vadd.f32 0.0, %v4721
      %4723 = vdwg.mxu0
      %4724 = vmatpush.msra.mxu0 %v3369
      %4725 = vmatpush.msra.mxu0 %v3368
      %4726 = vmatpush.msra.mxu0 %v3367
      %4727 = vmatpush.msra.mxu0 %v3366
      %4728 = vmatpush.msra.mxu0 %v3365
      %4729 = vmatpush.msra.mxu0 %v3364
      %4730 = vmatpush.msra.mxu0 %v3363
      %4731 = vmatpush.msra.mxu0 %v3362
      %4732 = vmatpush.msra.mxu0 %v3361
      %4733 = vmatpush.msra.mxu0 %v3360
      %4734 = vmatpush.msra.mxu0 %v3359
      %4735 = vmatpush.msra.mxu0 %v3358
      %4736 = vmatpush.msra.mxu0 %v3357
      %4737 = vmatpush.msra.mxu0 %v3356
      %4738 = vmatpush.msra.mxu0 %v3355
      %4739 = vmatpush.msra.mxu0 %v3354
      %4740 = vmatmul.f32.gmra.mxu0 %v3350
      %v4741 = vpop.f32.mrf.mxu0
      %v4742 = vadd.f32 %v4713, %v4741
      %4743 = vmatmul.f32.gmra.mxu0 %v3351
      %v4744 = vpop.f32.mrf.mxu0
      %v4745 = vadd.f32 %v4716, %v4744
      %4746 = vmatmul.f32.gmra.mxu0 %v3352
      %v4747 = vpop.f32.mrf.mxu0
      %v4748 = vadd.f32 %v4719, %v4747
      %4749 = vmatmul.f32.gmra.mxu0 %v3353
      %v4750 = vpop.f32.mrf.mxu0
      %v4751 = vadd.f32 %v4722, %v4750
      %4752 = vdwg.mxu0
      %s4753 = scalar_lea.vmem %s6, 32
      %v4754 = vld [vmem:[%s4753] sm:$0xff]
      %v4755 = vld [vmem:[%s4753 + $0x8] sm:$0xff]
      %v4756 = vld [vmem:[%s4753 + $0x10] sm:$0xff]
      %v4757 = vld [vmem:[%s4753 + $0x18] sm:$0xff]
      %v4759 = vsel %vm2981, %v4667, 0
      %v4762 = vsel %vm2981, %v4668, 0
      %v4765 = vsel %vm2981, %v4669, 0
      %v4768 = vsel %vm2981, %v4670, 0
      %4770 = vmatpush.msra.mxu0 0.0
      %4771 = vmatpush.msra.mxu0 0.0
      %4772 = vmatpush.msra.mxu0 0.0
      %4773 = vmatpush.msra.mxu0 0.0
      %4774 = vmatpush.msra.mxu0 0.0
      %4775 = vmatpush.msra.mxu0 0.0
      %4776 = vmatpush.msra.mxu0 0.0
      %4777 = vmatpush.msra.mxu0 0.0
      %4778 = vmatpush.msra.mxu0 0.0
      %4779 = vmatpush.msra.mxu0 0.0
      %4780 = vmatpush.msra.mxu0 0.0
      %4781 = vmatpush.msra.mxu0 0.0
      %4782 = vmatpush.msra.mxu0 %v4757
      %4783 = vmatpush.msra.mxu0 %v4756
      %4784 = vmatpush.msra.mxu0 %v4755
      %4785 = vmatpush.msra.mxu0 %v4754
      %4786 = vmatmul.f32.gmra.mxu0 %v4759
      %v4787 = vpop.f32.mrf.mxu0
      %v4788 = vadd.f32 0.0, %v4787
      %4789 = vmatmul.f32.gmra.mxu0 %v4762
      %v4790 = vpop.f32.mrf.mxu0
      %v4791 = vadd.f32 0.0, %v4790
      %4792 = vmatmul.f32.gmra.mxu0 %v4765
      %v4793 = vpop.f32.mrf.mxu0
      %v4794 = vadd.f32 0.0, %v4793
      %4795 = vmatmul.f32.gmra.mxu0 %v4768
      %v4796 = vpop.f32.mrf.mxu0
      %v4797 = vadd.f32 0.0, %v4796
      %4798 = vdwg.mxu0
      %v4799 = vadd.f32 %v4742, %v4788
      %v4800 = vadd.f32 %v4745, %v4791
      %v4801 = vadd.f32 %v4748, %v4794
      %v4802 = vadd.f32 %v4751, %v4797
      %s4803 = scalar_lea.vmem %s6, 64
      %v4804 = vld [vmem:[%s4803] sm:$0xff]
      %v4805 = vld [vmem:[%s4803 + $0x8] sm:$0xff]
      %v4806 = vld [vmem:[%s4803 + $0x10] sm:$0xff]
      %v4807 = vld [vmem:[%s4803 + $0x18] sm:$0xff]
      %v4809 = vsel %vm2981, %v4671, 0
      %v4812 = vsel %vm2981, %v4672, 0
      %v4815 = vsel %vm2981, %v4673, 0
      %v4818 = vsel %vm2981, %v4674, 0
      %4820 = vmatpush.msra.mxu0 0.0
      %4821 = vmatpush.msra.mxu0 0.0
      %4822 = vmatpush.msra.mxu0 0.0
      %4823 = vmatpush.msra.mxu0 0.0
      %4824 = vmatpush.msra.mxu0 0.0
      %4825 = vmatpush.msra.mxu0 0.0
      %4826 = vmatpush.msra.mxu0 0.0
      %4827 = vmatpush.msra.mxu0 0.0
      %4828 = vmatpush.msra.mxu0 0.0
      %4829 = vmatpush.msra.mxu0 0.0
      %4830 = vmatpush.msra.mxu0 0.0
      %4831 = vmatpush.msra.mxu0 0.0
      %4832 = vmatpush.msra.mxu0 %v4807
      %4833 = vmatpush.msra.mxu0 %v4806
      %4834 = vmatpush.msra.mxu0 %v4805
      %4835 = vmatpush.msra.mxu0 %v4804
      %4836 = vmatmul.f32.gmra.mxu0 %v4809
      %v4837 = vpop.f32.mrf.mxu0
      %v4838 = vadd.f32 0.0, %v4837
      %4839 = vmatmul.f32.gmra.mxu0 %v4812
      %v4840 = vpop.f32.mrf.mxu0
      %v4841 = vadd.f32 0.0, %v4840
      %4842 = vmatmul.f32.gmra.mxu0 %v4815
      %v4843 = vpop.f32.mrf.mxu0
      %v4844 = vadd.f32 0.0, %v4843
      %4845 = vmatmul.f32.gmra.mxu0 %v4818
      %v4846 = vpop.f32.mrf.mxu0
      %v4847 = vadd.f32 0.0, %v4846
      %4848 = vdwg.mxu0
      %v4849 = vadd.f32 %v4799, %v4838
      %v4850 = vadd.f32 %v4800, %v4841
      %v4851 = vadd.f32 %v4801, %v4844
      %v4852 = vadd.f32 %v4802, %v4847
      %s4853 = scalar_lea.vmem %s6, 96
      %v4854 = vld [vmem:[%s4853] sm:$0xff]
      %v4855 = vld [vmem:[%s4853 + $0x8] sm:$0xff]
      %v4856 = vld [vmem:[%s4853 + $0x10] sm:$0xff]
      %v4857 = vld [vmem:[%s4853 + $0x18] sm:$0xff]
      %v4859 = vsel %vm2981, %v4675, 0
      %v4862 = vsel %vm2981, %v4676, 0
      %v4865 = vsel %vm2981, %v4677, 0
      %v4868 = vsel %vm2981, %v4678, 0
      %4870 = vmatpush.msra.mxu0 0.0
      %4871 = vmatpush.msra.mxu0 0.0
      %4872 = vmatpush.msra.mxu0 0.0
      %4873 = vmatpush.msra.mxu0 0.0
      %4874 = vmatpush.msra.mxu0 0.0
      %4875 = vmatpush.msra.mxu0 0.0
      %4876 = vmatpush.msra.mxu0 0.0
      %4877 = vmatpush.msra.mxu0 0.0
      %4878 = vmatpush.msra.mxu0 0.0
      %4879 = vmatpush.msra.mxu0 0.0
      %4880 = vmatpush.msra.mxu0 0.0
      %4881 = vmatpush.msra.mxu0 0.0
      %4882 = vmatpush.msra.mxu0 %v4857
      %4883 = vmatpush.msra.mxu0 %v4856
      %4884 = vmatpush.msra.mxu0 %v4855
      %4885 = vmatpush.msra.mxu0 %v4854
      %4886 = vmatmul.f32.gmra.mxu0 %v4859
      %v4887 = vpop.f32.mrf.mxu0
      %v4888 = vadd.f32 0.0, %v4887
      %4889 = vmatmul.f32.gmra.mxu0 %v4862
      %v4890 = vpop.f32.mrf.mxu0
      %v4891 = vadd.f32 0.0, %v4890
      %4892 = vmatmul.f32.gmra.mxu0 %v4865
      %v4893 = vpop.f32.mrf.mxu0
      %v4894 = vadd.f32 0.0, %v4893
      %4895 = vmatmul.f32.gmra.mxu0 %v4868
      %v4896 = vpop.f32.mrf.mxu0
      %v4897 = vadd.f32 0.0, %v4896
      %4898 = vdwg.mxu0
      %v4899 = vadd.f32 %v4849, %v4888
      %v4900 = vadd.f32 %v4850, %v4891
      %v4901 = vadd.f32 %v4851, %v4894
      %v4902 = vadd.f32 %v4852, %v4897
      %4903 = vmatpush.msra.mxu0 0.0
      %4904 = vmatpush.msra.mxu0 0.0
      %4905 = vmatpush.msra.mxu0 0.0
      %4906 = vmatpush.msra.mxu0 0.0
      %4907 = vmatpush.msra.mxu0 0.0
      %4908 = vmatpush.msra.mxu0 0.0
      %4909 = vmatpush.msra.mxu0 0.0
      %4910 = vmatpush.msra.mxu0 0.0
      %4911 = vmatpush.msra.mxu0 0.0
      %4912 = vmatpush.msra.mxu0 0.0
      %4913 = vmatpush.msra.mxu0 0.0
      %4914 = vmatpush.msra.mxu0 0.0
      %4915 = vmatpush.msra.mxu0 %v3314
      %4916 = vmatpush.msra.mxu0 %v3313
      %4917 = vmatpush.msra.mxu0 %v3312
      %4918 = vmatpush.msra.mxu0 %v3311
      %4919 = vmatmul.f32.gmra.mxu0 %v4370
      %v4920 = vpop.f32.mrf.mxu0
      %v4921 = vadd.f32 0.0, %v4920
      %4922 = vmatmul.f32.gmra.mxu0 %v4373
      %v4923 = vpop.f32.mrf.mxu0
      %v4924 = vadd.f32 0.0, %v4923
      %4925 = vmatmul.f32.gmra.mxu0 %v4376
      %v4926 = vpop.f32.mrf.mxu0
      %v4927 = vadd.f32 0.0, %v4926
      %4928 = vmatmul.f32.gmra.mxu0 %v4379
      %v4929 = vpop.f32.mrf.mxu0
      %v4930 = vadd.f32 0.0, %v4929
      %4931 = vmatmul.f32.gmra.mxu0 %v4382
      %v4932 = vpop.f32.mrf.mxu0
      %v4933 = vadd.f32 0.0, %v4932
      %4934 = vmatmul.f32.gmra.mxu0 %v4385
      %v4935 = vpop.f32.mrf.mxu0
      %v4936 = vadd.f32 0.0, %v4935
      %4937 = vmatmul.f32.gmra.mxu0 %v4388
      %v4938 = vpop.f32.mrf.mxu0
      %v4939 = vadd.f32 0.0, %v4938
      %4940 = vmatmul.f32.gmra.mxu0 %v4391
      %v4941 = vpop.f32.mrf.mxu0
      %v4942 = vadd.f32 0.0, %v4941
      %4943 = vmatmul.f32.gmra.mxu0 %v4394
      %v4944 = vpop.f32.mrf.mxu0
      %v4945 = vadd.f32 0.0, %v4944
      %4946 = vmatmul.f32.gmra.mxu0 %v4397
      %v4947 = vpop.f32.mrf.mxu0
      %v4948 = vadd.f32 0.0, %v4947
      %4949 = vmatmul.f32.gmra.mxu0 %v4400
      %v4950 = vpop.f32.mrf.mxu0
      %v4951 = vadd.f32 0.0, %v4950
      %4952 = vmatmul.f32.gmra.mxu0 %v4403
      %v4953 = vpop.f32.mrf.mxu0
      %v4954 = vadd.f32 0.0, %v4953
      %4955 = vmatmul.f32.gmra.mxu0 %v4406
      %v4956 = vpop.f32.mrf.mxu0
      %v4957 = vadd.f32 0.0, %v4956
      %4958 = vmatmul.f32.gmra.mxu0 %v4409
      %v4959 = vpop.f32.mrf.mxu0
      %v4960 = vadd.f32 0.0, %v4959
      %4961 = vmatmul.f32.gmra.mxu0 %v4412
      %v4962 = vpop.f32.mrf.mxu0
      %v4963 = vadd.f32 0.0, %v4962
      %4964 = vmatmul.f32.gmra.mxu0 %v4415
      %v4965 = vpop.f32.mrf.mxu0
      %v4966 = vadd.f32 0.0, %v4965
      %4967 = vdwg.mxu0
      %4968 = vmatpush.msra.mxu0 0.0
      %4969 = vmatpush.msra.mxu0 0.0
      %4970 = vmatpush.msra.mxu0 0.0
      %4971 = vmatpush.msra.mxu0 0.0
      %4972 = vmatpush.msra.mxu0 0.0
      %4973 = vmatpush.msra.mxu0 0.0
      %4974 = vmatpush.msra.mxu0 0.0
      %4975 = vmatpush.msra.mxu0 0.0
      %4976 = vmatpush.msra.mxu0 0.0
      %4977 = vmatpush.msra.mxu0 0.0
      %4978 = vmatpush.msra.mxu0 0.0
      %4979 = vmatpush.msra.mxu0 0.0
      %4980 = vmatpush.msra.mxu0 %v3309
      %4981 = vmatpush.msra.mxu0 %v3308
      %4982 = vmatpush.msra.mxu0 %v3307
      %4983 = vmatpush.msra.mxu0 %v3306
      %4984 = vmatmul.f32.gmra.mxu0 %v4225
      %v4985 = vpop.f32.mrf.mxu0
      %v4986 = vadd.f32 %v4921, %v4985
      %4987 = vmatmul.f32.gmra.mxu0 %v4228
      %v4988 = vpop.f32.mrf.mxu0
      %v4989 = vadd.f32 %v4924, %v4988
      %4990 = vmatmul.f32.gmra.mxu0 %v4231
      %v4991 = vpop.f32.mrf.mxu0
      %v4992 = vadd.f32 %v4927, %v4991
      %4993 = vmatmul.f32.gmra.mxu0 %v4234
      %v4994 = vpop.f32.mrf.mxu0
      %v4995 = vadd.f32 %v4930, %v4994
      %4996 = vmatmul.f32.gmra.mxu0 %v4237
      %v4997 = vpop.f32.mrf.mxu0
      %v4998 = vadd.f32 %v4933, %v4997
      %4999 = vmatmul.f32.gmra.mxu0 %v4240
      %v5000 = vpop.f32.mrf.mxu0
      %v5001 = vadd.f32 %v4936, %v5000
      %5002 = vmatmul.f32.gmra.mxu0 %v4243
      %v5003 = vpop.f32.mrf.mxu0
      %v5004 = vadd.f32 %v4939, %v5003
      %5005 = vmatmul.f32.gmra.mxu0 %v4246
      %v5006 = vpop.f32.mrf.mxu0
      %v5007 = vadd.f32 %v4942, %v5006
      %5008 = vmatmul.f32.gmra.mxu0 %v4249
      %v5009 = vpop.f32.mrf.mxu0
      %v5010 = vadd.f32 %v4945, %v5009
      %5011 = vmatmul.f32.gmra.mxu0 %v4252
      %v5012 = vpop.f32.mrf.mxu0
      %v5013 = vadd.f32 %v4948, %v5012
      %5014 = vmatmul.f32.gmra.mxu0 %v4255
      %v5015 = vpop.f32.mrf.mxu0
      %v5016 = vadd.f32 %v4951, %v5015
      %5017 = vmatmul.f32.gmra.mxu0 %v4258
      %v5018 = vpop.f32.mrf.mxu0
      %v5019 = vadd.f32 %v4954, %v5018
      %5020 = vmatmul.f32.gmra.mxu0 %v4261
      %v5021 = vpop.f32.mrf.mxu0
      %v5022 = vadd.f32 %v4957, %v5021
      %5023 = vmatmul.f32.gmra.mxu0 %v4264
      %v5024 = vpop.f32.mrf.mxu0
      %v5025 = vadd.f32 %v4960, %v5024
      %5026 = vmatmul.f32.gmra.mxu0 %v4267
      %v5027 = vpop.f32.mrf.mxu0
      %v5028 = vadd.f32 %v4963, %v5027
      %5029 = vmatmul.f32.gmra.mxu0 %v4270
      %v5030 = vpop.f32.mrf.mxu0
      %v5031 = vadd.f32 %v4966, %v5030
      %5032 = vdwg.mxu0
      %5033 = vmatpush.msra.mxu0 0.0
      %5034 = vmatpush.msra.mxu0 0.0
      %5035 = vmatpush.msra.mxu0 0.0
      %5036 = vmatpush.msra.mxu0 0.0
      %5037 = vmatpush.msra.mxu0 0.0
      %5038 = vmatpush.msra.mxu0 0.0
      %5039 = vmatpush.msra.mxu0 0.0
      %5040 = vmatpush.msra.mxu0 0.0
      %5041 = vmatpush.msra.mxu0 0.0
      %5042 = vmatpush.msra.mxu0 0.0
      %5043 = vmatpush.msra.mxu0 0.0
      %5044 = vmatpush.msra.mxu0 0.0
      %5045 = vmatpush.msra.mxu0 %v3319
      %5046 = vmatpush.msra.mxu0 %v3318
      %5047 = vmatpush.msra.mxu0 %v3317
      %5048 = vmatpush.msra.mxu0 %v3316
      %5049 = vmatmul.f32.gmra.mxu0 %v4515
      %v5050 = vpop.f32.mrf.mxu0
      %v5051 = vadd.f32 0.0, %v5050
      %5052 = vmatmul.f32.gmra.mxu0 %v4518
      %v5053 = vpop.f32.mrf.mxu0
      %v5054 = vadd.f32 0.0, %v5053
      %5055 = vmatmul.f32.gmra.mxu0 %v4521
      %v5056 = vpop.f32.mrf.mxu0
      %v5057 = vadd.f32 0.0, %v5056
      %5058 = vmatmul.f32.gmra.mxu0 %v4524
      %v5059 = vpop.f32.mrf.mxu0
      %v5060 = vadd.f32 0.0, %v5059
      %5061 = vmatmul.f32.gmra.mxu0 %v4527
      %v5062 = vpop.f32.mrf.mxu0
      %v5063 = vadd.f32 0.0, %v5062
      %5064 = vmatmul.f32.gmra.mxu0 %v4530
      %v5065 = vpop.f32.mrf.mxu0
      %v5066 = vadd.f32 0.0, %v5065
      %5067 = vmatmul.f32.gmra.mxu0 %v4533
      %v5068 = vpop.f32.mrf.mxu0
      %v5069 = vadd.f32 0.0, %v5068
      %5070 = vmatmul.f32.gmra.mxu0 %v4536
      %v5071 = vpop.f32.mrf.mxu0
      %v5072 = vadd.f32 0.0, %v5071
      %5073 = vmatmul.f32.gmra.mxu0 %v4539
      %v5074 = vpop.f32.mrf.mxu0
      %v5075 = vadd.f32 0.0, %v5074
      %5076 = vmatmul.f32.gmra.mxu0 %v4542
      %v5077 = vpop.f32.mrf.mxu0
      %v5078 = vadd.f32 0.0, %v5077
      %5079 = vmatmul.f32.gmra.mxu0 %v4545
      %v5080 = vpop.f32.mrf.mxu0
      %v5081 = vadd.f32 0.0, %v5080
      %5082 = vmatmul.f32.gmra.mxu0 %v4548
      %v5083 = vpop.f32.mrf.mxu0
      %v5084 = vadd.f32 0.0, %v5083
      %5085 = vmatmul.f32.gmra.mxu0 %v4551
      %v5086 = vpop.f32.mrf.mxu0
      %v5087 = vadd.f32 0.0, %v5086
      %5088 = vmatmul.f32.gmra.mxu0 %v4554
      %v5089 = vpop.f32.mrf.mxu0
      %v5090 = vadd.f32 0.0, %v5089
      %5091 = vmatmul.f32.gmra.mxu0 %v4557
      %v5092 = vpop.f32.mrf.mxu0
      %v5093 = vadd.f32 0.0, %v5092
      %5094 = vmatmul.f32.gmra.mxu0 %v4560
      %v5095 = vpop.f32.mrf.mxu0
      %v5096 = vadd.f32 0.0, %v5095
      %5097 = vdwg.mxu0
      %v5098 = vadd.f32 %v4986, %v5051
      %v5099 = vadd.f32 %v4989, %v5054
      %v5100 = vadd.f32 %v4992, %v5057
      %v5101 = vadd.f32 %v4995, %v5060
      %v5102 = vadd.f32 %v4998, %v5063
      %v5103 = vadd.f32 %v5001, %v5066
      %v5104 = vadd.f32 %v5004, %v5069
      %v5105 = vadd.f32 %v5007, %v5072
      %v5106 = vadd.f32 %v5010, %v5075
      %v5107 = vadd.f32 %v5013, %v5078
      %v5108 = vadd.f32 %v5016, %v5081
      %v5109 = vadd.f32 %v5019, %v5084
      %v5110 = vadd.f32 %v5022, %v5087
      %v5111 = vadd.f32 %v5025, %v5090
      %v5112 = vadd.f32 %v5028, %v5093
      %v5113 = vadd.f32 %v5031, %v5096
      %v5114 = vld [vmem:[#allocation2 + $0x6c0] sm:$0xff]
      %v5115 = vld [vmem:[#allocation2 + $0x6c8] sm:$0xff]
      %v5116 = vld [vmem:[#allocation2 + $0x6d0] sm:$0xff]
      %v5117 = vld [vmem:[#allocation2 + $0x6d8] sm:$0xff]
      %v5118 = vld [vmem:[#allocation2 + $0x6e0] sm:$0xff]
      %v5119 = vld [vmem:[#allocation2 + $0x6e8] sm:$0xff]
      %v5120 = vld [vmem:[#allocation2 + $0x6f0] sm:$0xff]
      %v5121 = vld [vmem:[#allocation2 + $0x6f8] sm:$0xff]
      %v5122 = vld [vmem:[#allocation2 + $0x700] sm:$0xff]
      %v5123 = vld [vmem:[#allocation2 + $0x708] sm:$0xff]
      %v5124 = vld [vmem:[#allocation2 + $0x710] sm:$0xff]
      %v5125 = vld [vmem:[#allocation2 + $0x718] sm:$0xff]
      %v5126 = vld [vmem:[#allocation2 + $0x720] sm:$0xff]
      %v5127 = vld [vmem:[#allocation2 + $0x728] sm:$0xff]
      %v5128 = vld [vmem:[#allocation2 + $0x730] sm:$0xff]
      %v5129 = vld [vmem:[#allocation2 + $0x738] sm:$0xff]
      %v5131 = vsel %vm2981, %v5114, 0
      %v5134 = vsel %vm2981, %v5115, 0
      %v5137 = vsel %vm2981, %v5116, 0
      %v5140 = vsel %vm2981, %v5117, 0
      %v5143 = vsel %vm2981, %v5118, 0
      %v5146 = vsel %vm2981, %v5119, 0
      %v5149 = vsel %vm2981, %v5120, 0
      %v5152 = vsel %vm2981, %v5121, 0
      %v5155 = vsel %vm2981, %v5122, 0
      %v5158 = vsel %vm2981, %v5123, 0
      %v5161 = vsel %vm2981, %v5124, 0
      %v5164 = vsel %vm2981, %v5125, 0
      %v5167 = vsel %vm2981, %v5126, 0
      %v5170 = vsel %vm2981, %v5127, 0
      %v5173 = vsel %vm2981, %v5128, 0
      %v5176 = vsel %vm2981, %v5129, 0
      %5178 = vmatpush.msra.mxu0 0.0
      %5179 = vmatpush.msra.mxu0 0.0
      %5180 = vmatpush.msra.mxu0 0.0
      %5181 = vmatpush.msra.mxu0 0.0
      %5182 = vmatpush.msra.mxu0 0.0
      %5183 = vmatpush.msra.mxu0 0.0
      %5184 = vmatpush.msra.mxu0 0.0
      %5185 = vmatpush.msra.mxu0 0.0
      %5186 = vmatpush.msra.mxu0 0.0
      %5187 = vmatpush.msra.mxu0 0.0
      %5188 = vmatpush.msra.mxu0 0.0
      %5189 = vmatpush.msra.mxu0 0.0
      %5190 = vmatpush.msra.mxu0 %v3324
      %5191 = vmatpush.msra.mxu0 %v3323
      %5192 = vmatpush.msra.mxu0 %v3322
      %5193 = vmatpush.msra.mxu0 %v3321
      %5194 = vmatmul.f32.gmra.mxu0 %v5131
      %v5195 = vpop.f32.mrf.mxu0
      %v5196 = vadd.f32 0.0, %v5195
      %5197 = vmatmul.f32.gmra.mxu0 %v5134
      %v5198 = vpop.f32.mrf.mxu0
      %v5199 = vadd.f32 0.0, %v5198
      %5200 = vmatmul.f32.gmra.mxu0 %v5137
      %v5201 = vpop.f32.mrf.mxu0
      %v5202 = vadd.f32 0.0, %v5201
      %5203 = vmatmul.f32.gmra.mxu0 %v5140
      %v5204 = vpop.f32.mrf.mxu0
      %v5205 = vadd.f32 0.0, %v5204
      %5206 = vmatmul.f32.gmra.mxu0 %v5143
      %v5207 = vpop.f32.mrf.mxu0
      %v5208 = vadd.f32 0.0, %v5207
      %5209 = vmatmul.f32.gmra.mxu0 %v5146
      %v5210 = vpop.f32.mrf.mxu0
      %v5211 = vadd.f32 0.0, %v5210
      %5212 = vmatmul.f32.gmra.mxu0 %v5149
      %v5213 = vpop.f32.mrf.mxu0
      %v5214 = vadd.f32 0.0, %v5213
      %5215 = vmatmul.f32.gmra.mxu0 %v5152
      %v5216 = vpop.f32.mrf.mxu0
      %v5217 = vadd.f32 0.0, %v5216
      %5218 = vmatmul.f32.gmra.mxu0 %v5155
      %v5219 = vpop.f32.mrf.mxu0
      %v5220 = vadd.f32 0.0, %v5219
      %5221 = vmatmul.f32.gmra.mxu0 %v5158
      %v5222 = vpop.f32.mrf.mxu0
      %v5223 = vadd.f32 0.0, %v5222
      %5224 = vmatmul.f32.gmra.mxu0 %v5161
      %v5225 = vpop.f32.mrf.mxu0
      %v5226 = vadd.f32 0.0, %v5225
      %5227 = vmatmul.f32.gmra.mxu0 %v5164
      %v5228 = vpop.f32.mrf.mxu0
      %v5229 = vadd.f32 0.0, %v5228
      %5230 = vmatmul.f32.gmra.mxu0 %v5167
      %v5231 = vpop.f32.mrf.mxu0
      %v5232 = vadd.f32 0.0, %v5231
      %5233 = vmatmul.f32.gmra.mxu0 %v5170
      %v5234 = vpop.f32.mrf.mxu0
      %v5235 = vadd.f32 0.0, %v5234
      %5236 = vmatmul.f32.gmra.mxu0 %v5173
      %v5237 = vpop.f32.mrf.mxu0
      %v5238 = vadd.f32 0.0, %v5237
      %5239 = vmatmul.f32.gmra.mxu0 %v5176
      %v5240 = vpop.f32.mrf.mxu0
      %v5241 = vadd.f32 0.0, %v5240
      %5242 = vdwg.mxu0
      %v5243 = vadd.f32 %v5098, %v5196
      %v5244 = vadd.f32 %v5099, %v5199
      %v5245 = vadd.f32 %v5100, %v5202
      %v5246 = vadd.f32 %v5101, %v5205
      %v5247 = vadd.f32 %v5102, %v5208
      %v5248 = vadd.f32 %v5103, %v5211
      %v5249 = vadd.f32 %v5104, %v5214
      %v5250 = vadd.f32 %v5105, %v5217
      %v5251 = vadd.f32 %v5106, %v5220
      %v5252 = vadd.f32 %v5107, %v5223
      %v5253 = vadd.f32 %v5108, %v5226
      %v5254 = vadd.f32 %v5109, %v5229
      %v5255 = vadd.f32 %v5110, %v5232
      %v5256 = vadd.f32 %v5111, %v5235
      %v5257 = vadd.f32 %v5112, %v5238
      %v5258 = vadd.f32 %v5113, %v5241
      %v5259 = vld [vmem:[#allocation2 + $0x760] sm:$0xff]
      %v5260 = vld [vmem:[#allocation2 + $0x768] sm:$0xff]
      %v5261 = vld [vmem:[#allocation2 + $0x770] sm:$0xff]
      %v5262 = vld [vmem:[#allocation2 + $0x778] sm:$0xff]
      %v5263 = vld [vmem:[#allocation2 + $0x780] sm:$0xff]
      %v5264 = vld [vmem:[#allocation2 + $0x788] sm:$0xff]
      %v5265 = vld [vmem:[#allocation2 + $0x790] sm:$0xff]
      %v5266 = vld [vmem:[#allocation2 + $0x798] sm:$0xff]
      %v5267 = vld [vmem:[#allocation2 + $0x7a0] sm:$0xff]
      %v5268 = vld [vmem:[#allocation2 + $0x7a8] sm:$0xff]
      %v5269 = vld [vmem:[#allocation2 + $0x7b0] sm:$0xff]
      %v5270 = vld [vmem:[#allocation2 + $0x7b8] sm:$0xff]
      %v5271 = vld [vmem:[#allocation2 + $0x7c0] sm:$0xff]
      %v5272 = vld [vmem:[#allocation2 + $0x7c8] sm:$0xff]
      %v5273 = vld [vmem:[#allocation2 + $0x7d0] sm:$0xff]
      %v5274 = vld [vmem:[#allocation2 + $0x7d8] sm:$0xff]
      %v5276 = vsel %vm2981, %v5259, 0
      %v5279 = vsel %vm2981, %v5260, 0
      %v5282 = vsel %vm2981, %v5261, 0
      %v5285 = vsel %vm2981, %v5262, 0
      %v5288 = vsel %vm2981, %v5263, 0
      %v5291 = vsel %vm2981, %v5264, 0
      %v5294 = vsel %vm2981, %v5265, 0
      %v5297 = vsel %vm2981, %v5266, 0
      %v5300 = vsel %vm2981, %v5267, 0
      %v5303 = vsel %vm2981, %v5268, 0
      %v5306 = vsel %vm2981, %v5269, 0
      %v5309 = vsel %vm2981, %v5270, 0
      %v5312 = vsel %vm2981, %v5271, 0
      %v5315 = vsel %vm2981, %v5272, 0
      %v5318 = vsel %vm2981, %v5273, 0
      %v5321 = vsel %vm2981, %v5274, 0
      %5323 = vmatpush.msra.mxu0 0.0
      %5324 = vmatpush.msra.mxu0 0.0
      %5325 = vmatpush.msra.mxu0 0.0
      %5326 = vmatpush.msra.mxu0 0.0
      %5327 = vmatpush.msra.mxu0 0.0
      %5328 = vmatpush.msra.mxu0 0.0
      %5329 = vmatpush.msra.mxu0 0.0
      %5330 = vmatpush.msra.mxu0 0.0
      %5331 = vmatpush.msra.mxu0 0.0
      %5332 = vmatpush.msra.mxu0 0.0
      %5333 = vmatpush.msra.mxu0 0.0
      %5334 = vmatpush.msra.mxu0 0.0
      %5335 = vmatpush.msra.mxu0 %v3329
      %5336 = vmatpush.msra.mxu0 %v3328
      %5337 = vmatpush.msra.mxu0 %v3327
      %5338 = vmatpush.msra.mxu0 %v3326
      %5339 = vmatmul.f32.gmra.mxu0 %v5276
      %v5340 = vpop.f32.mrf.mxu0
      %v5341 = vadd.f32 0.0, %v5340
      %5342 = vmatmul.f32.gmra.mxu0 %v5279
      %v5343 = vpop.f32.mrf.mxu0
      %v5344 = vadd.f32 0.0, %v5343
      %5345 = vmatmul.f32.gmra.mxu0 %v5282
      %v5346 = vpop.f32.mrf.mxu0
      %v5347 = vadd.f32 0.0, %v5346
      %5348 = vmatmul.f32.gmra.mxu0 %v5285
      %v5349 = vpop.f32.mrf.mxu0
      %v5350 = vadd.f32 0.0, %v5349
      %5351 = vmatmul.f32.gmra.mxu0 %v5288
      %v5352 = vpop.f32.mrf.mxu0
      %v5353 = vadd.f32 0.0, %v5352
      %5354 = vmatmul.f32.gmra.mxu0 %v5291
      %v5355 = vpop.f32.mrf.mxu0
      %v5356 = vadd.f32 0.0, %v5355
      %5357 = vmatmul.f32.gmra.mxu0 %v5294
      %v5358 = vpop.f32.mrf.mxu0
      %v5359 = vadd.f32 0.0, %v5358
      %5360 = vmatmul.f32.gmra.mxu0 %v5297
      %v5361 = vpop.f32.mrf.mxu0
      %v5362 = vadd.f32 0.0, %v5361
      %5363 = vmatmul.f32.gmra.mxu0 %v5300
      %v5364 = vpop.f32.mrf.mxu0
      %v5365 = vadd.f32 0.0, %v5364
      %5366 = vmatmul.f32.gmra.mxu0 %v5303
      %v5367 = vpop.f32.mrf.mxu0
      %v5368 = vadd.f32 0.0, %v5367
      %5369 = vmatmul.f32.gmra.mxu0 %v5306
      %v5370 = vpop.f32.mrf.mxu0
      %v5371 = vadd.f32 0.0, %v5370
      %5372 = vmatmul.f32.gmra.mxu0 %v5309
      %v5373 = vpop.f32.mrf.mxu0
      %v5374 = vadd.f32 0.0, %v5373
      %5375 = vmatmul.f32.gmra.mxu0 %v5312
      %v5376 = vpop.f32.mrf.mxu0
      %v5377 = vadd.f32 0.0, %v5376
      %5378 = vmatmul.f32.gmra.mxu0 %v5315
      %v5379 = vpop.f32.mrf.mxu0
      %v5380 = vadd.f32 0.0, %v5379
      %5381 = vmatmul.f32.gmra.mxu0 %v5318
      %v5382 = vpop.f32.mrf.mxu0
      %v5383 = vadd.f32 0.0, %v5382
      %5384 = vmatmul.f32.gmra.mxu0 %v5321
      %v5385 = vpop.f32.mrf.mxu0
      %v5386 = vadd.f32 0.0, %v5385
      %5387 = vdwg.mxu0
      %v5388 = vadd.f32 %v5243, %v5341
      %v5389 = vadd.f32 %v5244, %v5344
      %v5390 = vadd.f32 %v5245, %v5347
      %v5391 = vadd.f32 %v5246, %v5350
      %v5392 = vadd.f32 %v5247, %v5353
      %v5393 = vadd.f32 %v5248, %v5356
      %v5394 = vadd.f32 %v5249, %v5359
      %v5395 = vadd.f32 %v5250, %v5362
      %v5396 = vadd.f32 %v5251, %v5365
      %v5397 = vadd.f32 %v5252, %v5368
      %v5398 = vadd.f32 %v5253, %v5371
      %v5399 = vadd.f32 %v5254, %v5374
      %v5400 = vadd.f32 %v5255, %v5377
      %v5401 = vadd.f32 %v5256, %v5380
      %v5402 = vadd.f32 %v5257, %v5383
      %v5403 = vadd.f32 %v5258, %v5386
      %v5404 = vld [vmem:[#allocation2 + $0x6e0] sm:$0xff]
      %v5405 = vld [vmem:[#allocation2 + $0x6e8] sm:$0xff]
      %v5406 = vld [vmem:[#allocation2 + $0x6f0] sm:$0xff]
      %v5407 = vld [vmem:[#allocation2 + $0x6f8] sm:$0xff]
      %v5408 = vld [vmem:[#allocation2 + $0x700] sm:$0xff]
      %v5409 = vld [vmem:[#allocation2 + $0x708] sm:$0xff]
      %v5410 = vld [vmem:[#allocation2 + $0x710] sm:$0xff]
      %v5411 = vld [vmem:[#allocation2 + $0x718] sm:$0xff]
      %v5412 = vld [vmem:[#allocation2 + $0x720] sm:$0xff]
      %v5413 = vld [vmem:[#allocation2 + $0x728] sm:$0xff]
      %v5414 = vld [vmem:[#allocation2 + $0x730] sm:$0xff]
      %v5415 = vld [vmem:[#allocation2 + $0x738] sm:$0xff]
      %v5416 = vld [vmem:[#allocation2 + $0x740] sm:$0xff]
      %v5417 = vld [vmem:[#allocation2 + $0x748] sm:$0xff]
      %v5418 = vld [vmem:[#allocation2 + $0x750] sm:$0xff]
      %v5419 = vld [vmem:[#allocation2 + $0x758] sm:$0xff]
      %v5421 = vsel %vm2981, %v5404, 0
      %v5424 = vsel %vm2981, %v5405, 0
      %v5427 = vsel %vm2981, %v5406, 0
      %v5430 = vsel %vm2981, %v5407, 0
      %v5433 = vsel %vm2981, %v5408, 0
      %v5436 = vsel %vm2981, %v5409, 0
      %v5439 = vsel %vm2981, %v5410, 0
      %v5442 = vsel %vm2981, %v5411, 0
      %v5445 = vsel %vm2981, %v5412, 0
      %v5448 = vsel %vm2981, %v5413, 0
      %v5451 = vsel %vm2981, %v5414, 0
      %v5454 = vsel %vm2981, %v5415, 0
      %v5457 = vsel %vm2981, %v5416, 0
      %v5460 = vsel %vm2981, %v5417, 0
      %v5463 = vsel %vm2981, %v5418, 0
      %v5466 = vsel %vm2981, %v5419, 0
      %5468 = vmatpush.msra.mxu0 0.0
      %5469 = vmatpush.msra.mxu0 0.0
      %5470 = vmatpush.msra.mxu0 0.0
      %5471 = vmatpush.msra.mxu0 0.0
      %5472 = vmatpush.msra.mxu0 0.0
      %5473 = vmatpush.msra.mxu0 0.0
      %5474 = vmatpush.msra.mxu0 0.0
      %5475 = vmatpush.msra.mxu0 0.0
      %5476 = vmatpush.msra.mxu0 0.0
      %5477 = vmatpush.msra.mxu0 0.0
      %5478 = vmatpush.msra.mxu0 0.0
      %5479 = vmatpush.msra.mxu0 0.0
      %5480 = vmatpush.msra.mxu0 %v3334
      %5481 = vmatpush.msra.mxu0 %v3333
      %5482 = vmatpush.msra.mxu0 %v3332
      %5483 = vmatpush.msra.mxu0 %v3331
      %5484 = vmatmul.f32.gmra.mxu0 %v5421
      %v5485 = vpop.f32.mrf.mxu0
      %v5486 = vadd.f32 0.0, %v5485
      %5487 = vmatmul.f32.gmra.mxu0 %v5424
      %v5488 = vpop.f32.mrf.mxu0
      %v5489 = vadd.f32 0.0, %v5488
      %5490 = vmatmul.f32.gmra.mxu0 %v5427
      %v5491 = vpop.f32.mrf.mxu0
      %v5492 = vadd.f32 0.0, %v5491
      %5493 = vmatmul.f32.gmra.mxu0 %v5430
      %v5494 = vpop.f32.mrf.mxu0
      %v5495 = vadd.f32 0.0, %v5494
      %5496 = vmatmul.f32.gmra.mxu0 %v5433
      %v5497 = vpop.f32.mrf.mxu0
      %v5498 = vadd.f32 0.0, %v5497
      %5499 = vmatmul.f32.gmra.mxu0 %v5436
      %v5500 = vpop.f32.mrf.mxu0
      %v5501 = vadd.f32 0.0, %v5500
      %5502 = vmatmul.f32.gmra.mxu0 %v5439
      %v5503 = vpop.f32.mrf.mxu0
      %v5504 = vadd.f32 0.0, %v5503
      %5505 = vmatmul.f32.gmra.mxu0 %v5442
      %v5506 = vpop.f32.mrf.mxu0
      %v5507 = vadd.f32 0.0, %v5506
      %5508 = vmatmul.f32.gmra.mxu0 %v5445
      %v5509 = vpop.f32.mrf.mxu0
      %v5510 = vadd.f32 0.0, %v5509
      %5511 = vmatmul.f32.gmra.mxu0 %v5448
      %v5512 = vpop.f32.mrf.mxu0
      %v5513 = vadd.f32 0.0, %v5512
      %5514 = vmatmul.f32.gmra.mxu0 %v5451
      %v5515 = vpop.f32.mrf.mxu0
      %v5516 = vadd.f32 0.0, %v5515
      %5517 = vmatmul.f32.gmra.mxu0 %v5454
      %v5518 = vpop.f32.mrf.mxu0
      %v5519 = vadd.f32 0.0, %v5518
      %5520 = vmatmul.f32.gmra.mxu0 %v5457
      %v5521 = vpop.f32.mrf.mxu0
      %v5522 = vadd.f32 0.0, %v5521
      %5523 = vmatmul.f32.gmra.mxu0 %v5460
      %v5524 = vpop.f32.mrf.mxu0
      %v5525 = vadd.f32 0.0, %v5524
      %5526 = vmatmul.f32.gmra.mxu0 %v5463
      %v5527 = vpop.f32.mrf.mxu0
      %v5528 = vadd.f32 0.0, %v5527
      %5529 = vmatmul.f32.gmra.mxu0 %v5466
      %v5530 = vpop.f32.mrf.mxu0
      %v5531 = vadd.f32 0.0, %v5530
      %5532 = vdwg.mxu0
      %v5533 = vadd.f32 %v5388, %v5486
      %v5534 = vadd.f32 %v5389, %v5489
      %v5535 = vadd.f32 %v5390, %v5492
      %v5536 = vadd.f32 %v5391, %v5495
      %v5537 = vadd.f32 %v5392, %v5498
      %v5538 = vadd.f32 %v5393, %v5501
      %v5539 = vadd.f32 %v5394, %v5504
      %v5540 = vadd.f32 %v5395, %v5507
      %v5541 = vadd.f32 %v5396, %v5510
      %v5542 = vadd.f32 %v5397, %v5513
      %v5543 = vadd.f32 %v5398, %v5516
      %v5544 = vadd.f32 %v5399, %v5519
      %v5545 = vadd.f32 %v5400, %v5522
      %v5546 = vadd.f32 %v5401, %v5525
      %v5547 = vadd.f32 %v5402, %v5528
      %v5548 = vadd.f32 %v5403, %v5531
      %v5549 = vld [vmem:[#allocation2 + $0x240] sm:$0xff]
      %v5550 = vld [vmem:[#allocation2 + $0x248] sm:$0xff]
      %v5551 = vld [vmem:[#allocation2 + $0x250] sm:$0xff]
      %v5552 = vld [vmem:[#allocation2 + $0x258] sm:$0xff]
      %v5553 = vld [vmem:[#allocation2 + $0x260] sm:$0xff]
      %v5554 = vld [vmem:[#allocation2 + $0x268] sm:$0xff]
      %v5555 = vld [vmem:[#allocation2 + $0x270] sm:$0xff]
      %v5556 = vld [vmem:[#allocation2 + $0x278] sm:$0xff]
      %v5557 = vld [vmem:[#allocation2 + $0x280] sm:$0xff]
      %v5558 = vld [vmem:[#allocation2 + $0x288] sm:$0xff]
      %v5559 = vld [vmem:[#allocation2 + $0x290] sm:$0xff]
      %v5560 = vld [vmem:[#allocation2 + $0x298] sm:$0xff]
      %v5561 = vld [vmem:[#allocation2 + $0x2a0] sm:$0xff]
      %v5562 = vld [vmem:[#allocation2 + $0x2a8] sm:$0xff]
      %v5563 = vld [vmem:[#allocation2 + $0x2b0] sm:$0xff]
      %v5564 = vld [vmem:[#allocation2 + $0x2b8] sm:$0xff]
      %v5566 = vsel %vm2981, %v5549, 0
      %v5569 = vsel %vm2981, %v5550, 0
      %v5572 = vsel %vm2981, %v5551, 0
      %v5575 = vsel %vm2981, %v5552, 0
      %v5578 = vsel %vm2981, %v5553, 0
      %v5581 = vsel %vm2981, %v5554, 0
      %v5584 = vsel %vm2981, %v5555, 0
      %v5587 = vsel %vm2981, %v5556, 0
      %v5590 = vsel %vm2981, %v5557, 0
      %v5593 = vsel %vm2981, %v5558, 0
      %v5596 = vsel %vm2981, %v5559, 0
      %v5599 = vsel %vm2981, %v5560, 0
      %v5602 = vsel %vm2981, %v5561, 0
      %v5605 = vsel %vm2981, %v5562, 0
      %v5608 = vsel %vm2981, %v5563, 0
      %v5611 = vsel %vm2981, %v5564, 0
      %5613 = vmatpush.msra.mxu0 0.0
      %5614 = vmatpush.msra.mxu0 0.0
      %5615 = vmatpush.msra.mxu0 0.0
      %5616 = vmatpush.msra.mxu0 0.0
      %5617 = vmatpush.msra.mxu0 0.0
      %5618 = vmatpush.msra.mxu0 0.0
      %5619 = vmatpush.msra.mxu0 0.0
      %5620 = vmatpush.msra.mxu0 0.0
      %5621 = vmatpush.msra.mxu0 0.0
      %5622 = vmatpush.msra.mxu0 0.0
      %5623 = vmatpush.msra.mxu0 0.0
      %5624 = vmatpush.msra.mxu0 0.0
      %5625 = vmatpush.msra.mxu0 %v3339
      %5626 = vmatpush.msra.mxu0 %v3338
      %5627 = vmatpush.msra.mxu0 %v3337
      %5628 = vmatpush.msra.mxu0 %v3336
      %5629 = vmatmul.f32.gmra.mxu0 %v5566
      %v5630 = vpop.f32.mrf.mxu0
      %v5631 = vadd.f32 0.0, %v5630
      %5632 = vmatmul.f32.gmra.mxu0 %v5569
      %v5633 = vpop.f32.mrf.mxu0
      %v5634 = vadd.f32 0.0, %v5633
      %5635 = vmatmul.f32.gmra.mxu0 %v5572
      %v5636 = vpop.f32.mrf.mxu0
      %v5637 = vadd.f32 0.0, %v5636
      %5638 = vmatmul.f32.gmra.mxu0 %v5575
      %v5639 = vpop.f32.mrf.mxu0
      %v5640 = vadd.f32 0.0, %v5639
      %5641 = vmatmul.f32.gmra.mxu0 %v5578
      %v5642 = vpop.f32.mrf.mxu0
      %v5643 = vadd.f32 0.0, %v5642
      %5644 = vmatmul.f32.gmra.mxu0 %v5581
      %v5645 = vpop.f32.mrf.mxu0
      %v5646 = vadd.f32 0.0, %v5645
      %5647 = vmatmul.f32.gmra.mxu0 %v5584
      %v5648 = vpop.f32.mrf.mxu0
      %v5649 = vadd.f32 0.0, %v5648
      %5650 = vmatmul.f32.gmra.mxu0 %v5587
      %v5651 = vpop.f32.mrf.mxu0
      %v5652 = vadd.f32 0.0, %v5651
      %5653 = vmatmul.f32.gmra.mxu0 %v5590
      %v5654 = vpop.f32.mrf.mxu0
      %v5655 = vadd.f32 0.0, %v5654
      %5656 = vmatmul.f32.gmra.mxu0 %v5593
      %v5657 = vpop.f32.mrf.mxu0
      %v5658 = vadd.f32 0.0, %v5657
      %5659 = vmatmul.f32.gmra.mxu0 %v5596
      %v5660 = vpop.f32.mrf.mxu0
      %v5661 = vadd.f32 0.0, %v5660
      %5662 = vmatmul.f32.gmra.mxu0 %v5599
      %v5663 = vpop.f32.mrf.mxu0
      %v5664 = vadd.f32 0.0, %v5663
      %5665 = vmatmul.f32.gmra.mxu0 %v5602
      %v5666 = vpop.f32.mrf.mxu0
      %v5667 = vadd.f32 0.0, %v5666
      %5668 = vmatmul.f32.gmra.mxu0 %v5605
      %v5669 = vpop.f32.mrf.mxu0
      %v5670 = vadd.f32 0.0, %v5669
      %5671 = vmatmul.f32.gmra.mxu0 %v5608
      %v5672 = vpop.f32.mrf.mxu0
      %v5673 = vadd.f32 0.0, %v5672
      %5674 = vmatmul.f32.gmra.mxu0 %v5611
      %v5675 = vpop.f32.mrf.mxu0
      %v5676 = vadd.f32 0.0, %v5675
      %5677 = vdwg.mxu0
      %v5678 = vadd.f32 %v5533, %v5631
      %v5679 = vadd.f32 %v5534, %v5634
      %v5680 = vadd.f32 %v5535, %v5637
      %v5681 = vadd.f32 %v5536, %v5640
      %v5682 = vadd.f32 %v5537, %v5643
      %v5683 = vadd.f32 %v5538, %v5646
      %v5684 = vadd.f32 %v5539, %v5649
      %v5685 = vadd.f32 %v5540, %v5652
      %v5686 = vadd.f32 %v5541, %v5655
      %v5687 = vadd.f32 %v5542, %v5658
      %v5688 = vadd.f32 %v5543, %v5661
      %v5689 = vadd.f32 %v5544, %v5664
      %v5690 = vadd.f32 %v5545, %v5667
      %v5691 = vadd.f32 %v5546, %v5670
      %v5692 = vadd.f32 %v5547, %v5673
      %v5693 = vadd.f32 %v5548, %v5676
      %v5694 = vld [vmem:[#allocation2 + $0x2e0] sm:$0xff]
      %v5695 = vld [vmem:[#allocation2 + $0x2e8] sm:$0xff]
      %v5696 = vld [vmem:[#allocation2 + $0x2f0] sm:$0xff]
      %v5697 = vld [vmem:[#allocation2 + $0x2f8] sm:$0xff]
      %v5698 = vld [vmem:[#allocation2 + $0x300] sm:$0xff]
      %v5699 = vld [vmem:[#allocation2 + $0x308] sm:$0xff]
      %v5700 = vld [vmem:[#allocation2 + $0x310] sm:$0xff]
      %v5701 = vld [vmem:[#allocation2 + $0x318] sm:$0xff]
      %v5702 = vld [vmem:[#allocation2 + $0x320] sm:$0xff]
      %v5703 = vld [vmem:[#allocation2 + $0x328] sm:$0xff]
      %v5704 = vld [vmem:[#allocation2 + $0x330] sm:$0xff]
      %v5705 = vld [vmem:[#allocation2 + $0x338] sm:$0xff]
      %v5706 = vld [vmem:[#allocation2 + $0x340] sm:$0xff]
      %v5707 = vld [vmem:[#allocation2 + $0x348] sm:$0xff]
      %v5708 = vld [vmem:[#allocation2 + $0x350] sm:$0xff]
      %v5709 = vld [vmem:[#allocation2 + $0x358] sm:$0xff]
      %v5711 = vsel %vm2981, %v5694, 0
      %v5714 = vsel %vm2981, %v5695, 0
      %v5717 = vsel %vm2981, %v5696, 0
      %v5720 = vsel %vm2981, %v5697, 0
      %v5723 = vsel %vm2981, %v5698, 0
      %v5726 = vsel %vm2981, %v5699, 0
      %v5729 = vsel %vm2981, %v5700, 0
      %v5732 = vsel %vm2981, %v5701, 0
      %v5735 = vsel %vm2981, %v5702, 0
      %v5738 = vsel %vm2981, %v5703, 0
      %v5741 = vsel %vm2981, %v5704, 0
      %v5744 = vsel %vm2981, %v5705, 0
      %v5747 = vsel %vm2981, %v5706, 0
      %v5750 = vsel %vm2981, %v5707, 0
      %v5753 = vsel %vm2981, %v5708, 0
      %v5756 = vsel %vm2981, %v5709, 0
      %5758 = vmatpush.msra.mxu0 0.0
      %5759 = vmatpush.msra.mxu0 0.0
      %5760 = vmatpush.msra.mxu0 0.0
      %5761 = vmatpush.msra.mxu0 0.0
      %5762 = vmatpush.msra.mxu0 0.0
      %5763 = vmatpush.msra.mxu0 0.0
      %5764 = vmatpush.msra.mxu0 0.0
      %5765 = vmatpush.msra.mxu0 0.0
      %5766 = vmatpush.msra.mxu0 0.0
      %5767 = vmatpush.msra.mxu0 0.0
      %5768 = vmatpush.msra.mxu0 0.0
      %5769 = vmatpush.msra.mxu0 0.0
      %5770 = vmatpush.msra.mxu0 %v3344
      %5771 = vmatpush.msra.mxu0 %v3343
      %5772 = vmatpush.msra.mxu0 %v3342
      %5773 = vmatpush.msra.mxu0 %v3341
      %5774 = vmatmul.f32.gmra.mxu0 %v5711
      %v5775 = vpop.f32.mrf.mxu0
      %v5776 = vadd.f32 0.0, %v5775
      %5777 = vmatmul.f32.gmra.mxu0 %v5714
      %v5778 = vpop.f32.mrf.mxu0
      %v5779 = vadd.f32 0.0, %v5778
      %5780 = vmatmul.f32.gmra.mxu0 %v5717
      %v5781 = vpop.f32.mrf.mxu0
      %v5782 = vadd.f32 0.0, %v5781
      %5783 = vmatmul.f32.gmra.mxu0 %v5720
      %v5784 = vpop.f32.mrf.mxu0
      %v5785 = vadd.f32 0.0, %v5784
      %5786 = vmatmul.f32.gmra.mxu0 %v5723
      %v5787 = vpop.f32.mrf.mxu0
      %v5788 = vadd.f32 0.0, %v5787
      %5789 = vmatmul.f32.gmra.mxu0 %v5726
      %v5790 = vpop.f32.mrf.mxu0
      %v5791 = vadd.f32 0.0, %v5790
      %5792 = vmatmul.f32.gmra.mxu0 %v5729
      %v5793 = vpop.f32.mrf.mxu0
      %v5794 = vadd.f32 0.0, %v5793
      %5795 = vmatmul.f32.gmra.mxu0 %v5732
      %v5796 = vpop.f32.mrf.mxu0
      %v5797 = vadd.f32 0.0, %v5796
      %5798 = vmatmul.f32.gmra.mxu0 %v5735
      %v5799 = vpop.f32.mrf.mxu0
      %v5800 = vadd.f32 0.0, %v5799
      %5801 = vmatmul.f32.gmra.mxu0 %v5738
      %v5802 = vpop.f32.mrf.mxu0
      %v5803 = vadd.f32 0.0, %v5802
      %5804 = vmatmul.f32.gmra.mxu0 %v5741
      %v5805 = vpop.f32.mrf.mxu0
      %v5806 = vadd.f32 0.0, %v5805
      %5807 = vmatmul.f32.gmra.mxu0 %v5744
      %v5808 = vpop.f32.mrf.mxu0
      %v5809 = vadd.f32 0.0, %v5808
      %5810 = vmatmul.f32.gmra.mxu0 %v5747
      %v5811 = vpop.f32.mrf.mxu0
      %v5812 = vadd.f32 0.0, %v5811
      %5813 = vmatmul.f32.gmra.mxu0 %v5750
      %v5814 = vpop.f32.mrf.mxu0
      %v5815 = vadd.f32 0.0, %v5814
      %5816 = vmatmul.f32.gmra.mxu0 %v5753
      %v5817 = vpop.f32.mrf.mxu0
      %v5818 = vadd.f32 0.0, %v5817
      %5819 = vmatmul.f32.gmra.mxu0 %v5756
      %v5820 = vpop.f32.mrf.mxu0
      %v5821 = vadd.f32 0.0, %v5820
      %5822 = vdwg.mxu0
      %v5823 = vadd.f32 %v5678, %v5776
      %v5824 = vadd.f32 %v5679, %v5779
      %v5825 = vadd.f32 %v5680, %v5782
      %v5826 = vadd.f32 %v5681, %v5785
      %v5827 = vadd.f32 %v5682, %v5788
      %v5828 = vadd.f32 %v5683, %v5791
      %v5829 = vadd.f32 %v5684, %v5794
      %v5830 = vadd.f32 %v5685, %v5797
      %v5831 = vadd.f32 %v5686, %v5800
      %v5832 = vadd.f32 %v5687, %v5803
      %v5833 = vadd.f32 %v5688, %v5806
      %v5834 = vadd.f32 %v5689, %v5809
      %v5835 = vadd.f32 %v5690, %v5812
      %v5836 = vadd.f32 %v5691, %v5815
      %v5837 = vadd.f32 %v5692, %v5818
      %v5838 = vadd.f32 %v5693, %v5821
      %v5839 = vld [vmem:[#allocation2 + $0x260] sm:$0xff]
      %v5840 = vld [vmem:[#allocation2 + $0x268] sm:$0xff]
      %v5841 = vld [vmem:[#allocation2 + $0x270] sm:$0xff]
      %v5842 = vld [vmem:[#allocation2 + $0x278] sm:$0xff]
      %v5843 = vld [vmem:[#allocation2 + $0x280] sm:$0xff]
      %v5844 = vld [vmem:[#allocation2 + $0x288] sm:$0xff]
      %v5845 = vld [vmem:[#allocation2 + $0x290] sm:$0xff]
      %v5846 = vld [vmem:[#allocation2 + $0x298] sm:$0xff]
      %v5847 = vld [vmem:[#allocation2 + $0x2a0] sm:$0xff]
      %v5848 = vld [vmem:[#allocation2 + $0x2a8] sm:$0xff]
      %v5849 = vld [vmem:[#allocation2 + $0x2b0] sm:$0xff]
      %v5850 = vld [vmem:[#allocation2 + $0x2b8] sm:$0xff]
      %v5851 = vld [vmem:[#allocation2 + $0x2c0] sm:$0xff]
      %v5852 = vld [vmem:[#allocation2 + $0x2c8] sm:$0xff]
      %v5853 = vld [vmem:[#allocation2 + $0x2d0] sm:$0xff]
      %v5854 = vld [vmem:[#allocation2 + $0x2d8] sm:$0xff]
      %v5856 = vsel %vm2981, %v5839, 0
      %v5859 = vsel %vm2981, %v5840, 0
      %v5862 = vsel %vm2981, %v5841, 0
      %v5865 = vsel %vm2981, %v5842, 0
      %v5868 = vsel %vm2981, %v5843, 0
      %v5871 = vsel %vm2981, %v5844, 0
      %v5874 = vsel %vm2981, %v5845, 0
      %v5877 = vsel %vm2981, %v5846, 0
      %v5880 = vsel %vm2981, %v5847, 0
      %v5883 = vsel %vm2981, %v5848, 0
      %v5886 = vsel %vm2981, %v5849, 0
      %v5889 = vsel %vm2981, %v5850, 0
      %v5892 = vsel %vm2981, %v5851, 0
      %v5895 = vsel %vm2981, %v5852, 0
      %v5898 = vsel %vm2981, %v5853, 0
      %v5901 = vsel %vm2981, %v5854, 0
      %5903 = vmatpush.msra.mxu0 0.0
      %5904 = vmatpush.msra.mxu0 0.0
      %5905 = vmatpush.msra.mxu0 0.0
      %5906 = vmatpush.msra.mxu0 0.0
      %5907 = vmatpush.msra.mxu0 0.0
      %5908 = vmatpush.msra.mxu0 0.0
      %5909 = vmatpush.msra.mxu0 0.0
      %5910 = vmatpush.msra.mxu0 0.0
      %5911 = vmatpush.msra.mxu0 0.0
      %5912 = vmatpush.msra.mxu0 0.0
      %5913 = vmatpush.msra.mxu0 0.0
      %5914 = vmatpush.msra.mxu0 0.0
      %5915 = vmatpush.msra.mxu0 %v3349
      %5916 = vmatpush.msra.mxu0 %v3348
      %5917 = vmatpush.msra.mxu0 %v3347
      %5918 = vmatpush.msra.mxu0 %v3346
      %5919 = vmatmul.f32.gmra.mxu0 %v5856
      %v5920 = vpop.f32.mrf.mxu0
      %v5921 = vadd.f32 0.0, %v5920
      %5922 = vmatmul.f32.gmra.mxu0 %v5859
      %v5923 = vpop.f32.mrf.mxu0
      %v5924 = vadd.f32 0.0, %v5923
      %5925 = vmatmul.f32.gmra.mxu0 %v5862
      %v5926 = vpop.f32.mrf.mxu0
      %v5927 = vadd.f32 0.0, %v5926
      %5928 = vmatmul.f32.gmra.mxu0 %v5865
      %v5929 = vpop.f32.mrf.mxu0
      %v5930 = vadd.f32 0.0, %v5929
      %5931 = vmatmul.f32.gmra.mxu0 %v5868
      %v5932 = vpop.f32.mrf.mxu0
      %v5933 = vadd.f32 0.0, %v5932
      %5934 = vmatmul.f32.gmra.mxu0 %v5871
      %v5935 = vpop.f32.mrf.mxu0
      %v5936 = vadd.f32 0.0, %v5935
      %5937 = vmatmul.f32.gmra.mxu0 %v5874
      %v5938 = vpop.f32.mrf.mxu0
      %v5939 = vadd.f32 0.0, %v5938
      %5940 = vmatmul.f32.gmra.mxu0 %v5877
      %v5941 = vpop.f32.mrf.mxu0
      %v5942 = vadd.f32 0.0, %v5941
      %5943 = vmatmul.f32.gmra.mxu0 %v5880
      %v5944 = vpop.f32.mrf.mxu0
      %v5945 = vadd.f32 0.0, %v5944
      %5946 = vmatmul.f32.gmra.mxu0 %v5883
      %v5947 = vpop.f32.mrf.mxu0
      %v5948 = vadd.f32 0.0, %v5947
      %5949 = vmatmul.f32.gmra.mxu0 %v5886
      %v5950 = vpop.f32.mrf.mxu0
      %v5951 = vadd.f32 0.0, %v5950
      %5952 = vmatmul.f32.gmra.mxu0 %v5889
      %v5953 = vpop.f32.mrf.mxu0
      %v5954 = vadd.f32 0.0, %v5953
      %5955 = vmatmul.f32.gmra.mxu0 %v5892
      %v5956 = vpop.f32.mrf.mxu0
      %v5957 = vadd.f32 0.0, %v5956
      %5958 = vmatmul.f32.gmra.mxu0 %v5895
      %v5959 = vpop.f32.mrf.mxu0
      %v5960 = vadd.f32 0.0, %v5959
      %5961 = vmatmul.f32.gmra.mxu0 %v5898
      %v5962 = vpop.f32.mrf.mxu0
      %v5963 = vadd.f32 0.0, %v5962
      %5964 = vmatmul.f32.gmra.mxu0 %v5901
      %v5965 = vpop.f32.mrf.mxu0
      %v5966 = vadd.f32 0.0, %v5965
      %5967 = vdwg.mxu0
      %v5968 = vadd.f32 %v5823, %v5921
      %v5969 = vadd.f32 %v5824, %v5924
      %v5970 = vadd.f32 %v5825, %v5927
      %v5971 = vadd.f32 %v5826, %v5930
      %v5972 = vadd.f32 %v5827, %v5933
      %v5973 = vadd.f32 %v5828, %v5936
      %v5974 = vadd.f32 %v5829, %v5939
      %v5975 = vadd.f32 %v5830, %v5942
      %v5976 = vadd.f32 %v5831, %v5945
      %v5977 = vadd.f32 %v5832, %v5948
      %v5978 = vadd.f32 %v5833, %v5951
      %v5979 = vadd.f32 %v5834, %v5954
      %v5980 = vadd.f32 %v5835, %v5957
      %v5981 = vadd.f32 %v5836, %v5960
      %v5982 = vadd.f32 %v5837, %v5963
      %v5983 = vadd.f32 %v5838, %v5966
      %v5984 = vadd.f32 %v5968, %v4645
      %v5985 = vadd.f32 %v5969, %v4645
      %v5986 = vadd.f32 %v5970, %v4645
      %v5987 = vadd.f32 %v5971, %v4645
      %v5988 = vadd.f32 %v5972, %v4645
      %v5989 = vadd.f32 %v5973, %v4645
      %v5990 = vadd.f32 %v5974, %v4645
      %v5991 = vadd.f32 %v5975, %v4645
      %v5992 = vadd.f32 %v5976, %v4645
      %v5993 = vadd.f32 %v5977, %v4645
      %v5994 = vadd.f32 %v5978, %v4645
      %v5995 = vadd.f32 %v5979, %v4645
      %v5996 = vadd.f32 %v5980, %v4645
      %v5997 = vadd.f32 %v5981, %v4645
      %v5998 = vadd.f32 %v5982, %v4645
      %v5999 = vadd.f32 %v5983, %v4645
      %v6000 = vmax.f32 %v5984, 0.0
      %v6001 = vmax.f32 %v5985, 0.0
      %v6002 = vmax.f32 %v5986, 0.0
      %v6003 = vmax.f32 %v5987, 0.0
      %v6004 = vmax.f32 %v5988, 0.0
      %v6005 = vmax.f32 %v5989, 0.0
      %v6006 = vmax.f32 %v5990, 0.0
      %v6007 = vmax.f32 %v5991, 0.0
      %v6008 = vmax.f32 %v5992, 0.0
      %v6009 = vmax.f32 %v5993, 0.0
      %v6010 = vmax.f32 %v5994, 0.0
      %v6011 = vmax.f32 %v5995, 0.0
      %v6012 = vmax.f32 %v5996, 0.0
      %v6013 = vmax.f32 %v5997, 0.0
      %v6014 = vmax.f32 %v5998, 0.0
      %v6015 = vmax.f32 %v5999, 0.0
      %s6016 = scalar_lea.vmem %s6, 128
      %v6017 = vld [vmem:[%s6016] sm:$0xff]
      %v6018 = vld [vmem:[%s6016 + $0x8] sm:$0xff]
      %v6019 = vld [vmem:[%s6016 + $0x10] sm:$0xff]
      %v6020 = vld [vmem:[%s6016 + $0x18] sm:$0xff]
      %v6022 = vsel %vm2981, %v6000, 0
      %v6025 = vsel %vm2981, %v6001, 0
      %v6028 = vsel %vm2981, %v6002, 0
      %v6031 = vsel %vm2981, %v6003, 0
      %6033 = vmatpush.msra.mxu0 0.0
      %6034 = vmatpush.msra.mxu0 0.0
      %6035 = vmatpush.msra.mxu0 0.0
      %6036 = vmatpush.msra.mxu0 0.0
      %6037 = vmatpush.msra.mxu0 0.0
      %6038 = vmatpush.msra.mxu0 0.0
      %6039 = vmatpush.msra.mxu0 0.0
      %6040 = vmatpush.msra.mxu0 0.0
      %6041 = vmatpush.msra.mxu0 0.0
      %6042 = vmatpush.msra.mxu0 0.0
      %6043 = vmatpush.msra.mxu0 0.0
      %6044 = vmatpush.msra.mxu0 0.0
      %6045 = vmatpush.msra.mxu0 %v6020
      %6046 = vmatpush.msra.mxu0 %v6019
      %6047 = vmatpush.msra.mxu0 %v6018
      %6048 = vmatpush.msra.mxu0 %v6017
      %6049 = vmatmul.f32.gmra.mxu0 %v6022
      %v6050 = vpop.f32.mrf.mxu0
      %v6051 = vadd.f32 0.0, %v6050
      %6052 = vmatmul.f32.gmra.mxu0 %v6025
      %v6053 = vpop.f32.mrf.mxu0
      %v6054 = vadd.f32 0.0, %v6053
      %6055 = vmatmul.f32.gmra.mxu0 %v6028
      %v6056 = vpop.f32.mrf.mxu0
      %v6057 = vadd.f32 0.0, %v6056
      %6058 = vmatmul.f32.gmra.mxu0 %v6031
      %v6059 = vpop.f32.mrf.mxu0
      %v6060 = vadd.f32 0.0, %v6059
      %6061 = vdwg.mxu0
      %v6062 = vadd.f32 %v4899, %v6051
      %v6063 = vadd.f32 %v4900, %v6054
      %v6064 = vadd.f32 %v4901, %v6057
      %v6065 = vadd.f32 %v4902, %v6060
      %s6066 = scalar_lea.vmem %s6, 160
      %v6067 = vld [vmem:[%s6066] sm:$0xff]
      %v6068 = vld [vmem:[%s6066 + $0x8] sm:$0xff]
      %v6069 = vld [vmem:[%s6066 + $0x10] sm:$0xff]
      %v6070 = vld [vmem:[%s6066 + $0x18] sm:$0xff]
      %v6072 = vsel %vm2981, %v6004, 0
      %v6075 = vsel %vm2981, %v6005, 0
      %v6078 = vsel %vm2981, %v6006, 0
      %v6081 = vsel %vm2981, %v6007, 0
      %6083 = vmatpush.msra.mxu0 0.0
      %6084 = vmatpush.msra.mxu0 0.0
      %6085 = vmatpush.msra.mxu0 0.0
      %6086 = vmatpush.msra.mxu0 0.0
      %6087 = vmatpush.msra.mxu0 0.0
      %6088 = vmatpush.msra.mxu0 0.0
      %6089 = vmatpush.msra.mxu0 0.0
      %6090 = vmatpush.msra.mxu0 0.0
      %6091 = vmatpush.msra.mxu0 0.0
      %6092 = vmatpush.msra.mxu0 0.0
      %6093 = vmatpush.msra.mxu0 0.0
      %6094 = vmatpush.msra.mxu0 0.0
      %6095 = vmatpush.msra.mxu0 %v6070
      %6096 = vmatpush.msra.mxu0 %v6069
      %6097 = vmatpush.msra.mxu0 %v6068
      %6098 = vmatpush.msra.mxu0 %v6067
      %6099 = vmatmul.f32.gmra.mxu0 %v6072
      %v6100 = vpop.f32.mrf.mxu0
      %v6101 = vadd.f32 0.0, %v6100
      %6102 = vmatmul.f32.gmra.mxu0 %v6075
      %v6103 = vpop.f32.mrf.mxu0
      %v6104 = vadd.f32 0.0, %v6103
      %6105 = vmatmul.f32.gmra.mxu0 %v6078
      %v6106 = vpop.f32.mrf.mxu0
      %v6107 = vadd.f32 0.0, %v6106
      %6108 = vmatmul.f32.gmra.mxu0 %v6081
      %v6109 = vpop.f32.mrf.mxu0
      %v6110 = vadd.f32 0.0, %v6109
      %6111 = vdwg.mxu0
      %v6112 = vadd.f32 %v6062, %v6101
      %v6113 = vadd.f32 %v6063, %v6104
      %v6114 = vadd.f32 %v6064, %v6107
      %v6115 = vadd.f32 %v6065, %v6110
      %s6116 = scalar_lea.vmem %s6, 192
      %v6117 = vld [vmem:[%s6116] sm:$0xff]
      %v6118 = vld [vmem:[%s6116 + $0x8] sm:$0xff]
      %v6119 = vld [vmem:[%s6116 + $0x10] sm:$0xff]
      %v6120 = vld [vmem:[%s6116 + $0x18] sm:$0xff]
      %v6122 = vsel %vm2981, %v6008, 0
      %v6125 = vsel %vm2981, %v6009, 0
      %v6128 = vsel %vm2981, %v6010, 0
      %v6131 = vsel %vm2981, %v6011, 0
      %6133 = vmatpush.msra.mxu0 0.0
      %6134 = vmatpush.msra.mxu0 0.0
      %6135 = vmatpush.msra.mxu0 0.0
      %6136 = vmatpush.msra.mxu0 0.0
      %6137 = vmatpush.msra.mxu0 0.0
      %6138 = vmatpush.msra.mxu0 0.0
      %6139 = vmatpush.msra.mxu0 0.0
      %6140 = vmatpush.msra.mxu0 0.0
      %6141 = vmatpush.msra.mxu0 0.0
      %6142 = vmatpush.msra.mxu0 0.0
      %6143 = vmatpush.msra.mxu0 0.0
      %6144 = vmatpush.msra.mxu0 0.0
      %6145 = vmatpush.msra.mxu0 %v6120
      %6146 = vmatpush.msra.mxu0 %v6119
      %6147 = vmatpush.msra.mxu0 %v6118
      %6148 = vmatpush.msra.mxu0 %v6117
      %6149 = vmatmul.f32.gmra.mxu0 %v6122
      %v6150 = vpop.f32.mrf.mxu0
      %v6151 = vadd.f32 0.0, %v6150
      %6152 = vmatmul.f32.gmra.mxu0 %v6125
      %v6153 = vpop.f32.mrf.mxu0
      %v6154 = vadd.f32 0.0, %v6153
      %6155 = vmatmul.f32.gmra.mxu0 %v6128
      %v6156 = vpop.f32.mrf.mxu0
      %v6157 = vadd.f32 0.0, %v6156
      %6158 = vmatmul.f32.gmra.mxu0 %v6131
      %v6159 = vpop.f32.mrf.mxu0
      %v6160 = vadd.f32 0.0, %v6159
      %6161 = vdwg.mxu0
      %v6162 = vadd.f32 %v6112, %v6151
      %v6163 = vadd.f32 %v6113, %v6154
      %v6164 = vadd.f32 %v6114, %v6157
      %v6165 = vadd.f32 %v6115, %v6160
      %s6166 = scalar_lea.vmem %s6, 224
      %v6167 = vld [vmem:[%s6166] sm:$0xff]
      %v6168 = vld [vmem:[%s6166 + $0x8] sm:$0xff]
      %v6169 = vld [vmem:[%s6166 + $0x10] sm:$0xff]
      %v6170 = vld [vmem:[%s6166 + $0x18] sm:$0xff]
      %v6172 = vsel %vm2981, %v6012, 0
      %v6175 = vsel %vm2981, %v6013, 0
      %v6178 = vsel %vm2981, %v6014, 0
      %v6181 = vsel %vm2981, %v6015, 0
      %6183 = vmatpush.msra.mxu0 0.0
      %6184 = vmatpush.msra.mxu0 0.0
      %6185 = vmatpush.msra.mxu0 0.0
      %6186 = vmatpush.msra.mxu0 0.0
      %6187 = vmatpush.msra.mxu0 0.0
      %6188 = vmatpush.msra.mxu0 0.0
      %6189 = vmatpush.msra.mxu0 0.0
      %6190 = vmatpush.msra.mxu0 0.0
      %6191 = vmatpush.msra.mxu0 0.0
      %6192 = vmatpush.msra.mxu0 0.0
      %6193 = vmatpush.msra.mxu0 0.0
      %6194 = vmatpush.msra.mxu0 0.0
      %6195 = vmatpush.msra.mxu0 %v6170
      %6196 = vmatpush.msra.mxu0 %v6169
      %6197 = vmatpush.msra.mxu0 %v6168
      %6198 = vmatpush.msra.mxu0 %v6167
      %6199 = vmatmul.f32.gmra.mxu0 %v6172
      %v6200 = vpop.f32.mrf.mxu0
      %v6201 = vadd.f32 0.0, %v6200
      %6202 = vmatmul.f32.gmra.mxu0 %v6175
      %v6203 = vpop.f32.mrf.mxu0
      %v6204 = vadd.f32 0.0, %v6203
      %6205 = vmatmul.f32.gmra.mxu0 %v6178
      %v6206 = vpop.f32.mrf.mxu0
      %v6207 = vadd.f32 0.0, %v6206
      %6208 = vmatmul.f32.gmra.mxu0 %v6181
      %v6209 = vpop.f32.mrf.mxu0
      %v6210 = vadd.f32 0.0, %v6209
      %6211 = vdwg.mxu0
      %v6212 = vadd.f32 %v6162, %v6201
      %v6213 = vadd.f32 %v6163, %v6204
      %v6214 = vadd.f32 %v6164, %v6207
      %v6215 = vadd.f32 %v6165, %v6210
      %6216 = vmatpush.msra.mxu0 0.0
      %6217 = vmatpush.msra.mxu0 0.0
      %6218 = vmatpush.msra.mxu0 0.0
      %6219 = vmatpush.msra.mxu0 0.0
      %6220 = vmatpush.msra.mxu0 0.0
      %6221 = vmatpush.msra.mxu0 0.0
      %6222 = vmatpush.msra.mxu0 0.0
      %6223 = vmatpush.msra.mxu0 0.0
      %6224 = vmatpush.msra.mxu0 0.0
      %6225 = vmatpush.msra.mxu0 0.0
      %6226 = vmatpush.msra.mxu0 0.0
      %6227 = vmatpush.msra.mxu0 0.0
      %6228 = vmatpush.msra.mxu0 %v3314
      %6229 = vmatpush.msra.mxu0 %v3313
      %6230 = vmatpush.msra.mxu0 %v3312
      %6231 = vmatpush.msra.mxu0 %v3311
      %6232 = vmatmul.f32.gmra.mxu0 %v5711
      %v6233 = vpop.f32.mrf.mxu0
      %v6234 = vadd.f32 0.0, %v6233
      %6235 = vmatmul.f32.gmra.mxu0 %v5714
      %v6236 = vpop.f32.mrf.mxu0
      %v6237 = vadd.f32 0.0, %v6236
      %6238 = vmatmul.f32.gmra.mxu0 %v5717
      %v6239 = vpop.f32.mrf.mxu0
      %v6240 = vadd.f32 0.0, %v6239
      %6241 = vmatmul.f32.gmra.mxu0 %v5720
      %v6242 = vpop.f32.mrf.mxu0
      %v6243 = vadd.f32 0.0, %v6242
      %6244 = vmatmul.f32.gmra.mxu0 %v5723
      %v6245 = vpop.f32.mrf.mxu0
      %v6246 = vadd.f32 0.0, %v6245
      %6247 = vmatmul.f32.gmra.mxu0 %v5726
      %v6248 = vpop.f32.mrf.mxu0
      %v6249 = vadd.f32 0.0, %v6248
      %6250 = vmatmul.f32.gmra.mxu0 %v5729
      %v6251 = vpop.f32.mrf.mxu0
      %v6252 = vadd.f32 0.0, %v6251
      %6253 = vmatmul.f32.gmra.mxu0 %v5732
      %v6254 = vpop.f32.mrf.mxu0
      %v6255 = vadd.f32 0.0, %v6254
      %6256 = vmatmul.f32.gmra.mxu0 %v5735
      %v6257 = vpop.f32.mrf.mxu0
      %v6258 = vadd.f32 0.0, %v6257
      %6259 = vmatmul.f32.gmra.mxu0 %v5738
      %v6260 = vpop.f32.mrf.mxu0
      %v6261 = vadd.f32 0.0, %v6260
      %6262 = vmatmul.f32.gmra.mxu0 %v5741
      %v6263 = vpop.f32.mrf.mxu0
      %v6264 = vadd.f32 0.0, %v6263
      %6265 = vmatmul.f32.gmra.mxu0 %v5744
      %v6266 = vpop.f32.mrf.mxu0
      %v6267 = vadd.f32 0.0, %v6266
      %6268 = vmatmul.f32.gmra.mxu0 %v5747
      %v6269 = vpop.f32.mrf.mxu0
      %v6270 = vadd.f32 0.0, %v6269
      %6271 = vmatmul.f32.gmra.mxu0 %v5750
      %v6272 = vpop.f32.mrf.mxu0
      %v6273 = vadd.f32 0.0, %v6272
      %6274 = vmatmul.f32.gmra.mxu0 %v5753
      %v6275 = vpop.f32.mrf.mxu0
      %v6276 = vadd.f32 0.0, %v6275
      %6277 = vmatmul.f32.gmra.mxu0 %v5756
      %v6278 = vpop.f32.mrf.mxu0
      %v6279 = vadd.f32 0.0, %v6278
      %6280 = vdwg.mxu0
      %6281 = vmatpush.msra.mxu0 0.0
      %6282 = vmatpush.msra.mxu0 0.0
      %6283 = vmatpush.msra.mxu0 0.0
      %6284 = vmatpush.msra.mxu0 0.0
      %6285 = vmatpush.msra.mxu0 0.0
      %6286 = vmatpush.msra.mxu0 0.0
      %6287 = vmatpush.msra.mxu0 0.0
      %6288 = vmatpush.msra.mxu0 0.0
      %6289 = vmatpush.msra.mxu0 0.0
      %6290 = vmatpush.msra.mxu0 0.0
      %6291 = vmatpush.msra.mxu0 0.0
      %6292 = vmatpush.msra.mxu0 0.0
      %6293 = vmatpush.msra.mxu0 %v3309
      %6294 = vmatpush.msra.mxu0 %v3308
      %6295 = vmatpush.msra.mxu0 %v3307
      %6296 = vmatpush.msra.mxu0 %v3306
      %6297 = vmatmul.f32.gmra.mxu0 %v5566
      %v6298 = vpop.f32.mrf.mxu0
      %v6299 = vadd.f32 %v6234, %v6298
      %6300 = vmatmul.f32.gmra.mxu0 %v5569
      %v6301 = vpop.f32.mrf.mxu0
      %v6302 = vadd.f32 %v6237, %v6301
      %6303 = vmatmul.f32.gmra.mxu0 %v5572
      %v6304 = vpop.f32.mrf.mxu0
      %v6305 = vadd.f32 %v6240, %v6304
      %6306 = vmatmul.f32.gmra.mxu0 %v5575
      %v6307 = vpop.f32.mrf.mxu0
      %v6308 = vadd.f32 %v6243, %v6307
      %6309 = vmatmul.f32.gmra.mxu0 %v5578
      %v6310 = vpop.f32.mrf.mxu0
      %v6311 = vadd.f32 %v6246, %v6310
      %6312 = vmatmul.f32.gmra.mxu0 %v5581
      %v6313 = vpop.f32.mrf.mxu0
      %v6314 = vadd.f32 %v6249, %v6313
      %6315 = vmatmul.f32.gmra.mxu0 %v5584
      %v6316 = vpop.f32.mrf.mxu0
      %v6317 = vadd.f32 %v6252, %v6316
      %6318 = vmatmul.f32.gmra.mxu0 %v5587
      %v6319 = vpop.f32.mrf.mxu0
      %v6320 = vadd.f32 %v6255, %v6319
      %6321 = vmatmul.f32.gmra.mxu0 %v5590
      %v6322 = vpop.f32.mrf.mxu0
      %v6323 = vadd.f32 %v6258, %v6322
      %6324 = vmatmul.f32.gmra.mxu0 %v5593
      %v6325 = vpop.f32.mrf.mxu0
      %v6326 = vadd.f32 %v6261, %v6325
      %6327 = vmatmul.f32.gmra.mxu0 %v5596
      %v6328 = vpop.f32.mrf.mxu0
      %v6329 = vadd.f32 %v6264, %v6328
      %6330 = vmatmul.f32.gmra.mxu0 %v5599
      %v6331 = vpop.f32.mrf.mxu0
      %v6332 = vadd.f32 %v6267, %v6331
      %6333 = vmatmul.f32.gmra.mxu0 %v5602
      %v6334 = vpop.f32.mrf.mxu0
      %v6335 = vadd.f32 %v6270, %v6334
      %6336 = vmatmul.f32.gmra.mxu0 %v5605
      %v6337 = vpop.f32.mrf.mxu0
      %v6338 = vadd.f32 %v6273, %v6337
      %6339 = vmatmul.f32.gmra.mxu0 %v5608
      %v6340 = vpop.f32.mrf.mxu0
      %v6341 = vadd.f32 %v6276, %v6340
      %6342 = vmatmul.f32.gmra.mxu0 %v5611
      %v6343 = vpop.f32.mrf.mxu0
      %v6344 = vadd.f32 %v6279, %v6343
      %6345 = vdwg.mxu0
      %6346 = vmatpush.msra.mxu0 0.0
      %6347 = vmatpush.msra.mxu0 0.0
      %6348 = vmatpush.msra.mxu0 0.0
      %6349 = vmatpush.msra.mxu0 0.0
      %6350 = vmatpush.msra.mxu0 0.0
      %6351 = vmatpush.msra.mxu0 0.0
      %6352 = vmatpush.msra.mxu0 0.0
      %6353 = vmatpush.msra.mxu0 0.0
      %6354 = vmatpush.msra.mxu0 0.0
      %6355 = vmatpush.msra.mxu0 0.0
      %6356 = vmatpush.msra.mxu0 0.0
      %6357 = vmatpush.msra.mxu0 0.0
      %6358 = vmatpush.msra.mxu0 %v3319
      %6359 = vmatpush.msra.mxu0 %v3318
      %6360 = vmatpush.msra.mxu0 %v3317
      %6361 = vmatpush.msra.mxu0 %v3316
      %6362 = vmatmul.f32.gmra.mxu0 %v5856
      %v6363 = vpop.f32.mrf.mxu0
      %v6364 = vadd.f32 0.0, %v6363
      %6365 = vmatmul.f32.gmra.mxu0 %v5859
      %v6366 = vpop.f32.mrf.mxu0
      %v6367 = vadd.f32 0.0, %v6366
      %6368 = vmatmul.f32.gmra.mxu0 %v5862
      %v6369 = vpop.f32.mrf.mxu0
      %v6370 = vadd.f32 0.0, %v6369
      %6371 = vmatmul.f32.gmra.mxu0 %v5865
      %v6372 = vpop.f32.mrf.mxu0
      %v6373 = vadd.f32 0.0, %v6372
      %6374 = vmatmul.f32.gmra.mxu0 %v5868
      %v6375 = vpop.f32.mrf.mxu0
      %v6376 = vadd.f32 0.0, %v6375
      %6377 = vmatmul.f32.gmra.mxu0 %v5871
      %v6378 = vpop.f32.mrf.mxu0
      %v6379 = vadd.f32 0.0, %v6378
      %6380 = vmatmul.f32.gmra.mxu0 %v5874
      %v6381 = vpop.f32.mrf.mxu0
      %v6382 = vadd.f32 0.0, %v6381
      %6383 = vmatmul.f32.gmra.mxu0 %v5877
      %v6384 = vpop.f32.mrf.mxu0
      %v6385 = vadd.f32 0.0, %v6384
      %6386 = vmatmul.f32.gmra.mxu0 %v5880
      %v6387 = vpop.f32.mrf.mxu0
      %v6388 = vadd.f32 0.0, %v6387
      %6389 = vmatmul.f32.gmra.mxu0 %v5883
      %v6390 = vpop.f32.mrf.mxu0
      %v6391 = vadd.f32 0.0, %v6390
      %6392 = vmatmul.f32.gmra.mxu0 %v5886
      %v6393 = vpop.f32.mrf.mxu0
      %v6394 = vadd.f32 0.0, %v6393
      %6395 = vmatmul.f32.gmra.mxu0 %v5889
      %v6396 = vpop.f32.mrf.mxu0
      %v6397 = vadd.f32 0.0, %v6396
      %6398 = vmatmul.f32.gmra.mxu0 %v5892
      %v6399 = vpop.f32.mrf.mxu0
      %v6400 = vadd.f32 0.0, %v6399
      %6401 = vmatmul.f32.gmra.mxu0 %v5895
      %v6402 = vpop.f32.mrf.mxu0
      %v6403 = vadd.f32 0.0, %v6402
      %6404 = vmatmul.f32.gmra.mxu0 %v5898
      %v6405 = vpop.f32.mrf.mxu0
      %v6406 = vadd.f32 0.0, %v6405
      %6407 = vmatmul.f32.gmra.mxu0 %v5901
      %v6408 = vpop.f32.mrf.mxu0
      %v6409 = vadd.f32 0.0, %v6408
      %6410 = vdwg.mxu0
      %v6411 = vadd.f32 %v6299, %v6364
      %v6412 = vadd.f32 %v6302, %v6367
      %v6413 = vadd.f32 %v6305, %v6370
      %v6414 = vadd.f32 %v6308, %v6373
      %v6415 = vadd.f32 %v6311, %v6376
      %v6416 = vadd.f32 %v6314, %v6379
      %v6417 = vadd.f32 %v6317, %v6382
      %v6418 = vadd.f32 %v6320, %v6385
      %v6419 = vadd.f32 %v6323, %v6388
      %v6420 = vadd.f32 %v6326, %v6391
      %v6421 = vadd.f32 %v6329, %v6394
      %v6422 = vadd.f32 %v6332, %v6397
      %v6423 = vadd.f32 %v6335, %v6400
      %v6424 = vadd.f32 %v6338, %v6403
      %v6425 = vadd.f32 %v6341, %v6406
      %v6426 = vadd.f32 %v6344, %v6409
      %v6427 = vld [vmem:[#allocation2 + $0x7e0] sm:$0xff]
      %v6428 = vld [vmem:[#allocation2 + $0x7e8] sm:$0xff]
      %v6429 = vld [vmem:[#allocation2 + $0x7f0] sm:$0xff]
      %v6430 = vld [vmem:[#allocation2 + $0x7f8] sm:$0xff]
      %v6431 = vld [vmem:[#allocation2 + $0x800] sm:$0xff]
      %v6432 = vld [vmem:[#allocation2 + $0x808] sm:$0xff]
      %v6433 = vld [vmem:[#allocation2 + $0x810] sm:$0xff]
      %v6434 = vld [vmem:[#allocation2 + $0x818] sm:$0xff]
      %v6435 = vld [vmem:[#allocation2 + $0x820] sm:$0xff]
      %v6436 = vld [vmem:[#allocation2 + $0x828] sm:$0xff]
      %v6437 = vld [vmem:[#allocation2 + $0x830] sm:$0xff]
      %v6438 = vld [vmem:[#allocation2 + $0x838] sm:$0xff]
      %v6439 = vld [vmem:[#allocation2 + $0x840] sm:$0xff]
      %v6440 = vld [vmem:[#allocation2 + $0x848] sm:$0xff]
      %v6441 = vld [vmem:[#allocation2 + $0x850] sm:$0xff]
      %v6442 = vld [vmem:[#allocation2 + $0x858] sm:$0xff]
      %v6444 = vsel %vm2981, %v6427, 0
      %v6447 = vsel %vm2981, %v6428, 0
      %v6450 = vsel %vm2981, %v6429, 0
      %v6453 = vsel %vm2981, %v6430, 0
      %v6456 = vsel %vm2981, %v6431, 0
      %v6459 = vsel %vm2981, %v6432, 0
      %v6462 = vsel %vm2981, %v6433, 0
      %v6465 = vsel %vm2981, %v6434, 0
      %v6468 = vsel %vm2981, %v6435, 0
      %v6471 = vsel %vm2981, %v6436, 0
      %v6474 = vsel %vm2981, %v6437, 0
      %v6477 = vsel %vm2981, %v6438, 0
      %v6480 = vsel %vm2981, %v6439, 0
      %v6483 = vsel %vm2981, %v6440, 0
      %v6486 = vsel %vm2981, %v6441, 0
      %v6489 = vsel %vm2981, %v6442, 0
      %6491 = vmatpush.msra.mxu0 0.0
      %6492 = vmatpush.msra.mxu0 0.0
      %6493 = vmatpush.msra.mxu0 0.0
      %6494 = vmatpush.msra.mxu0 0.0
      %6495 = vmatpush.msra.mxu0 0.0
      %6496 = vmatpush.msra.mxu0 0.0
      %6497 = vmatpush.msra.mxu0 0.0
      %6498 = vmatpush.msra.mxu0 0.0
      %6499 = vmatpush.msra.mxu0 0.0
      %6500 = vmatpush.msra.mxu0 0.0
      %6501 = vmatpush.msra.mxu0 0.0
      %6502 = vmatpush.msra.mxu0 0.0
      %6503 = vmatpush.msra.mxu0 %v3324
      %6504 = vmatpush.msra.mxu0 %v3323
      %6505 = vmatpush.msra.mxu0 %v3322
      %6506 = vmatpush.msra.mxu0 %v3321
      %6507 = vmatmul.f32.gmra.mxu0 %v6444
      %v6508 = vpop.f32.mrf.mxu0
      %v6509 = vadd.f32 0.0, %v6508
      %6510 = vmatmul.f32.gmra.mxu0 %v6447
      %v6511 = vpop.f32.mrf.mxu0
      %v6512 = vadd.f32 0.0, %v6511
      %6513 = vmatmul.f32.gmra.mxu0 %v6450
      %v6514 = vpop.f32.mrf.mxu0
      %v6515 = vadd.f32 0.0, %v6514
      %6516 = vmatmul.f32.gmra.mxu0 %v6453
      %v6517 = vpop.f32.mrf.mxu0
      %v6518 = vadd.f32 0.0, %v6517
      %6519 = vmatmul.f32.gmra.mxu0 %v6456
      %v6520 = vpop.f32.mrf.mxu0
      %v6521 = vadd.f32 0.0, %v6520
      %6522 = vmatmul.f32.gmra.mxu0 %v6459
      %v6523 = vpop.f32.mrf.mxu0
      %v6524 = vadd.f32 0.0, %v6523
      %6525 = vmatmul.f32.gmra.mxu0 %v6462
      %v6526 = vpop.f32.mrf.mxu0
      %v6527 = vadd.f32 0.0, %v6526
      %6528 = vmatmul.f32.gmra.mxu0 %v6465
      %v6529 = vpop.f32.mrf.mxu0
      %v6530 = vadd.f32 0.0, %v6529
      %6531 = vmatmul.f32.gmra.mxu0 %v6468
      %v6532 = vpop.f32.mrf.mxu0
      %v6533 = vadd.f32 0.0, %v6532
      %6534 = vmatmul.f32.gmra.mxu0 %v6471
      %v6535 = vpop.f32.mrf.mxu0
      %v6536 = vadd.f32 0.0, %v6535
      %6537 = vmatmul.f32.gmra.mxu0 %v6474
      %v6538 = vpop.f32.mrf.mxu0
      %v6539 = vadd.f32 0.0, %v6538
      %6540 = vmatmul.f32.gmra.mxu0 %v6477
      %v6541 = vpop.f32.mrf.mxu0
      %v6542 = vadd.f32 0.0, %v6541
      %6543 = vmatmul.f32.gmra.mxu0 %v6480
      %v6544 = vpop.f32.mrf.mxu0
      %v6545 = vadd.f32 0.0, %v6544
      %6546 = vmatmul.f32.gmra.mxu0 %v6483
      %v6547 = vpop.f32.mrf.mxu0
      %v6548 = vadd.f32 0.0, %v6547
      %6549 = vmatmul.f32.gmra.mxu0 %v6486
      %v6550 = vpop.f32.mrf.mxu0
      %v6551 = vadd.f32 0.0, %v6550
      %6552 = vmatmul.f32.gmra.mxu0 %v6489
      %v6553 = vpop.f32.mrf.mxu0
      %v6554 = vadd.f32 0.0, %v6553
      %6555 = vdwg.mxu0
      %v6556 = vadd.f32 %v6411, %v6509
      %v6557 = vadd.f32 %v6412, %v6512
      %v6558 = vadd.f32 %v6413, %v6515
      %v6559 = vadd.f32 %v6414, %v6518
      %v6560 = vadd.f32 %v6415, %v6521
      %v6561 = vadd.f32 %v6416, %v6524
      %v6562 = vadd.f32 %v6417, %v6527
      %v6563 = vadd.f32 %v6418, %v6530
      %v6564 = vadd.f32 %v6419, %v6533
      %v6565 = vadd.f32 %v6420, %v6536
      %v6566 = vadd.f32 %v6421, %v6539
      %v6567 = vadd.f32 %v6422, %v6542
      %v6568 = vadd.f32 %v6423, %v6545
      %v6569 = vadd.f32 %v6424, %v6548
      %v6570 = vadd.f32 %v6425, %v6551
      %v6571 = vadd.f32 %v6426, %v6554
      %v6572 = vld [vmem:[#allocation2 + $0x880] sm:$0xff]
      %v6573 = vld [vmem:[#allocation2 + $0x888] sm:$0xff]
      %v6574 = vld [vmem:[#allocation2 + $0x890] sm:$0xff]
      %v6575 = vld [vmem:[#allocation2 + $0x898] sm:$0xff]
      %v6576 = vld [vmem:[#allocation2 + $0x8a0] sm:$0xff]
      %v6577 = vld [vmem:[#allocation2 + $0x8a8] sm:$0xff]
      %v6578 = vld [vmem:[#allocation2 + $0x8b0] sm:$0xff]
      %v6579 = vld [vmem:[#allocation2 + $0x8b8] sm:$0xff]
      %v6580 = vld [vmem:[#allocation2 + $0x8c0] sm:$0xff]
      %v6581 = vld [vmem:[#allocation2 + $0x8c8] sm:$0xff]
      %v6582 = vld [vmem:[#allocation2 + $0x8d0] sm:$0xff]
      %v6583 = vld [vmem:[#allocation2 + $0x8d8] sm:$0xff]
      %v6584 = vld [vmem:[#allocation2 + $0x8e0] sm:$0xff]
      %v6585 = vld [vmem:[#allocation2 + $0x8e8] sm:$0xff]
      %v6586 = vld [vmem:[#allocation2 + $0x8f0] sm:$0xff]
      %v6587 = vld [vmem:[#allocation2 + $0x8f8] sm:$0xff]
      %v6589 = vsel %vm2981, %v6572, 0
      %v6592 = vsel %vm2981, %v6573, 0
      %v6595 = vsel %vm2981, %v6574, 0
      %v6598 = vsel %vm2981, %v6575, 0
      %v6601 = vsel %vm2981, %v6576, 0
      %v6604 = vsel %vm2981, %v6577, 0
      %v6607 = vsel %vm2981, %v6578, 0
      %v6610 = vsel %vm2981, %v6579, 0
      %v6613 = vsel %vm2981, %v6580, 0
      %v6616 = vsel %vm2981, %v6581, 0
      %v6619 = vsel %vm2981, %v6582, 0
      %v6622 = vsel %vm2981, %v6583, 0
      %v6625 = vsel %vm2981, %v6584, 0
      %v6628 = vsel %vm2981, %v6585, 0
      %v6631 = vsel %vm2981, %v6586, 0
      %v6634 = vsel %vm2981, %v6587, 0
      %6636 = vmatpush.msra.mxu0 0.0
      %6637 = vmatpush.msra.mxu0 0.0
      %6638 = vmatpush.msra.mxu0 0.0
      %6639 = vmatpush.msra.mxu0 0.0
      %6640 = vmatpush.msra.mxu0 0.0
      %6641 = vmatpush.msra.mxu0 0.0
      %6642 = vmatpush.msra.mxu0 0.0
      %6643 = vmatpush.msra.mxu0 0.0
      %6644 = vmatpush.msra.mxu0 0.0
      %6645 = vmatpush.msra.mxu0 0.0
      %6646 = vmatpush.msra.mxu0 0.0
      %6647 = vmatpush.msra.mxu0 0.0
      %6648 = vmatpush.msra.mxu0 %v3329
      %6649 = vmatpush.msra.mxu0 %v3328
      %6650 = vmatpush.msra.mxu0 %v3327
      %6651 = vmatpush.msra.mxu0 %v3326
      %6652 = vmatmul.f32.gmra.mxu0 %v6589
      %v6653 = vpop.f32.mrf.mxu0
      %v6654 = vadd.f32 0.0, %v6653
      %6655 = vmatmul.f32.gmra.mxu0 %v6592
      %v6656 = vpop.f32.mrf.mxu0
      %v6657 = vadd.f32 0.0, %v6656
      %6658 = vmatmul.f32.gmra.mxu0 %v6595
      %v6659 = vpop.f32.mrf.mxu0
      %v6660 = vadd.f32 0.0, %v6659
      %6661 = vmatmul.f32.gmra.mxu0 %v6598
      %v6662 = vpop.f32.mrf.mxu0
      %v6663 = vadd.f32 0.0, %v6662
      %6664 = vmatmul.f32.gmra.mxu0 %v6601
      %v6665 = vpop.f32.mrf.mxu0
      %v6666 = vadd.f32 0.0, %v6665
      %6667 = vmatmul.f32.gmra.mxu0 %v6604
      %v6668 = vpop.f32.mrf.mxu0
      %v6669 = vadd.f32 0.0, %v6668
      %6670 = vmatmul.f32.gmra.mxu0 %v6607
      %v6671 = vpop.f32.mrf.mxu0
      %v6672 = vadd.f32 0.0, %v6671
      %6673 = vmatmul.f32.gmra.mxu0 %v6610
      %v6674 = vpop.f32.mrf.mxu0
      %v6675 = vadd.f32 0.0, %v6674
      %6676 = vmatmul.f32.gmra.mxu0 %v6613
      %v6677 = vpop.f32.mrf.mxu0
      %v6678 = vadd.f32 0.0, %v6677
      %6679 = vmatmul.f32.gmra.mxu0 %v6616
      %v6680 = vpop.f32.mrf.mxu0
      %v6681 = vadd.f32 0.0, %v6680
      %6682 = vmatmul.f32.gmra.mxu0 %v6619
      %v6683 = vpop.f32.mrf.mxu0
      %v6684 = vadd.f32 0.0, %v6683
      %6685 = vmatmul.f32.gmra.mxu0 %v6622
      %v6686 = vpop.f32.mrf.mxu0
      %v6687 = vadd.f32 0.0, %v6686
      %6688 = vmatmul.f32.gmra.mxu0 %v6625
      %v6689 = vpop.f32.mrf.mxu0
      %v6690 = vadd.f32 0.0, %v6689
      %6691 = vmatmul.f32.gmra.mxu0 %v6628
      %v6692 = vpop.f32.mrf.mxu0
      %v6693 = vadd.f32 0.0, %v6692
      %6694 = vmatmul.f32.gmra.mxu0 %v6631
      %v6695 = vpop.f32.mrf.mxu0
      %v6696 = vadd.f32 0.0, %v6695
      %6697 = vmatmul.f32.gmra.mxu0 %v6634
      %v6698 = vpop.f32.mrf.mxu0
      %v6699 = vadd.f32 0.0, %v6698
      %6700 = vdwg.mxu0
      %v6701 = vadd.f32 %v6556, %v6654
      %v6702 = vadd.f32 %v6557, %v6657
      %v6703 = vadd.f32 %v6558, %v6660
      %v6704 = vadd.f32 %v6559, %v6663
      %v6705 = vadd.f32 %v6560, %v6666
      %v6706 = vadd.f32 %v6561, %v6669
      %v6707 = vadd.f32 %v6562, %v6672
      %v6708 = vadd.f32 %v6563, %v6675
      %v6709 = vadd.f32 %v6564, %v6678
      %v6710 = vadd.f32 %v6565, %v6681
      %v6711 = vadd.f32 %v6566, %v6684
      %v6712 = vadd.f32 %v6567, %v6687
      %v6713 = vadd.f32 %v6568, %v6690
      %v6714 = vadd.f32 %v6569, %v6693
      %v6715 = vadd.f32 %v6570, %v6696
      %v6716 = vadd.f32 %v6571, %v6699
      %v6717 = vld [vmem:[#allocation2 + $0x800] sm:$0xff]
      %v6718 = vld [vmem:[#allocation2 + $0x808] sm:$0xff]
      %v6719 = vld [vmem:[#allocation2 + $0x810] sm:$0xff]
      %v6720 = vld [vmem:[#allocation2 + $0x818] sm:$0xff]
      %v6721 = vld [vmem:[#allocation2 + $0x820] sm:$0xff]
      %v6722 = vld [vmem:[#allocation2 + $0x828] sm:$0xff]
      %v6723 = vld [vmem:[#allocation2 + $0x830] sm:$0xff]
      %v6724 = vld [vmem:[#allocation2 + $0x838] sm:$0xff]
      %v6725 = vld [vmem:[#allocation2 + $0x840] sm:$0xff]
      %v6726 = vld [vmem:[#allocation2 + $0x848] sm:$0xff]
      %v6727 = vld [vmem:[#allocation2 + $0x850] sm:$0xff]
      %v6728 = vld [vmem:[#allocation2 + $0x858] sm:$0xff]
      %v6729 = vld [vmem:[#allocation2 + $0x860] sm:$0xff]
      %v6730 = vld [vmem:[#allocation2 + $0x868] sm:$0xff]
      %v6731 = vld [vmem:[#allocation2 + $0x870] sm:$0xff]
      %v6732 = vld [vmem:[#allocation2 + $0x878] sm:$0xff]
      %v6734 = vsel %vm2981, %v6717, 0
      %v6737 = vsel %vm2981, %v6718, 0
      %v6740 = vsel %vm2981, %v6719, 0
      %v6743 = vsel %vm2981, %v6720, 0
      %v6746 = vsel %vm2981, %v6721, 0
      %v6749 = vsel %vm2981, %v6722, 0
      %v6752 = vsel %vm2981, %v6723, 0
      %v6755 = vsel %vm2981, %v6724, 0
      %v6758 = vsel %vm2981, %v6725, 0
      %v6761 = vsel %vm2981, %v6726, 0
      %v6764 = vsel %vm2981, %v6727, 0
      %v6767 = vsel %vm2981, %v6728, 0
      %v6770 = vsel %vm2981, %v6729, 0
      %v6773 = vsel %vm2981, %v6730, 0
      %v6776 = vsel %vm2981, %v6731, 0
      %v6779 = vsel %vm2981, %v6732, 0
      %6781 = vmatpush.msra.mxu0 0.0
      %6782 = vmatpush.msra.mxu0 0.0
      %6783 = vmatpush.msra.mxu0 0.0
      %6784 = vmatpush.msra.mxu0 0.0
      %6785 = vmatpush.msra.mxu0 0.0
      %6786 = vmatpush.msra.mxu0 0.0
      %6787 = vmatpush.msra.mxu0 0.0
      %6788 = vmatpush.msra.mxu0 0.0
      %6789 = vmatpush.msra.mxu0 0.0
      %6790 = vmatpush.msra.mxu0 0.0
      %6791 = vmatpush.msra.mxu0 0.0
      %6792 = vmatpush.msra.mxu0 0.0
      %6793 = vmatpush.msra.mxu0 %v3334
      %6794 = vmatpush.msra.mxu0 %v3333
      %6795 = vmatpush.msra.mxu0 %v3332
      %6796 = vmatpush.msra.mxu0 %v3331
      %6797 = vmatmul.f32.gmra.mxu0 %v6734
      %v6798 = vpop.f32.mrf.mxu0
      %v6799 = vadd.f32 0.0, %v6798
      %6800 = vmatmul.f32.gmra.mxu0 %v6737
      %v6801 = vpop.f32.mrf.mxu0
      %v6802 = vadd.f32 0.0, %v6801
      %6803 = vmatmul.f32.gmra.mxu0 %v6740
      %v6804 = vpop.f32.mrf.mxu0
      %v6805 = vadd.f32 0.0, %v6804
      %6806 = vmatmul.f32.gmra.mxu0 %v6743
      %v6807 = vpop.f32.mrf.mxu0
      %v6808 = vadd.f32 0.0, %v6807
      %6809 = vmatmul.f32.gmra.mxu0 %v6746
      %v6810 = vpop.f32.mrf.mxu0
      %v6811 = vadd.f32 0.0, %v6810
      %6812 = vmatmul.f32.gmra.mxu0 %v6749
      %v6813 = vpop.f32.mrf.mxu0
      %v6814 = vadd.f32 0.0, %v6813
      %6815 = vmatmul.f32.gmra.mxu0 %v6752
      %v6816 = vpop.f32.mrf.mxu0
      %v6817 = vadd.f32 0.0, %v6816
      %6818 = vmatmul.f32.gmra.mxu0 %v6755
      %v6819 = vpop.f32.mrf.mxu0
      %v6820 = vadd.f32 0.0, %v6819
      %6821 = vmatmul.f32.gmra.mxu0 %v6758
      %v6822 = vpop.f32.mrf.mxu0
      %v6823 = vadd.f32 0.0, %v6822
      %6824 = vmatmul.f32.gmra.mxu0 %v6761
      %v6825 = vpop.f32.mrf.mxu0
      %v6826 = vadd.f32 0.0, %v6825
      %6827 = vmatmul.f32.gmra.mxu0 %v6764
      %v6828 = vpop.f32.mrf.mxu0
      %v6829 = vadd.f32 0.0, %v6828
      %6830 = vmatmul.f32.gmra.mxu0 %v6767
      %v6831 = vpop.f32.mrf.mxu0
      %v6832 = vadd.f32 0.0, %v6831
      %6833 = vmatmul.f32.gmra.mxu0 %v6770
      %v6834 = vpop.f32.mrf.mxu0
      %v6835 = vadd.f32 0.0, %v6834
      %6836 = vmatmul.f32.gmra.mxu0 %v6773
      %v6837 = vpop.f32.mrf.mxu0
      %v6838 = vadd.f32 0.0, %v6837
      %6839 = vmatmul.f32.gmra.mxu0 %v6776
      %v6840 = vpop.f32.mrf.mxu0
      %v6841 = vadd.f32 0.0, %v6840
      %6842 = vmatmul.f32.gmra.mxu0 %v6779
      %v6843 = vpop.f32.mrf.mxu0
      %v6844 = vadd.f32 0.0, %v6843
      %6845 = vdwg.mxu0
      %v6846 = vadd.f32 %v6701, %v6799
      %v6847 = vadd.f32 %v6702, %v6802
      %v6848 = vadd.f32 %v6703, %v6805
      %v6849 = vadd.f32 %v6704, %v6808
      %v6850 = vadd.f32 %v6705, %v6811
      %v6851 = vadd.f32 %v6706, %v6814
      %v6852 = vadd.f32 %v6707, %v6817
      %v6853 = vadd.f32 %v6708, %v6820
      %v6854 = vadd.f32 %v6709, %v6823
      %v6855 = vadd.f32 %v6710, %v6826
      %v6856 = vadd.f32 %v6711, %v6829
      %v6857 = vadd.f32 %v6712, %v6832
      %v6858 = vadd.f32 %v6713, %v6835
      %v6859 = vadd.f32 %v6714, %v6838
      %v6860 = vadd.f32 %v6715, %v6841
      %v6861 = vadd.f32 %v6716, %v6844
      %v6862 = vld [vmem:[#allocation2 + $0x360] sm:$0xff]
      %v6863 = vld [vmem:[#allocation2 + $0x368] sm:$0xff]
      %v6864 = vld [vmem:[#allocation2 + $0x370] sm:$0xff]
      %v6865 = vld [vmem:[#allocation2 + $0x378] sm:$0xff]
      %v6866 = vld [vmem:[#allocation2 + $0x380] sm:$0xff]
      %v6867 = vld [vmem:[#allocation2 + $0x388] sm:$0xff]
      %v6868 = vld [vmem:[#allocation2 + $0x390] sm:$0xff]
      %v6869 = vld [vmem:[#allocation2 + $0x398] sm:$0xff]
      %v6870 = vld [vmem:[#allocation2 + $0x3a0] sm:$0xff]
      %v6871 = vld [vmem:[#allocation2 + $0x3a8] sm:$0xff]
      %v6872 = vld [vmem:[#allocation2 + $0x3b0] sm:$0xff]
      %v6873 = vld [vmem:[#allocation2 + $0x3b8] sm:$0xff]
      %v6874 = vld [vmem:[#allocation2 + $0x3c0] sm:$0xff]
      %v6875 = vld [vmem:[#allocation2 + $0x3c8] sm:$0xff]
      %v6876 = vld [vmem:[#allocation2 + $0x3d0] sm:$0xff]
      %v6877 = vld [vmem:[#allocation2 + $0x3d8] sm:$0xff]
      %v6879 = vsel %vm2981, %v6862, 0
      %v6882 = vsel %vm2981, %v6863, 0
      %v6885 = vsel %vm2981, %v6864, 0
      %v6888 = vsel %vm2981, %v6865, 0
      %v6891 = vsel %vm2981, %v6866, 0
      %v6894 = vsel %vm2981, %v6867, 0
      %v6897 = vsel %vm2981, %v6868, 0
      %v6900 = vsel %vm2981, %v6869, 0
      %v6903 = vsel %vm2981, %v6870, 0
      %v6906 = vsel %vm2981, %v6871, 0
      %v6909 = vsel %vm2981, %v6872, 0
      %v6912 = vsel %vm2981, %v6873, 0
      %v6915 = vsel %vm2981, %v6874, 0
      %v6918 = vsel %vm2981, %v6875, 0
      %v6921 = vsel %vm2981, %v6876, 0
      %v6924 = vsel %vm2981, %v6877, 0
      %6926 = vmatpush.msra.mxu0 0.0
      %6927 = vmatpush.msra.mxu0 0.0
      %6928 = vmatpush.msra.mxu0 0.0
      %6929 = vmatpush.msra.mxu0 0.0
      %6930 = vmatpush.msra.mxu0 0.0
      %6931 = vmatpush.msra.mxu0 0.0
      %6932 = vmatpush.msra.mxu0 0.0
      %6933 = vmatpush.msra.mxu0 0.0
      %6934 = vmatpush.msra.mxu0 0.0
      %6935 = vmatpush.msra.mxu0 0.0
      %6936 = vmatpush.msra.mxu0 0.0
      %6937 = vmatpush.msra.mxu0 0.0
      %6938 = vmatpush.msra.mxu0 %v3339
      %6939 = vmatpush.msra.mxu0 %v3338
      %6940 = vmatpush.msra.mxu0 %v3337
      %6941 = vmatpush.msra.mxu0 %v3336
      %6942 = vmatmul.f32.gmra.mxu0 %v6879
      %v6943 = vpop.f32.mrf.mxu0
      %v6944 = vadd.f32 0.0, %v6943
      %6945 = vmatmul.f32.gmra.mxu0 %v6882
      %v6946 = vpop.f32.mrf.mxu0
      %v6947 = vadd.f32 0.0, %v6946
      %6948 = vmatmul.f32.gmra.mxu0 %v6885
      %v6949 = vpop.f32.mrf.mxu0
      %v6950 = vadd.f32 0.0, %v6949
      %6951 = vmatmul.f32.gmra.mxu0 %v6888
      %v6952 = vpop.f32.mrf.mxu0
      %v6953 = vadd.f32 0.0, %v6952
      %6954 = vmatmul.f32.gmra.mxu0 %v6891
      %v6955 = vpop.f32.mrf.mxu0
      %v6956 = vadd.f32 0.0, %v6955
      %6957 = vmatmul.f32.gmra.mxu0 %v6894
      %v6958 = vpop.f32.mrf.mxu0
      %v6959 = vadd.f32 0.0, %v6958
      %6960 = vmatmul.f32.gmra.mxu0 %v6897
      %v6961 = vpop.f32.mrf.mxu0
      %v6962 = vadd.f32 0.0, %v6961
      %6963 = vmatmul.f32.gmra.mxu0 %v6900
      %v6964 = vpop.f32.mrf.mxu0
      %v6965 = vadd.f32 0.0, %v6964
      %6966 = vmatmul.f32.gmra.mxu0 %v6903
      %v6967 = vpop.f32.mrf.mxu0
      %v6968 = vadd.f32 0.0, %v6967
      %6969 = vmatmul.f32.gmra.mxu0 %v6906
      %v6970 = vpop.f32.mrf.mxu0
      %v6971 = vadd.f32 0.0, %v6970
      %6972 = vmatmul.f32.gmra.mxu0 %v6909
      %v6973 = vpop.f32.mrf.mxu0
      %v6974 = vadd.f32 0.0, %v6973
      %6975 = vmatmul.f32.gmra.mxu0 %v6912
      %v6976 = vpop.f32.mrf.mxu0
      %v6977 = vadd.f32 0.0, %v6976
      %6978 = vmatmul.f32.gmra.mxu0 %v6915
      %v6979 = vpop.f32.mrf.mxu0
      %v6980 = vadd.f32 0.0, %v6979
      %6981 = vmatmul.f32.gmra.mxu0 %v6918
      %v6982 = vpop.f32.mrf.mxu0
      %v6983 = vadd.f32 0.0, %v6982
      %6984 = vmatmul.f32.gmra.mxu0 %v6921
      %v6985 = vpop.f32.mrf.mxu0
      %v6986 = vadd.f32 0.0, %v6985
      %6987 = vmatmul.f32.gmra.mxu0 %v6924
      %v6988 = vpop.f32.mrf.mxu0
      %v6989 = vadd.f32 0.0, %v6988
      %6990 = vdwg.mxu0
      %v6991 = vadd.f32 %v6846, %v6944
      %v6992 = vadd.f32 %v6847, %v6947
      %v6993 = vadd.f32 %v6848, %v6950
      %v6994 = vadd.f32 %v6849, %v6953
      %v6995 = vadd.f32 %v6850, %v6956
      %v6996 = vadd.f32 %v6851, %v6959
      %v6997 = vadd.f32 %v6852, %v6962
      %v6998 = vadd.f32 %v6853, %v6965
      %v6999 = vadd.f32 %v6854, %v6968
      %v7000 = vadd.f32 %v6855, %v6971
      %v7001 = vadd.f32 %v6856, %v6974
      %v7002 = vadd.f32 %v6857, %v6977
      %v7003 = vadd.f32 %v6858, %v6980
      %v7004 = vadd.f32 %v6859, %v6983
      %v7005 = vadd.f32 %v6860, %v6986
      %v7006 = vadd.f32 %v6861, %v6989
      %v7007 = vld [vmem:[#allocation2 + $0x400] sm:$0xff]
      %v7008 = vld [vmem:[#allocation2 + $0x408] sm:$0xff]
      %v7009 = vld [vmem:[#allocation2 + $0x410] sm:$0xff]
      %v7010 = vld [vmem:[#allocation2 + $0x418] sm:$0xff]
      %v7011 = vld [vmem:[#allocation2 + $0x420] sm:$0xff]
      %v7012 = vld [vmem:[#allocation2 + $0x428] sm:$0xff]
      %v7013 = vld [vmem:[#allocation2 + $0x430] sm:$0xff]
      %v7014 = vld [vmem:[#allocation2 + $0x438] sm:$0xff]
      %v7015 = vld [vmem:[#allocation2 + $0x440] sm:$0xff]
      %v7016 = vld [vmem:[#allocation2 + $0x448] sm:$0xff]
      %v7017 = vld [vmem:[#allocation2 + $0x450] sm:$0xff]
      %v7018 = vld [vmem:[#allocation2 + $0x458] sm:$0xff]
      %v7019 = vld [vmem:[#allocation2 + $0x460] sm:$0xff]
      %v7020 = vld [vmem:[#allocation2 + $0x468] sm:$0xff]
      %v7021 = vld [vmem:[#allocation2 + $0x470] sm:$0xff]
      %v7022 = vld [vmem:[#allocation2 + $0x478] sm:$0xff]
      %v7024 = vsel %vm2981, %v7007, 0
      %v7027 = vsel %vm2981, %v7008, 0
      %v7030 = vsel %vm2981, %v7009, 0
      %v7033 = vsel %vm2981, %v7010, 0
      %v7036 = vsel %vm2981, %v7011, 0
      %v7039 = vsel %vm2981, %v7012, 0
      %v7042 = vsel %vm2981, %v7013, 0
      %v7045 = vsel %vm2981, %v7014, 0
      %v7048 = vsel %vm2981, %v7015, 0
      %v7051 = vsel %vm2981, %v7016, 0
      %v7054 = vsel %vm2981, %v7017, 0
      %v7057 = vsel %vm2981, %v7018, 0
      %v7060 = vsel %vm2981, %v7019, 0
      %v7063 = vsel %vm2981, %v7020, 0
      %v7066 = vsel %vm2981, %v7021, 0
      %v7069 = vsel %vm2981, %v7022, 0
      %7071 = vmatpush.msra.mxu0 0.0
      %7072 = vmatpush.msra.mxu0 0.0
      %7073 = vmatpush.msra.mxu0 0.0
      %7074 = vmatpush.msra.mxu0 0.0
      %7075 = vmatpush.msra.mxu0 0.0
      %7076 = vmatpush.msra.mxu0 0.0
      %7077 = vmatpush.msra.mxu0 0.0
      %7078 = vmatpush.msra.mxu0 0.0
      %7079 = vmatpush.msra.mxu0 0.0
      %7080 = vmatpush.msra.mxu0 0.0
      %7081 = vmatpush.msra.mxu0 0.0
      %7082 = vmatpush.msra.mxu0 0.0
      %7083 = vmatpush.msra.mxu0 %v3344
      %7084 = vmatpush.msra.mxu0 %v3343
      %7085 = vmatpush.msra.mxu0 %v3342
      %7086 = vmatpush.msra.mxu0 %v3341
      %7087 = vmatmul.f32.gmra.mxu0 %v7024
      %v7088 = vpop.f32.mrf.mxu0
      %v7089 = vadd.f32 0.0, %v7088
      %7090 = vmatmul.f32.gmra.mxu0 %v7027
      %v7091 = vpop.f32.mrf.mxu0
      %v7092 = vadd.f32 0.0, %v7091
      %7093 = vmatmul.f32.gmra.mxu0 %v7030
      %v7094 = vpop.f32.mrf.mxu0
      %v7095 = vadd.f32 0.0, %v7094
      %7096 = vmatmul.f32.gmra.mxu0 %v7033
      %v7097 = vpop.f32.mrf.mxu0
      %v7098 = vadd.f32 0.0, %v7097
      %7099 = vmatmul.f32.gmra.mxu0 %v7036
      %v7100 = vpop.f32.mrf.mxu0
      %v7101 = vadd.f32 0.0, %v7100
      %7102 = vmatmul.f32.gmra.mxu0 %v7039
      %v7103 = vpop.f32.mrf.mxu0
      %v7104 = vadd.f32 0.0, %v7103
      %7105 = vmatmul.f32.gmra.mxu0 %v7042
      %v7106 = vpop.f32.mrf.mxu0
      %v7107 = vadd.f32 0.0, %v7106
      %7108 = vmatmul.f32.gmra.mxu0 %v7045
      %v7109 = vpop.f32.mrf.mxu0
      %v7110 = vadd.f32 0.0, %v7109
      %7111 = vmatmul.f32.gmra.mxu0 %v7048
      %v7112 = vpop.f32.mrf.mxu0
      %v7113 = vadd.f32 0.0, %v7112
      %7114 = vmatmul.f32.gmra.mxu0 %v7051
      %v7115 = vpop.f32.mrf.mxu0
      %v7116 = vadd.f32 0.0, %v7115
      %7117 = vmatmul.f32.gmra.mxu0 %v7054
      %v7118 = vpop.f32.mrf.mxu0
      %v7119 = vadd.f32 0.0, %v7118
      %7120 = vmatmul.f32.gmra.mxu0 %v7057
      %v7121 = vpop.f32.mrf.mxu0
      %v7122 = vadd.f32 0.0, %v7121
      %7123 = vmatmul.f32.gmra.mxu0 %v7060
      %v7124 = vpop.f32.mrf.mxu0
      %v7125 = vadd.f32 0.0, %v7124
      %7126 = vmatmul.f32.gmra.mxu0 %v7063
      %v7127 = vpop.f32.mrf.mxu0
      %v7128 = vadd.f32 0.0, %v7127
      %7129 = vmatmul.f32.gmra.mxu0 %v7066
      %v7130 = vpop.f32.mrf.mxu0
      %v7131 = vadd.f32 0.0, %v7130
      %7132 = vmatmul.f32.gmra.mxu0 %v7069
      %v7133 = vpop.f32.mrf.mxu0
      %v7134 = vadd.f32 0.0, %v7133
      %7135 = vdwg.mxu0
      %v7136 = vadd.f32 %v6991, %v7089
      %v7137 = vadd.f32 %v6992, %v7092
      %v7138 = vadd.f32 %v6993, %v7095
      %v7139 = vadd.f32 %v6994, %v7098
      %v7140 = vadd.f32 %v6995, %v7101
      %v7141 = vadd.f32 %v6996, %v7104
      %v7142 = vadd.f32 %v6997, %v7107
      %v7143 = vadd.f32 %v6998, %v7110
      %v7144 = vadd.f32 %v6999, %v7113
      %v7145 = vadd.f32 %v7000, %v7116
      %v7146 = vadd.f32 %v7001, %v7119
      %v7147 = vadd.f32 %v7002, %v7122
      %v7148 = vadd.f32 %v7003, %v7125
      %v7149 = vadd.f32 %v7004, %v7128
      %v7150 = vadd.f32 %v7005, %v7131
      %v7151 = vadd.f32 %v7006, %v7134
      %v7152 = vld [vmem:[#allocation2 + $0x380] sm:$0xff]
      %v7153 = vld [vmem:[#allocation2 + $0x388] sm:$0xff]
      %v7154 = vld [vmem:[#allocation2 + $0x390] sm:$0xff]
      %v7155 = vld [vmem:[#allocation2 + $0x398] sm:$0xff]
      %v7156 = vld [vmem:[#allocation2 + $0x3a0] sm:$0xff]
      %v7157 = vld [vmem:[#allocation2 + $0x3a8] sm:$0xff]
      %v7158 = vld [vmem:[#allocation2 + $0x3b0] sm:$0xff]
      %v7159 = vld [vmem:[#allocation2 + $0x3b8] sm:$0xff]
      %v7160 = vld [vmem:[#allocation2 + $0x3c0] sm:$0xff]
      %v7161 = vld [vmem:[#allocation2 + $0x3c8] sm:$0xff]
      %v7162 = vld [vmem:[#allocation2 + $0x3d0] sm:$0xff]
      %v7163 = vld [vmem:[#allocation2 + $0x3d8] sm:$0xff]
      %v7164 = vld [vmem:[#allocation2 + $0x3e0] sm:$0xff]
      %v7165 = vld [vmem:[#allocation2 + $0x3e8] sm:$0xff]
      %v7166 = vld [vmem:[#allocation2 + $0x3f0] sm:$0xff]
      %v7167 = vld [vmem:[#allocation2 + $0x3f8] sm:$0xff]
      %v7169 = vsel %vm2981, %v7152, 0
      %v7172 = vsel %vm2981, %v7153, 0
      %v7175 = vsel %vm2981, %v7154, 0
      %v7178 = vsel %vm2981, %v7155, 0
      %v7181 = vsel %vm2981, %v7156, 0
      %v7184 = vsel %vm2981, %v7157, 0
      %v7187 = vsel %vm2981, %v7158, 0
      %v7190 = vsel %vm2981, %v7159, 0
      %v7193 = vsel %vm2981, %v7160, 0
      %v7196 = vsel %vm2981, %v7161, 0
      %v7199 = vsel %vm2981, %v7162, 0
      %v7202 = vsel %vm2981, %v7163, 0
      %v7205 = vsel %vm2981, %v7164, 0
      %v7208 = vsel %vm2981, %v7165, 0
      %v7211 = vsel %vm2981, %v7166, 0
      %v7214 = vsel %vm2981, %v7167, 0
      %7216 = vmatpush.msra.mxu0 0.0
      %7217 = vmatpush.msra.mxu0 0.0
      %7218 = vmatpush.msra.mxu0 0.0
      %7219 = vmatpush.msra.mxu0 0.0
      %7220 = vmatpush.msra.mxu0 0.0
      %7221 = vmatpush.msra.mxu0 0.0
      %7222 = vmatpush.msra.mxu0 0.0
      %7223 = vmatpush.msra.mxu0 0.0
      %7224 = vmatpush.msra.mxu0 0.0
      %7225 = vmatpush.msra.mxu0 0.0
      %7226 = vmatpush.msra.mxu0 0.0
      %7227 = vmatpush.msra.mxu0 0.0
      %7228 = vmatpush.msra.mxu0 %v3349
      %7229 = vmatpush.msra.mxu0 %v3348
      %7230 = vmatpush.msra.mxu0 %v3347
      %7231 = vmatpush.msra.mxu0 %v3346
      %7232 = vmatmul.f32.gmra.mxu0 %v7169
      %v7233 = vpop.f32.mrf.mxu0
      %v7234 = vadd.f32 0.0, %v7233
      %7235 = vmatmul.f32.gmra.mxu0 %v7172
      %v7236 = vpop.f32.mrf.mxu0
      %v7237 = vadd.f32 0.0, %v7236
      %7238 = vmatmul.f32.gmra.mxu0 %v7175
      %v7239 = vpop.f32.mrf.mxu0
      %v7240 = vadd.f32 0.0, %v7239
      %7241 = vmatmul.f32.gmra.mxu0 %v7178
      %v7242 = vpop.f32.mrf.mxu0
      %v7243 = vadd.f32 0.0, %v7242
      %7244 = vmatmul.f32.gmra.mxu0 %v7181
      %v7245 = vpop.f32.mrf.mxu0
      %v7246 = vadd.f32 0.0, %v7245
      %7247 = vmatmul.f32.gmra.mxu0 %v7184
      %v7248 = vpop.f32.mrf.mxu0
      %v7249 = vadd.f32 0.0, %v7248
      %7250 = vmatmul.f32.gmra.mxu0 %v7187
      %v7251 = vpop.f32.mrf.mxu0
      %v7252 = vadd.f32 0.0, %v7251
      %7253 = vmatmul.f32.gmra.mxu0 %v7190
      %v7254 = vpop.f32.mrf.mxu0
      %v7255 = vadd.f32 0.0, %v7254
      %7256 = vmatmul.f32.gmra.mxu0 %v7193
      %v7257 = vpop.f32.mrf.mxu0
      %v7258 = vadd.f32 0.0, %v7257
      %7259 = vmatmul.f32.gmra.mxu0 %v7196
      %v7260 = vpop.f32.mrf.mxu0
      %v7261 = vadd.f32 0.0, %v7260
      %7262 = vmatmul.f32.gmra.mxu0 %v7199
      %v7263 = vpop.f32.mrf.mxu0
      %v7264 = vadd.f32 0.0, %v7263
      %7265 = vmatmul.f32.gmra.mxu0 %v7202
      %v7266 = vpop.f32.mrf.mxu0
      %v7267 = vadd.f32 0.0, %v7266
      %7268 = vmatmul.f32.gmra.mxu0 %v7205
      %v7269 = vpop.f32.mrf.mxu0
      %v7270 = vadd.f32 0.0, %v7269
      %7271 = vmatmul.f32.gmra.mxu0 %v7208
      %v7272 = vpop.f32.mrf.mxu0
      %v7273 = vadd.f32 0.0, %v7272
      %7274 = vmatmul.f32.gmra.mxu0 %v7211
      %v7275 = vpop.f32.mrf.mxu0
      %v7276 = vadd.f32 0.0, %v7275
      %7277 = vmatmul.f32.gmra.mxu0 %v7214
      %v7278 = vpop.f32.mrf.mxu0
      %v7279 = vadd.f32 0.0, %v7278
      %7280 = vdwg.mxu0
      %v7281 = vadd.f32 %v7136, %v7234
      %v7282 = vadd.f32 %v7137, %v7237
      %v7283 = vadd.f32 %v7138, %v7240
      %v7284 = vadd.f32 %v7139, %v7243
      %v7285 = vadd.f32 %v7140, %v7246
      %v7286 = vadd.f32 %v7141, %v7249
      %v7287 = vadd.f32 %v7142, %v7252
      %v7288 = vadd.f32 %v7143, %v7255
      %v7289 = vadd.f32 %v7144, %v7258
      %v7290 = vadd.f32 %v7145, %v7261
      %v7291 = vadd.f32 %v7146, %v7264
      %v7292 = vadd.f32 %v7147, %v7267
      %v7293 = vadd.f32 %v7148, %v7270
      %v7294 = vadd.f32 %v7149, %v7273
      %v7295 = vadd.f32 %v7150, %v7276
      %v7296 = vadd.f32 %v7151, %v7279
      %v7297 = vadd.f32 %v7281, %v4645
      %v7298 = vadd.f32 %v7282, %v4645
      %v7299 = vadd.f32 %v7283, %v4645
      %v7300 = vadd.f32 %v7284, %v4645
      %v7301 = vadd.f32 %v7285, %v4645
      %v7302 = vadd.f32 %v7286, %v4645
      %v7303 = vadd.f32 %v7287, %v4645
      %v7304 = vadd.f32 %v7288, %v4645
      %v7305 = vadd.f32 %v7289, %v4645
      %v7306 = vadd.f32 %v7290, %v4645
      %v7307 = vadd.f32 %v7291, %v4645
      %v7308 = vadd.f32 %v7292, %v4645
      %v7309 = vadd.f32 %v7293, %v4645
      %v7310 = vadd.f32 %v7294, %v4645
      %v7311 = vadd.f32 %v7295, %v4645
      %v7312 = vadd.f32 %v7296, %v4645
      %v7313 = vmax.f32 %v7297, 0.0
      %v7314 = vmax.f32 %v7298, 0.0
      %v7315 = vmax.f32 %v7299, 0.0
      %v7316 = vmax.f32 %v7300, 0.0
      %v7317 = vmax.f32 %v7301, 0.0
      %v7318 = vmax.f32 %v7302, 0.0
      %v7319 = vmax.f32 %v7303, 0.0
      %v7320 = vmax.f32 %v7304, 0.0
      %v7321 = vmax.f32 %v7305, 0.0
      %v7322 = vmax.f32 %v7306, 0.0
      %v7323 = vmax.f32 %v7307, 0.0
      %v7324 = vmax.f32 %v7308, 0.0
      %v7325 = vmax.f32 %v7309, 0.0
      %v7326 = vmax.f32 %v7310, 0.0
      %v7327 = vmax.f32 %v7311, 0.0
      %v7328 = vmax.f32 %v7312, 0.0
      %s7329 = scalar_lea.vmem %s6, 256
      %v7330 = vld [vmem:[%s7329] sm:$0xff]
      %v7331 = vld [vmem:[%s7329 + $0x8] sm:$0xff]
      %v7332 = vld [vmem:[%s7329 + $0x10] sm:$0xff]
      %v7333 = vld [vmem:[%s7329 + $0x18] sm:$0xff]
      %v7335 = vsel %vm2981, %v7313, 0
      %v7338 = vsel %vm2981, %v7314, 0
      %v7341 = vsel %vm2981, %v7315, 0
      %v7344 = vsel %vm2981, %v7316, 0
      %7346 = vmatpush.msra.mxu0 0.0
      %7347 = vmatpush.msra.mxu0 0.0
      %7348 = vmatpush.msra.mxu0 0.0
      %7349 = vmatpush.msra.mxu0 0.0
      %7350 = vmatpush.msra.mxu0 0.0
      %7351 = vmatpush.msra.mxu0 0.0
      %7352 = vmatpush.msra.mxu0 0.0
      %7353 = vmatpush.msra.mxu0 0.0
      %7354 = vmatpush.msra.mxu0 0.0
      %7355 = vmatpush.msra.mxu0 0.0
      %7356 = vmatpush.msra.mxu0 0.0
      %7357 = vmatpush.msra.mxu0 0.0
      %7358 = vmatpush.msra.mxu0 %v7333
      %7359 = vmatpush.msra.mxu0 %v7332
      %7360 = vmatpush.msra.mxu0 %v7331
      %7361 = vmatpush.msra.mxu0 %v7330
      %7362 = vmatmul.f32.gmra.mxu0 %v7335
      %v7363 = vpop.f32.mrf.mxu0
      %v7364 = vadd.f32 0.0, %v7363
      %7365 = vmatmul.f32.gmra.mxu0 %v7338
      %v7366 = vpop.f32.mrf.mxu0
      %v7367 = vadd.f32 0.0, %v7366
      %7368 = vmatmul.f32.gmra.mxu0 %v7341
      %v7369 = vpop.f32.mrf.mxu0
      %v7370 = vadd.f32 0.0, %v7369
      %7371 = vmatmul.f32.gmra.mxu0 %v7344
      %v7372 = vpop.f32.mrf.mxu0
      %v7373 = vadd.f32 0.0, %v7372
      %7374 = vdwg.mxu0
      %v7375 = vadd.f32 %v6212, %v7364
      %v7376 = vadd.f32 %v6213, %v7367
      %v7377 = vadd.f32 %v6214, %v7370
      %v7378 = vadd.f32 %v6215, %v7373
      %s7379 = scalar_lea.vmem %s6, 288
      %v7380 = vld [vmem:[%s7379] sm:$0xff]
      %v7381 = vld [vmem:[%s7379 + $0x8] sm:$0xff]
      %v7382 = vld [vmem:[%s7379 + $0x10] sm:$0xff]
      %v7383 = vld [vmem:[%s7379 + $0x18] sm:$0xff]
      %v7385 = vsel %vm2981, %v7317, 0
      %v7388 = vsel %vm2981, %v7318, 0
      %v7391 = vsel %vm2981, %v7319, 0
      %v7394 = vsel %vm2981, %v7320, 0
      %7396 = vmatpush.msra.mxu0 0.0
      %7397 = vmatpush.msra.mxu0 0.0
      %7398 = vmatpush.msra.mxu0 0.0
      %7399 = vmatpush.msra.mxu0 0.0
      %7400 = vmatpush.msra.mxu0 0.0
      %7401 = vmatpush.msra.mxu0 0.0
      %7402 = vmatpush.msra.mxu0 0.0
      %7403 = vmatpush.msra.mxu0 0.0
      %7404 = vmatpush.msra.mxu0 0.0
      %7405 = vmatpush.msra.mxu0 0.0
      %7406 = vmatpush.msra.mxu0 0.0
      %7407 = vmatpush.msra.mxu0 0.0
      %7408 = vmatpush.msra.mxu0 %v7383
      %7409 = vmatpush.msra.mxu0 %v7382
      %7410 = vmatpush.msra.mxu0 %v7381
      %7411 = vmatpush.msra.mxu0 %v7380
      %7412 = vmatmul.f32.gmra.mxu0 %v7385
      %v7413 = vpop.f32.mrf.mxu0
      %v7414 = vadd.f32 0.0, %v7413
      %7415 = vmatmul.f32.gmra.mxu0 %v7388
      %v7416 = vpop.f32.mrf.mxu0
      %v7417 = vadd.f32 0.0, %v7416
      %7418 = vmatmul.f32.gmra.mxu0 %v7391
      %v7419 = vpop.f32.mrf.mxu0
      %v7420 = vadd.f32 0.0, %v7419
      %7421 = vmatmul.f32.gmra.mxu0 %v7394
      %v7422 = vpop.f32.mrf.mxu0
      %v7423 = vadd.f32 0.0, %v7422
      %7424 = vdwg.mxu0
      %v7425 = vadd.f32 %v7375, %v7414
      %v7426 = vadd.f32 %v7376, %v7417
      %v7427 = vadd.f32 %v7377, %v7420
      %v7428 = vadd.f32 %v7378, %v7423
      %s7429 = scalar_lea.vmem %s6, 320
      %v7430 = vld [vmem:[%s7429] sm:$0xff]
      %v7431 = vld [vmem:[%s7429 + $0x8] sm:$0xff]
      %v7432 = vld [vmem:[%s7429 + $0x10] sm:$0xff]
      %v7433 = vld [vmem:[%s7429 + $0x18] sm:$0xff]
      %v7435 = vsel %vm2981, %v7321, 0
      %v7438 = vsel %vm2981, %v7322, 0
      %v7441 = vsel %vm2981, %v7323, 0
      %v7444 = vsel %vm2981, %v7324, 0
      %7446 = vmatpush.msra.mxu0 0.0
      %7447 = vmatpush.msra.mxu0 0.0
      %7448 = vmatpush.msra.mxu0 0.0
      %7449 = vmatpush.msra.mxu0 0.0
      %7450 = vmatpush.msra.mxu0 0.0
      %7451 = vmatpush.msra.mxu0 0.0
      %7452 = vmatpush.msra.mxu0 0.0
      %7453 = vmatpush.msra.mxu0 0.0
      %7454 = vmatpush.msra.mxu0 0.0
      %7455 = vmatpush.msra.mxu0 0.0
      %7456 = vmatpush.msra.mxu0 0.0
      %7457 = vmatpush.msra.mxu0 0.0
      %7458 = vmatpush.msra.mxu0 %v7433
      %7459 = vmatpush.msra.mxu0 %v7432
      %7460 = vmatpush.msra.mxu0 %v7431
      %7461 = vmatpush.msra.mxu0 %v7430
      %7462 = vmatmul.f32.gmra.mxu0 %v7435
      %v7463 = vpop.f32.mrf.mxu0
      %v7464 = vadd.f32 0.0, %v7463
      %7465 = vmatmul.f32.gmra.mxu0 %v7438
      %v7466 = vpop.f32.mrf.mxu0
      %v7467 = vadd.f32 0.0, %v7466
      %7468 = vmatmul.f32.gmra.mxu0 %v7441
      %v7469 = vpop.f32.mrf.mxu0
      %v7470 = vadd.f32 0.0, %v7469
      %7471 = vmatmul.f32.gmra.mxu0 %v7444
      %v7472 = vpop.f32.mrf.mxu0
      %v7473 = vadd.f32 0.0, %v7472
      %7474 = vdwg.mxu0
      %v7475 = vadd.f32 %v7425, %v7464
      %v7476 = vadd.f32 %v7426, %v7467
      %v7477 = vadd.f32 %v7427, %v7470
      %v7478 = vadd.f32 %v7428, %v7473
      %s7479 = scalar_lea.vmem %s6, 352
      %v7480 = vld [vmem:[%s7479] sm:$0xff]
      %v7481 = vld [vmem:[%s7479 + $0x8] sm:$0xff]
      %v7482 = vld [vmem:[%s7479 + $0x10] sm:$0xff]
      %v7483 = vld [vmem:[%s7479 + $0x18] sm:$0xff]
      %v7485 = vsel %vm2981, %v7325, 0
      %v7488 = vsel %vm2981, %v7326, 0
      %v7491 = vsel %vm2981, %v7327, 0
      %v7494 = vsel %vm2981, %v7328, 0
      %7496 = vmatpush.msra.mxu0 0.0
      %7497 = vmatpush.msra.mxu0 0.0
      %7498 = vmatpush.msra.mxu0 0.0
      %7499 = vmatpush.msra.mxu0 0.0
      %7500 = vmatpush.msra.mxu0 0.0
      %7501 = vmatpush.msra.mxu0 0.0
      %7502 = vmatpush.msra.mxu0 0.0
      %7503 = vmatpush.msra.mxu0 0.0
      %7504 = vmatpush.msra.mxu0 0.0
      %7505 = vmatpush.msra.mxu0 0.0
      %7506 = vmatpush.msra.mxu0 0.0
      %7507 = vmatpush.msra.mxu0 0.0
      %7508 = vmatpush.msra.mxu0 %v7483
      %7509 = vmatpush.msra.mxu0 %v7482
      %7510 = vmatpush.msra.mxu0 %v7481
      %7511 = vmatpush.msra.mxu0 %v7480
      %7512 = vmatmul.f32.gmra.mxu0 %v7485
      %v7513 = vpop.f32.mrf.mxu0
      %v7514 = vadd.f32 0.0, %v7513
      %7515 = vmatmul.f32.gmra.mxu0 %v7488
      %v7516 = vpop.f32.mrf.mxu0
      %v7517 = vadd.f32 0.0, %v7516
      %7518 = vmatmul.f32.gmra.mxu0 %v7491
      %v7519 = vpop.f32.mrf.mxu0
      %v7520 = vadd.f32 0.0, %v7519
      %7521 = vmatmul.f32.gmra.mxu0 %v7494
      %v7522 = vpop.f32.mrf.mxu0
      %v7523 = vadd.f32 0.0, %v7522
      %7524 = vdwg.mxu0
      %v7525 = vadd.f32 %v7475, %v7514
      %v7526 = vadd.f32 %v7476, %v7517
      %v7527 = vadd.f32 %v7477, %v7520
      %v7528 = vadd.f32 %v7478, %v7523
      %7529 = vmatpush.msra.mxu0 0.0
      %7530 = vmatpush.msra.mxu0 0.0
      %7531 = vmatpush.msra.mxu0 0.0
      %7532 = vmatpush.msra.mxu0 0.0
      %7533 = vmatpush.msra.mxu0 0.0
      %7534 = vmatpush.msra.mxu0 0.0
      %7535 = vmatpush.msra.mxu0 0.0
      %7536 = vmatpush.msra.mxu0 0.0
      %7537 = vmatpush.msra.mxu0 0.0
      %7538 = vmatpush.msra.mxu0 0.0
      %7539 = vmatpush.msra.mxu0 0.0
      %7540 = vmatpush.msra.mxu0 0.0
      %7541 = vmatpush.msra.mxu0 %v3314
      %7542 = vmatpush.msra.mxu0 %v3313
      %7543 = vmatpush.msra.mxu0 %v3312
      %7544 = vmatpush.msra.mxu0 %v3311
      %7545 = vmatmul.f32.gmra.mxu0 %v7024
      %v7546 = vpop.f32.mrf.mxu0
      %v7547 = vadd.f32 0.0, %v7546
      %7548 = vmatmul.f32.gmra.mxu0 %v7027
      %v7549 = vpop.f32.mrf.mxu0
      %v7550 = vadd.f32 0.0, %v7549
      %7551 = vmatmul.f32.gmra.mxu0 %v7030
      %v7552 = vpop.f32.mrf.mxu0
      %v7553 = vadd.f32 0.0, %v7552
      %7554 = vmatmul.f32.gmra.mxu0 %v7033
      %v7555 = vpop.f32.mrf.mxu0
      %v7556 = vadd.f32 0.0, %v7555
      %7557 = vmatmul.f32.gmra.mxu0 %v7036
      %v7558 = vpop.f32.mrf.mxu0
      %v7559 = vadd.f32 0.0, %v7558
      %7560 = vmatmul.f32.gmra.mxu0 %v7039
      %v7561 = vpop.f32.mrf.mxu0
      %v7562 = vadd.f32 0.0, %v7561
      %7563 = vmatmul.f32.gmra.mxu0 %v7042
      %v7564 = vpop.f32.mrf.mxu0
      %v7565 = vadd.f32 0.0, %v7564
      %7566 = vmatmul.f32.gmra.mxu0 %v7045
      %v7567 = vpop.f32.mrf.mxu0
      %v7568 = vadd.f32 0.0, %v7567
      %7569 = vmatmul.f32.gmra.mxu0 %v7048
      %v7570 = vpop.f32.mrf.mxu0
      %v7571 = vadd.f32 0.0, %v7570
      %7572 = vmatmul.f32.gmra.mxu0 %v7051
      %v7573 = vpop.f32.mrf.mxu0
      %v7574 = vadd.f32 0.0, %v7573
      %7575 = vmatmul.f32.gmra.mxu0 %v7054
      %v7576 = vpop.f32.mrf.mxu0
      %v7577 = vadd.f32 0.0, %v7576
      %7578 = vmatmul.f32.gmra.mxu0 %v7057
      %v7579 = vpop.f32.mrf.mxu0
      %v7580 = vadd.f32 0.0, %v7579
      %7581 = vmatmul.f32.gmra.mxu0 %v7060
      %v7582 = vpop.f32.mrf.mxu0
      %v7583 = vadd.f32 0.0, %v7582
      %7584 = vmatmul.f32.gmra.mxu0 %v7063
      %v7585 = vpop.f32.mrf.mxu0
      %v7586 = vadd.f32 0.0, %v7585
      %7587 = vmatmul.f32.gmra.mxu0 %v7066
      %v7588 = vpop.f32.mrf.mxu0
      %v7589 = vadd.f32 0.0, %v7588
      %7590 = vmatmul.f32.gmra.mxu0 %v7069
      %v7591 = vpop.f32.mrf.mxu0
      %v7592 = vadd.f32 0.0, %v7591
      %7593 = vdwg.mxu0
      %7594 = vmatpush.msra.mxu0 0.0
      %7595 = vmatpush.msra.mxu0 0.0
      %7596 = vmatpush.msra.mxu0 0.0
      %7597 = vmatpush.msra.mxu0 0.0
      %7598 = vmatpush.msra.mxu0 0.0
      %7599 = vmatpush.msra.mxu0 0.0
      %7600 = vmatpush.msra.mxu0 0.0
      %7601 = vmatpush.msra.mxu0 0.0
      %7602 = vmatpush.msra.mxu0 0.0
      %7603 = vmatpush.msra.mxu0 0.0
      %7604 = vmatpush.msra.mxu0 0.0
      %7605 = vmatpush.msra.mxu0 0.0
      %7606 = vmatpush.msra.mxu0 %v3309
      %7607 = vmatpush.msra.mxu0 %v3308
      %7608 = vmatpush.msra.mxu0 %v3307
      %7609 = vmatpush.msra.mxu0 %v3306
      %7610 = vmatmul.f32.gmra.mxu0 %v6879
      %v7611 = vpop.f32.mrf.mxu0
      %v7612 = vadd.f32 %v7547, %v7611
      %7613 = vmatmul.f32.gmra.mxu0 %v6882
      %v7614 = vpop.f32.mrf.mxu0
      %v7615 = vadd.f32 %v7550, %v7614
      %7616 = vmatmul.f32.gmra.mxu0 %v6885
      %v7617 = vpop.f32.mrf.mxu0
      %v7618 = vadd.f32 %v7553, %v7617
      %7619 = vmatmul.f32.gmra.mxu0 %v6888
      %v7620 = vpop.f32.mrf.mxu0
      %v7621 = vadd.f32 %v7556, %v7620
      %7622 = vmatmul.f32.gmra.mxu0 %v6891
      %v7623 = vpop.f32.mrf.mxu0
      %v7624 = vadd.f32 %v7559, %v7623
      %7625 = vmatmul.f32.gmra.mxu0 %v6894
      %v7626 = vpop.f32.mrf.mxu0
      %v7627 = vadd.f32 %v7562, %v7626
      %7628 = vmatmul.f32.gmra.mxu0 %v6897
      %v7629 = vpop.f32.mrf.mxu0
      %v7630 = vadd.f32 %v7565, %v7629
      %7631 = vmatmul.f32.gmra.mxu0 %v6900
      %v7632 = vpop.f32.mrf.mxu0
      %v7633 = vadd.f32 %v7568, %v7632
      %7634 = vmatmul.f32.gmra.mxu0 %v6903
      %v7635 = vpop.f32.mrf.mxu0
      %v7636 = vadd.f32 %v7571, %v7635
      %7637 = vmatmul.f32.gmra.mxu0 %v6906
      %v7638 = vpop.f32.mrf.mxu0
      %v7639 = vadd.f32 %v7574, %v7638
      %7640 = vmatmul.f32.gmra.mxu0 %v6909
      %v7641 = vpop.f32.mrf.mxu0
      %v7642 = vadd.f32 %v7577, %v7641
      %7643 = vmatmul.f32.gmra.mxu0 %v6912
      %v7644 = vpop.f32.mrf.mxu0
      %v7645 = vadd.f32 %v7580, %v7644
      %7646 = vmatmul.f32.gmra.mxu0 %v6915
      %v7647 = vpop.f32.mrf.mxu0
      %v7648 = vadd.f32 %v7583, %v7647
      %7649 = vmatmul.f32.gmra.mxu0 %v6918
      %v7650 = vpop.f32.mrf.mxu0
      %v7651 = vadd.f32 %v7586, %v7650
      %7652 = vmatmul.f32.gmra.mxu0 %v6921
      %v7653 = vpop.f32.mrf.mxu0
      %v7654 = vadd.f32 %v7589, %v7653
      %7655 = vmatmul.f32.gmra.mxu0 %v6924
      %v7656 = vpop.f32.mrf.mxu0
      %v7657 = vadd.f32 %v7592, %v7656
      %7658 = vdwg.mxu0
      %7659 = vmatpush.msra.mxu0 0.0
      %7660 = vmatpush.msra.mxu0 0.0
      %7661 = vmatpush.msra.mxu0 0.0
      %7662 = vmatpush.msra.mxu0 0.0
      %7663 = vmatpush.msra.mxu0 0.0
      %7664 = vmatpush.msra.mxu0 0.0
      %7665 = vmatpush.msra.mxu0 0.0
      %7666 = vmatpush.msra.mxu0 0.0
      %7667 = vmatpush.msra.mxu0 0.0
      %7668 = vmatpush.msra.mxu0 0.0
      %7669 = vmatpush.msra.mxu0 0.0
      %7670 = vmatpush.msra.mxu0 0.0
      %7671 = vmatpush.msra.mxu0 %v3319
      %7672 = vmatpush.msra.mxu0 %v3318
      %7673 = vmatpush.msra.mxu0 %v3317
      %7674 = vmatpush.msra.mxu0 %v3316
      %7675 = vmatmul.f32.gmra.mxu0 %v7169
      %v7676 = vpop.f32.mrf.mxu0
      %v7677 = vadd.f32 0.0, %v7676
      %7678 = vmatmul.f32.gmra.mxu0 %v7172
      %v7679 = vpop.f32.mrf.mxu0
      %v7680 = vadd.f32 0.0, %v7679
      %7681 = vmatmul.f32.gmra.mxu0 %v7175
      %v7682 = vpop.f32.mrf.mxu0
      %v7683 = vadd.f32 0.0, %v7682
      %7684 = vmatmul.f32.gmra.mxu0 %v7178
      %v7685 = vpop.f32.mrf.mxu0
      %v7686 = vadd.f32 0.0, %v7685
      %7687 = vmatmul.f32.gmra.mxu0 %v7181
      %v7688 = vpop.f32.mrf.mxu0
      %v7689 = vadd.f32 0.0, %v7688
      %7690 = vmatmul.f32.gmra.mxu0 %v7184
      %v7691 = vpop.f32.mrf.mxu0
      %v7692 = vadd.f32 0.0, %v7691
      %7693 = vmatmul.f32.gmra.mxu0 %v7187
      %v7694 = vpop.f32.mrf.mxu0
      %v7695 = vadd.f32 0.0, %v7694
      %7696 = vmatmul.f32.gmra.mxu0 %v7190
      %v7697 = vpop.f32.mrf.mxu0
      %v7698 = vadd.f32 0.0, %v7697
      %7699 = vmatmul.f32.gmra.mxu0 %v7193
      %v7700 = vpop.f32.mrf.mxu0
      %v7701 = vadd.f32 0.0, %v7700
      %7702 = vmatmul.f32.gmra.mxu0 %v7196
      %v7703 = vpop.f32.mrf.mxu0
      %v7704 = vadd.f32 0.0, %v7703
      %7705 = vmatmul.f32.gmra.mxu0 %v7199
      %v7706 = vpop.f32.mrf.mxu0
      %v7707 = vadd.f32 0.0, %v7706
      %7708 = vmatmul.f32.gmra.mxu0 %v7202
      %v7709 = vpop.f32.mrf.mxu0
      %v7710 = vadd.f32 0.0, %v7709
      %7711 = vmatmul.f32.gmra.mxu0 %v7205
      %v7712 = vpop.f32.mrf.mxu0
      %v7713 = vadd.f32 0.0, %v7712
      %7714 = vmatmul.f32.gmra.mxu0 %v7208
      %v7715 = vpop.f32.mrf.mxu0
      %v7716 = vadd.f32 0.0, %v7715
      %7717 = vmatmul.f32.gmra.mxu0 %v7211
      %v7718 = vpop.f32.mrf.mxu0
      %v7719 = vadd.f32 0.0, %v7718
      %7720 = vmatmul.f32.gmra.mxu0 %v7214
      %v7721 = vpop.f32.mrf.mxu0
      %v7722 = vadd.f32 0.0, %v7721
      %7723 = vdwg.mxu0
      %v7724 = vadd.f32 %v7612, %v7677
      %v7725 = vadd.f32 %v7615, %v7680
      %v7726 = vadd.f32 %v7618, %v7683
      %v7727 = vadd.f32 %v7621, %v7686
      %v7728 = vadd.f32 %v7624, %v7689
      %v7729 = vadd.f32 %v7627, %v7692
      %v7730 = vadd.f32 %v7630, %v7695
      %v7731 = vadd.f32 %v7633, %v7698
      %v7732 = vadd.f32 %v7636, %v7701
      %v7733 = vadd.f32 %v7639, %v7704
      %v7734 = vadd.f32 %v7642, %v7707
      %v7735 = vadd.f32 %v7645, %v7710
      %v7736 = vadd.f32 %v7648, %v7713
      %v7737 = vadd.f32 %v7651, %v7716
      %v7738 = vadd.f32 %v7654, %v7719
      %v7739 = vadd.f32 %v7657, %v7722
      %v7740 = vld [vmem:[#allocation2 + $0x900] sm:$0xff]
      %v7741 = vld [vmem:[#allocation2 + $0x908] sm:$0xff]
      %v7742 = vld [vmem:[#allocation2 + $0x910] sm:$0xff]
      %v7743 = vld [vmem:[#allocation2 + $0x918] sm:$0xff]
      %v7744 = vld [vmem:[#allocation2 + $0x920] sm:$0xff]
      %v7745 = vld [vmem:[#allocation2 + $0x928] sm:$0xff]
      %v7746 = vld [vmem:[#allocation2 + $0x930] sm:$0xff]
      %v7747 = vld [vmem:[#allocation2 + $0x938] sm:$0xff]
      %v7748 = vld [vmem:[#allocation2 + $0x940] sm:$0xff]
      %v7749 = vld [vmem:[#allocation2 + $0x948] sm:$0xff]
      %v7750 = vld [vmem:[#allocation2 + $0x950] sm:$0xff]
      %v7751 = vld [vmem:[#allocation2 + $0x958] sm:$0xff]
      %v7752 = vld [vmem:[#allocation2 + $0x960] sm:$0xff]
      %v7753 = vld [vmem:[#allocation2 + $0x968] sm:$0xff]
      %v7754 = vld [vmem:[#allocation2 + $0x970] sm:$0xff]
      %v7755 = vld [vmem:[#allocation2 + $0x978] sm:$0xff]
      %v7757 = vsel %vm2981, %v7740, 0
      %v7760 = vsel %vm2981, %v7741, 0
      %v7763 = vsel %vm2981, %v7742, 0
      %v7766 = vsel %vm2981, %v7743, 0
      %v7769 = vsel %vm2981, %v7744, 0
      %v7772 = vsel %vm2981, %v7745, 0
      %v7775 = vsel %vm2981, %v7746, 0
      %v7778 = vsel %vm2981, %v7747, 0
      %v7781 = vsel %vm2981, %v7748, 0
      %v7784 = vsel %vm2981, %v7749, 0
      %v7787 = vsel %vm2981, %v7750, 0
      %v7790 = vsel %vm2981, %v7751, 0
      %v7793 = vsel %vm2981, %v7752, 0
      %v7796 = vsel %vm2981, %v7753, 0
      %v7799 = vsel %vm2981, %v7754, 0
      %v7802 = vsel %vm2981, %v7755, 0
      %7804 = vmatpush.msra.mxu0 0.0
      %7805 = vmatpush.msra.mxu0 0.0
      %7806 = vmatpush.msra.mxu0 0.0
      %7807 = vmatpush.msra.mxu0 0.0
      %7808 = vmatpush.msra.mxu0 0.0
      %7809 = vmatpush.msra.mxu0 0.0
      %7810 = vmatpush.msra.mxu0 0.0
      %7811 = vmatpush.msra.mxu0 0.0
      %7812 = vmatpush.msra.mxu0 0.0
      %7813 = vmatpush.msra.mxu0 0.0
      %7814 = vmatpush.msra.mxu0 0.0
      %7815 = vmatpush.msra.mxu0 0.0
      %7816 = vmatpush.msra.mxu0 %v3324
      %7817 = vmatpush.msra.mxu0 %v3323
      %7818 = vmatpush.msra.mxu0 %v3322
      %7819 = vmatpush.msra.mxu0 %v3321
      %7820 = vmatmul.f32.gmra.mxu0 %v7757
      %v7821 = vpop.f32.mrf.mxu0
      %v7822 = vadd.f32 0.0, %v7821
      %7823 = vmatmul.f32.gmra.mxu0 %v7760
      %v7824 = vpop.f32.mrf.mxu0
      %v7825 = vadd.f32 0.0, %v7824
      %7826 = vmatmul.f32.gmra.mxu0 %v7763
      %v7827 = vpop.f32.mrf.mxu0
      %v7828 = vadd.f32 0.0, %v7827
      %7829 = vmatmul.f32.gmra.mxu0 %v7766
      %v7830 = vpop.f32.mrf.mxu0
      %v7831 = vadd.f32 0.0, %v7830
      %7832 = vmatmul.f32.gmra.mxu0 %v7769
      %v7833 = vpop.f32.mrf.mxu0
      %v7834 = vadd.f32 0.0, %v7833
      %7835 = vmatmul.f32.gmra.mxu0 %v7772
      %v7836 = vpop.f32.mrf.mxu0
      %v7837 = vadd.f32 0.0, %v7836
      %7838 = vmatmul.f32.gmra.mxu0 %v7775
      %v7839 = vpop.f32.mrf.mxu0
      %v7840 = vadd.f32 0.0, %v7839
      %7841 = vmatmul.f32.gmra.mxu0 %v7778
      %v7842 = vpop.f32.mrf.mxu0
      %v7843 = vadd.f32 0.0, %v7842
      %7844 = vmatmul.f32.gmra.mxu0 %v7781
      %v7845 = vpop.f32.mrf.mxu0
      %v7846 = vadd.f32 0.0, %v7845
      %7847 = vmatmul.f32.gmra.mxu0 %v7784
      %v7848 = vpop.f32.mrf.mxu0
      %v7849 = vadd.f32 0.0, %v7848
      %7850 = vmatmul.f32.gmra.mxu0 %v7787
      %v7851 = vpop.f32.mrf.mxu0
      %v7852 = vadd.f32 0.0, %v7851
      %7853 = vmatmul.f32.gmra.mxu0 %v7790
      %v7854 = vpop.f32.mrf.mxu0
      %v7855 = vadd.f32 0.0, %v7854
      %7856 = vmatmul.f32.gmra.mxu0 %v7793
      %v7857 = vpop.f32.mrf.mxu0
      %v7858 = vadd.f32 0.0, %v7857
      %7859 = vmatmul.f32.gmra.mxu0 %v7796
      %v7860 = vpop.f32.mrf.mxu0
      %v7861 = vadd.f32 0.0, %v7860
      %7862 = vmatmul.f32.gmra.mxu0 %v7799
      %v7863 = vpop.f32.mrf.mxu0
      %v7864 = vadd.f32 0.0, %v7863
      %7865 = vmatmul.f32.gmra.mxu0 %v7802
      %v7866 = vpop.f32.mrf.mxu0
      %v7867 = vadd.f32 0.0, %v7866
      %7868 = vdwg.mxu0
      %v7869 = vadd.f32 %v7724, %v7822
      %v7870 = vadd.f32 %v7725, %v7825
      %v7871 = vadd.f32 %v7726, %v7828
      %v7872 = vadd.f32 %v7727, %v7831
      %v7873 = vadd.f32 %v7728, %v7834
      %v7874 = vadd.f32 %v7729, %v7837
      %v7875 = vadd.f32 %v7730, %v7840
      %v7876 = vadd.f32 %v7731, %v7843
      %v7877 = vadd.f32 %v7732, %v7846
      %v7878 = vadd.f32 %v7733, %v7849
      %v7879 = vadd.f32 %v7734, %v7852
      %v7880 = vadd.f32 %v7735, %v7855
      %v7881 = vadd.f32 %v7736, %v7858
      %v7882 = vadd.f32 %v7737, %v7861
      %v7883 = vadd.f32 %v7738, %v7864
      %v7884 = vadd.f32 %v7739, %v7867
      %v7885 = vld [vmem:[#allocation2 + $0x9a0] sm:$0xff]
      %v7886 = vld [vmem:[#allocation2 + $0x9a8] sm:$0xff]
      %v7887 = vld [vmem:[#allocation2 + $0x9b0] sm:$0xff]
      %v7888 = vld [vmem:[#allocation2 + $0x9b8] sm:$0xff]
      %v7889 = vld [vmem:[#allocation2 + $0x9c0] sm:$0xff]
      %v7890 = vld [vmem:[#allocation2 + $0x9c8] sm:$0xff]
      %v7891 = vld [vmem:[#allocation2 + $0x9d0] sm:$0xff]
      %v7892 = vld [vmem:[#allocation2 + $0x9d8] sm:$0xff]
      %v7893 = vld [vmem:[#allocation2 + $0x9e0] sm:$0xff]
      %v7894 = vld [vmem:[#allocation2 + $0x9e8] sm:$0xff]
      %v7895 = vld [vmem:[#allocation2 + $0x9f0] sm:$0xff]
      %v7896 = vld [vmem:[#allocation2 + $0x9f8] sm:$0xff]
      %v7897 = vld [vmem:[#allocation2 + $0xa00] sm:$0xff]
      %v7898 = vld [vmem:[#allocation2 + $0xa08] sm:$0xff]
      %v7899 = vld [vmem:[#allocation2 + $0xa10] sm:$0xff]
      %v7900 = vld [vmem:[#allocation2 + $0xa18] sm:$0xff]
      %v7902 = vsel %vm2981, %v7885, 0
      %v7905 = vsel %vm2981, %v7886, 0
      %v7908 = vsel %vm2981, %v7887, 0
      %v7911 = vsel %vm2981, %v7888, 0
      %v7914 = vsel %vm2981, %v7889, 0
      %v7917 = vsel %vm2981, %v7890, 0
      %v7920 = vsel %vm2981, %v7891, 0
      %v7923 = vsel %vm2981, %v7892, 0
      %v7926 = vsel %vm2981, %v7893, 0
      %v7929 = vsel %vm2981, %v7894, 0
      %v7932 = vsel %vm2981, %v7895, 0
      %v7935 = vsel %vm2981, %v7896, 0
      %v7938 = vsel %vm2981, %v7897, 0
      %v7941 = vsel %vm2981, %v7898, 0
      %v7944 = vsel %vm2981, %v7899, 0
      %v7947 = vsel %vm2981, %v7900, 0
      %7949 = vmatpush.msra.mxu0 0.0
      %7950 = vmatpush.msra.mxu0 0.0
      %7951 = vmatpush.msra.mxu0 0.0
      %7952 = vmatpush.msra.mxu0 0.0
      %7953 = vmatpush.msra.mxu0 0.0
      %7954 = vmatpush.msra.mxu0 0.0
      %7955 = vmatpush.msra.mxu0 0.0
      %7956 = vmatpush.msra.mxu0 0.0
      %7957 = vmatpush.msra.mxu0 0.0
      %7958 = vmatpush.msra.mxu0 0.0
      %7959 = vmatpush.msra.mxu0 0.0
      %7960 = vmatpush.msra.mxu0 0.0
      %7961 = vmatpush.msra.mxu0 %v3329
      %7962 = vmatpush.msra.mxu0 %v3328
      %7963 = vmatpush.msra.mxu0 %v3327
      %7964 = vmatpush.msra.mxu0 %v3326
      %7965 = vmatmul.f32.gmra.mxu0 %v7902
      %v7966 = vpop.f32.mrf.mxu0
      %v7967 = vadd.f32 0.0, %v7966
      %7968 = vmatmul.f32.gmra.mxu0 %v7905
      %v7969 = vpop.f32.mrf.mxu0
      %v7970 = vadd.f32 0.0, %v7969
      %7971 = vmatmul.f32.gmra.mxu0 %v7908
      %v7972 = vpop.f32.mrf.mxu0
      %v7973 = vadd.f32 0.0, %v7972
      %7974 = vmatmul.f32.gmra.mxu0 %v7911
      %v7975 = vpop.f32.mrf.mxu0
      %v7976 = vadd.f32 0.0, %v7975
      %7977 = vmatmul.f32.gmra.mxu0 %v7914
      %v7978 = vpop.f32.mrf.mxu0
      %v7979 = vadd.f32 0.0, %v7978
      %7980 = vmatmul.f32.gmra.mxu0 %v7917
      %v7981 = vpop.f32.mrf.mxu0
      %v7982 = vadd.f32 0.0, %v7981
      %7983 = vmatmul.f32.gmra.mxu0 %v7920
      %v7984 = vpop.f32.mrf.mxu0
      %v7985 = vadd.f32 0.0, %v7984
      %7986 = vmatmul.f32.gmra.mxu0 %v7923
      %v7987 = vpop.f32.mrf.mxu0
      %v7988 = vadd.f32 0.0, %v7987
      %7989 = vmatmul.f32.gmra.mxu0 %v7926
      %v7990 = vpop.f32.mrf.mxu0
      %v7991 = vadd.f32 0.0, %v7990
      %7992 = vmatmul.f32.gmra.mxu0 %v7929
      %v7993 = vpop.f32.mrf.mxu0
      %v7994 = vadd.f32 0.0, %v7993
      %7995 = vmatmul.f32.gmra.mxu0 %v7932
      %v7996 = vpop.f32.mrf.mxu0
      %v7997 = vadd.f32 0.0, %v7996
      %7998 = vmatmul.f32.gmra.mxu0 %v7935
      %v7999 = vpop.f32.mrf.mxu0
      %v8000 = vadd.f32 0.0, %v7999
      %8001 = vmatmul.f32.gmra.mxu0 %v7938
      %v8002 = vpop.f32.mrf.mxu0
      %v8003 = vadd.f32 0.0, %v8002
      %8004 = vmatmul.f32.gmra.mxu0 %v7941
      %v8005 = vpop.f32.mrf.mxu0
      %v8006 = vadd.f32 0.0, %v8005
      %8007 = vmatmul.f32.gmra.mxu0 %v7944
      %v8008 = vpop.f32.mrf.mxu0
      %v8009 = vadd.f32 0.0, %v8008
      %8010 = vmatmul.f32.gmra.mxu0 %v7947
      %v8011 = vpop.f32.mrf.mxu0
      %v8012 = vadd.f32 0.0, %v8011
      %8013 = vdwg.mxu0
      %v8014 = vadd.f32 %v7869, %v7967
      %v8015 = vadd.f32 %v7870, %v7970
      %v8016 = vadd.f32 %v7871, %v7973
      %v8017 = vadd.f32 %v7872, %v7976
      %v8018 = vadd.f32 %v7873, %v7979
      %v8019 = vadd.f32 %v7874, %v7982
      %v8020 = vadd.f32 %v7875, %v7985
      %v8021 = vadd.f32 %v7876, %v7988
      %v8022 = vadd.f32 %v7877, %v7991
      %v8023 = vadd.f32 %v7878, %v7994
      %v8024 = vadd.f32 %v7879, %v7997
      %v8025 = vadd.f32 %v7880, %v8000
      %v8026 = vadd.f32 %v7881, %v8003
      %v8027 = vadd.f32 %v7882, %v8006
      %v8028 = vadd.f32 %v7883, %v8009
      %v8029 = vadd.f32 %v7884, %v8012
      %v8030 = vld [vmem:[#allocation2 + $0x920] sm:$0xff]
      %v8031 = vld [vmem:[#allocation2 + $0x928] sm:$0xff]
      %v8032 = vld [vmem:[#allocation2 + $0x930] sm:$0xff]
      %v8033 = vld [vmem:[#allocation2 + $0x938] sm:$0xff]
      %v8034 = vld [vmem:[#allocation2 + $0x940] sm:$0xff]
      %v8035 = vld [vmem:[#allocation2 + $0x948] sm:$0xff]
      %v8036 = vld [vmem:[#allocation2 + $0x950] sm:$0xff]
      %v8037 = vld [vmem:[#allocation2 + $0x958] sm:$0xff]
      %v8038 = vld [vmem:[#allocation2 + $0x960] sm:$0xff]
      %v8039 = vld [vmem:[#allocation2 + $0x968] sm:$0xff]
      %v8040 = vld [vmem:[#allocation2 + $0x970] sm:$0xff]
      %v8041 = vld [vmem:[#allocation2 + $0x978] sm:$0xff]
      %v8042 = vld [vmem:[#allocation2 + $0x980] sm:$0xff]
      %v8043 = vld [vmem:[#allocation2 + $0x988] sm:$0xff]
      %v8044 = vld [vmem:[#allocation2 + $0x990] sm:$0xff]
      %v8045 = vld [vmem:[#allocation2 + $0x998] sm:$0xff]
      %v8047 = vsel %vm2981, %v8030, 0
      %v8050 = vsel %vm2981, %v8031, 0
      %v8053 = vsel %vm2981, %v8032, 0
      %v8056 = vsel %vm2981, %v8033, 0
      %v8059 = vsel %vm2981, %v8034, 0
      %v8062 = vsel %vm2981, %v8035, 0
      %v8065 = vsel %vm2981, %v8036, 0
      %v8068 = vsel %vm2981, %v8037, 0
      %v8071 = vsel %vm2981, %v8038, 0
      %v8074 = vsel %vm2981, %v8039, 0
      %v8077 = vsel %vm2981, %v8040, 0
      %v8080 = vsel %vm2981, %v8041, 0
      %v8083 = vsel %vm2981, %v8042, 0
      %v8086 = vsel %vm2981, %v8043, 0
      %v8089 = vsel %vm2981, %v8044, 0
      %v8092 = vsel %vm2981, %v8045, 0
      %8094 = vmatpush.msra.mxu0 0.0
      %8095 = vmatpush.msra.mxu0 0.0
      %8096 = vmatpush.msra.mxu0 0.0
      %8097 = vmatpush.msra.mxu0 0.0
      %8098 = vmatpush.msra.mxu0 0.0
      %8099 = vmatpush.msra.mxu0 0.0
      %8100 = vmatpush.msra.mxu0 0.0
      %8101 = vmatpush.msra.mxu0 0.0
      %8102 = vmatpush.msra.mxu0 0.0
      %8103 = vmatpush.msra.mxu0 0.0
      %8104 = vmatpush.msra.mxu0 0.0
      %8105 = vmatpush.msra.mxu0 0.0
      %8106 = vmatpush.msra.mxu0 %v3334
      %8107 = vmatpush.msra.mxu0 %v3333
      %8108 = vmatpush.msra.mxu0 %v3332
      %8109 = vmatpush.msra.mxu0 %v3331
      %8110 = vmatmul.f32.gmra.mxu0 %v8047
      %v8111 = vpop.f32.mrf.mxu0
      %v8112 = vadd.f32 0.0, %v8111
      %8113 = vmatmul.f32.gmra.mxu0 %v8050
      %v8114 = vpop.f32.mrf.mxu0
      %v8115 = vadd.f32 0.0, %v8114
      %8116 = vmatmul.f32.gmra.mxu0 %v8053
      %v8117 = vpop.f32.mrf.mxu0
      %v8118 = vadd.f32 0.0, %v8117
      %8119 = vmatmul.f32.gmra.mxu0 %v8056
      %v8120 = vpop.f32.mrf.mxu0
      %v8121 = vadd.f32 0.0, %v8120
      %8122 = vmatmul.f32.gmra.mxu0 %v8059
      %v8123 = vpop.f32.mrf.mxu0
      %v8124 = vadd.f32 0.0, %v8123
      %8125 = vmatmul.f32.gmra.mxu0 %v8062
      %v8126 = vpop.f32.mrf.mxu0
      %v8127 = vadd.f32 0.0, %v8126
      %8128 = vmatmul.f32.gmra.mxu0 %v8065
      %v8129 = vpop.f32.mrf.mxu0
      %v8130 = vadd.f32 0.0, %v8129
      %8131 = vmatmul.f32.gmra.mxu0 %v8068
      %v8132 = vpop.f32.mrf.mxu0
      %v8133 = vadd.f32 0.0, %v8132
      %8134 = vmatmul.f32.gmra.mxu0 %v8071
      %v8135 = vpop.f32.mrf.mxu0
      %v8136 = vadd.f32 0.0, %v8135
      %8137 = vmatmul.f32.gmra.mxu0 %v8074
      %v8138 = vpop.f32.mrf.mxu0
      %v8139 = vadd.f32 0.0, %v8138
      %8140 = vmatmul.f32.gmra.mxu0 %v8077
      %v8141 = vpop.f32.mrf.mxu0
      %v8142 = vadd.f32 0.0, %v8141
      %8143 = vmatmul.f32.gmra.mxu0 %v8080
      %v8144 = vpop.f32.mrf.mxu0
      %v8145 = vadd.f32 0.0, %v8144
      %8146 = vmatmul.f32.gmra.mxu0 %v8083
      %v8147 = vpop.f32.mrf.mxu0
      %v8148 = vadd.f32 0.0, %v8147
      %8149 = vmatmul.f32.gmra.mxu0 %v8086
      %v8150 = vpop.f32.mrf.mxu0
      %v8151 = vadd.f32 0.0, %v8150
      %8152 = vmatmul.f32.gmra.mxu0 %v8089
      %v8153 = vpop.f32.mrf.mxu0
      %v8154 = vadd.f32 0.0, %v8153
      %8155 = vmatmul.f32.gmra.mxu0 %v8092
      %v8156 = vpop.f32.mrf.mxu0
      %v8157 = vadd.f32 0.0, %v8156
      %8158 = vdwg.mxu0
      %v8159 = vadd.f32 %v8014, %v8112
      %v8160 = vadd.f32 %v8015, %v8115
      %v8161 = vadd.f32 %v8016, %v8118
      %v8162 = vadd.f32 %v8017, %v8121
      %v8163 = vadd.f32 %v8018, %v8124
      %v8164 = vadd.f32 %v8019, %v8127
      %v8165 = vadd.f32 %v8020, %v8130
      %v8166 = vadd.f32 %v8021, %v8133
      %v8167 = vadd.f32 %v8022, %v8136
      %v8168 = vadd.f32 %v8023, %v8139
      %v8169 = vadd.f32 %v8024, %v8142
      %v8170 = vadd.f32 %v8025, %v8145
      %v8171 = vadd.f32 %v8026, %v8148
      %v8172 = vadd.f32 %v8027, %v8151
      %v8173 = vadd.f32 %v8028, %v8154
      %v8174 = vadd.f32 %v8029, %v8157
      %v8175 = vld [vmem:[#allocation2 + $0x480] sm:$0xff]
      %v8176 = vld [vmem:[#allocation2 + $0x488] sm:$0xff]
      %v8177 = vld [vmem:[#allocation2 + $0x490] sm:$0xff]
      %v8178 = vld [vmem:[#allocation2 + $0x498] sm:$0xff]
      %v8179 = vld [vmem:[#allocation2 + $0x4a0] sm:$0xff]
      %v8180 = vld [vmem:[#allocation2 + $0x4a8] sm:$0xff]
      %v8181 = vld [vmem:[#allocation2 + $0x4b0] sm:$0xff]
      %v8182 = vld [vmem:[#allocation2 + $0x4b8] sm:$0xff]
      %v8183 = vld [vmem:[#allocation2 + $0x4c0] sm:$0xff]
      %v8184 = vld [vmem:[#allocation2 + $0x4c8] sm:$0xff]
      %v8185 = vld [vmem:[#allocation2 + $0x4d0] sm:$0xff]
      %v8186 = vld [vmem:[#allocation2 + $0x4d8] sm:$0xff]
      %v8187 = vld [vmem:[#allocation2 + $0x4e0] sm:$0xff]
      %v8188 = vld [vmem:[#allocation2 + $0x4e8] sm:$0xff]
      %v8189 = vld [vmem:[#allocation2 + $0x4f0] sm:$0xff]
      %v8190 = vld [vmem:[#allocation2 + $0x4f8] sm:$0xff]
      %v8192 = vsel %vm2981, %v8175, 0
      %v8195 = vsel %vm2981, %v8176, 0
      %v8198 = vsel %vm2981, %v8177, 0
      %v8201 = vsel %vm2981, %v8178, 0
      %v8204 = vsel %vm2981, %v8179, 0
      %v8207 = vsel %vm2981, %v8180, 0
      %v8210 = vsel %vm2981, %v8181, 0
      %v8213 = vsel %vm2981, %v8182, 0
      %v8216 = vsel %vm2981, %v8183, 0
      %v8219 = vsel %vm2981, %v8184, 0
      %v8222 = vsel %vm2981, %v8185, 0
      %v8225 = vsel %vm2981, %v8186, 0
      %v8228 = vsel %vm2981, %v8187, 0
      %v8231 = vsel %vm2981, %v8188, 0
      %v8234 = vsel %vm2981, %v8189, 0
      %v8237 = vsel %vm2981, %v8190, 0
      %8239 = vmatpush.msra.mxu0 0.0
      %8240 = vmatpush.msra.mxu0 0.0
      %8241 = vmatpush.msra.mxu0 0.0
      %8242 = vmatpush.msra.mxu0 0.0
      %8243 = vmatpush.msra.mxu0 0.0
      %8244 = vmatpush.msra.mxu0 0.0
      %8245 = vmatpush.msra.mxu0 0.0
      %8246 = vmatpush.msra.mxu0 0.0
      %8247 = vmatpush.msra.mxu0 0.0
      %8248 = vmatpush.msra.mxu0 0.0
      %8249 = vmatpush.msra.mxu0 0.0
      %8250 = vmatpush.msra.mxu0 0.0
      %8251 = vmatpush.msra.mxu0 %v3339
      %8252 = vmatpush.msra.mxu0 %v3338
      %8253 = vmatpush.msra.mxu0 %v3337
      %8254 = vmatpush.msra.mxu0 %v3336
      %8255 = vmatmul.f32.gmra.mxu0 %v8192
      %v8256 = vpop.f32.mrf.mxu0
      %v8257 = vadd.f32 0.0, %v8256
      %8258 = vmatmul.f32.gmra.mxu0 %v8195
      %v8259 = vpop.f32.mrf.mxu0
      %v8260 = vadd.f32 0.0, %v8259
      %8261 = vmatmul.f32.gmra.mxu0 %v8198
      %v8262 = vpop.f32.mrf.mxu0
      %v8263 = vadd.f32 0.0, %v8262
      %8264 = vmatmul.f32.gmra.mxu0 %v8201
      %v8265 = vpop.f32.mrf.mxu0
      %v8266 = vadd.f32 0.0, %v8265
      %8267 = vmatmul.f32.gmra.mxu0 %v8204
      %v8268 = vpop.f32.mrf.mxu0
      %v8269 = vadd.f32 0.0, %v8268
      %8270 = vmatmul.f32.gmra.mxu0 %v8207
      %v8271 = vpop.f32.mrf.mxu0
      %v8272 = vadd.f32 0.0, %v8271
      %8273 = vmatmul.f32.gmra.mxu0 %v8210
      %v8274 = vpop.f32.mrf.mxu0
      %v8275 = vadd.f32 0.0, %v8274
      %8276 = vmatmul.f32.gmra.mxu0 %v8213
      %v8277 = vpop.f32.mrf.mxu0
      %v8278 = vadd.f32 0.0, %v8277
      %8279 = vmatmul.f32.gmra.mxu0 %v8216
      %v8280 = vpop.f32.mrf.mxu0
      %v8281 = vadd.f32 0.0, %v8280
      %8282 = vmatmul.f32.gmra.mxu0 %v8219
      %v8283 = vpop.f32.mrf.mxu0
      %v8284 = vadd.f32 0.0, %v8283
      %8285 = vmatmul.f32.gmra.mxu0 %v8222
      %v8286 = vpop.f32.mrf.mxu0
      %v8287 = vadd.f32 0.0, %v8286
      %8288 = vmatmul.f32.gmra.mxu0 %v8225
      %v8289 = vpop.f32.mrf.mxu0
      %v8290 = vadd.f32 0.0, %v8289
      %8291 = vmatmul.f32.gmra.mxu0 %v8228
      %v8292 = vpop.f32.mrf.mxu0
      %v8293 = vadd.f32 0.0, %v8292
      %8294 = vmatmul.f32.gmra.mxu0 %v8231
      %v8295 = vpop.f32.mrf.mxu0
      %v8296 = vadd.f32 0.0, %v8295
      %8297 = vmatmul.f32.gmra.mxu0 %v8234
      %v8298 = vpop.f32.mrf.mxu0
      %v8299 = vadd.f32 0.0, %v8298
      %8300 = vmatmul.f32.gmra.mxu0 %v8237
      %v8301 = vpop.f32.mrf.mxu0
      %v8302 = vadd.f32 0.0, %v8301
      %8303 = vdwg.mxu0
      %v8304 = vadd.f32 %v8159, %v8257
      %v8305 = vadd.f32 %v8160, %v8260
      %v8306 = vadd.f32 %v8161, %v8263
      %v8307 = vadd.f32 %v8162, %v8266
      %v8308 = vadd.f32 %v8163, %v8269
      %v8309 = vadd.f32 %v8164, %v8272
      %v8310 = vadd.f32 %v8165, %v8275
      %v8311 = vadd.f32 %v8166, %v8278
      %v8312 = vadd.f32 %v8167, %v8281
      %v8313 = vadd.f32 %v8168, %v8284
      %v8314 = vadd.f32 %v8169, %v8287
      %v8315 = vadd.f32 %v8170, %v8290
      %v8316 = vadd.f32 %v8171, %v8293
      %v8317 = vadd.f32 %v8172, %v8296
      %v8318 = vadd.f32 %v8173, %v8299
      %v8319 = vadd.f32 %v8174, %v8302
      %v8320 = vld [vmem:[#allocation2 + $0x520] sm:$0xff]
      %v8321 = vld [vmem:[#allocation2 + $0x528] sm:$0xff]
      %v8322 = vld [vmem:[#allocation2 + $0x530] sm:$0xff]
      %v8323 = vld [vmem:[#allocation2 + $0x538] sm:$0xff]
      %v8324 = vld [vmem:[#allocation2 + $0x540] sm:$0xff]
      %v8325 = vld [vmem:[#allocation2 + $0x548] sm:$0xff]
      %v8326 = vld [vmem:[#allocation2 + $0x550] sm:$0xff]
      %v8327 = vld [vmem:[#allocation2 + $0x558] sm:$0xff]
      %v8328 = vld [vmem:[#allocation2 + $0x560] sm:$0xff]
      %v8329 = vld [vmem:[#allocation2 + $0x568] sm:$0xff]
      %v8330 = vld [vmem:[#allocation2 + $0x570] sm:$0xff]
      %v8331 = vld [vmem:[#allocation2 + $0x578] sm:$0xff]
      %v8332 = vld [vmem:[#allocation2 + $0x580] sm:$0xff]
      %v8333 = vld [vmem:[#allocation2 + $0x588] sm:$0xff]
      %v8334 = vld [vmem:[#allocation2 + $0x590] sm:$0xff]
      %v8335 = vld [vmem:[#allocation2 + $0x598] sm:$0xff]
      %v8337 = vsel %vm2981, %v8320, 0
      %v8340 = vsel %vm2981, %v8321, 0
      %v8343 = vsel %vm2981, %v8322, 0
      %v8346 = vsel %vm2981, %v8323, 0
      %v8349 = vsel %vm2981, %v8324, 0
      %v8352 = vsel %vm2981, %v8325, 0
      %v8355 = vsel %vm2981, %v8326, 0
      %v8358 = vsel %vm2981, %v8327, 0
      %v8361 = vsel %vm2981, %v8328, 0
      %v8364 = vsel %vm2981, %v8329, 0
      %v8367 = vsel %vm2981, %v8330, 0
      %v8370 = vsel %vm2981, %v8331, 0
      %v8373 = vsel %vm2981, %v8332, 0
      %v8376 = vsel %vm2981, %v8333, 0
      %v8379 = vsel %vm2981, %v8334, 0
      %v8382 = vsel %vm2981, %v8335, 0
      %8384 = vmatpush.msra.mxu0 0.0
      %8385 = vmatpush.msra.mxu0 0.0
      %8386 = vmatpush.msra.mxu0 0.0
      %8387 = vmatpush.msra.mxu0 0.0
      %8388 = vmatpush.msra.mxu0 0.0
      %8389 = vmatpush.msra.mxu0 0.0
      %8390 = vmatpush.msra.mxu0 0.0
      %8391 = vmatpush.msra.mxu0 0.0
      %8392 = vmatpush.msra.mxu0 0.0
      %8393 = vmatpush.msra.mxu0 0.0
      %8394 = vmatpush.msra.mxu0 0.0
      %8395 = vmatpush.msra.mxu0 0.0
      %8396 = vmatpush.msra.mxu0 %v3344
      %8397 = vmatpush.msra.mxu0 %v3343
      %8398 = vmatpush.msra.mxu0 %v3342
      %8399 = vmatpush.msra.mxu0 %v3341
      %8400 = vmatmul.f32.gmra.mxu0 %v8337
      %v8401 = vpop.f32.mrf.mxu0
      %v8402 = vadd.f32 0.0, %v8401
      %8403 = vmatmul.f32.gmra.mxu0 %v8340
      %v8404 = vpop.f32.mrf.mxu0
      %v8405 = vadd.f32 0.0, %v8404
      %8406 = vmatmul.f32.gmra.mxu0 %v8343
      %v8407 = vpop.f32.mrf.mxu0
      %v8408 = vadd.f32 0.0, %v8407
      %8409 = vmatmul.f32.gmra.mxu0 %v8346
      %v8410 = vpop.f32.mrf.mxu0
      %v8411 = vadd.f32 0.0, %v8410
      %8412 = vmatmul.f32.gmra.mxu0 %v8349
      %v8413 = vpop.f32.mrf.mxu0
      %v8414 = vadd.f32 0.0, %v8413
      %8415 = vmatmul.f32.gmra.mxu0 %v8352
      %v8416 = vpop.f32.mrf.mxu0
      %v8417 = vadd.f32 0.0, %v8416
      %8418 = vmatmul.f32.gmra.mxu0 %v8355
      %v8419 = vpop.f32.mrf.mxu0
      %v8420 = vadd.f32 0.0, %v8419
      %8421 = vmatmul.f32.gmra.mxu0 %v8358
      %v8422 = vpop.f32.mrf.mxu0
      %v8423 = vadd.f32 0.0, %v8422
      %8424 = vmatmul.f32.gmra.mxu0 %v8361
      %v8425 = vpop.f32.mrf.mxu0
      %v8426 = vadd.f32 0.0, %v8425
      %8427 = vmatmul.f32.gmra.mxu0 %v8364
      %v8428 = vpop.f32.mrf.mxu0
      %v8429 = vadd.f32 0.0, %v8428
      %8430 = vmatmul.f32.gmra.mxu0 %v8367
      %v8431 = vpop.f32.mrf.mxu0
      %v8432 = vadd.f32 0.0, %v8431
      %8433 = vmatmul.f32.gmra.mxu0 %v8370
      %v8434 = vpop.f32.mrf.mxu0
      %v8435 = vadd.f32 0.0, %v8434
      %8436 = vmatmul.f32.gmra.mxu0 %v8373
      %v8437 = vpop.f32.mrf.mxu0
      %v8438 = vadd.f32 0.0, %v8437
      %8439 = vmatmul.f32.gmra.mxu0 %v8376
      %v8440 = vpop.f32.mrf.mxu0
      %v8441 = vadd.f32 0.0, %v8440
      %8442 = vmatmul.f32.gmra.mxu0 %v8379
      %v8443 = vpop.f32.mrf.mxu0
      %v8444 = vadd.f32 0.0, %v8443
      %8445 = vmatmul.f32.gmra.mxu0 %v8382
      %v8446 = vpop.f32.mrf.mxu0
      %v8447 = vadd.f32 0.0, %v8446
      %8448 = vdwg.mxu0
      %v8449 = vadd.f32 %v8304, %v8402
      %v8450 = vadd.f32 %v8305, %v8405
      %v8451 = vadd.f32 %v8306, %v8408
      %v8452 = vadd.f32 %v8307, %v8411
      %v8453 = vadd.f32 %v8308, %v8414
      %v8454 = vadd.f32 %v8309, %v8417
      %v8455 = vadd.f32 %v8310, %v8420
      %v8456 = vadd.f32 %v8311, %v8423
      %v8457 = vadd.f32 %v8312, %v8426
      %v8458 = vadd.f32 %v8313, %v8429
      %v8459 = vadd.f32 %v8314, %v8432
      %v8460 = vadd.f32 %v8315, %v8435
      %v8461 = vadd.f32 %v8316, %v8438
      %v8462 = vadd.f32 %v8317, %v8441
      %v8463 = vadd.f32 %v8318, %v8444
      %v8464 = vadd.f32 %v8319, %v8447
      %v8465 = vld [vmem:[#allocation2 + $0x4a0] sm:$0xff]
      %v8466 = vld [vmem:[#allocation2 + $0x4a8] sm:$0xff]
      %v8467 = vld [vmem:[#allocation2 + $0x4b0] sm:$0xff]
      %v8468 = vld [vmem:[#allocation2 + $0x4b8] sm:$0xff]
      %v8469 = vld [vmem:[#allocation2 + $0x4c0] sm:$0xff]
      %v8470 = vld [vmem:[#allocation2 + $0x4c8] sm:$0xff]
      %v8471 = vld [vmem:[#allocation2 + $0x4d0] sm:$0xff]
      %v8472 = vld [vmem:[#allocation2 + $0x4d8] sm:$0xff]
      %v8473 = vld [vmem:[#allocation2 + $0x4e0] sm:$0xff]
      %v8474 = vld [vmem:[#allocation2 + $0x4e8] sm:$0xff]
      %v8475 = vld [vmem:[#allocation2 + $0x4f0] sm:$0xff]
      %v8476 = vld [vmem:[#allocation2 + $0x4f8] sm:$0xff]
      %v8477 = vld [vmem:[#allocation2 + $0x500] sm:$0xff]
      %v8478 = vld [vmem:[#allocation2 + $0x508] sm:$0xff]
      %v8479 = vld [vmem:[#allocation2 + $0x510] sm:$0xff]
      %v8480 = vld [vmem:[#allocation2 + $0x518] sm:$0xff]
      %v8482 = vsel %vm2981, %v8465, 0
      %v8485 = vsel %vm2981, %v8466, 0
      %v8488 = vsel %vm2981, %v8467, 0
      %v8491 = vsel %vm2981, %v8468, 0
      %v8494 = vsel %vm2981, %v8469, 0
      %v8497 = vsel %vm2981, %v8470, 0
      %v8500 = vsel %vm2981, %v8471, 0
      %v8503 = vsel %vm2981, %v8472, 0
      %v8506 = vsel %vm2981, %v8473, 0
      %v8509 = vsel %vm2981, %v8474, 0
      %v8512 = vsel %vm2981, %v8475, 0
      %v8515 = vsel %vm2981, %v8476, 0
      %v8518 = vsel %vm2981, %v8477, 0
      %v8521 = vsel %vm2981, %v8478, 0
      %v8524 = vsel %vm2981, %v8479, 0
      %v8527 = vsel %vm2981, %v8480, 0
      %8529 = vmatpush.msra.mxu0 0.0
      %8530 = vmatpush.msra.mxu0 0.0
      %8531 = vmatpush.msra.mxu0 0.0
      %8532 = vmatpush.msra.mxu0 0.0
      %8533 = vmatpush.msra.mxu0 0.0
      %8534 = vmatpush.msra.mxu0 0.0
      %8535 = vmatpush.msra.mxu0 0.0
      %8536 = vmatpush.msra.mxu0 0.0
      %8537 = vmatpush.msra.mxu0 0.0
      %8538 = vmatpush.msra.mxu0 0.0
      %8539 = vmatpush.msra.mxu0 0.0
      %8540 = vmatpush.msra.mxu0 0.0
      %8541 = vmatpush.msra.mxu0 %v3349
      %8542 = vmatpush.msra.mxu0 %v3348
      %8543 = vmatpush.msra.mxu0 %v3347
      %8544 = vmatpush.msra.mxu0 %v3346
      %8545 = vmatmul.f32.gmra.mxu0 %v8482
      %v8546 = vpop.f32.mrf.mxu0
      %v8547 = vadd.f32 0.0, %v8546
      %8548 = vmatmul.f32.gmra.mxu0 %v8485
      %v8549 = vpop.f32.mrf.mxu0
      %v8550 = vadd.f32 0.0, %v8549
      %8551 = vmatmul.f32.gmra.mxu0 %v8488
      %v8552 = vpop.f32.mrf.mxu0
      %v8553 = vadd.f32 0.0, %v8552
      %8554 = vmatmul.f32.gmra.mxu0 %v8491
      %v8555 = vpop.f32.mrf.mxu0
      %v8556 = vadd.f32 0.0, %v8555
      %8557 = vmatmul.f32.gmra.mxu0 %v8494
      %v8558 = vpop.f32.mrf.mxu0
      %v8559 = vadd.f32 0.0, %v8558
      %8560 = vmatmul.f32.gmra.mxu0 %v8497
      %v8561 = vpop.f32.mrf.mxu0
      %v8562 = vadd.f32 0.0, %v8561
      %8563 = vmatmul.f32.gmra.mxu0 %v8500
      %v8564 = vpop.f32.mrf.mxu0
      %v8565 = vadd.f32 0.0, %v8564
      %8566 = vmatmul.f32.gmra.mxu0 %v8503
      %v8567 = vpop.f32.mrf.mxu0
      %v8568 = vadd.f32 0.0, %v8567
      %8569 = vmatmul.f32.gmra.mxu0 %v8506
      %v8570 = vpop.f32.mrf.mxu0
      %v8571 = vadd.f32 0.0, %v8570
      %8572 = vmatmul.f32.gmra.mxu0 %v8509
      %v8573 = vpop.f32.mrf.mxu0
      %v8574 = vadd.f32 0.0, %v8573
      %8575 = vmatmul.f32.gmra.mxu0 %v8512
      %v8576 = vpop.f32.mrf.mxu0
      %v8577 = vadd.f32 0.0, %v8576
      %8578 = vmatmul.f32.gmra.mxu0 %v8515
      %v8579 = vpop.f32.mrf.mxu0
      %v8580 = vadd.f32 0.0, %v8579
      %8581 = vmatmul.f32.gmra.mxu0 %v8518
      %v8582 = vpop.f32.mrf.mxu0
      %v8583 = vadd.f32 0.0, %v8582
      %8584 = vmatmul.f32.gmra.mxu0 %v8521
      %v8585 = vpop.f32.mrf.mxu0
      %v8586 = vadd.f32 0.0, %v8585
      %8587 = vmatmul.f32.gmra.mxu0 %v8524
      %v8588 = vpop.f32.mrf.mxu0
      %v8589 = vadd.f32 0.0, %v8588
      %8590 = vmatmul.f32.gmra.mxu0 %v8527
      %v8591 = vpop.f32.mrf.mxu0
      %v8592 = vadd.f32 0.0, %v8591
      %8593 = vdwg.mxu0
      %v8594 = vadd.f32 %v8449, %v8547
      %v8595 = vadd.f32 %v8450, %v8550
      %v8596 = vadd.f32 %v8451, %v8553
      %v8597 = vadd.f32 %v8452, %v8556
      %v8598 = vadd.f32 %v8453, %v8559
      %v8599 = vadd.f32 %v8454, %v8562
      %v8600 = vadd.f32 %v8455, %v8565
      %v8601 = vadd.f32 %v8456, %v8568
      %v8602 = vadd.f32 %v8457, %v8571
      %v8603 = vadd.f32 %v8458, %v8574
      %v8604 = vadd.f32 %v8459, %v8577
      %v8605 = vadd.f32 %v8460, %v8580
      %v8606 = vadd.f32 %v8461, %v8583
      %v8607 = vadd.f32 %v8462, %v8586
      %v8608 = vadd.f32 %v8463, %v8589
      %v8609 = vadd.f32 %v8464, %v8592
      %v8610 = vadd.f32 %v8594, %v4645
      %v8611 = vadd.f32 %v8595, %v4645
      %v8612 = vadd.f32 %v8596, %v4645
      %v8613 = vadd.f32 %v8597, %v4645
      %v8614 = vadd.f32 %v8598, %v4645
      %v8615 = vadd.f32 %v8599, %v4645
      %v8616 = vadd.f32 %v8600, %v4645
      %v8617 = vadd.f32 %v8601, %v4645
      %v8618 = vadd.f32 %v8602, %v4645
      %v8619 = vadd.f32 %v8603, %v4645
      %v8620 = vadd.f32 %v8604, %v4645
      %v8621 = vadd.f32 %v8605, %v4645
      %v8622 = vadd.f32 %v8606, %v4645
      %v8623 = vadd.f32 %v8607, %v4645
      %v8624 = vadd.f32 %v8608, %v4645
      %v8625 = vadd.f32 %v8609, %v4645
      %v8626 = vmax.f32 %v8610, 0.0
      %v8627 = vmax.f32 %v8611, 0.0
      %v8628 = vmax.f32 %v8612, 0.0
      %v8629 = vmax.f32 %v8613, 0.0
      %v8630 = vmax.f32 %v8614, 0.0
      %v8631 = vmax.f32 %v8615, 0.0
      %v8632 = vmax.f32 %v8616, 0.0
      %v8633 = vmax.f32 %v8617, 0.0
      %v8634 = vmax.f32 %v8618, 0.0
      %v8635 = vmax.f32 %v8619, 0.0
      %v8636 = vmax.f32 %v8620, 0.0
      %v8637 = vmax.f32 %v8621, 0.0
      %v8638 = vmax.f32 %v8622, 0.0
      %v8639 = vmax.f32 %v8623, 0.0
      %v8640 = vmax.f32 %v8624, 0.0
      %v8641 = vmax.f32 %v8625, 0.0
      %s8642 = scalar_lea.vmem %s6, 384
      %v8643 = vld [vmem:[%s8642] sm:$0xff]
      %v8644 = vld [vmem:[%s8642 + $0x8] sm:$0xff]
      %v8645 = vld [vmem:[%s8642 + $0x10] sm:$0xff]
      %v8646 = vld [vmem:[%s8642 + $0x18] sm:$0xff]
      %v8648 = vsel %vm2981, %v8626, 0
      %v8651 = vsel %vm2981, %v8627, 0
      %v8654 = vsel %vm2981, %v8628, 0
      %v8657 = vsel %vm2981, %v8629, 0
      %8659 = vmatpush.msra.mxu0 0.0
      %8660 = vmatpush.msra.mxu0 0.0
      %8661 = vmatpush.msra.mxu0 0.0
      %8662 = vmatpush.msra.mxu0 0.0
      %8663 = vmatpush.msra.mxu0 0.0
      %8664 = vmatpush.msra.mxu0 0.0
      %8665 = vmatpush.msra.mxu0 0.0
      %8666 = vmatpush.msra.mxu0 0.0
      %8667 = vmatpush.msra.mxu0 0.0
      %8668 = vmatpush.msra.mxu0 0.0
      %8669 = vmatpush.msra.mxu0 0.0
      %8670 = vmatpush.msra.mxu0 0.0
      %8671 = vmatpush.msra.mxu0 %v8646
      %8672 = vmatpush.msra.mxu0 %v8645
      %8673 = vmatpush.msra.mxu0 %v8644
      %8674 = vmatpush.msra.mxu0 %v8643
      %8675 = vmatmul.f32.gmra.mxu0 %v8648
      %v8676 = vpop.f32.mrf.mxu0
      %v8677 = vadd.f32 0.0, %v8676
      %8678 = vmatmul.f32.gmra.mxu0 %v8651
      %v8679 = vpop.f32.mrf.mxu0
      %v8680 = vadd.f32 0.0, %v8679
      %8681 = vmatmul.f32.gmra.mxu0 %v8654
      %v8682 = vpop.f32.mrf.mxu0
      %v8683 = vadd.f32 0.0, %v8682
      %8684 = vmatmul.f32.gmra.mxu0 %v8657
      %v8685 = vpop.f32.mrf.mxu0
      %v8686 = vadd.f32 0.0, %v8685
      %8687 = vdwg.mxu0
      %v8688 = vadd.f32 %v7525, %v8677
      %v8689 = vadd.f32 %v7526, %v8680
      %v8690 = vadd.f32 %v7527, %v8683
      %v8691 = vadd.f32 %v7528, %v8686
      %s8692 = scalar_lea.vmem %s6, 416
      %v8693 = vld [vmem:[%s8692] sm:$0xff]
      %v8694 = vld [vmem:[%s8692 + $0x8] sm:$0xff]
      %v8695 = vld [vmem:[%s8692 + $0x10] sm:$0xff]
      %v8696 = vld [vmem:[%s8692 + $0x18] sm:$0xff]
      %v8698 = vsel %vm2981, %v8630, 0
      %v8701 = vsel %vm2981, %v8631, 0
      %v8704 = vsel %vm2981, %v8632, 0
      %v8707 = vsel %vm2981, %v8633, 0
      %8709 = vmatpush.msra.mxu0 0.0
      %8710 = vmatpush.msra.mxu0 0.0
      %8711 = vmatpush.msra.mxu0 0.0
      %8712 = vmatpush.msra.mxu0 0.0
      %8713 = vmatpush.msra.mxu0 0.0
      %8714 = vmatpush.msra.mxu0 0.0
      %8715 = vmatpush.msra.mxu0 0.0
      %8716 = vmatpush.msra.mxu0 0.0
      %8717 = vmatpush.msra.mxu0 0.0
      %8718 = vmatpush.msra.mxu0 0.0
      %8719 = vmatpush.msra.mxu0 0.0
      %8720 = vmatpush.msra.mxu0 0.0
      %8721 = vmatpush.msra.mxu0 %v8696
      %8722 = vmatpush.msra.mxu0 %v8695
      %8723 = vmatpush.msra.mxu0 %v8694
      %8724 = vmatpush.msra.mxu0 %v8693
      %8725 = vmatmul.f32.gmra.mxu0 %v8698
      %v8726 = vpop.f32.mrf.mxu0
      %v8727 = vadd.f32 0.0, %v8726
      %8728 = vmatmul.f32.gmra.mxu0 %v8701
      %v8729 = vpop.f32.mrf.mxu0
      %v8730 = vadd.f32 0.0, %v8729
      %8731 = vmatmul.f32.gmra.mxu0 %v8704
      %v8732 = vpop.f32.mrf.mxu0
      %v8733 = vadd.f32 0.0, %v8732
      %8734 = vmatmul.f32.gmra.mxu0 %v8707
      %v8735 = vpop.f32.mrf.mxu0
      %v8736 = vadd.f32 0.0, %v8735
      %8737 = vdwg.mxu0
      %v8738 = vadd.f32 %v8688, %v8727
      %v8739 = vadd.f32 %v8689, %v8730
      %v8740 = vadd.f32 %v8690, %v8733
      %v8741 = vadd.f32 %v8691, %v8736
      %s8742 = scalar_lea.vmem %s6, 448
      %v8743 = vld [vmem:[%s8742] sm:$0xff]
      %v8744 = vld [vmem:[%s8742 + $0x8] sm:$0xff]
      %v8745 = vld [vmem:[%s8742 + $0x10] sm:$0xff]
      %v8746 = vld [vmem:[%s8742 + $0x18] sm:$0xff]
      %v8748 = vsel %vm2981, %v8634, 0
      %v8751 = vsel %vm2981, %v8635, 0
      %v8754 = vsel %vm2981, %v8636, 0
      %v8757 = vsel %vm2981, %v8637, 0
      %8759 = vmatpush.msra.mxu0 0.0
      %8760 = vmatpush.msra.mxu0 0.0
      %8761 = vmatpush.msra.mxu0 0.0
      %8762 = vmatpush.msra.mxu0 0.0
      %8763 = vmatpush.msra.mxu0 0.0
      %8764 = vmatpush.msra.mxu0 0.0
      %8765 = vmatpush.msra.mxu0 0.0
      %8766 = vmatpush.msra.mxu0 0.0
      %8767 = vmatpush.msra.mxu0 0.0
      %8768 = vmatpush.msra.mxu0 0.0
      %8769 = vmatpush.msra.mxu0 0.0
      %8770 = vmatpush.msra.mxu0 0.0
      %8771 = vmatpush.msra.mxu0 %v8746
      %8772 = vmatpush.msra.mxu0 %v8745
      %8773 = vmatpush.msra.mxu0 %v8744
      %8774 = vmatpush.msra.mxu0 %v8743
      %8775 = vmatmul.f32.gmra.mxu0 %v8748
      %v8776 = vpop.f32.mrf.mxu0
      %v8777 = vadd.f32 0.0, %v8776
      %8778 = vmatmul.f32.gmra.mxu0 %v8751
      %v8779 = vpop.f32.mrf.mxu0
      %v8780 = vadd.f32 0.0, %v8779
      %8781 = vmatmul.f32.gmra.mxu0 %v8754
      %v8782 = vpop.f32.mrf.mxu0
      %v8783 = vadd.f32 0.0, %v8782
      %8784 = vmatmul.f32.gmra.mxu0 %v8757
      %v8785 = vpop.f32.mrf.mxu0
      %v8786 = vadd.f32 0.0, %v8785
      %8787 = vdwg.mxu0
      %v8788 = vadd.f32 %v8738, %v8777
      %v8789 = vadd.f32 %v8739, %v8780
      %v8790 = vadd.f32 %v8740, %v8783
      %v8791 = vadd.f32 %v8741, %v8786
      %s8792 = scalar_lea.vmem %s6, 480
      %v8793 = vld [vmem:[%s8792] sm:$0xff]
      %v8794 = vld [vmem:[%s8792 + $0x8] sm:$0xff]
      %v8795 = vld [vmem:[%s8792 + $0x10] sm:$0xff]
      %v8796 = vld [vmem:[%s8792 + $0x18] sm:$0xff]
      %v8798 = vsel %vm2981, %v8638, 0
      %v8801 = vsel %vm2981, %v8639, 0
      %v8804 = vsel %vm2981, %v8640, 0
      %v8807 = vsel %vm2981, %v8641, 0
      %8809 = vmatpush.msra.mxu0 0.0
      %8810 = vmatpush.msra.mxu0 0.0
      %8811 = vmatpush.msra.mxu0 0.0
      %8812 = vmatpush.msra.mxu0 0.0
      %8813 = vmatpush.msra.mxu0 0.0
      %8814 = vmatpush.msra.mxu0 0.0
      %8815 = vmatpush.msra.mxu0 0.0
      %8816 = vmatpush.msra.mxu0 0.0
      %8817 = vmatpush.msra.mxu0 0.0
      %8818 = vmatpush.msra.mxu0 0.0
      %8819 = vmatpush.msra.mxu0 0.0
      %8820 = vmatpush.msra.mxu0 0.0
      %8821 = vmatpush.msra.mxu0 %v8796
      %8822 = vmatpush.msra.mxu0 %v8795
      %8823 = vmatpush.msra.mxu0 %v8794
      %8824 = vmatpush.msra.mxu0 %v8793
      %8825 = vmatmul.f32.gmra.mxu0 %v8798
      %v8826 = vpop.f32.mrf.mxu0
      %v8827 = vadd.f32 0.0, %v8826
      %8828 = vmatmul.f32.gmra.mxu0 %v8801
      %v8829 = vpop.f32.mrf.mxu0
      %v8830 = vadd.f32 0.0, %v8829
      %8831 = vmatmul.f32.gmra.mxu0 %v8804
      %v8832 = vpop.f32.mrf.mxu0
      %v8833 = vadd.f32 0.0, %v8832
      %8834 = vmatmul.f32.gmra.mxu0 %v8807
      %v8835 = vpop.f32.mrf.mxu0
      %v8836 = vadd.f32 0.0, %v8835
      %8837 = vdwg.mxu0
      %v8838 = vadd.f32 %v8788, %v8827
      %v8839 = vadd.f32 %v8789, %v8830
      %v8840 = vadd.f32 %v8790, %v8833
      %v8841 = vadd.f32 %v8791, %v8836
      %v8842 = vld [vmem:[%s8] sm:$0x1]
      %v8844 = vperm.slane %v8842, 0
      %v8846 = vadd.f32 %v8838, %v8844
      %v8847 = vadd.f32 %v8839, %v8844
      %v8848 = vadd.f32 %v8840, %v8844
      %v8849 = vadd.f32 %v8841, %v8844
      %v8850 = vmax.f32 %v8846, 0.0
      %v8851 = vmax.f32 %v8847, 0.0
      %v8852 = vmax.f32 %v8848, 0.0
      %v8853 = vmax.f32 %v8849, 0.0
      %8854 = vst [vmem:[%s356] sm:$0xff] %v8850
      %8855 = vst [vmem:[%s356 + $0x8] sm:$0xff] %v8851
      %8856 = vst [vmem:[%s356 + $0x10] sm:$0xff] %v8852
      %8857 = vst [vmem:[%s356 + $0x18] sm:$0xff] %v8853
      %s8858 = smul.u32 4, %s20
      %p8859 = scmp.lt.s32.totalorder %s8858, 7
      %s8860 = scalar_select %p8859, %s8858, 7
      %s8861 = smul.addr %s8860, 8
      %s8862 = scalar_lea.vmem %s9, %s8861
      // Predicated region
      $region57: #{cnn2_forward.1} parent=55 // pred_check
        %p8863 = pneg %p237
      $region58: #{cnn2_forward.1} parent=55 // pred_check_branch
        %8865 = sbr.rel (%p8863) target = $region60
      $region59: #{cnn2_forward.1} parent=55 // pred_region
        %s8866 = smul.u32 4, %s20
      $region60: #{cnn2_forward.1} parent=55 // pred_fallthru
        _
    $region56: #{cnn2_forward.1} parent=5 // pred_fallthru
      _
    %p8867 = scmp.le.s32.totalorder 2, %s15
    // Predicated region
    $region61: #{cnn2_forward.1} parent=5 // pred_check
      %p8868 = pneg %p8867
    $region62: #{cnn2_forward.1} parent=5 // pred_check_branch
      %8870 = sbr.rel (%p8868) target = $region64
    $region63: #{cnn2_forward.1} parent=5 // pred_region
      %s8871 = ssub.s32 %s15, 2
      // Predicated region
      $region65: #{cnn2_forward.1} parent=63 // pred_check
        %p8872 = pneg %p243
      $region66: #{cnn2_forward.1} parent=63 // pred_check_branch
        %8874 = sbr.rel (%p8872) target = $region68
      $region67: #{cnn2_forward.1} parent=63 // pred_region
        %s8875 = smul.u32 4, %s21
        %p8876 = scmp.lt.s32.totalorder %s8875, 7
        %s8877 = scalar_select %p8876, %s8875, 7
        %s8878 = smul.addr %s8877, 8
        %s8879 = scalar_lea.vmem %s9, %s8878
      $region68: #{cnn2_forward.1} parent=63 // pred_fallthru
        _
    $region64: #{cnn2_forward.1} parent=5 // pred_fallthru
      _
  $region6: #{cnn2_forward.1} parent=0 // loop_footer
    %s19 = sadd.s32 1, %s15
  $region7: #{cnn2_forward.1} parent=0 // loop_footer_branch
    %14 = sbr.rel target = $region3
  $region8: #{cnn2_forward.1} parent=0 // loop_exit
    _

</llo_original>
